<compile_context>
chip_gen: v7x
topology: tpu7x:2x2x1
jax: 0.10.0
libtpu: 0.0.40
codegen_flags: <defaults>
</compile_context>

<pallas_src>
import functools

import numpy as np
import jax
import jax.numpy as jnp
from jax.experimental import pallas as pl
from jax.experimental.pallas import tpu as pltpu


def _vmem():
    # whole-array block, resident in VMEM (shapes here are tiny)
    return pl.BlockSpec(memory_space=pltpu.MemorySpace.VMEM)


def _layernorm(x, w, b, eps=1e-5):
    mu = jnp.mean(x, axis=-1, keepdims=True)
    var = jnp.mean((x - mu) ** 2, axis=-1, keepdims=True)
    return (x - mu) * jax.lax.rsqrt(var + eps) * w + b


# --------------------------------------------------------------------------
# Fused kernel: embeddings + all decoder layers + output head
# --------------------------------------------------------------------------
def transformer1_kernel(ctx_ref, tokx_ref, pos_ref,
                        cw1_ref, xw1_ref, embw2_ref, embb_ref,
                        wqkv_ref, bqkv_ref, wo_ref, lvec_ref,
                        w1_ref, b1_ref, w2_ref,
                        ow_ref, ob_ref, o_ref,
                        *, num_heads, num_layers, fin, fout, seq_t):
    f32 = jnp.float32
    N = tokx_ref.shape[0]          # B * T flat rows
    B = ctx_ref.shape[0]
    D = cw1_ref.shape[1]
    T = seq_t
    dh = D // num_heads
    scale = 1.0 / float(np.sqrt(dh))

    def leaky(z):                                            # LeakyReLU(0.01)
        return jnp.where(z >= 0.0, z, 0.01 * z)

    embb = embb_ref[...]                                     # (4, D) packed biases
    cb1, cb2, xb1, xb2 = (embb[i:i + 1, :] for i in range(4))

    # ---- context MLP on the compact (B, nc) operand only ----
    ce = leaky(jnp.dot(ctx_ref[...], cw1_ref[...],
                       preferred_element_type=f32) + cb1)
    ce = jnp.dot(ce, embw2_ref[0], preferred_element_type=f32) + cb2      # (B, D)

    # ---- x MLP over all N rows (ctx rows carry zeros and are replaced) ----
    xe = leaky(jnp.dot(tokx_ref[...], xw1_ref[...],
                       preferred_element_type=f32) + xb1)
    xe = jnp.dot(xe, embw2_ref[1], preferred_element_type=f32) + xb2      # (N, D)

    # ---- index helpers generated in-kernel (no O(N)/O(N^2) mask DMAs).
    #      Built from iota + compares + one tiny matmul: no vector integer
    #      div/mod needed. ----
    rB = jax.lax.broadcasted_iota(jnp.int32, (N, B), 0)
    bB = jax.lax.broadcasted_iota(jnp.int32, (N, B), 1)
    diff = rB - bB * T
    belongs = ((diff >= 0) & (diff < T)).astype(f32)         # (N, B) batch one-hot
    sel = (diff == 0).astype(f32)                            # (N, B) batch-start one-hot
    is_ctx = jnp.sum(sel, axis=1, keepdims=True) > 0.5       # (N, 1): row t == 0

    # scatter the B compact context embeddings to rows r = b*T (0/1 matmul)
    ce_full = jnp.dot(sel, ce, preferred_element_type=f32)   # (N, D)

    lane_nd = jax.lax.broadcasted_iota(jnp.int32, (N, D), 1)
    h = jnp.where(is_ctx, ce_full, xe)
    h = jnp.where(lane_nd == (D - 1), pos_ref[...], h)       # pos scalar in last lane

    # block-diagonal (per-batch) causal additive mask, kept in f32
    same_batch = jax.lax.dot_general(belongs, belongs, (((1,), (1,)), ((), ())),
                                     preferred_element_type=f32) > 0.5    # (N, N)
    rr = jax.lax.broadcasted_iota(jnp.int32, (N, N), 0)
    cc = jax.lax.broadcasted_iota(jnp.int32, (N, N), 1)
    neg = jnp.where(same_batch & (cc <= rr), 0.0, -1e30).astype(f32)

    lane_d = jax.lax.broadcasted_iota(jnp.int32, (1, D), 1)  # static lane index

    # TODO(synk): for larger d_model/num_layers, move this unrolled loop onto
    # a grid axis with Buffered(2) stacked-weight BlockSpecs (layer axis
    # "arbitrary"); budget VMEM against v7x's 64 MiB / v5e's 16 MiB scoped
    # default via pltpu.CompilerParams(vmem_limit_bytes=...).
    for l in range(num_layers):
        lv = lvec_ref[l]                                     # (9, D) packed vectors
        bo, xconst = lv[0:1, :], lv[1:2, :]
        ln1w, ln1b = lv[2:3, :], lv[3:4, :]
        ln2w, ln2b = lv[4:5, :], lv[5:6, :]
        ln3w, ln3b = lv[6:7, :], lv[7:8, :]
        b2 = lv[8:9, :]

        # ---- causal multi-head self attention (fused QKV GEMM) ----
        qkv = jnp.dot(h, wqkv_ref[l], preferred_element_type=f32) + bqkv_ref[l]
        q = qkv[:, 0:D]
        k = qkv[:, D:2 * D]
        v = qkv[:, 2 * D:3 * D]

        # full-width masked-K/V heads: no per-head lane slicing, no concat
        attn = None
        for hh in range(num_heads):
            in_head = (lane_d >= hh * dh) & (lane_d < (hh + 1) * dh)   # static
            kh = k * jnp.where(in_head, scale, 0.0)          # scale folded into mask
            vh = v * jnp.where(in_head, 1.0, 0.0)
            s = jax.lax.dot_general(q, kh, (((1,), (1,)), ((), ())),
                                    preferred_element_type=f32) + neg
            s = s - jnp.max(s, axis=-1, keepdims=True)
            p = jnp.exp(s)
            p = p * pl.reciprocal(jnp.sum(p, axis=-1, keepdims=True), approx=True)
            term = jnp.dot(p, vh, preferred_element_type=f32)
            attn = term if attn is None else attn + term      # lands at head lanes
        attn = jnp.dot(attn, wo_ref[l], preferred_element_type=f32) + bo
        h = _layernorm(h + attn, ln1w, ln1b)

        # ---- cross attention against all-zero memory: constant vector ----
        h = _layernorm(h + xconst, ln2w, ln2b)

        # ---- feed-forward (ReLU), bf16 weights, f32 accumulate/elementwise ----
        h1 = jnp.dot(h.astype(jnp.bfloat16), w1_ref[l],
                     preferred_element_type=f32) + b1_ref[l]
        h1 = jnp.maximum(h1, 0.0)
        h2 = jnp.dot(h1.astype(jnp.bfloat16), w2_ref[l],
                     preferred_element_type=f32) + b2
        h = _layernorm(h + h2, ln3w, ln3b)

    # ---- output head: one GEMM + grouped softmax (exact divide so the final
    #      probabilities / sum-to-1 stay exact) ----
    logits = jnp.dot(h, ow_ref[...], preferred_element_type=f32) + ob_ref[...]
    outs = []
    for i in range(fin):
        li = logits[:, i * fout:(i + 1) * fout]
        li = li - jnp.max(li, axis=-1, keepdims=True)
        e = jnp.exp(li)
        outs.append(e / jnp.sum(e, axis=-1, keepdims=True))
    # TODO(synk): if fin*fout stays < 128 while N scales, pad ow/ob to a
    # 128-lane multiple for unmasked full-width stores and slice in the wrapper.
    o_ref[...] = jnp.concatenate(outs, axis=1)               # (N, fin*fout)


# --------------------------------------------------------------------------
# Parameter preparation: stack / fuse / pad / pack / bf16-cast (done once)
# --------------------------------------------------------------------------
def prepare_kernel_params(params, cfg):
    pad_c = lambda m: jnp.pad(m, ((0, 0), (0, 1)))           # append zero column
    pad_rc = lambda m: jnp.pad(m, ((0, 1), (0, 1)))          # append zero row + col
    layers = params['layers']
    stack = lambda name: jnp.stack([lp[name] for lp in layers], axis=0)
    cw1, cb1, cw2, cb2 = params['ctx_emb']
    xw1, xb1, xw2, xb2 = params['emb']

    # nine tiny per-layer (1, D) vectors packed into one (L, 9, D) operand
    lvec = jnp.stack([jnp.concatenate(
        [lp['bo'],
         lp['xbv'] @ lp['xwo'] + lp['xbo'],    # zero-memory cross-attn constant
         lp['ln1w'], lp['ln1b'], lp['ln2w'], lp['ln2b'], lp['ln3w'], lp['ln3b'],
         lp['b2']], axis=0) for lp in layers], axis=0)

    return dict(
        cw1=pad_c(cw1), xw1=pad_c(xw1),
        emb_w2=jnp.stack([pad_rc(cw2), pad_rc(xw2)], axis=0),               # (2, D, D)
        emb_b=jnp.concatenate([pad_c(cb1), pad_c(cb2), pad_c(xb1), pad_c(xb2)],
                              axis=0),                                       # (4, D)
        pos=params['pos'],
        wqkv=jnp.stack([jnp.concatenate([lp['wq'], lp['wk'], lp['wv']], axis=1)
                        for lp in layers], axis=0),                          # (L, D, 3D)
        bqkv=jnp.stack([jnp.concatenate([lp['bq'], lp['bk'], lp['bv']], axis=1)
                        for lp in layers], axis=0),                          # (L, 1, 3D)
        wo=stack('wo'), lvec=lvec,
        w1=stack('w1').astype(jnp.bfloat16), b1=stack('b1'),
        w2=stack('w2').astype(jnp.bfloat16),
        out_w=params['out_w'], out_b=params['out_b'],
    )


# --------------------------------------------------------------------------
# Forward wrapper (layout plumbing in plain JAX; all math in the one kernel)
# --------------------------------------------------------------------------
def transformer1_forward(prep, context, x, cfg):
    B, S, fin = x.shape
    T = S + 1
    N = B * T
    D = cfg['d_model']
    nc = cfg['num_condition']
    fout = cfg['num_features_out']
    H = cfg['num_heads']
    L = cfg['num_layers']
    Fff = cfg['dim_feedforward']

    context = context.astype(jnp.float32).reshape(B, nc)
    x = x.astype(jnp.float32)

    # flat x-token matrix, row r = b*T + t (row 0 of each batch unused/replaced)
    tok_x = jnp.concatenate([jnp.zeros((B, 1, fin), jnp.float32), x],
                            axis=1).reshape(N, fin)
    # positional scalar as an (N, 1) column; placed into the last lane in-kernel
    pos_col = jnp.broadcast_to(prep['pos'][:, :T, :], (B, T, 1)).reshape(N, 1)

    args = (context, tok_x, pos_col,
            prep['cw1'], prep['xw1'], prep['emb_w2'], prep['emb_b'],
            prep['wqkv'], prep['bqkv'], prep['wo'], prep['lvec'],
            prep['w1'], prep['b1'], prep['w2'],
            prep['out_w'], prep['out_b'])

    flops = int(2 * B * (nc * D + D * D) + 2 * N * (fin * D + D * D) + 2 * N * B * D
                + L * (2 * N * D * 3 * D          # fused QKV
                       + 4 * H * N * N * D        # masked scores + PV
                       + 2 * N * D * D            # out projection
                       + 4 * N * D * Fff)         # FFN
                + 2 * N * D * fin * fout)
    transcendentals = int(L * (H * N * N + H * N + 3 * N) + N * fin * fout)
    bytes_accessed = int(sum(int(np.prod(a.shape)) * a.dtype.itemsize for a in args)
                         + N * fin * fout * 4)

    kernel = functools.partial(transformer1_kernel, num_heads=H, num_layers=L,
                               fin=fin, fout=fout, seq_t=T)

    # TODO(synk): once B*T grows beyond a few hundred rows, add a grid over
    # row-blocks (block by batch; the mask is block-diagonal per batch) with
    # dimension_semantics=("parallel",) so v7x's second TensorCore is used.
    out = pl.pallas_call(
        kernel,
        out_shape=jax.ShapeDtypeStruct((N, fin * fout), jnp.float32),
        in_specs=[_vmem() for _ in args],
        out_specs=_vmem(),
        cost_estimate=pl.CostEstimate(flops=flops,
                                      transcendentals=transcendentals,
                                      bytes_accessed=bytes_accessed),
    )(*args)
    return out.reshape(B, T, fin, fout)


# --------------------------------------------------------------------------
# Pure-JAX reference (original parameter layout / original op order)
# --------------------------------------------------------------------------
def forward_reference(params, context, x, cfg):
    B, S, fin = x.shape
    T = S + 1
    D = cfg['d_model']; H = cfg['num_heads']; dh = D // H
    fout = cfg['num_features_out']

    def mlp(z, p):
        w1, b1, w2, b2 = p
        h = z @ w1 + b1
        h = jnp.where(h >= 0, h, 0.01 * h)
        return h @ w2 + b2

    def ln(z, w, b):
        mu = z.mean(-1, keepdims=True)
        var = ((z - mu) ** 2).mean(-1, keepdims=True)
        return (z - mu) / jnp.sqrt(var + 1e-5) * w + b

    ctx_e = mlp(context.reshape(B, 1, -1), params['ctx_emb'])         # (B,1,D-1)
    x_e = mlp(x, params['emb'])                                       # (B,S,D-1)
    h = jnp.concatenate([ctx_e, x_e], axis=1)
    pos = jnp.broadcast_to(params['pos'][:, :T, :], (B, T, 1))
    h = jnp.concatenate([h, pos], axis=2)                             # (B,T,D)
    neg = jnp.where(jnp.arange(T)[None, :] > jnp.arange(T)[:, None], -1e30, 0.0)
    for lp in params['layers']:
        q = h @ lp['wq'] + lp['bq']
        k = h @ lp['wk'] + lp['bk']
        v = h @ lp['wv'] + lp['bv']
        qh = q.reshape(B, T, H, dh).transpose(0, 2, 1, 3)
        kh = k.reshape(B, T, H, dh).transpose(0, 2, 1, 3)
        vh = v.reshape(B, T, H, dh).transpose(0, 2, 1, 3)
        s = jnp.einsum('bhtd,bhsd->bhts', qh, kh) / np.sqrt(dh) + neg
        p = jax.nn.softmax(s, axis=-1)
        o = jnp.einsum('bhts,bhsd->bhtd', p, vh).transpose(0, 2, 1, 3).reshape(B, T, D)
        z = ln(h + (o @ lp['wo'] + lp['bo']), lp['ln1w'], lp['ln1b'])
        # cross attention against the all-zero memory -> constant vector
        z = ln(z + (lp['xbv'] @ lp['xwo'] + lp['xbo']), lp['ln2w'], lp['ln2b'])
        # FFN with bf16 weights (matches kernel precision), f32 accumulation
        h1 = jnp.maximum(
            jnp.dot(z.astype(jnp.bfloat16), lp['w1'].astype(jnp.bfloat16),
                    preferred_element_type=jnp.float32) + lp['b1'], 0.0)
        h2 = jnp.dot(h1.astype(jnp.bfloat16), lp['w2'].astype(jnp.bfloat16),
                     preferred_element_type=jnp.float32) + lp['b2']
        h = ln(z + h2, lp['ln3w'], lp['ln3b'])
    logits = h.reshape(B * T, D) @ params['out_w'] + params['out_b']
    return jax.nn.softmax(logits.reshape(B, T, fin, fout), axis=-1)


# --------------------------------------------------------------------------
# Deterministic synthetic parameter init (shapes match the nn.Module)
# --------------------------------------------------------------------------
def init_params(cfg, key):
    D = cfg['d_model']; Dm1 = D - 1
    fin = cfg['num_features_in']; fout = cfg['num_features_out']
    Fff = cfg['dim_feedforward']; nc = cfg['num_condition']
    keys = iter(jax.random.split(key, 1024))

    def w(shape, scale=0.1):
        return (scale * jax.random.normal(next(keys), shape)).astype(jnp.float32)

    params = {
        # Linear weights stored as (in, out) == PyTorch weight.T (synthetic values)
        'ctx_emb': (w((nc, Dm1)), w((1, Dm1)), w((Dm1, Dm1)), w((1, Dm1))),
        'emb': (w((fin, Dm1)), w((1, Dm1)), w((Dm1, Dm1)), w((1, Dm1))),
        'pos': w((1, cfg['max_length'], 1), scale=1.0),
        'out_w': w((D, fin * fout)),
        'out_b': w((1, fin * fout)),
    }
    ones = jnp.ones((1, D), jnp.float32)
    zeros = jnp.zeros((1, D), jnp.float32)
    layers = []
    for _ in range(cfg['num_layers']):
        layers.append(dict(
            wq=w((D, D)), bq=w((1, D)), wk=w((D, D)), bk=w((1, D)),
            wv=w((D, D)), bv=w((1, D)), wo=w((D, D)), bo=w((1, D)),
            xbv=w((1, D)), xwo=w((D, D)), xbo=w((1, D)),   # cross-attn (zero memory)
            ln1w=ones, ln1b=zeros, ln2w=ones, ln2b=zeros, ln3w=ones, ln3b=zeros,
            w1=w((D, Fff)), b1=w((1, Fff)), w2=w((Fff, D)), b2=w((1, D)),
        ))
    params['layers'] = layers
    return params


if __name__ == "__main__":
    cfg = dict(num_condition=3, d_model=32, num_layers=2, num_heads=4,
               max_length=8, num_features_in=2, num_features_out=16,
               dim_feedforward=2048)   # 2048 = nn.TransformerDecoderLayer default

    key = jax.random.PRNGKey(0)
    kp, kc, kx = jax.random.split(key, 3)
    params = init_params(cfg, kp)
    prep = prepare_kernel_params(params, cfg)

    B, S = 2, 5                          # total decoder length T = S + 1 = 6 <= max_length
    context = jax.random.uniform(kc, (B, cfg['num_condition']), dtype=jnp.float32)
    x = jax.random.uniform(kx, (B, S, cfg['num_features_in']), dtype=jnp.float32)

    fwd = jax.jit(lambda p, c, xx: transformer1_forward(p, c, xx, cfg))
    out = jax.block_until_ready(fwd(prep, context, x))

    assert out.shape == (B, S + 1, cfg['num_features_in'], cfg['num_features_out'])
    ref = forward_reference(params, context, x, cfg)
    np.testing.assert_allclose(np.asarray(out), np.asarray(ref), atol=2e-2, rtol=2e-2)
    # probabilities sum to 1 over the last axis (output softmax uses exact divide)
    np.testing.assert_allclose(np.asarray(out).sum(-1), 1.0, atol=1e-4)
    print("KERNEL_OK")
</pallas_src>

<mosaic_0001>
module attributes {stable_mosaic.version = 11 : i64} {
  func.func @transformer1_kernel(%arg0: memref<2x3xf32, #tpu.memory_space<vmem>>, %arg1: memref<12x2xf32, #tpu.memory_space<vmem>>, %arg2: memref<12x1xf32, #tpu.memory_space<vmem>>, %arg3: memref<3x32xf32, #tpu.memory_space<vmem>>, %arg4: memref<2x32xf32, #tpu.memory_space<vmem>>, %arg5: memref<2x32x32xf32, #tpu.memory_space<vmem>>, %arg6: memref<4x32xf32, #tpu.memory_space<vmem>>, %arg7: memref<2x32x96xf32, #tpu.memory_space<vmem>>, %arg8: memref<2x1x96xf32, #tpu.memory_space<vmem>>, %arg9: memref<2x32x32xf32, #tpu.memory_space<vmem>>, %arg10: memref<2x9x32xf32, #tpu.memory_space<vmem>>, %arg11: memref<2x32x2048xbf16, #tpu.memory_space<vmem>>, %arg12: memref<2x1x2048xf32, #tpu.memory_space<vmem>>, %arg13: memref<2x2048x32xbf16, #tpu.memory_space<vmem>>, %arg14: memref<32x32xf32, #tpu.memory_space<vmem>>, %arg15: memref<1x32xf32, #tpu.memory_space<vmem>>, %arg16: memref<12x32xf32, #tpu.memory_space<vmem>>) attributes {dimension_semantics = [], scalar_prefetch = 0 : i64, scratch_operands = 0 : i64, tpu.core_type = #tpu.core_type<tc>} {
    %c0 = arith.constant 0 : index
    %c0_0 = arith.constant 0 : index
    %0 = vector.load %arg6[%c0, %c0_0] : memref<4x32xf32, #tpu.memory_space<vmem>>, vector<4x32xf32>
    %1 = vector.extract_strided_slice %0 {offsets = [0, 0], sizes = [1, 32], strides = [1, 1]} : vector<4x32xf32> to vector<1x32xf32>
    %2 = vector.extract_strided_slice %0 {offsets = [1, 0], sizes = [1, 32], strides = [1, 1]} : vector<4x32xf32> to vector<1x32xf32>
    %3 = vector.extract_strided_slice %0 {offsets = [2, 0], sizes = [1, 32], strides = [1, 1]} : vector<4x32xf32> to vector<1x32xf32>
    %4 = vector.extract_strided_slice %0 {offsets = [3, 0], sizes = [1, 32], strides = [1, 1]} : vector<4x32xf32> to vector<1x32xf32>
    %c0_1 = arith.constant 0 : index
    %c0_2 = arith.constant 0 : index
    %5 = vector.load %arg0[%c0_1, %c0_2] : memref<2x3xf32, #tpu.memory_space<vmem>>, vector<2x3xf32>
    %c0_3 = arith.constant 0 : index
    %c0_4 = arith.constant 0 : index
    %6 = vector.load %arg3[%c0_3, %c0_4] : memref<3x32xf32, #tpu.memory_space<vmem>>, vector<3x32xf32>
    %cst = arith.constant dense<0.000000e+00> : vector<2x32xf32>
    %7 = tpu.matmul %5, %6, %cst {dimension_numbers = #tpu.dot_dimension_numbers<[1], [0], [0], [1], [0, 0, 1, 1], [], []>} : vector<2x3xf32>, vector<3x32xf32>, vector<2x32xf32> -> vector<2x32xf32>
    %8 = vector.broadcast %1 : vector<1x32xf32> to vector<2x32xf32>
    %9 = arith.addf %7, %8 : vector<2x32xf32>
    %cst_5 = arith.constant 0.000000e+00 : f32
    %10 = vector.broadcast %cst_5 : f32 to vector<2x32xf32>
    %11 = arith.cmpf oge, %9, %10 : vector<2x32xf32>
    %cst_6 = arith.constant 0.00999999977 : f32
    %12 = vector.broadcast %cst_6 : f32 to vector<2x32xf32>
    %13 = arith.mulf %12, %9 : vector<2x32xf32>
    %14 = arith.select %11, %9, %13 : vector<2x32xi1>, vector<2x32xf32>
    %c0_7 = arith.constant 0 : index
    %c0_8 = arith.constant 0 : index
    %c0_9 = arith.constant 0 : index
    %15 = vector.load %arg5[%c0_7, %c0_8, %c0_9] : memref<2x32x32xf32, #tpu.memory_space<vmem>>, vector<1x32x32xf32>
    %16 = vector.shape_cast %15 : vector<1x32x32xf32> to vector<32x32xf32>
    %cst_10 = arith.constant dense<0.000000e+00> : vector<2x32xf32>
    %17 = tpu.matmul %14, %16, %cst_10 {dimension_numbers = #tpu.dot_dimension_numbers<[1], [0], [0], [1], [0, 0, 1, 1], [], []>} : vector<2x32xf32>, vector<32x32xf32>, vector<2x32xf32> -> vector<2x32xf32>
    %18 = vector.broadcast %2 : vector<1x32xf32> to vector<2x32xf32>
    %19 = arith.addf %17, %18 : vector<2x32xf32>
    %c0_11 = arith.constant 0 : index
    %c0_12 = arith.constant 0 : index
    %20 = vector.load %arg1[%c0_11, %c0_12] : memref<12x2xf32, #tpu.memory_space<vmem>>, vector<12x2xf32>
    %c0_13 = arith.constant 0 : index
    %c0_14 = arith.constant 0 : index
    %21 = vector.load %arg4[%c0_13, %c0_14] : memref<2x32xf32, #tpu.memory_space<vmem>>, vector<2x32xf32>
    %cst_15 = arith.constant dense<0.000000e+00> : vector<12x32xf32>
    %22 = tpu.matmul %20, %21, %cst_15 {dimension_numbers = #tpu.dot_dimension_numbers<[1], [0], [0], [1], [0, 0, 1, 1], [], []>} : vector<12x2xf32>, vector<2x32xf32>, vector<12x32xf32> -> vector<12x32xf32>
    %23 = vector.broadcast %3 : vector<1x32xf32> to vector<12x32xf32>
    %24 = arith.addf %22, %23 : vector<12x32xf32>
    %cst_16 = arith.constant 0.000000e+00 : f32
    %25 = vector.broadcast %cst_16 : f32 to vector<12x32xf32>
    %26 = arith.cmpf oge, %24, %25 : vector<12x32xf32>
    %cst_17 = arith.constant 0.00999999977 : f32
    %27 = vector.broadcast %cst_17 : f32 to vector<12x32xf32>
    %28 = arith.mulf %27, %24 : vector<12x32xf32>
    %29 = arith.select %26, %24, %28 : vector<12x32xi1>, vector<12x32xf32>
    %c1 = arith.constant 1 : index
    %c0_18 = arith.constant 0 : index
    %c0_19 = arith.constant 0 : index
    %30 = vector.load %arg5[%c1, %c0_18, %c0_19] : memref<2x32x32xf32, #tpu.memory_space<vmem>>, vector<1x32x32xf32>
    %31 = vector.shape_cast %30 : vector<1x32x32xf32> to vector<32x32xf32>
    %cst_20 = arith.constant dense<0.000000e+00> : vector<12x32xf32>
    %32 = tpu.matmul %29, %31, %cst_20 {dimension_numbers = #tpu.dot_dimension_numbers<[1], [0], [0], [1], [0, 0, 1, 1], [], []>} : vector<12x32xf32>, vector<32x32xf32>, vector<12x32xf32> -> vector<12x32xf32>
    %33 = vector.broadcast %4 : vector<1x32xf32> to vector<12x32xf32>
    %34 = arith.addf %32, %33 : vector<12x32xf32>
    %35 = tpu.iota {dimensions = array<i32: 0>} : vector<12x2xi32>
    %36 = tpu.iota {dimensions = array<i32: 1>} : vector<12x2xi32>
    %c6_i32 = arith.constant 6 : i32
    %37 = vector.broadcast %c6_i32 : i32 to vector<12x2xi32>
    %38 = arith.muli %36, %37 : vector<12x2xi32>
    %39 = arith.subi %35, %38 : vector<12x2xi32>
    %c0_i32 = arith.constant 0 : i32
    %40 = vector.broadcast %c0_i32 : i32 to vector<12x2xi32>
    %41 = arith.cmpi sge, %39, %40 : vector<12x2xi32>
    %c6_i32_21 = arith.constant 6 : i32
    %42 = vector.broadcast %c6_i32_21 : i32 to vector<12x2xi32>
    %43 = arith.cmpi slt, %39, %42 : vector<12x2xi32>
    %44 = arith.andi %41, %43 : vector<12x2xi1>
    %45 = arith.extui %44 : vector<12x2xi1> to vector<12x2xi32>
    %46 = arith.sitofp %45 : vector<12x2xi32> to vector<12x2xf32>
    %c0_i32_22 = arith.constant 0 : i32
    %47 = vector.broadcast %c0_i32_22 : i32 to vector<12x2xi32>
    %48 = arith.cmpi eq, %39, %47 : vector<12x2xi32>
    %49 = arith.extui %48 : vector<12x2xi1> to vector<12x2xi32>
    %50 = arith.sitofp %49 : vector<12x2xi32> to vector<12x2xf32>
    %cst_23 = arith.constant dense<0.000000e+00> : vector<12xf32>
    %51 = vector.multi_reduction <add>, %50, %cst_23 [1] : vector<12x2xf32> to vector<12xf32>
    %52 = vector.shape_cast %51 : vector<12xf32> to vector<12x1xf32>
    %cst_24 = arith.constant 5.000000e-01 : f32
    %53 = vector.broadcast %cst_24 : f32 to vector<12x1xf32>
    %54 = arith.cmpf ogt, %52, %53 : vector<12x1xf32>
    %cst_25 = arith.constant dense<0.000000e+00> : vector<12x32xf32>
    %55 = tpu.matmul %50, %19, %cst_25 {dimension_numbers = #tpu.dot_dimension_numbers<[1], [0], [0], [1], [0, 0, 1, 1], [], []>} : vector<12x2xf32>, vector<2x32xf32>, vector<12x32xf32> -> vector<12x32xf32>
    %56 = tpu.iota {dimensions = array<i32: 1>} : vector<12x32xi32>
    %57 = vector.shape_cast %54 : vector<12x1xi1> to vector<12x1xi1>
    %58 = vector.broadcast %57 : vector<12x1xi1> to vector<12x32xi1>
    %59 = arith.select %58, %55, %34 : vector<12x32xi1>, vector<12x32xf32>
    %c31_i32 = arith.constant 31 : i32
    %60 = vector.broadcast %c31_i32 : i32 to vector<12x32xi32>
    %61 = arith.cmpi eq, %56, %60 : vector<12x32xi32>
    %c0_26 = arith.constant 0 : index
    %c0_27 = arith.constant 0 : index
    %62 = vector.load %arg2[%c0_26, %c0_27] : memref<12x1xf32, #tpu.memory_space<vmem>>, vector<12x1xf32>
    %63 = vector.shape_cast %62 : vector<12x1xf32> to vector<12x1xf32>
    %64 = vector.broadcast %63 : vector<12x1xf32> to vector<12x32xf32>
    %65 = arith.select %61, %64, %59 : vector<12x32xi1>, vector<12x32xf32>
    %cst_28 = arith.constant dense<0.000000e+00> : vector<12x12xf32>
    %66 = tpu.matmul %46, %46, %cst_28 {dimension_numbers = #tpu.dot_dimension_numbers<[1], [1], [0], [0], [0, 0, 1, 0], [], []>} : vector<12x2xf32>, vector<12x2xf32>, vector<12x12xf32> -> vector<12x12xf32>
    %cst_29 = arith.constant 5.000000e-01 : f32
    %67 = vector.broadcast %cst_29 : f32 to vector<12x12xf32>
    %68 = arith.cmpf ogt, %66, %67 : vector<12x12xf32>
    %69 = tpu.iota {dimensions = array<i32: 0>} : vector<12x12xi32>
    %70 = tpu.iota {dimensions = array<i32: 1>} : vector<12x12xi32>
    %71 = arith.cmpi sle, %70, %69 : vector<12x12xi32>
    %72 = arith.andi %68, %71 : vector<12x12xi1>
    %cst_30 = arith.constant 0.000000e+00 : f32
    %cst_31 = arith.constant -1.000000e+30 : f32
    %73 = vector.broadcast %cst_30 : f32 to vector<12x12xf32>
    %74 = vector.broadcast %cst_31 : f32 to vector<12x12xf32>
    %75 = arith.select %72, %73, %74 : vector<12x12xi1>, vector<12x12xf32>
    %76 = tpu.iota {dimensions = array<i32: 1>} : vector<1x32xi32>
    %c0_32 = arith.constant 0 : index
    %c0_33 = arith.constant 0 : index
    %c0_34 = arith.constant 0 : index
    %77 = vector.load %arg10[%c0_32, %c0_33, %c0_34] : memref<2x9x32xf32, #tpu.memory_space<vmem>>, vector<1x9x32xf32>
    %78 = vector.shape_cast %77 : vector<1x9x32xf32> to vector<9x32xf32>
    %79 = vector.extract_strided_slice %78 {offsets = [0, 0], sizes = [1, 32], strides = [1, 1]} : vector<9x32xf32> to vector<1x32xf32>
    %80 = vector.extract_strided_slice %78 {offsets = [1, 0], sizes = [1, 32], strides = [1, 1]} : vector<9x32xf32> to vector<1x32xf32>
    %81 = vector.extract_strided_slice %78 {offsets = [2, 0], sizes = [1, 32], strides = [1, 1]} : vector<9x32xf32> to vector<1x32xf32>
    %82 = vector.extract_strided_slice %78 {offsets = [3, 0], sizes = [1, 32], strides = [1, 1]} : vector<9x32xf32> to vector<1x32xf32>
    %83 = vector.extract_strided_slice %78 {offsets = [4, 0], sizes = [1, 32], strides = [1, 1]} : vector<9x32xf32> to vector<1x32xf32>
    %84 = vector.extract_strided_slice %78 {offsets = [5, 0], sizes = [1, 32], strides = [1, 1]} : vector<9x32xf32> to vector<1x32xf32>
    %85 = vector.extract_strided_slice %78 {offsets = [6, 0], sizes = [1, 32], strides = [1, 1]} : vector<9x32xf32> to vector<1x32xf32>
    %86 = vector.extract_strided_slice %78 {offsets = [7, 0], sizes = [1, 32], strides = [1, 1]} : vector<9x32xf32> to vector<1x32xf32>
    %87 = vector.extract_strided_slice %78 {offsets = [8, 0], sizes = [1, 32], strides = [1, 1]} : vector<9x32xf32> to vector<1x32xf32>
    %c0_35 = arith.constant 0 : index
    %c0_36 = arith.constant 0 : index
    %c0_37 = arith.constant 0 : index
    %88 = vector.load %arg7[%c0_35, %c0_36, %c0_37] : memref<2x32x96xf32, #tpu.memory_space<vmem>>, vector<1x32x96xf32>
    %89 = vector.shape_cast %88 : vector<1x32x96xf32> to vector<32x96xf32>
    %cst_38 = arith.constant dense<0.000000e+00> : vector<12x96xf32>
    %90 = tpu.matmul %65, %89, %cst_38 {dimension_numbers = #tpu.dot_dimension_numbers<[1], [0], [0], [1], [0, 0, 1, 1], [], []>} : vector<12x32xf32>, vector<32x96xf32>, vector<12x96xf32> -> vector<12x96xf32>
    %c0_39 = arith.constant 0 : index
    %c0_40 = arith.constant 0 : index
    %c0_41 = arith.constant 0 : index
    %91 = vector.load %arg8[%c0_39, %c0_40, %c0_41] : memref<2x1x96xf32, #tpu.memory_space<vmem>>, vector<1x1x96xf32>
    %92 = vector.shape_cast %91 : vector<1x1x96xf32> to vector<1x96xf32>
    %93 = vector.broadcast %92 : vector<1x96xf32> to vector<12x96xf32>
    %94 = arith.addf %90, %93 : vector<12x96xf32>
    %95 = vector.extract_strided_slice %94 {offsets = [0, 0], sizes = [12, 32], strides = [1, 1]} : vector<12x96xf32> to vector<12x32xf32>
    %96 = vector.extract_strided_slice %94 {offsets = [0, 32], sizes = [12, 32], strides = [1, 1]} : vector<12x96xf32> to vector<12x32xf32>
    %97 = vector.extract_strided_slice %94 {offsets = [0, 64], sizes = [12, 32], strides = [1, 1]} : vector<12x96xf32> to vector<12x32xf32>
    %c0_i32_42 = arith.constant 0 : i32
    %98 = vector.broadcast %c0_i32_42 : i32 to vector<1x32xi32>
    %99 = arith.cmpi sge, %76, %98 : vector<1x32xi32>
    %c8_i32 = arith.constant 8 : i32
    %100 = vector.broadcast %c8_i32 : i32 to vector<1x32xi32>
    %101 = arith.cmpi slt, %76, %100 : vector<1x32xi32>
    %102 = arith.andi %99, %101 : vector<1x32xi1>
    %cst_43 = arith.constant 0.353553385 : f32
    %cst_44 = arith.constant 0.000000e+00 : f32
    %103 = vector.broadcast %cst_43 : f32 to vector<1x32xf32>
    %104 = vector.broadcast %cst_44 : f32 to vector<1x32xf32>
    %105 = arith.select %102, %103, %104 : vector<1x32xi1>, vector<1x32xf32>
    %106 = vector.broadcast %105 : vector<1x32xf32> to vector<12x32xf32>
    %107 = arith.mulf %96, %106 : vector<12x32xf32>
    %cst_45 = arith.constant 1.000000e+00 : f32
    %cst_46 = arith.constant 0.000000e+00 : f32
    %108 = vector.broadcast %cst_45 : f32 to vector<1x32xf32>
    %109 = vector.broadcast %cst_46 : f32 to vector<1x32xf32>
    %110 = arith.select %102, %108, %109 : vector<1x32xi1>, vector<1x32xf32>
    %111 = vector.broadcast %110 : vector<1x32xf32> to vector<12x32xf32>
    %112 = arith.mulf %97, %111 : vector<12x32xf32>
    %cst_47 = arith.constant dense<0.000000e+00> : vector<12x12xf32>
    %113 = tpu.matmul %95, %107, %cst_47 {dimension_numbers = #tpu.dot_dimension_numbers<[1], [1], [0], [0], [0, 0, 1, 0], [], []>} : vector<12x32xf32>, vector<12x32xf32>, vector<12x12xf32> -> vector<12x12xf32>
    %114 = arith.addf %113, %75 : vector<12x12xf32>
    %cst_48 = arith.constant dense<0xFF800000> : vector<12xf32>
    %115 = vector.multi_reduction <maximumf>, %114, %cst_48 [1] : vector<12x12xf32> to vector<12xf32>
    %116 = vector.shape_cast %115 : vector<12xf32> to vector<12x1xf32>
    %117 = vector.broadcast %116 : vector<12x1xf32> to vector<12x12xf32>
    %118 = arith.subf %114, %117 : vector<12x12xf32>
    %119 = math.exp %118 : vector<12x12xf32>
    %cst_49 = arith.constant dense<0.000000e+00> : vector<12xf32>
    %120 = vector.multi_reduction <add>, %119, %cst_49 [1] : vector<12x12xf32> to vector<12xf32>
    %121 = vector.shape_cast %120 : vector<12xf32> to vector<12x1xf32>
    %122 = tpu.reciprocal %121 {approx = true} : vector<12x1xf32> -> vector<12x1xf32>
    %123 = vector.broadcast %122 : vector<12x1xf32> to vector<12x12xf32>
    %124 = arith.mulf %119, %123 : vector<12x12xf32>
    %cst_50 = arith.constant dense<0.000000e+00> : vector<12x32xf32>
    %125 = tpu.matmul %124, %112, %cst_50 {dimension_numbers = #tpu.dot_dimension_numbers<[1], [0], [0], [1], [0, 0, 1, 1], [], []>} : vector<12x12xf32>, vector<12x32xf32>, vector<12x32xf32> -> vector<12x32xf32>
    %c8_i32_51 = arith.constant 8 : i32
    %126 = vector.broadcast %c8_i32_51 : i32 to vector<1x32xi32>
    %127 = arith.cmpi sge, %76, %126 : vector<1x32xi32>
    %c16_i32 = arith.constant 16 : i32
    %128 = vector.broadcast %c16_i32 : i32 to vector<1x32xi32>
    %129 = arith.cmpi slt, %76, %128 : vector<1x32xi32>
    %130 = arith.andi %127, %129 : vector<1x32xi1>
    %cst_52 = arith.constant 0.353553385 : f32
    %cst_53 = arith.constant 0.000000e+00 : f32
    %131 = vector.broadcast %cst_52 : f32 to vector<1x32xf32>
    %132 = vector.broadcast %cst_53 : f32 to vector<1x32xf32>
    %133 = arith.select %130, %131, %132 : vector<1x32xi1>, vector<1x32xf32>
    %134 = vector.broadcast %133 : vector<1x32xf32> to vector<12x32xf32>
    %135 = arith.mulf %96, %134 : vector<12x32xf32>
    %cst_54 = arith.constant 1.000000e+00 : f32
    %cst_55 = arith.constant 0.000000e+00 : f32
    %136 = vector.broadcast %cst_54 : f32 to vector<1x32xf32>
    %137 = vector.broadcast %cst_55 : f32 to vector<1x32xf32>
    %138 = arith.select %130, %136, %137 : vector<1x32xi1>, vector<1x32xf32>
    %139 = vector.broadcast %138 : vector<1x32xf32> to vector<12x32xf32>
    %140 = arith.mulf %97, %139 : vector<12x32xf32>
    %cst_56 = arith.constant dense<0.000000e+00> : vector<12x12xf32>
    %141 = tpu.matmul %95, %135, %cst_56 {dimension_numbers = #tpu.dot_dimension_numbers<[1], [1], [0], [0], [0, 0, 1, 0], [], []>} : vector<12x32xf32>, vector<12x32xf32>, vector<12x12xf32> -> vector<12x12xf32>
    %142 = arith.addf %141, %75 : vector<12x12xf32>
    %cst_57 = arith.constant dense<0xFF800000> : vector<12xf32>
    %143 = vector.multi_reduction <maximumf>, %142, %cst_57 [1] : vector<12x12xf32> to vector<12xf32>
    %144 = vector.shape_cast %143 : vector<12xf32> to vector<12x1xf32>
    %145 = vector.broadcast %144 : vector<12x1xf32> to vector<12x12xf32>
    %146 = arith.subf %142, %145 : vector<12x12xf32>
    %147 = math.exp %146 : vector<12x12xf32>
    %cst_58 = arith.constant dense<0.000000e+00> : vector<12xf32>
    %148 = vector.multi_reduction <add>, %147, %cst_58 [1] : vector<12x12xf32> to vector<12xf32>
    %149 = vector.shape_cast %148 : vector<12xf32> to vector<12x1xf32>
    %150 = tpu.reciprocal %149 {approx = true} : vector<12x1xf32> -> vector<12x1xf32>
    %151 = vector.broadcast %150 : vector<12x1xf32> to vector<12x12xf32>
    %152 = arith.mulf %147, %151 : vector<12x12xf32>
    %cst_59 = arith.constant dense<0.000000e+00> : vector<12x32xf32>
    %153 = tpu.matmul %152, %140, %cst_59 {dimension_numbers = #tpu.dot_dimension_numbers<[1], [0], [0], [1], [0, 0, 1, 1], [], []>} : vector<12x12xf32>, vector<12x32xf32>, vector<12x32xf32> -> vector<12x32xf32>
    %154 = arith.addf %125, %153 : vector<12x32xf32>
    %c16_i32_60 = arith.constant 16 : i32
    %155 = vector.broadcast %c16_i32_60 : i32 to vector<1x32xi32>
    %156 = arith.cmpi sge, %76, %155 : vector<1x32xi32>
    %c24_i32 = arith.constant 24 : i32
    %157 = vector.broadcast %c24_i32 : i32 to vector<1x32xi32>
    %158 = arith.cmpi slt, %76, %157 : vector<1x32xi32>
    %159 = arith.andi %156, %158 : vector<1x32xi1>
    %cst_61 = arith.constant 0.353553385 : f32
    %cst_62 = arith.constant 0.000000e+00 : f32
    %160 = vector.broadcast %cst_61 : f32 to vector<1x32xf32>
    %161 = vector.broadcast %cst_62 : f32 to vector<1x32xf32>
    %162 = arith.select %159, %160, %161 : vector<1x32xi1>, vector<1x32xf32>
    %163 = vector.broadcast %162 : vector<1x32xf32> to vector<12x32xf32>
    %164 = arith.mulf %96, %163 : vector<12x32xf32>
    %cst_63 = arith.constant 1.000000e+00 : f32
    %cst_64 = arith.constant 0.000000e+00 : f32
    %165 = vector.broadcast %cst_63 : f32 to vector<1x32xf32>
    %166 = vector.broadcast %cst_64 : f32 to vector<1x32xf32>
    %167 = arith.select %159, %165, %166 : vector<1x32xi1>, vector<1x32xf32>
    %168 = vector.broadcast %167 : vector<1x32xf32> to vector<12x32xf32>
    %169 = arith.mulf %97, %168 : vector<12x32xf32>
    %cst_65 = arith.constant dense<0.000000e+00> : vector<12x12xf32>
    %170 = tpu.matmul %95, %164, %cst_65 {dimension_numbers = #tpu.dot_dimension_numbers<[1], [1], [0], [0], [0, 0, 1, 0], [], []>} : vector<12x32xf32>, vector<12x32xf32>, vector<12x12xf32> -> vector<12x12xf32>
    %171 = arith.addf %170, %75 : vector<12x12xf32>
    %cst_66 = arith.constant dense<0xFF800000> : vector<12xf32>
    %172 = vector.multi_reduction <maximumf>, %171, %cst_66 [1] : vector<12x12xf32> to vector<12xf32>
    %173 = vector.shape_cast %172 : vector<12xf32> to vector<12x1xf32>
    %174 = vector.broadcast %173 : vector<12x1xf32> to vector<12x12xf32>
    %175 = arith.subf %171, %174 : vector<12x12xf32>
    %176 = math.exp %175 : vector<12x12xf32>
    %cst_67 = arith.constant dense<0.000000e+00> : vector<12xf32>
    %177 = vector.multi_reduction <add>, %176, %cst_67 [1] : vector<12x12xf32> to vector<12xf32>
    %178 = vector.shape_cast %177 : vector<12xf32> to vector<12x1xf32>
    %179 = tpu.reciprocal %178 {approx = true} : vector<12x1xf32> -> vector<12x1xf32>
    %180 = vector.broadcast %179 : vector<12x1xf32> to vector<12x12xf32>
    %181 = arith.mulf %176, %180 : vector<12x12xf32>
    %cst_68 = arith.constant dense<0.000000e+00> : vector<12x32xf32>
    %182 = tpu.matmul %181, %169, %cst_68 {dimension_numbers = #tpu.dot_dimension_numbers<[1], [0], [0], [1], [0, 0, 1, 1], [], []>} : vector<12x12xf32>, vector<12x32xf32>, vector<12x32xf32> -> vector<12x32xf32>
    %183 = arith.addf %154, %182 : vector<12x32xf32>
    %c24_i32_69 = arith.constant 24 : i32
    %184 = vector.broadcast %c24_i32_69 : i32 to vector<1x32xi32>
    %185 = arith.cmpi sge, %76, %184 : vector<1x32xi32>
    %c32_i32 = arith.constant 32 : i32
    %186 = vector.broadcast %c32_i32 : i32 to vector<1x32xi32>
    %187 = arith.cmpi slt, %76, %186 : vector<1x32xi32>
    %188 = arith.andi %185, %187 : vector<1x32xi1>
    %cst_70 = arith.constant 0.353553385 : f32
    %cst_71 = arith.constant 0.000000e+00 : f32
    %189 = vector.broadcast %cst_70 : f32 to vector<1x32xf32>
    %190 = vector.broadcast %cst_71 : f32 to vector<1x32xf32>
    %191 = arith.select %188, %189, %190 : vector<1x32xi1>, vector<1x32xf32>
    %192 = vector.broadcast %191 : vector<1x32xf32> to vector<12x32xf32>
    %193 = arith.mulf %96, %192 : vector<12x32xf32>
    %cst_72 = arith.constant 1.000000e+00 : f32
    %cst_73 = arith.constant 0.000000e+00 : f32
    %194 = vector.broadcast %cst_72 : f32 to vector<1x32xf32>
    %195 = vector.broadcast %cst_73 : f32 to vector<1x32xf32>
    %196 = arith.select %188, %194, %195 : vector<1x32xi1>, vector<1x32xf32>
    %197 = vector.broadcast %196 : vector<1x32xf32> to vector<12x32xf32>
    %198 = arith.mulf %97, %197 : vector<12x32xf32>
    %cst_74 = arith.constant dense<0.000000e+00> : vector<12x12xf32>
    %199 = tpu.matmul %95, %193, %cst_74 {dimension_numbers = #tpu.dot_dimension_numbers<[1], [1], [0], [0], [0, 0, 1, 0], [], []>} : vector<12x32xf32>, vector<12x32xf32>, vector<12x12xf32> -> vector<12x12xf32>
    %200 = arith.addf %199, %75 : vector<12x12xf32>
    %cst_75 = arith.constant dense<0xFF800000> : vector<12xf32>
    %201 = vector.multi_reduction <maximumf>, %200, %cst_75 [1] : vector<12x12xf32> to vector<12xf32>
    %202 = vector.shape_cast %201 : vector<12xf32> to vector<12x1xf32>
    %203 = vector.broadcast %202 : vector<12x1xf32> to vector<12x12xf32>
    %204 = arith.subf %200, %203 : vector<12x12xf32>
    %205 = math.exp %204 : vector<12x12xf32>
    %cst_76 = arith.constant dense<0.000000e+00> : vector<12xf32>
    %206 = vector.multi_reduction <add>, %205, %cst_76 [1] : vector<12x12xf32> to vector<12xf32>
    %207 = vector.shape_cast %206 : vector<12xf32> to vector<12x1xf32>
    %208 = tpu.reciprocal %207 {approx = true} : vector<12x1xf32> -> vector<12x1xf32>
    %209 = vector.broadcast %208 : vector<12x1xf32> to vector<12x12xf32>
    %210 = arith.mulf %205, %209 : vector<12x12xf32>
    %cst_77 = arith.constant dense<0.000000e+00> : vector<12x32xf32>
    %211 = tpu.matmul %210, %198, %cst_77 {dimension_numbers = #tpu.dot_dimension_numbers<[1], [0], [0], [1], [0, 0, 1, 1], [], []>} : vector<12x12xf32>, vector<12x32xf32>, vector<12x32xf32> -> vector<12x32xf32>
    %212 = arith.addf %183, %211 : vector<12x32xf32>
    %c0_78 = arith.constant 0 : index
    %c0_79 = arith.constant 0 : index
    %c0_80 = arith.constant 0 : index
    %213 = vector.load %arg9[%c0_78, %c0_79, %c0_80] : memref<2x32x32xf32, #tpu.memory_space<vmem>>, vector<1x32x32xf32>
    %214 = vector.shape_cast %213 : vector<1x32x32xf32> to vector<32x32xf32>
    %cst_81 = arith.constant dense<0.000000e+00> : vector<12x32xf32>
    %215 = tpu.matmul %212, %214, %cst_81 {dimension_numbers = #tpu.dot_dimension_numbers<[1], [0], [0], [1], [0, 0, 1, 1], [], []>} : vector<12x32xf32>, vector<32x32xf32>, vector<12x32xf32> -> vector<12x32xf32>
    %216 = vector.broadcast %79 : vector<1x32xf32> to vector<12x32xf32>
    %217 = arith.addf %215, %216 : vector<12x32xf32>
    %218 = arith.addf %65, %217 : vector<12x32xf32>
    %cst_82 = arith.constant dense<0.000000e+00> : vector<12xf32>
    %219 = vector.multi_reduction <add>, %218, %cst_82 [1] : vector<12x32xf32> to vector<12xf32>
    %220 = vector.shape_cast %219 : vector<12xf32> to vector<12x1xf32>
    %cst_83 = arith.constant 3.200000e+01 : f32
    %221 = vector.broadcast %cst_83 : f32 to vector<12x1xf32>
    %222 = arith.divf %220, %221 : vector<12x1xf32>
    %223 = vector.broadcast %222 : vector<12x1xf32> to vector<12x32xf32>
    %224 = arith.subf %218, %223 : vector<12x32xf32>
    %225 = arith.mulf %224, %224 : vector<12x32xf32>
    %cst_84 = arith.constant dense<0.000000e+00> : vector<12xf32>
    %226 = vector.multi_reduction <add>, %225, %cst_84 [1] : vector<12x32xf32> to vector<12xf32>
    %227 = vector.shape_cast %226 : vector<12xf32> to vector<12x1xf32>
    %cst_85 = arith.constant 3.200000e+01 : f32
    %228 = vector.broadcast %cst_85 : f32 to vector<12x1xf32>
    %229 = arith.divf %227, %228 : vector<12x1xf32>
    %230 = vector.broadcast %222 : vector<12x1xf32> to vector<12x32xf32>
    %231 = arith.subf %218, %230 : vector<12x32xf32>
    %cst_86 = arith.constant 9.99999974E-6 : f32
    %232 = vector.broadcast %cst_86 : f32 to vector<12x1xf32>
    %233 = arith.addf %229, %232 : vector<12x1xf32>
    %234 = math.rsqrt %233 : vector<12x1xf32>
    %235 = vector.broadcast %234 : vector<12x1xf32> to vector<12x32xf32>
    %236 = arith.mulf %231, %235 : vector<12x32xf32>
    %237 = vector.broadcast %81 : vector<1x32xf32> to vector<12x32xf32>
    %238 = arith.mulf %236, %237 : vector<12x32xf32>
    %239 = vector.broadcast %82 : vector<1x32xf32> to vector<12x32xf32>
    %240 = arith.addf %238, %239 : vector<12x32xf32>
    %241 = vector.broadcast %80 : vector<1x32xf32> to vector<12x32xf32>
    %242 = arith.addf %240, %241 : vector<12x32xf32>
    %cst_87 = arith.constant dense<0.000000e+00> : vector<12xf32>
    %243 = vector.multi_reduction <add>, %242, %cst_87 [1] : vector<12x32xf32> to vector<12xf32>
    %244 = vector.shape_cast %243 : vector<12xf32> to vector<12x1xf32>
    %cst_88 = arith.constant 3.200000e+01 : f32
    %245 = vector.broadcast %cst_88 : f32 to vector<12x1xf32>
    %246 = arith.divf %244, %245 : vector<12x1xf32>
    %247 = vector.broadcast %246 : vector<12x1xf32> to vector<12x32xf32>
    %248 = arith.subf %242, %247 : vector<12x32xf32>
    %249 = arith.mulf %248, %248 : vector<12x32xf32>
    %cst_89 = arith.constant dense<0.000000e+00> : vector<12xf32>
    %250 = vector.multi_reduction <add>, %249, %cst_89 [1] : vector<12x32xf32> to vector<12xf32>
    %251 = vector.shape_cast %250 : vector<12xf32> to vector<12x1xf32>
    %cst_90 = arith.constant 3.200000e+01 : f32
    %252 = vector.broadcast %cst_90 : f32 to vector<12x1xf32>
    %253 = arith.divf %251, %252 : vector<12x1xf32>
    %254 = vector.broadcast %246 : vector<12x1xf32> to vector<12x32xf32>
    %255 = arith.subf %242, %254 : vector<12x32xf32>
    %cst_91 = arith.constant 9.99999974E-6 : f32
    %256 = vector.broadcast %cst_91 : f32 to vector<12x1xf32>
    %257 = arith.addf %253, %256 : vector<12x1xf32>
    %258 = math.rsqrt %257 : vector<12x1xf32>
    %259 = vector.broadcast %258 : vector<12x1xf32> to vector<12x32xf32>
    %260 = arith.mulf %255, %259 : vector<12x32xf32>
    %261 = vector.broadcast %83 : vector<1x32xf32> to vector<12x32xf32>
    %262 = arith.mulf %260, %261 : vector<12x32xf32>
    %263 = vector.broadcast %84 : vector<1x32xf32> to vector<12x32xf32>
    %264 = arith.addf %262, %263 : vector<12x32xf32>
    %265 = arith.truncf %264 : vector<12x32xf32> to vector<12x32xbf16>
    %c0_92 = arith.constant 0 : index
    %c0_93 = arith.constant 0 : index
    %c0_94 = arith.constant 0 : index
    %266 = vector.load %arg11[%c0_92, %c0_93, %c0_94] : memref<2x32x2048xbf16, #tpu.memory_space<vmem>>, vector<1x32x2048xbf16>
    %267 = vector.shape_cast %266 : vector<1x32x2048xbf16> to vector<32x2048xbf16>
    %cst_95 = arith.constant dense<0.000000e+00> : vector<12x2048xf32>
    %268 = tpu.matmul %265, %267, %cst_95 {dimension_numbers = #tpu.dot_dimension_numbers<[1], [0], [0], [1], [0, 0, 1, 1], [], []>} : vector<12x32xbf16>, vector<32x2048xbf16>, vector<12x2048xf32> -> vector<12x2048xf32>
    %c0_96 = arith.constant 0 : index
    %c0_97 = arith.constant 0 : index
    %c0_98 = arith.constant 0 : index
    %269 = vector.load %arg12[%c0_96, %c0_97, %c0_98] : memref<2x1x2048xf32, #tpu.memory_space<vmem>>, vector<1x1x2048xf32>
    %270 = vector.shape_cast %269 : vector<1x1x2048xf32> to vector<1x2048xf32>
    %271 = vector.broadcast %270 : vector<1x2048xf32> to vector<12x2048xf32>
    %272 = arith.addf %268, %271 : vector<12x2048xf32>
    %cst_99 = arith.constant 0.000000e+00 : f32
    %273 = vector.broadcast %cst_99 : f32 to vector<12x2048xf32>
    %274 = arith.maximumf %272, %273 : vector<12x2048xf32>
    %275 = arith.truncf %274 : vector<12x2048xf32> to vector<12x2048xbf16>
    %c0_100 = arith.constant 0 : index
    %c0_101 = arith.constant 0 : index
    %c0_102 = arith.constant 0 : index
    %276 = vector.load %arg13[%c0_100, %c0_101, %c0_102] : memref<2x2048x32xbf16, #tpu.memory_space<vmem>>, vector<1x2048x32xbf16>
    %277 = vector.shape_cast %276 : vector<1x2048x32xbf16> to vector<2048x32xbf16>
    %cst_103 = arith.constant dense<0.000000e+00> : vector<12x32xf32>
    %278 = tpu.matmul %275, %277, %cst_103 {dimension_numbers = #tpu.dot_dimension_numbers<[1], [0], [0], [1], [0, 0, 1, 1], [], []>} : vector<12x2048xbf16>, vector<2048x32xbf16>, vector<12x32xf32> -> vector<12x32xf32>
    %279 = vector.broadcast %87 : vector<1x32xf32> to vector<12x32xf32>
    %280 = arith.addf %278, %279 : vector<12x32xf32>
    %281 = arith.addf %264, %280 : vector<12x32xf32>
    %cst_104 = arith.constant dense<0.000000e+00> : vector<12xf32>
    %282 = vector.multi_reduction <add>, %281, %cst_104 [1] : vector<12x32xf32> to vector<12xf32>
    %283 = vector.shape_cast %282 : vector<12xf32> to vector<12x1xf32>
    %cst_105 = arith.constant 3.200000e+01 : f32
    %284 = vector.broadcast %cst_105 : f32 to vector<12x1xf32>
    %285 = arith.divf %283, %284 : vector<12x1xf32>
    %286 = vector.broadcast %285 : vector<12x1xf32> to vector<12x32xf32>
    %287 = arith.subf %281, %286 : vector<12x32xf32>
    %288 = arith.mulf %287, %287 : vector<12x32xf32>
    %cst_106 = arith.constant dense<0.000000e+00> : vector<12xf32>
    %289 = vector.multi_reduction <add>, %288, %cst_106 [1] : vector<12x32xf32> to vector<12xf32>
    %290 = vector.shape_cast %289 : vector<12xf32> to vector<12x1xf32>
    %cst_107 = arith.constant 3.200000e+01 : f32
    %291 = vector.broadcast %cst_107 : f32 to vector<12x1xf32>
    %292 = arith.divf %290, %291 : vector<12x1xf32>
    %293 = vector.broadcast %285 : vector<12x1xf32> to vector<12x32xf32>
    %294 = arith.subf %281, %293 : vector<12x32xf32>
    %cst_108 = arith.constant 9.99999974E-6 : f32
    %295 = vector.broadcast %cst_108 : f32 to vector<12x1xf32>
    %296 = arith.addf %292, %295 : vector<12x1xf32>
    %297 = math.rsqrt %296 : vector<12x1xf32>
    %298 = vector.broadcast %297 : vector<12x1xf32> to vector<12x32xf32>
    %299 = arith.mulf %294, %298 : vector<12x32xf32>
    %300 = vector.broadcast %85 : vector<1x32xf32> to vector<12x32xf32>
    %301 = arith.mulf %299, %300 : vector<12x32xf32>
    %302 = vector.broadcast %86 : vector<1x32xf32> to vector<12x32xf32>
    %303 = arith.addf %301, %302 : vector<12x32xf32>
    %c1_109 = arith.constant 1 : index
    %c0_110 = arith.constant 0 : index
    %c0_111 = arith.constant 0 : index
    %304 = vector.load %arg10[%c1_109, %c0_110, %c0_111] : memref<2x9x32xf32, #tpu.memory_space<vmem>>, vector<1x9x32xf32>
    %305 = vector.shape_cast %304 : vector<1x9x32xf32> to vector<9x32xf32>
    %306 = vector.extract_strided_slice %305 {offsets = [0, 0], sizes = [1, 32], strides = [1, 1]} : vector<9x32xf32> to vector<1x32xf32>
    %307 = vector.extract_strided_slice %305 {offsets = [1, 0], sizes = [1, 32], strides = [1, 1]} : vector<9x32xf32> to vector<1x32xf32>
    %308 = vector.extract_strided_slice %305 {offsets = [2, 0], sizes = [1, 32], strides = [1, 1]} : vector<9x32xf32> to vector<1x32xf32>
    %309 = vector.extract_strided_slice %305 {offsets = [3, 0], sizes = [1, 32], strides = [1, 1]} : vector<9x32xf32> to vector<1x32xf32>
    %310 = vector.extract_strided_slice %305 {offsets = [4, 0], sizes = [1, 32], strides = [1, 1]} : vector<9x32xf32> to vector<1x32xf32>
    %311 = vector.extract_strided_slice %305 {offsets = [5, 0], sizes = [1, 32], strides = [1, 1]} : vector<9x32xf32> to vector<1x32xf32>
    %312 = vector.extract_strided_slice %305 {offsets = [6, 0], sizes = [1, 32], strides = [1, 1]} : vector<9x32xf32> to vector<1x32xf32>
    %313 = vector.extract_strided_slice %305 {offsets = [7, 0], sizes = [1, 32], strides = [1, 1]} : vector<9x32xf32> to vector<1x32xf32>
    %314 = vector.extract_strided_slice %305 {offsets = [8, 0], sizes = [1, 32], strides = [1, 1]} : vector<9x32xf32> to vector<1x32xf32>
    %c1_112 = arith.constant 1 : index
    %c0_113 = arith.constant 0 : index
    %c0_114 = arith.constant 0 : index
    %315 = vector.load %arg7[%c1_112, %c0_113, %c0_114] : memref<2x32x96xf32, #tpu.memory_space<vmem>>, vector<1x32x96xf32>
    %316 = vector.shape_cast %315 : vector<1x32x96xf32> to vector<32x96xf32>
    %cst_115 = arith.constant dense<0.000000e+00> : vector<12x96xf32>
    %317 = tpu.matmul %303, %316, %cst_115 {dimension_numbers = #tpu.dot_dimension_numbers<[1], [0], [0], [1], [0, 0, 1, 1], [], []>} : vector<12x32xf32>, vector<32x96xf32>, vector<12x96xf32> -> vector<12x96xf32>
    %c1_116 = arith.constant 1 : index
    %c0_117 = arith.constant 0 : index
    %c0_118 = arith.constant 0 : index
    %318 = vector.load %arg8[%c1_116, %c0_117, %c0_118] : memref<2x1x96xf32, #tpu.memory_space<vmem>>, vector<1x1x96xf32>
    %319 = vector.shape_cast %318 : vector<1x1x96xf32> to vector<1x96xf32>
    %320 = vector.broadcast %319 : vector<1x96xf32> to vector<12x96xf32>
    %321 = arith.addf %317, %320 : vector<12x96xf32>
    %322 = vector.extract_strided_slice %321 {offsets = [0, 0], sizes = [12, 32], strides = [1, 1]} : vector<12x96xf32> to vector<12x32xf32>
    %323 = vector.extract_strided_slice %321 {offsets = [0, 32], sizes = [12, 32], strides = [1, 1]} : vector<12x96xf32> to vector<12x32xf32>
    %324 = vector.extract_strided_slice %321 {offsets = [0, 64], sizes = [12, 32], strides = [1, 1]} : vector<12x96xf32> to vector<12x32xf32>
    %c0_i32_119 = arith.constant 0 : i32
    %325 = vector.broadcast %c0_i32_119 : i32 to vector<1x32xi32>
    %326 = arith.cmpi sge, %76, %325 : vector<1x32xi32>
    %c8_i32_120 = arith.constant 8 : i32
    %327 = vector.broadcast %c8_i32_120 : i32 to vector<1x32xi32>
    %328 = arith.cmpi slt, %76, %327 : vector<1x32xi32>
    %329 = arith.andi %326, %328 : vector<1x32xi1>
    %cst_121 = arith.constant 0.353553385 : f32
    %cst_122 = arith.constant 0.000000e+00 : f32
    %330 = vector.broadcast %cst_121 : f32 to vector<1x32xf32>
    %331 = vector.broadcast %cst_122 : f32 to vector<1x32xf32>
    %332 = arith.select %329, %330, %331 : vector<1x32xi1>, vector<1x32xf32>
    %333 = vector.broadcast %332 : vector<1x32xf32> to vector<12x32xf32>
    %334 = arith.mulf %323, %333 : vector<12x32xf32>
    %cst_123 = arith.constant 1.000000e+00 : f32
    %cst_124 = arith.constant 0.000000e+00 : f32
    %335 = vector.broadcast %cst_123 : f32 to vector<1x32xf32>
    %336 = vector.broadcast %cst_124 : f32 to vector<1x32xf32>
    %337 = arith.select %329, %335, %336 : vector<1x32xi1>, vector<1x32xf32>
    %338 = vector.broadcast %337 : vector<1x32xf32> to vector<12x32xf32>
    %339 = arith.mulf %324, %338 : vector<12x32xf32>
    %cst_125 = arith.constant dense<0.000000e+00> : vector<12x12xf32>
    %340 = tpu.matmul %322, %334, %cst_125 {dimension_numbers = #tpu.dot_dimension_numbers<[1], [1], [0], [0], [0, 0, 1, 0], [], []>} : vector<12x32xf32>, vector<12x32xf32>, vector<12x12xf32> -> vector<12x12xf32>
    %341 = arith.addf %340, %75 : vector<12x12xf32>
    %cst_126 = arith.constant dense<0xFF800000> : vector<12xf32>
    %342 = vector.multi_reduction <maximumf>, %341, %cst_126 [1] : vector<12x12xf32> to vector<12xf32>
    %343 = vector.shape_cast %342 : vector<12xf32> to vector<12x1xf32>
    %344 = vector.broadcast %343 : vector<12x1xf32> to vector<12x12xf32>
    %345 = arith.subf %341, %344 : vector<12x12xf32>
    %346 = math.exp %345 : vector<12x12xf32>
    %cst_127 = arith.constant dense<0.000000e+00> : vector<12xf32>
    %347 = vector.multi_reduction <add>, %346, %cst_127 [1] : vector<12x12xf32> to vector<12xf32>
    %348 = vector.shape_cast %347 : vector<12xf32> to vector<12x1xf32>
    %349 = tpu.reciprocal %348 {approx = true} : vector<12x1xf32> -> vector<12x1xf32>
    %350 = vector.broadcast %349 : vector<12x1xf32> to vector<12x12xf32>
    %351 = arith.mulf %346, %350 : vector<12x12xf32>
    %cst_128 = arith.constant dense<0.000000e+00> : vector<12x32xf32>
    %352 = tpu.matmul %351, %339, %cst_128 {dimension_numbers = #tpu.dot_dimension_numbers<[1], [0], [0], [1], [0, 0, 1, 1], [], []>} : vector<12x12xf32>, vector<12x32xf32>, vector<12x32xf32> -> vector<12x32xf32>
    %c8_i32_129 = arith.constant 8 : i32
    %353 = vector.broadcast %c8_i32_129 : i32 to vector<1x32xi32>
    %354 = arith.cmpi sge, %76, %353 : vector<1x32xi32>
    %c16_i32_130 = arith.constant 16 : i32
    %355 = vector.broadcast %c16_i32_130 : i32 to vector<1x32xi32>
    %356 = arith.cmpi slt, %76, %355 : vector<1x32xi32>
    %357 = arith.andi %354, %356 : vector<1x32xi1>
    %cst_131 = arith.constant 0.353553385 : f32
    %cst_132 = arith.constant 0.000000e+00 : f32
    %358 = vector.broadcast %cst_131 : f32 to vector<1x32xf32>
    %359 = vector.broadcast %cst_132 : f32 to vector<1x32xf32>
    %360 = arith.select %357, %358, %359 : vector<1x32xi1>, vector<1x32xf32>
    %361 = vector.broadcast %360 : vector<1x32xf32> to vector<12x32xf32>
    %362 = arith.mulf %323, %361 : vector<12x32xf32>
    %cst_133 = arith.constant 1.000000e+00 : f32
    %cst_134 = arith.constant 0.000000e+00 : f32
    %363 = vector.broadcast %cst_133 : f32 to vector<1x32xf32>
    %364 = vector.broadcast %cst_134 : f32 to vector<1x32xf32>
    %365 = arith.select %357, %363, %364 : vector<1x32xi1>, vector<1x32xf32>
    %366 = vector.broadcast %365 : vector<1x32xf32> to vector<12x32xf32>
    %367 = arith.mulf %324, %366 : vector<12x32xf32>
    %cst_135 = arith.constant dense<0.000000e+00> : vector<12x12xf32>
    %368 = tpu.matmul %322, %362, %cst_135 {dimension_numbers = #tpu.dot_dimension_numbers<[1], [1], [0], [0], [0, 0, 1, 0], [], []>} : vector<12x32xf32>, vector<12x32xf32>, vector<12x12xf32> -> vector<12x12xf32>
    %369 = arith.addf %368, %75 : vector<12x12xf32>
    %cst_136 = arith.constant dense<0xFF800000> : vector<12xf32>
    %370 = vector.multi_reduction <maximumf>, %369, %cst_136 [1] : vector<12x12xf32> to vector<12xf32>
    %371 = vector.shape_cast %370 : vector<12xf32> to vector<12x1xf32>
    %372 = vector.broadcast %371 : vector<12x1xf32> to vector<12x12xf32>
    %373 = arith.subf %369, %372 : vector<12x12xf32>
    %374 = math.exp %373 : vector<12x12xf32>
    %cst_137 = arith.constant dense<0.000000e+00> : vector<12xf32>
    %375 = vector.multi_reduction <add>, %374, %cst_137 [1] : vector<12x12xf32> to vector<12xf32>
    %376 = vector.shape_cast %375 : vector<12xf32> to vector<12x1xf32>
    %377 = tpu.reciprocal %376 {approx = true} : vector<12x1xf32> -> vector<12x1xf32>
    %378 = vector.broadcast %377 : vector<12x1xf32> to vector<12x12xf32>
    %379 = arith.mulf %374, %378 : vector<12x12xf32>
    %cst_138 = arith.constant dense<0.000000e+00> : vector<12x32xf32>
    %380 = tpu.matmul %379, %367, %cst_138 {dimension_numbers = #tpu.dot_dimension_numbers<[1], [0], [0], [1], [0, 0, 1, 1], [], []>} : vector<12x12xf32>, vector<12x32xf32>, vector<12x32xf32> -> vector<12x32xf32>
    %381 = arith.addf %352, %380 : vector<12x32xf32>
    %c16_i32_139 = arith.constant 16 : i32
    %382 = vector.broadcast %c16_i32_139 : i32 to vector<1x32xi32>
    %383 = arith.cmpi sge, %76, %382 : vector<1x32xi32>
    %c24_i32_140 = arith.constant 24 : i32
    %384 = vector.broadcast %c24_i32_140 : i32 to vector<1x32xi32>
    %385 = arith.cmpi slt, %76, %384 : vector<1x32xi32>
    %386 = arith.andi %383, %385 : vector<1x32xi1>
    %cst_141 = arith.constant 0.353553385 : f32
    %cst_142 = arith.constant 0.000000e+00 : f32
    %387 = vector.broadcast %cst_141 : f32 to vector<1x32xf32>
    %388 = vector.broadcast %cst_142 : f32 to vector<1x32xf32>
    %389 = arith.select %386, %387, %388 : vector<1x32xi1>, vector<1x32xf32>
    %390 = vector.broadcast %389 : vector<1x32xf32> to vector<12x32xf32>
    %391 = arith.mulf %323, %390 : vector<12x32xf32>
    %cst_143 = arith.constant 1.000000e+00 : f32
    %cst_144 = arith.constant 0.000000e+00 : f32
    %392 = vector.broadcast %cst_143 : f32 to vector<1x32xf32>
    %393 = vector.broadcast %cst_144 : f32 to vector<1x32xf32>
    %394 = arith.select %386, %392, %393 : vector<1x32xi1>, vector<1x32xf32>
    %395 = vector.broadcast %394 : vector<1x32xf32> to vector<12x32xf32>
    %396 = arith.mulf %324, %395 : vector<12x32xf32>
    %cst_145 = arith.constant dense<0.000000e+00> : vector<12x12xf32>
    %397 = tpu.matmul %322, %391, %cst_145 {dimension_numbers = #tpu.dot_dimension_numbers<[1], [1], [0], [0], [0, 0, 1, 0], [], []>} : vector<12x32xf32>, vector<12x32xf32>, vector<12x12xf32> -> vector<12x12xf32>
    %398 = arith.addf %397, %75 : vector<12x12xf32>
    %cst_146 = arith.constant dense<0xFF800000> : vector<12xf32>
    %399 = vector.multi_reduction <maximumf>, %398, %cst_146 [1] : vector<12x12xf32> to vector<12xf32>
    %400 = vector.shape_cast %399 : vector<12xf32> to vector<12x1xf32>
    %401 = vector.broadcast %400 : vector<12x1xf32> to vector<12x12xf32>
    %402 = arith.subf %398, %401 : vector<12x12xf32>
    %403 = math.exp %402 : vector<12x12xf32>
    %cst_147 = arith.constant dense<0.000000e+00> : vector<12xf32>
    %404 = vector.multi_reduction <add>, %403, %cst_147 [1] : vector<12x12xf32> to vector<12xf32>
    %405 = vector.shape_cast %404 : vector<12xf32> to vector<12x1xf32>
    %406 = tpu.reciprocal %405 {approx = true} : vector<12x1xf32> -> vector<12x1xf32>
    %407 = vector.broadcast %406 : vector<12x1xf32> to vector<12x12xf32>
    %408 = arith.mulf %403, %407 : vector<12x12xf32>
    %cst_148 = arith.constant dense<0.000000e+00> : vector<12x32xf32>
    %409 = tpu.matmul %408, %396, %cst_148 {dimension_numbers = #tpu.dot_dimension_numbers<[1], [0], [0], [1], [0, 0, 1, 1], [], []>} : vector<12x12xf32>, vector<12x32xf32>, vector<12x32xf32> -> vector<12x32xf32>
    %410 = arith.addf %381, %409 : vector<12x32xf32>
    %c24_i32_149 = arith.constant 24 : i32
    %411 = vector.broadcast %c24_i32_149 : i32 to vector<1x32xi32>
    %412 = arith.cmpi sge, %76, %411 : vector<1x32xi32>
    %c32_i32_150 = arith.constant 32 : i32
    %413 = vector.broadcast %c32_i32_150 : i32 to vector<1x32xi32>
    %414 = arith.cmpi slt, %76, %413 : vector<1x32xi32>
    %415 = arith.andi %412, %414 : vector<1x32xi1>
    %cst_151 = arith.constant 0.353553385 : f32
    %cst_152 = arith.constant 0.000000e+00 : f32
    %416 = vector.broadcast %cst_151 : f32 to vector<1x32xf32>
    %417 = vector.broadcast %cst_152 : f32 to vector<1x32xf32>
    %418 = arith.select %415, %416, %417 : vector<1x32xi1>, vector<1x32xf32>
    %419 = vector.broadcast %418 : vector<1x32xf32> to vector<12x32xf32>
    %420 = arith.mulf %323, %419 : vector<12x32xf32>
    %cst_153 = arith.constant 1.000000e+00 : f32
    %cst_154 = arith.constant 0.000000e+00 : f32
    %421 = vector.broadcast %cst_153 : f32 to vector<1x32xf32>
    %422 = vector.broadcast %cst_154 : f32 to vector<1x32xf32>
    %423 = arith.select %415, %421, %422 : vector<1x32xi1>, vector<1x32xf32>
    %424 = vector.broadcast %423 : vector<1x32xf32> to vector<12x32xf32>
    %425 = arith.mulf %324, %424 : vector<12x32xf32>
    %cst_155 = arith.constant dense<0.000000e+00> : vector<12x12xf32>
    %426 = tpu.matmul %322, %420, %cst_155 {dimension_numbers = #tpu.dot_dimension_numbers<[1], [1], [0], [0], [0, 0, 1, 0], [], []>} : vector<12x32xf32>, vector<12x32xf32>, vector<12x12xf32> -> vector<12x12xf32>
    %427 = arith.addf %426, %75 : vector<12x12xf32>
    %cst_156 = arith.constant dense<0xFF800000> : vector<12xf32>
    %428 = vector.multi_reduction <maximumf>, %427, %cst_156 [1] : vector<12x12xf32> to vector<12xf32>
    %429 = vector.shape_cast %428 : vector<12xf32> to vector<12x1xf32>
    %430 = vector.broadcast %429 : vector<12x1xf32> to vector<12x12xf32>
    %431 = arith.subf %427, %430 : vector<12x12xf32>
    %432 = math.exp %431 : vector<12x12xf32>
    %cst_157 = arith.constant dense<0.000000e+00> : vector<12xf32>
    %433 = vector.multi_reduction <add>, %432, %cst_157 [1] : vector<12x12xf32> to vector<12xf32>
    %434 = vector.shape_cast %433 : vector<12xf32> to vector<12x1xf32>
    %435 = tpu.reciprocal %434 {approx = true} : vector<12x1xf32> -> vector<12x1xf32>
    %436 = vector.broadcast %435 : vector<12x1xf32> to vector<12x12xf32>
    %437 = arith.mulf %432, %436 : vector<12x12xf32>
    %cst_158 = arith.constant dense<0.000000e+00> : vector<12x32xf32>
    %438 = tpu.matmul %437, %425, %cst_158 {dimension_numbers = #tpu.dot_dimension_numbers<[1], [0], [0], [1], [0, 0, 1, 1], [], []>} : vector<12x12xf32>, vector<12x32xf32>, vector<12x32xf32> -> vector<12x32xf32>
    %439 = arith.addf %410, %438 : vector<12x32xf32>
    %c1_159 = arith.constant 1 : index
    %c0_160 = arith.constant 0 : index
    %c0_161 = arith.constant 0 : index
    %440 = vector.load %arg9[%c1_159, %c0_160, %c0_161] : memref<2x32x32xf32, #tpu.memory_space<vmem>>, vector<1x32x32xf32>
    %441 = vector.shape_cast %440 : vector<1x32x32xf32> to vector<32x32xf32>
    %cst_162 = arith.constant dense<0.000000e+00> : vector<12x32xf32>
    %442 = tpu.matmul %439, %441, %cst_162 {dimension_numbers = #tpu.dot_dimension_numbers<[1], [0], [0], [1], [0, 0, 1, 1], [], []>} : vector<12x32xf32>, vector<32x32xf32>, vector<12x32xf32> -> vector<12x32xf32>
    %443 = vector.broadcast %306 : vector<1x32xf32> to vector<12x32xf32>
    %444 = arith.addf %442, %443 : vector<12x32xf32>
    %445 = arith.addf %303, %444 : vector<12x32xf32>
    %cst_163 = arith.constant dense<0.000000e+00> : vector<12xf32>
    %446 = vector.multi_reduction <add>, %445, %cst_163 [1] : vector<12x32xf32> to vector<12xf32>
    %447 = vector.shape_cast %446 : vector<12xf32> to vector<12x1xf32>
    %cst_164 = arith.constant 3.200000e+01 : f32
    %448 = vector.broadcast %cst_164 : f32 to vector<12x1xf32>
    %449 = arith.divf %447, %448 : vector<12x1xf32>
    %450 = vector.broadcast %449 : vector<12x1xf32> to vector<12x32xf32>
    %451 = arith.subf %445, %450 : vector<12x32xf32>
    %452 = arith.mulf %451, %451 : vector<12x32xf32>
    %cst_165 = arith.constant dense<0.000000e+00> : vector<12xf32>
    %453 = vector.multi_reduction <add>, %452, %cst_165 [1] : vector<12x32xf32> to vector<12xf32>
    %454 = vector.shape_cast %453 : vector<12xf32> to vector<12x1xf32>
    %cst_166 = arith.constant 3.200000e+01 : f32
    %455 = vector.broadcast %cst_166 : f32 to vector<12x1xf32>
    %456 = arith.divf %454, %455 : vector<12x1xf32>
    %457 = vector.broadcast %449 : vector<12x1xf32> to vector<12x32xf32>
    %458 = arith.subf %445, %457 : vector<12x32xf32>
    %cst_167 = arith.constant 9.99999974E-6 : f32
    %459 = vector.broadcast %cst_167 : f32 to vector<12x1xf32>
    %460 = arith.addf %456, %459 : vector<12x1xf32>
    %461 = math.rsqrt %460 : vector<12x1xf32>
    %462 = vector.broadcast %461 : vector<12x1xf32> to vector<12x32xf32>
    %463 = arith.mulf %458, %462 : vector<12x32xf32>
    %464 = vector.broadcast %308 : vector<1x32xf32> to vector<12x32xf32>
    %465 = arith.mulf %463, %464 : vector<12x32xf32>
    %466 = vector.broadcast %309 : vector<1x32xf32> to vector<12x32xf32>
    %467 = arith.addf %465, %466 : vector<12x32xf32>
    %468 = vector.broadcast %307 : vector<1x32xf32> to vector<12x32xf32>
    %469 = arith.addf %467, %468 : vector<12x32xf32>
    %cst_168 = arith.constant dense<0.000000e+00> : vector<12xf32>
    %470 = vector.multi_reduction <add>, %469, %cst_168 [1] : vector<12x32xf32> to vector<12xf32>
    %471 = vector.shape_cast %470 : vector<12xf32> to vector<12x1xf32>
    %cst_169 = arith.constant 3.200000e+01 : f32
    %472 = vector.broadcast %cst_169 : f32 to vector<12x1xf32>
    %473 = arith.divf %471, %472 : vector<12x1xf32>
    %474 = vector.broadcast %473 : vector<12x1xf32> to vector<12x32xf32>
    %475 = arith.subf %469, %474 : vector<12x32xf32>
    %476 = arith.mulf %475, %475 : vector<12x32xf32>
    %cst_170 = arith.constant dense<0.000000e+00> : vector<12xf32>
    %477 = vector.multi_reduction <add>, %476, %cst_170 [1] : vector<12x32xf32> to vector<12xf32>
    %478 = vector.shape_cast %477 : vector<12xf32> to vector<12x1xf32>
    %cst_171 = arith.constant 3.200000e+01 : f32
    %479 = vector.broadcast %cst_171 : f32 to vector<12x1xf32>
    %480 = arith.divf %478, %479 : vector<12x1xf32>
    %481 = vector.broadcast %473 : vector<12x1xf32> to vector<12x32xf32>
    %482 = arith.subf %469, %481 : vector<12x32xf32>
    %cst_172 = arith.constant 9.99999974E-6 : f32
    %483 = vector.broadcast %cst_172 : f32 to vector<12x1xf32>
    %484 = arith.addf %480, %483 : vector<12x1xf32>
    %485 = math.rsqrt %484 : vector<12x1xf32>
    %486 = vector.broadcast %485 : vector<12x1xf32> to vector<12x32xf32>
    %487 = arith.mulf %482, %486 : vector<12x32xf32>
    %488 = vector.broadcast %310 : vector<1x32xf32> to vector<12x32xf32>
    %489 = arith.mulf %487, %488 : vector<12x32xf32>
    %490 = vector.broadcast %311 : vector<1x32xf32> to vector<12x32xf32>
    %491 = arith.addf %489, %490 : vector<12x32xf32>
    %492 = arith.truncf %491 : vector<12x32xf32> to vector<12x32xbf16>
    %c1_173 = arith.constant 1 : index
    %c0_174 = arith.constant 0 : index
    %c0_175 = arith.constant 0 : index
    %493 = vector.load %arg11[%c1_173, %c0_174, %c0_175] : memref<2x32x2048xbf16, #tpu.memory_space<vmem>>, vector<1x32x2048xbf16>
    %494 = vector.shape_cast %493 : vector<1x32x2048xbf16> to vector<32x2048xbf16>
    %cst_176 = arith.constant dense<0.000000e+00> : vector<12x2048xf32>
    %495 = tpu.matmul %492, %494, %cst_176 {dimension_numbers = #tpu.dot_dimension_numbers<[1], [0], [0], [1], [0, 0, 1, 1], [], []>} : vector<12x32xbf16>, vector<32x2048xbf16>, vector<12x2048xf32> -> vector<12x2048xf32>
    %c1_177 = arith.constant 1 : index
    %c0_178 = arith.constant 0 : index
    %c0_179 = arith.constant 0 : index
    %496 = vector.load %arg12[%c1_177, %c0_178, %c0_179] : memref<2x1x2048xf32, #tpu.memory_space<vmem>>, vector<1x1x2048xf32>
    %497 = vector.shape_cast %496 : vector<1x1x2048xf32> to vector<1x2048xf32>
    %498 = vector.broadcast %497 : vector<1x2048xf32> to vector<12x2048xf32>
    %499 = arith.addf %495, %498 : vector<12x2048xf32>
    %cst_180 = arith.constant 0.000000e+00 : f32
    %500 = vector.broadcast %cst_180 : f32 to vector<12x2048xf32>
    %501 = arith.maximumf %499, %500 : vector<12x2048xf32>
    %502 = arith.truncf %501 : vector<12x2048xf32> to vector<12x2048xbf16>
    %c1_181 = arith.constant 1 : index
    %c0_182 = arith.constant 0 : index
    %c0_183 = arith.constant 0 : index
    %503 = vector.load %arg13[%c1_181, %c0_182, %c0_183] : memref<2x2048x32xbf16, #tpu.memory_space<vmem>>, vector<1x2048x32xbf16>
    %504 = vector.shape_cast %503 : vector<1x2048x32xbf16> to vector<2048x32xbf16>
    %cst_184 = arith.constant dense<0.000000e+00> : vector<12x32xf32>
    %505 = tpu.matmul %502, %504, %cst_184 {dimension_numbers = #tpu.dot_dimension_numbers<[1], [0], [0], [1], [0, 0, 1, 1], [], []>} : vector<12x2048xbf16>, vector<2048x32xbf16>, vector<12x32xf32> -> vector<12x32xf32>
    %506 = vector.broadcast %314 : vector<1x32xf32> to vector<12x32xf32>
    %507 = arith.addf %505, %506 : vector<12x32xf32>
    %508 = arith.addf %491, %507 : vector<12x32xf32>
    %cst_185 = arith.constant dense<0.000000e+00> : vector<12xf32>
    %509 = vector.multi_reduction <add>, %508, %cst_185 [1] : vector<12x32xf32> to vector<12xf32>
    %510 = vector.shape_cast %509 : vector<12xf32> to vector<12x1xf32>
    %cst_186 = arith.constant 3.200000e+01 : f32
    %511 = vector.broadcast %cst_186 : f32 to vector<12x1xf32>
    %512 = arith.divf %510, %511 : vector<12x1xf32>
    %513 = vector.broadcast %512 : vector<12x1xf32> to vector<12x32xf32>
    %514 = arith.subf %508, %513 : vector<12x32xf32>
    %515 = arith.mulf %514, %514 : vector<12x32xf32>
    %cst_187 = arith.constant dense<0.000000e+00> : vector<12xf32>
    %516 = vector.multi_reduction <add>, %515, %cst_187 [1] : vector<12x32xf32> to vector<12xf32>
    %517 = vector.shape_cast %516 : vector<12xf32> to vector<12x1xf32>
    %cst_188 = arith.constant 3.200000e+01 : f32
    %518 = vector.broadcast %cst_188 : f32 to vector<12x1xf32>
    %519 = arith.divf %517, %518 : vector<12x1xf32>
    %520 = vector.broadcast %512 : vector<12x1xf32> to vector<12x32xf32>
    %521 = arith.subf %508, %520 : vector<12x32xf32>
    %cst_189 = arith.constant 9.99999974E-6 : f32
    %522 = vector.broadcast %cst_189 : f32 to vector<12x1xf32>
    %523 = arith.addf %519, %522 : vector<12x1xf32>
    %524 = math.rsqrt %523 : vector<12x1xf32>
    %525 = vector.broadcast %524 : vector<12x1xf32> to vector<12x32xf32>
    %526 = arith.mulf %521, %525 : vector<12x32xf32>
    %527 = vector.broadcast %312 : vector<1x32xf32> to vector<12x32xf32>
    %528 = arith.mulf %526, %527 : vector<12x32xf32>
    %529 = vector.broadcast %313 : vector<1x32xf32> to vector<12x32xf32>
    %530 = arith.addf %528, %529 : vector<12x32xf32>
    %c0_190 = arith.constant 0 : index
    %c0_191 = arith.constant 0 : index
    %531 = vector.load %arg14[%c0_190, %c0_191] : memref<32x32xf32, #tpu.memory_space<vmem>>, vector<32x32xf32>
    %cst_192 = arith.constant dense<0.000000e+00> : vector<12x32xf32>
    %532 = tpu.matmul %530, %531, %cst_192 {dimension_numbers = #tpu.dot_dimension_numbers<[1], [0], [0], [1], [0, 0, 1, 1], [], []>} : vector<12x32xf32>, vector<32x32xf32>, vector<12x32xf32> -> vector<12x32xf32>
    %c0_193 = arith.constant 0 : index
    %c0_194 = arith.constant 0 : index
    %533 = vector.load %arg15[%c0_193, %c0_194] : memref<1x32xf32, #tpu.memory_space<vmem>>, vector<1x32xf32>
    %534 = vector.broadcast %533 : vector<1x32xf32> to vector<12x32xf32>
    %535 = arith.addf %532, %534 : vector<12x32xf32>
    %536 = vector.extract_strided_slice %535 {offsets = [0, 0], sizes = [12, 16], strides = [1, 1]} : vector<12x32xf32> to vector<12x16xf32>
    %cst_195 = arith.constant dense<0xFF800000> : vector<12xf32>
    %537 = vector.multi_reduction <maximumf>, %536, %cst_195 [1] : vector<12x16xf32> to vector<12xf32>
    %538 = vector.shape_cast %537 : vector<12xf32> to vector<12x1xf32>
    %539 = vector.broadcast %538 : vector<12x1xf32> to vector<12x16xf32>
    %540 = arith.subf %536, %539 : vector<12x16xf32>
    %541 = math.exp %540 : vector<12x16xf32>
    %cst_196 = arith.constant dense<0.000000e+00> : vector<12xf32>
    %542 = vector.multi_reduction <add>, %541, %cst_196 [1] : vector<12x16xf32> to vector<12xf32>
    %543 = vector.shape_cast %542 : vector<12xf32> to vector<12x1xf32>
    %544 = vector.broadcast %543 : vector<12x1xf32> to vector<12x16xf32>
    %545 = arith.divf %541, %544 : vector<12x16xf32>
    %546 = vector.extract_strided_slice %535 {offsets = [0, 16], sizes = [12, 16], strides = [1, 1]} : vector<12x32xf32> to vector<12x16xf32>
    %cst_197 = arith.constant dense<0xFF800000> : vector<12xf32>
    %547 = vector.multi_reduction <maximumf>, %546, %cst_197 [1] : vector<12x16xf32> to vector<12xf32>
    %548 = vector.shape_cast %547 : vector<12xf32> to vector<12x1xf32>
    %549 = vector.broadcast %548 : vector<12x1xf32> to vector<12x16xf32>
    %550 = arith.subf %546, %549 : vector<12x16xf32>
    %551 = math.exp %550 : vector<12x16xf32>
    %cst_198 = arith.constant dense<0.000000e+00> : vector<12xf32>
    %552 = vector.multi_reduction <add>, %551, %cst_198 [1] : vector<12x16xf32> to vector<12xf32>
    %553 = vector.shape_cast %552 : vector<12xf32> to vector<12x1xf32>
    %554 = vector.broadcast %553 : vector<12x1xf32> to vector<12x16xf32>
    %555 = arith.divf %551, %554 : vector<12x16xf32>
    %556 = tpu.concatenate %545, %555 in 1 : vector<12x16xf32>, vector<12x16xf32> -> vector<12x32xf32>
    %c0_199 = arith.constant 0 : index
    %c0_200 = arith.constant 0 : index
    %557 = vector.load %arg16[%c0_199, %c0_200] : memref<12x32xf32, #tpu.memory_space<vmem>>, vector<12x32xf32>
    tpu.vector_store %arg16[%c0_199, %c0_200], %556 {strides = array<i32>} : memref<12x32xf32, #tpu.memory_space<vmem>>, vector<12x32xf32>,
    return
  }
}

</mosaic_0001>

<llo_original>
// kernel: _lambda_.1
$region0: #{_lambda_.1}
  #allocation0 [shape = 'u32[]', space=smem, size = 0x4, offset = 0x4, fixed_abs, tag = 'smem constant byte address 0x4 - core index']
  #allocation1 [shape = 'u32[144,128]{1,0:T(1,128)}', space=vmem, size = 0x12000, scoped, tag = 'internal scratch']
  %s0 = inlined_call_operand.vmem [shape: f32[2,3], index: 0, kind: input, shape index: {}]
  %s1 = inlined_call_operand.vmem [shape: f32[12,2], index: 1, kind: input, shape index: {}]
  %s2 = inlined_call_operand.vmem [shape: f32[12,1], index: 2, kind: input, shape index: {}]
  %s3 = inlined_call_operand.vmem [shape: f32[3,32], index: 3, kind: input, shape index: {}]
  %s4 = inlined_call_operand.vmem [shape: f32[2,32], index: 4, kind: input, shape index: {}]
  %s5 = inlined_call_operand.vmem [shape: f32[2,32,32], index: 5, kind: input, shape index: {}]
  %s6 = inlined_call_operand.vmem [shape: f32[4,32], index: 6, kind: input, shape index: {}]
  %s7 = inlined_call_operand.vmem [shape: f32[2,32,96], index: 7, kind: input, shape index: {}]
  %s8 = inlined_call_operand.vmem [shape: f32[2,1,96], index: 8, kind: input, shape index: {}]
  %s9 = inlined_call_operand.vmem [shape: f32[2,32,32], index: 9, kind: input, shape index: {}]
  %s10 = inlined_call_operand.vmem [shape: f32[2,9,32], index: 10, kind: input, shape index: {}]
  %s11 = inlined_call_operand.vmem [shape: bf16[2,32,2048], index: 11, kind: input, shape index: {}]
  %s12 = inlined_call_operand.vmem [shape: f32[2,1,2048], index: 12, kind: input, shape index: {}]
  %s13 = inlined_call_operand.vmem [shape: bf16[2,2048,32], index: 13, kind: input, shape index: {}]
  %s14 = inlined_call_operand.vmem [shape: f32[32,32], index: 14, kind: input, shape index: {}]
  %s15 = inlined_call_operand.vmem [shape: f32[1,32], index: 15, kind: input, shape index: {}]
  %s16 = inlined_call_operand.vmem [shape: f32[12,32], index: 16, kind: output, shape index: {}]
  %s17 = sld [smem:[#allocation0]]
  $region74: #{_lambda_.1} parent=0
    _
  %s19 = ssub.s32 1, %s17
  %s20 = scalar_select 0, %s19, %s17
  // Predicated region
  $region2: #{_lambda_.1} parent=0 // pred_check
    _
  $region3: #{_lambda_.1} parent=0 // pred_check_branch
    %22 = sbr.rel (0) target = $region5
  $region4: #{_lambda_.1} parent=0 // pred_region
    _
  $region5: #{_lambda_.1} parent=0 // pred_fallthru
    _
  // Predicated region
  $region6: #{_lambda_.1} parent=0 // pred_check
    _
  $region7: #{_lambda_.1} parent=0 // pred_check_branch
    %24 = sbr.rel (0) target = $region9
  $region8: #{_lambda_.1} parent=0 // pred_region
    _
  $region9: #{_lambda_.1} parent=0 // pred_fallthru
    _
  // Predicated region
  $region10: #{_lambda_.1} parent=0 // pred_check
    _
  $region11: #{_lambda_.1} parent=0 // pred_check_branch
    %26 = sbr.rel (0) target = $region13
  $region12: #{_lambda_.1} parent=0 // pred_region
    _
  $region13: #{_lambda_.1} parent=0 // pred_fallthru
    _
  // Predicated region
  $region14: #{_lambda_.1} parent=0 // pred_check
    _
  $region15: #{_lambda_.1} parent=0 // pred_check_branch
    %28 = sbr.rel (0) target = $region17
  $region16: #{_lambda_.1} parent=0 // pred_region
    _
  $region17: #{_lambda_.1} parent=0 // pred_fallthru
    _
  // Predicated region
  $region18: #{_lambda_.1} parent=0 // pred_check
    _
  $region19: #{_lambda_.1} parent=0 // pred_check_branch
    %30 = sbr.rel (0) target = $region21
  $region20: #{_lambda_.1} parent=0 // pred_region
    _
  $region21: #{_lambda_.1} parent=0 // pred_fallthru
    _
  // Predicated region
  $region22: #{_lambda_.1} parent=0 // pred_check
    _
  $region23: #{_lambda_.1} parent=0 // pred_check_branch
    %32 = sbr.rel (0) target = $region25
  $region24: #{_lambda_.1} parent=0 // pred_region
    _
  $region25: #{_lambda_.1} parent=0 // pred_fallthru
    _
  // Predicated region
  $region26: #{_lambda_.1} parent=0 // pred_check
    _
  $region27: #{_lambda_.1} parent=0 // pred_check_branch
    %34 = sbr.rel (0) target = $region29
  $region28: #{_lambda_.1} parent=0 // pred_region
    _
  $region29: #{_lambda_.1} parent=0 // pred_fallthru
    _
  // Predicated region
  $region30: #{_lambda_.1} parent=0 // pred_check
    _
  $region31: #{_lambda_.1} parent=0 // pred_check_branch
    %36 = sbr.rel (0) target = $region33
  $region32: #{_lambda_.1} parent=0 // pred_region
    _
  $region33: #{_lambda_.1} parent=0 // pred_fallthru
    _
  // Predicated region
  $region34: #{_lambda_.1} parent=0 // pred_check
    _
  $region35: #{_lambda_.1} parent=0 // pred_check_branch
    %38 = sbr.rel (0) target = $region37
  $region36: #{_lambda_.1} parent=0 // pred_region
    _
  $region37: #{_lambda_.1} parent=0 // pred_fallthru
    _
  // Predicated region
  $region38: #{_lambda_.1} parent=0 // pred_check
    _
  $region39: #{_lambda_.1} parent=0 // pred_check_branch
    %40 = sbr.rel (0) target = $region41
  $region40: #{_lambda_.1} parent=0 // pred_region
    _
  $region41: #{_lambda_.1} parent=0 // pred_fallthru
    _
  // Predicated region
  $region42: #{_lambda_.1} parent=0 // pred_check
    _
  $region43: #{_lambda_.1} parent=0 // pred_check_branch
    %42 = sbr.rel (0) target = $region45
  $region44: #{_lambda_.1} parent=0 // pred_region
    _
  $region45: #{_lambda_.1} parent=0 // pred_fallthru
    _
  // Predicated region
  $region46: #{_lambda_.1} parent=0 // pred_check
    _
  $region47: #{_lambda_.1} parent=0 // pred_check_branch
    %44 = sbr.rel (0) target = $region49
  $region48: #{_lambda_.1} parent=0 // pred_region
    _
  $region49: #{_lambda_.1} parent=0 // pred_fallthru
    _
  // Predicated region
  $region50: #{_lambda_.1} parent=0 // pred_check
    _
  $region51: #{_lambda_.1} parent=0 // pred_check_branch
    %46 = sbr.rel (0) target = $region53
  $region52: #{_lambda_.1} parent=0 // pred_region
    _
  $region53: #{_lambda_.1} parent=0 // pred_fallthru
    _
  // Predicated region
  $region54: #{_lambda_.1} parent=0 // pred_check
    _
  $region55: #{_lambda_.1} parent=0 // pred_check_branch
    %48 = sbr.rel (0) target = $region57
  $region56: #{_lambda_.1} parent=0 // pred_region
    _
  $region57: #{_lambda_.1} parent=0 // pred_fallthru
    _
  // Predicated region
  $region58: #{_lambda_.1} parent=0 // pred_check
    _
  $region59: #{_lambda_.1} parent=0 // pred_check_branch
    %50 = sbr.rel (0) target = $region61
  $region60: #{_lambda_.1} parent=0 // pred_region
    _
  $region61: #{_lambda_.1} parent=0 // pred_fallthru
    _
  // Predicated region
  $region62: #{_lambda_.1} parent=0 // pred_check
    _
  $region63: #{_lambda_.1} parent=0 // pred_check_branch
    %52 = sbr.rel (0) target = $region65
  $region64: #{_lambda_.1} parent=0 // pred_region
    _
  $region65: #{_lambda_.1} parent=0 // pred_fallthru
    _
  %v54 = vld [vmem:[%s6] sm:$0xf]
  %v55 = vld [vmem:[%s0] sm:$0x3]
  %v56 = vld [vmem:[%s3] sm:$0x7]
  %v57 = vlaneseq
  %v58 = vshrl.u32 %v57, 7
  %v59 = vsub.s32 0, %v58
  %v60 = vrot.slane %v54, %v59
  %vm61 = vcmask 23552
  %v63 = vsel %vm61, %v55, 0
  %vm65 = vcmask 1042432
  %v67 = vsel %vm65, %v56, 0
  %69 = vmatprep.subr.mxu0 0.0
  %70 = vmatpush1.msra.mxu0 %v67
  %71 = vmatprep.subr.mxu0 0.0
  %72 = vmatpush1.msra.mxu0 0.0
  %73 = vmatprep.subr.mxu0 0.0
  %74 = vmatpush1.msra.mxu0 0.0
  %75 = vmatprep.subr.mxu0 0.0
  %76 = vmatpush1.msra.mxu0 0.0
  %77 = vmatprep.subr.mxu0 0.0
  %78 = vmatpush1.msra.mxu0 0.0
  %79 = vmatprep.subr.mxu0 0.0
  %80 = vmatpush1.msra.mxu0 0.0
  %81 = vmatprep.subr.mxu0 0.0
  %82 = vmatpush1.msra.mxu0 0.0
  %83 = vmatprep.subr.mxu0 0.0
  %84 = vmatpush1.msra.mxu0 0.0
  %85 = vmatprep.subr.mxu0 0.0
  %86 = vmatpush1.msra.mxu0 0.0
  %87 = vmatprep.subr.mxu0 0.0
  %88 = vmatpush1.msra.mxu0 0.0
  %89 = vmatprep.subr.mxu0 0.0
  %90 = vmatpush1.msra.mxu0 0.0
  %91 = vmatprep.subr.mxu0 0.0
  %92 = vmatpush1.msra.mxu0 0.0
  %93 = vmatprep.subr.mxu0 0.0
  %94 = vmatpush1.msra.mxu0 0.0
  %95 = vmatprep.subr.mxu0 0.0
  %96 = vmatpush1.msra.mxu0 0.0
  %97 = vmatprep.subr.mxu0 0.0
  %98 = vmatpush1.msra.mxu0 0.0
  %99 = vmatprep.subr.mxu0 0.0
  %100 = vmatpush1.msra.mxu0 0.0
  %101 = vmatprep.subr.mxu0 0.0
  %102 = vmatpush1.msra.mxu0 0.0
  %103 = vmatprep.subr.mxu0 0.0
  %104 = vmatpush1.msra.mxu0 0.0
  %105 = vmatprep.subr.mxu0 0.0
  %106 = vmatpush1.msra.mxu0 0.0
  %107 = vmatprep.subr.mxu0 0.0
  %108 = vmatpush1.msra.mxu0 0.0
  %109 = vmatprep.subr.mxu0 0.0
  %110 = vmatpush1.msra.mxu0 0.0
  %111 = vmatprep.subr.mxu0 0.0
  %112 = vmatpush1.msra.mxu0 0.0
  %113 = vmatprep.subr.mxu0 0.0
  %114 = vmatpush1.msra.mxu0 0.0
  %115 = vmatprep.subr.mxu0 0.0
  %116 = vmatpush1.msra.mxu0 0.0
  %117 = vmatprep.subr.mxu0 0.0
  %118 = vmatpush1.msra.mxu0 0.0
  %119 = vmatprep.subr.mxu0 0.0
  %120 = vmatpush1.msra.mxu0 0.0
  %121 = vmatprep.subr.mxu0 0.0
  %122 = vmatpush1.msra.mxu0 0.0
  %123 = vmatprep.subr.mxu0 0.0
  %124 = vmatpush1.msra.mxu0 0.0
  %125 = vmatprep.subr.mxu0 0.0
  %126 = vmatpush1.msra.mxu0 0.0
  %127 = vmatprep.subr.mxu0 0.0
  %128 = vmatpush1.msra.mxu0 0.0
  %129 = vmatprep.subr.mxu0 0.0
  %130 = vmatpush1.msra.mxu0 0.0
  %131 = vmatprep.subr.mxu0 0.0
  %132 = vmatpush1.msra.mxu0 0.0
  %133 = vmatprep.mubr.f32.mxu0 0.0
  %134 = vmatmul.mubr.f32.gmra.mrb[0].mxu0 %v63
  %v135 = vpop.f32.mrb[0].mxu0
  %v136 = vadd.f32 %v60, %v135
  %v137 = vpop.f32.mrb[0].mxu0
  %138 = vdwg.mxu0
  %vm139 = vcmp.ge.f32.partialorder %v136, 0.0
  %v140 = vmul.f32 %v136, 0.01
  %v141 = vsel %vm139, %v136, %v140
  %v142 = vld [vmem:[%s5] sm:$0xff]
  %v143 = vld [vmem:[%s5 + $0x8] sm:$0xff]
  %v144 = vld [vmem:[%s5 + $0x10] sm:$0xff]
  %v145 = vld [vmem:[%s5 + $0x18] sm:$0xff]
  %v146 = vlaneseq
  %v147 = vshrl.u32 %v146, 7
  %v148 = vsub.s32 1, %v147
  %v149 = vrot.slane %v54, %v148
  %vm150 = vcmask 261120
  %v152 = vsel %vm150, %v141, 0
  %154 = vmatprep.subr.mxu0 0.0
  %155 = vmatpush1.msra.mxu0 %v142
  %156 = vmatprep.subr.mxu0 0.0
  %157 = vmatpush1.msra.mxu0 %v143
  %158 = vmatprep.subr.mxu0 0.0
  %159 = vmatpush1.msra.mxu0 %v144
  %160 = vmatprep.subr.mxu0 0.0
  %161 = vmatpush1.msra.mxu0 %v145
  %162 = vmatprep.subr.mxu0 0.0
  %163 = vmatpush1.msra.mxu0 0.0
  %164 = vmatprep.subr.mxu0 0.0
  %165 = vmatpush1.msra.mxu0 0.0
  %166 = vmatprep.subr.mxu0 0.0
  %167 = vmatpush1.msra.mxu0 0.0
  %168 = vmatprep.subr.mxu0 0.0
  %169 = vmatpush1.msra.mxu0 0.0
  %170 = vmatprep.subr.mxu0 0.0
  %171 = vmatpush1.msra.mxu0 0.0
  %172 = vmatprep.subr.mxu0 0.0
  %173 = vmatpush1.msra.mxu0 0.0
  %174 = vmatprep.subr.mxu0 0.0
  %175 = vmatpush1.msra.mxu0 0.0
  %176 = vmatprep.subr.mxu0 0.0
  %177 = vmatpush1.msra.mxu0 0.0
  %178 = vmatprep.subr.mxu0 0.0
  %179 = vmatpush1.msra.mxu0 0.0
  %180 = vmatprep.subr.mxu0 0.0
  %181 = vmatpush1.msra.mxu0 0.0
  %182 = vmatprep.subr.mxu0 0.0
  %183 = vmatpush1.msra.mxu0 0.0
  %184 = vmatprep.subr.mxu0 0.0
  %185 = vmatpush1.msra.mxu0 0.0
  %186 = vmatprep.subr.mxu0 0.0
  %187 = vmatpush1.msra.mxu0 0.0
  %188 = vmatprep.subr.mxu0 0.0
  %189 = vmatpush1.msra.mxu0 0.0
  %190 = vmatprep.subr.mxu0 0.0
  %191 = vmatpush1.msra.mxu0 0.0
  %192 = vmatprep.subr.mxu0 0.0
  %193 = vmatpush1.msra.mxu0 0.0
  %194 = vmatprep.subr.mxu0 0.0
  %195 = vmatpush1.msra.mxu0 0.0
  %196 = vmatprep.subr.mxu0 0.0
  %197 = vmatpush1.msra.mxu0 0.0
  %198 = vmatprep.subr.mxu0 0.0
  %199 = vmatpush1.msra.mxu0 0.0
  %200 = vmatprep.subr.mxu0 0.0
  %201 = vmatpush1.msra.mxu0 0.0
  %202 = vmatprep.subr.mxu0 0.0
  %203 = vmatpush1.msra.mxu0 0.0
  %204 = vmatprep.subr.mxu0 0.0
  %205 = vmatpush1.msra.mxu0 0.0
  %206 = vmatprep.subr.mxu0 0.0
  %207 = vmatpush1.msra.mxu0 0.0
  %208 = vmatprep.subr.mxu0 0.0
  %209 = vmatpush1.msra.mxu0 0.0
  %210 = vmatprep.subr.mxu0 0.0
  %211 = vmatpush1.msra.mxu0 0.0
  %212 = vmatprep.subr.mxu0 0.0
  %213 = vmatpush1.msra.mxu0 0.0
  %214 = vmatprep.subr.mxu0 0.0
  %215 = vmatpush1.msra.mxu0 0.0
  %216 = vmatprep.subr.mxu0 0.0
  %217 = vmatpush1.msra.mxu0 0.0
  %218 = vmatprep.mubr.f32.mxu0 0.0
  %219 = vmatmul.mubr.f32.gmra.mrb[0].mxu0 %v152
  %v220 = vpop.f32.mrb[0].mxu0
  %v221 = vadd.f32 %v149, %v220
  %v222 = vpop.f32.mrb[0].mxu0
  %223 = vdwg.mxu0
  %v224 = vld [vmem:[%s1] sm:$0xff]
  %v225 = vld [vmem:[%s1 + $0x8] sm:$0xf]
  %v226 = vld [vmem:[%s4] sm:$0x3]
  %v227 = vlaneseq
  %v228 = vshrl.u32 %v227, 7
  %v229 = vsub.s32 2, %v228
  %v230 = vrot.slane %v54, %v229
  %vm231 = vcmask 15360
  %v233 = vsel %vm231, %v224, 0
  %v236 = vsel %vm231, %v225, 0
  %vm238 = vcmask 1041408
  %v240 = vsel %vm238, %v226, 0
  %242 = vmatprep.subr.mxu0 0.0
  %243 = vmatpush1.msra.mxu0 %v240
  %244 = vmatprep.subr.mxu0 0.0
  %245 = vmatpush1.msra.mxu0 0.0
  %246 = vmatprep.subr.mxu0 0.0
  %247 = vmatpush1.msra.mxu0 0.0
  %248 = vmatprep.subr.mxu0 0.0
  %249 = vmatpush1.msra.mxu0 0.0
  %250 = vmatprep.subr.mxu0 0.0
  %251 = vmatpush1.msra.mxu0 0.0
  %252 = vmatprep.subr.mxu0 0.0
  %253 = vmatpush1.msra.mxu0 0.0
  %254 = vmatprep.subr.mxu0 0.0
  %255 = vmatpush1.msra.mxu0 0.0
  %256 = vmatprep.subr.mxu0 0.0
  %257 = vmatpush1.msra.mxu0 0.0
  %258 = vmatprep.subr.mxu0 0.0
  %259 = vmatpush1.msra.mxu0 0.0
  %260 = vmatprep.subr.mxu0 0.0
  %261 = vmatpush1.msra.mxu0 0.0
  %262 = vmatprep.subr.mxu0 0.0
  %263 = vmatpush1.msra.mxu0 0.0
  %264 = vmatprep.subr.mxu0 0.0
  %265 = vmatpush1.msra.mxu0 0.0
  %266 = vmatprep.subr.mxu0 0.0
  %267 = vmatpush1.msra.mxu0 0.0
  %268 = vmatprep.subr.mxu0 0.0
  %269 = vmatpush1.msra.mxu0 0.0
  %270 = vmatprep.subr.mxu0 0.0
  %271 = vmatpush1.msra.mxu0 0.0
  %272 = vmatprep.subr.mxu0 0.0
  %273 = vmatpush1.msra.mxu0 0.0
  %274 = vmatprep.subr.mxu0 0.0
  %275 = vmatpush1.msra.mxu0 0.0
  %276 = vmatprep.subr.mxu0 0.0
  %277 = vmatpush1.msra.mxu0 0.0
  %278 = vmatprep.subr.mxu0 0.0
  %279 = vmatpush1.msra.mxu0 0.0
  %280 = vmatprep.subr.mxu0 0.0
  %281 = vmatpush1.msra.mxu0 0.0
  %282 = vmatprep.subr.mxu0 0.0
  %283 = vmatpush1.msra.mxu0 0.0
  %284 = vmatprep.subr.mxu0 0.0
  %285 = vmatpush1.msra.mxu0 0.0
  %286 = vmatprep.subr.mxu0 0.0
  %287 = vmatpush1.msra.mxu0 0.0
  %288 = vmatprep.subr.mxu0 0.0
  %289 = vmatpush1.msra.mxu0 0.0
  %290 = vmatprep.subr.mxu0 0.0
  %291 = vmatpush1.msra.mxu0 0.0
  %292 = vmatprep.subr.mxu0 0.0
  %293 = vmatpush1.msra.mxu0 0.0
  %294 = vmatprep.subr.mxu0 0.0
  %295 = vmatpush1.msra.mxu0 0.0
  %296 = vmatprep.subr.mxu0 0.0
  %297 = vmatpush1.msra.mxu0 0.0
  %298 = vmatprep.subr.mxu0 0.0
  %299 = vmatpush1.msra.mxu0 0.0
  %300 = vmatprep.subr.mxu0 0.0
  %301 = vmatpush1.msra.mxu0 0.0
  %302 = vmatprep.subr.mxu0 0.0
  %303 = vmatpush1.msra.mxu0 0.0
  %304 = vmatprep.subr.mxu0 0.0
  %305 = vmatpush1.msra.mxu0 0.0
  %306 = vmatprep.mubr.f32.mxu0 0.0
  %307 = vmatmul.mubr.f32.gmra.mrb[0].mxu0 %v233
  %v308 = vpop.f32.mrb[0].mxu0
  %v309 = vadd.f32 %v230, %v308
  %v310 = vpop.f32.mrb[0].mxu0
  %311 = vmatprep.mubr.f32.mxu0 0.0
  %312 = vmatmul.mubr.f32.gmra.mrb[0].mxu0 %v236
  %v313 = vpop.f32.mrb[0].mxu0
  %v314 = vadd.f32 %v230, %v313
  %v315 = vpop.f32.mrb[0].mxu0
  %316 = vdwg.mxu0
  %vm317 = vcmp.ge.f32.partialorder %v309, 0.0
  %vm318 = vcmp.ge.f32.partialorder %v314, 0.0
  %v319 = vmul.f32 %v309, 0.01
  %v320 = vmul.f32 %v314, 0.01
  %v321 = vsel %vm317, %v309, %v319
  %v322 = vsel %vm318, %v314, %v320
  %s323 = scalar_lea.vmem %s5, 32
  %v324 = vld [vmem:[%s323] sm:$0xff]
  %v325 = vld [vmem:[%s323 + $0x8] sm:$0xff]
  %v326 = vld [vmem:[%s323 + $0x10] sm:$0xff]
  %v327 = vld [vmem:[%s323 + $0x18] sm:$0xff]
  %v328 = vlaneseq
  %v329 = vshrl.u32 %v328, 7
  %v330 = vsub.s32 3, %v329
  %v331 = vrot.slane %v54, %v330
  %v333 = vsel %vm150, %v321, 0
  %v336 = vsel %vm150, %v322, 0
  %338 = vmatprep.subr.mxu0 0.0
  %339 = vmatpush1.msra.mxu0 %v324
  %340 = vmatprep.subr.mxu0 0.0
  %341 = vmatpush1.msra.mxu0 %v325
  %342 = vmatprep.subr.mxu0 0.0
  %343 = vmatpush1.msra.mxu0 %v326
  %344 = vmatprep.subr.mxu0 0.0
  %345 = vmatpush1.msra.mxu0 %v327
  %346 = vmatprep.subr.mxu0 0.0
  %347 = vmatpush1.msra.mxu0 0.0
  %348 = vmatprep.subr.mxu0 0.0
  %349 = vmatpush1.msra.mxu0 0.0
  %350 = vmatprep.subr.mxu0 0.0
  %351 = vmatpush1.msra.mxu0 0.0
  %352 = vmatprep.subr.mxu0 0.0
  %353 = vmatpush1.msra.mxu0 0.0
  %354 = vmatprep.subr.mxu0 0.0
  %355 = vmatpush1.msra.mxu0 0.0
  %356 = vmatprep.subr.mxu0 0.0
  %357 = vmatpush1.msra.mxu0 0.0
  %358 = vmatprep.subr.mxu0 0.0
  %359 = vmatpush1.msra.mxu0 0.0
  %360 = vmatprep.subr.mxu0 0.0
  %361 = vmatpush1.msra.mxu0 0.0
  %362 = vmatprep.subr.mxu0 0.0
  %363 = vmatpush1.msra.mxu0 0.0
  %364 = vmatprep.subr.mxu0 0.0
  %365 = vmatpush1.msra.mxu0 0.0
  %366 = vmatprep.subr.mxu0 0.0
  %367 = vmatpush1.msra.mxu0 0.0
  %368 = vmatprep.subr.mxu0 0.0
  %369 = vmatpush1.msra.mxu0 0.0
  %370 = vmatprep.subr.mxu0 0.0
  %371 = vmatpush1.msra.mxu0 0.0
  %372 = vmatprep.subr.mxu0 0.0
  %373 = vmatpush1.msra.mxu0 0.0
  %374 = vmatprep.subr.mxu0 0.0
  %375 = vmatpush1.msra.mxu0 0.0
  %376 = vmatprep.subr.mxu0 0.0
  %377 = vmatpush1.msra.mxu0 0.0
  %378 = vmatprep.subr.mxu0 0.0
  %379 = vmatpush1.msra.mxu0 0.0
  %380 = vmatprep.subr.mxu0 0.0
  %381 = vmatpush1.msra.mxu0 0.0
  %382 = vmatprep.subr.mxu0 0.0
  %383 = vmatpush1.msra.mxu0 0.0
  %384 = vmatprep.subr.mxu0 0.0
  %385 = vmatpush1.msra.mxu0 0.0
  %386 = vmatprep.subr.mxu0 0.0
  %387 = vmatpush1.msra.mxu0 0.0
  %388 = vmatprep.subr.mxu0 0.0
  %389 = vmatpush1.msra.mxu0 0.0
  %390 = vmatprep.subr.mxu0 0.0
  %391 = vmatpush1.msra.mxu0 0.0
  %392 = vmatprep.subr.mxu0 0.0
  %393 = vmatpush1.msra.mxu0 0.0
  %394 = vmatprep.subr.mxu0 0.0
  %395 = vmatpush1.msra.mxu0 0.0
  %396 = vmatprep.subr.mxu0 0.0
  %397 = vmatpush1.msra.mxu0 0.0
  %398 = vmatprep.subr.mxu0 0.0
  %399 = vmatpush1.msra.mxu0 0.0
  %400 = vmatprep.subr.mxu0 0.0
  %401 = vmatpush1.msra.mxu0 0.0
  %402 = vmatprep.mubr.f32.mxu0 0.0
  %403 = vmatmul.mubr.f32.gmra.mrb[0].mxu0 %v333
  %v404 = vpop.f32.mrb[0].mxu0
  %v405 = vadd.f32 %v331, %v404
  %v406 = vpop.f32.mrb[0].mxu0
  %407 = vmatprep.mubr.f32.mxu0 0.0
  %408 = vmatmul.mubr.f32.gmra.mrb[0].mxu0 %v336
  %v409 = vpop.f32.mrb[0].mxu0
  %v410 = vadd.f32 %v331, %v409
  %v411 = vpop.f32.mrb[0].mxu0
  %412 = vdwg.mxu0
  %v413 = vlaneseq
  %v414 = vshrl.u32 %v413, 7
  %v415 = vadd.s32 %v414, 8
  %v416 = vlaneseq
  %v417 = vand.u32 %v416, 127
  %v418 = vmul.u32 %v417, 6
  %v419 = vsub.s32 %v414, %v418
  %v420 = vsub.s32 %v415, %v418
  %vm421 = vcmp.ge.s32.totalorder %v419, 0
  %vm422 = vcmp.ge.s32.totalorder %v420, 0
  %vm423 = vcmp.lt.s32.totalorder %v419, 6
  %vm424 = vcmp.lt.s32.totalorder %v420, 6
  %vm425 = vmand %vm421, %vm423
  %vm426 = vmand %vm422, %vm424
  %v427 = vsel %vm425, 1, 0
  %v428 = vsel %vm426, 1, 0
  %v429 = vcvt.s32.f32 %v427
  %v430 = vcvt.s32.f32 %v428
  %vm431 = vcmp.eq.s32.totalorder %v419, 0
  %vm432 = vcmp.eq.s32.totalorder %v420, 0
  %v433 = vsel %vm431, 1, 0
  %v434 = vsel %vm432, 1, 0
  %v435 = vcvt.s32.f32 %v433
  %v436 = vcvt.s32.f32 %v434
  %v437 = vsel %vm231, %v435, 0.0
  %438 = vadd.xlane.f32.xlu0 %v437
  %v439 = vpop.xlane.xlu0 %438
  %vm440 = vcmask 11264
  %v441 = vsel %vm440, %v436, 0.0
  %442 = vadd.xlane.f32.xlu0 %v441
  %v443 = vpop.xlane.xlu0 %442
  %vm444 = vcmp.gt.f32.partialorder %v439, 0.5
  %vm445 = vcmp.gt.f32.partialorder %v443, 0.5
  %v447 = vsel %vm231, %v435, 0
  %v450 = vsel %vm231, %v436, 0
  %v453 = vsel %vm238, %v221, 0
  %455 = vmatprep.subr.mxu0 0.0
  %456 = vmatpush1.msra.mxu0 %v453
  %457 = vmatprep.subr.mxu0 0.0
  %458 = vmatpush1.msra.mxu0 0.0
  %459 = vmatprep.subr.mxu0 0.0
  %460 = vmatpush1.msra.mxu0 0.0
  %461 = vmatprep.subr.mxu0 0.0
  %462 = vmatpush1.msra.mxu0 0.0
  %463 = vmatprep.subr.mxu0 0.0
  %464 = vmatpush1.msra.mxu0 0.0
  %465 = vmatprep.subr.mxu0 0.0
  %466 = vmatpush1.msra.mxu0 0.0
  %467 = vmatprep.subr.mxu0 0.0
  %468 = vmatpush1.msra.mxu0 0.0
  %469 = vmatprep.subr.mxu0 0.0
  %470 = vmatpush1.msra.mxu0 0.0
  %471 = vmatprep.subr.mxu0 0.0
  %472 = vmatpush1.msra.mxu0 0.0
  %473 = vmatprep.subr.mxu0 0.0
  %474 = vmatpush1.msra.mxu0 0.0
  %475 = vmatprep.subr.mxu0 0.0
  %476 = vmatpush1.msra.mxu0 0.0
  %477 = vmatprep.subr.mxu0 0.0
  %478 = vmatpush1.msra.mxu0 0.0
  %479 = vmatprep.subr.mxu0 0.0
  %480 = vmatpush1.msra.mxu0 0.0
  %481 = vmatprep.subr.mxu0 0.0
  %482 = vmatpush1.msra.mxu0 0.0
  %483 = vmatprep.subr.mxu0 0.0
  %484 = vmatpush1.msra.mxu0 0.0
  %485 = vmatprep.subr.mxu0 0.0
  %486 = vmatpush1.msra.mxu0 0.0
  %487 = vmatprep.subr.mxu0 0.0
  %488 = vmatpush1.msra.mxu0 0.0
  %489 = vmatprep.subr.mxu0 0.0
  %490 = vmatpush1.msra.mxu0 0.0
  %491 = vmatprep.subr.mxu0 0.0
  %492 = vmatpush1.msra.mxu0 0.0
  %493 = vmatprep.subr.mxu0 0.0
  %494 = vmatpush1.msra.mxu0 0.0
  %495 = vmatprep.subr.mxu0 0.0
  %496 = vmatpush1.msra.mxu0 0.0
  %497 = vmatprep.subr.mxu0 0.0
  %498 = vmatpush1.msra.mxu0 0.0
  %499 = vmatprep.subr.mxu0 0.0
  %500 = vmatpush1.msra.mxu0 0.0
  %501 = vmatprep.subr.mxu0 0.0
  %502 = vmatpush1.msra.mxu0 0.0
  %503 = vmatprep.subr.mxu0 0.0
  %504 = vmatpush1.msra.mxu0 0.0
  %505 = vmatprep.subr.mxu0 0.0
  %506 = vmatpush1.msra.mxu0 0.0
  %507 = vmatprep.subr.mxu0 0.0
  %508 = vmatpush1.msra.mxu0 0.0
  %509 = vmatprep.subr.mxu0 0.0
  %510 = vmatpush1.msra.mxu0 0.0
  %511 = vmatprep.subr.mxu0 0.0
  %512 = vmatpush1.msra.mxu0 0.0
  %513 = vmatprep.subr.mxu0 0.0
  %514 = vmatpush1.msra.mxu0 0.0
  %515 = vmatprep.subr.mxu0 0.0
  %516 = vmatpush1.msra.mxu0 0.0
  %517 = vmatprep.subr.mxu0 0.0
  %518 = vmatpush1.msra.mxu0 0.0
  %519 = vmatprep.mubr.f32.mxu0 0.0
  %520 = vmatmul.mubr.f32.gmra.mrb[0].mxu0 %v447
  %v521 = vpop.f32.mrb[0].mxu0
  %v522 = vadd.f32 0.0, %v521
  %v523 = vpop.f32.mrb[0].mxu0
  %524 = vmatprep.mubr.f32.mxu0 0.0
  %525 = vmatmul.mubr.f32.gmra.mrb[0].mxu0 %v450
  %v526 = vpop.f32.mrb[0].mxu0
  %v527 = vadd.f32 0.0, %v526
  %v528 = vpop.f32.mrb[0].mxu0
  %529 = vdwg.mxu0
  %v530 = vsel %vm444, 1, 0
  %v531 = vsel %vm445, 1, 0
  %vm532 = vcmp.eq.s32.totalorder %v530, 1
  %vm533 = vcmp.eq.s32.totalorder %v531, 1
  %v534 = vsel %vm532, %v522, %v405
  %v535 = vsel %vm533, %v527, %v410
  %vm536 = vcmp.eq.s32.totalorder %v417, 31
  %v537 = vld [vmem:[%s2] sm:$0xff]
  %v538 = vld [vmem:[%s2 + $0x8] sm:$0xf]
  %540 = vset.pattern.permute.xlu0 0
  %541 = vperm.xlu0 %540, %v537
  %v542 = vpop.permute.xlu0 %541
  %545 = vset.pattern.permute.xlu0 0
  %546 = vperm.xlu0 %545, %v538
  %v547 = vpop.permute.xlu0 %546
  %v549 = vsel %vm536, %v542, %v534
  %v550 = vsel %vm536, %v547, %v535
  %v552 = vsel %vm231, %v429, 0
  %v555 = vsel %vm231, %v430, 0
  %557 = vmatprep.subr.mxu0 0.0
  %558 = vmatpush1.xpose.msra.mxu0 %v552
  %559 = vmatprep.subr.mxu0 0.0
  %560 = vmatpush1.xpose.msra.mxu0 %v555
  %561 = vmatprep.subr.mxu0 0.0
  %562 = vmatpush1.xpose.msra.mxu0 0.0
  %563 = vmatprep.subr.mxu0 0.0
  %564 = vmatpush1.xpose.msra.mxu0 0.0
  %565 = vmatprep.subr.mxu0 0.0
  %566 = vmatpush1.xpose.msra.mxu0 0.0
  %567 = vmatprep.subr.mxu0 0.0
  %568 = vmatpush1.xpose.msra.mxu0 0.0
  %569 = vmatprep.subr.mxu0 0.0
  %570 = vmatpush1.xpose.msra.mxu0 0.0
  %571 = vmatprep.subr.mxu0 0.0
  %572 = vmatpush1.xpose.msra.mxu0 0.0
  %573 = vmatprep.subr.mxu0 0.0
  %574 = vmatpush1.xpose.msra.mxu0 0.0
  %575 = vmatprep.subr.mxu0 0.0
  %576 = vmatpush1.xpose.msra.mxu0 0.0
  %577 = vmatprep.subr.mxu0 0.0
  %578 = vmatpush1.xpose.msra.mxu0 0.0
  %579 = vmatprep.subr.mxu0 0.0
  %580 = vmatpush1.xpose.msra.mxu0 0.0
  %581 = vmatprep.subr.mxu0 0.0
  %582 = vmatpush1.xpose.msra.mxu0 0.0
  %583 = vmatprep.subr.mxu0 0.0
  %584 = vmatpush1.xpose.msra.mxu0 0.0
  %585 = vmatprep.subr.mxu0 0.0
  %586 = vmatpush1.xpose.msra.mxu0 0.0
  %587 = vmatprep.subr.mxu0 0.0
  %588 = vmatpush1.xpose.msra.mxu0 0.0
  %589 = vmatprep.subr.mxu0 0.0
  %590 = vmatpush1.xpose.msra.mxu0 0.0
  %591 = vmatprep.subr.mxu0 0.0
  %592 = vmatpush1.xpose.msra.mxu0 0.0
  %593 = vmatprep.subr.mxu0 0.0
  %594 = vmatpush1.xpose.msra.mxu0 0.0
  %595 = vmatprep.subr.mxu0 0.0
  %596 = vmatpush1.xpose.msra.mxu0 0.0
  %597 = vmatprep.subr.mxu0 0.0
  %598 = vmatpush1.xpose.msra.mxu0 0.0
  %599 = vmatprep.subr.mxu0 0.0
  %600 = vmatpush1.xpose.msra.mxu0 0.0
  %601 = vmatprep.subr.mxu0 0.0
  %602 = vmatpush1.xpose.msra.mxu0 0.0
  %603 = vmatprep.subr.mxu0 0.0
  %604 = vmatpush1.xpose.msra.mxu0 0.0
  %605 = vmatprep.subr.mxu0 0.0
  %606 = vmatpush1.xpose.msra.mxu0 0.0
  %607 = vmatprep.subr.mxu0 0.0
  %608 = vmatpush1.xpose.msra.mxu0 0.0
  %609 = vmatprep.subr.mxu0 0.0
  %610 = vmatpush1.xpose.msra.mxu0 0.0
  %611 = vmatprep.subr.mxu0 0.0
  %612 = vmatpush1.xpose.msra.mxu0 0.0
  %613 = vmatprep.subr.mxu0 0.0
  %614 = vmatpush1.xpose.msra.mxu0 0.0
  %615 = vmatprep.subr.mxu0 0.0
  %616 = vmatpush1.xpose.msra.mxu0 0.0
  %617 = vmatprep.subr.mxu0 0.0
  %618 = vmatpush1.xpose.msra.mxu0 0.0
  %619 = vmatprep.subr.mxu0 0.0
  %620 = vmatpush1.xpose.msra.mxu0 0.0
  %621 = vmatprep.mubr.f32.mxu0 0.0
  %622 = vmatmul.mubr.f32.gmra.mrb[0].mxu0 %v552
  %v623 = vpop.f32.mrb[0].mxu0
  %v624 = vadd.f32 0.0, %v623
  %v625 = vpop.f32.mrb[0].mxu0
  %626 = vmatprep.mubr.f32.mxu0 0.0
  %627 = vmatmul.mubr.f32.gmra.mrb[0].mxu0 %v555
  %v628 = vpop.f32.mrb[0].mxu0
  %v629 = vadd.f32 0.0, %v628
  %v630 = vpop.f32.mrb[0].mxu0
  %631 = vdwg.mxu0
  %vm632 = vcmp.gt.f32.partialorder %v624, 0.5
  %vm633 = vcmp.gt.f32.partialorder %v629, 0.5
  %vm634 = vcmp.le.s32.totalorder %v417, %v414
  %vm635 = vcmp.le.s32.totalorder %v417, %v415
  %vm636 = vmand %vm632, %vm634
  %vm637 = vmand %vm633, %vm635
  %v638 = vsel %vm636, 0.0, -1e+30
  %v639 = vsel %vm637, 0.0, -1e+30
  %v640 = vld [vmem:[%s10] sm:$0xff]
  %v641 = vld [vmem:[%s10 + $0x8] sm:$0x1]
  %v642 = vld [vmem:[%s7] sm:$0xff]
  %v643 = vld [vmem:[%s7 + $0x8] sm:$0xff]
  %v644 = vld [vmem:[%s7 + $0x10] sm:$0xff]
  %v645 = vld [vmem:[%s7 + $0x18] sm:$0xff]
  %v646 = vld [vmem:[%s8] sm:$0x1]
  %v648 = vlaneseq
  %v649 = vshrl.u32 %v648, 7
  %v650 = vsub.s32 0, %v649
  %v651 = vrot.slane %v646, %v650
  %v654 = vsel %vm150, %v549, 0
  %v657 = vsel %vm150, %v550, 0
  %659 = vmatprep.subr.mxu0 0.0
  %660 = vmatpush1.msra.mxu0 %v642
  %661 = vmatprep.subr.mxu0 0.0
  %662 = vmatpush1.msra.mxu0 %v643
  %663 = vmatprep.subr.mxu0 0.0
  %664 = vmatpush1.msra.mxu0 %v644
  %665 = vmatprep.subr.mxu0 0.0
  %666 = vmatpush1.msra.mxu0 %v645
  %667 = vmatprep.subr.mxu0 0.0
  %668 = vmatpush1.msra.mxu0 0.0
  %669 = vmatprep.subr.mxu0 0.0
  %670 = vmatpush1.msra.mxu0 0.0
  %671 = vmatprep.subr.mxu0 0.0
  %672 = vmatpush1.msra.mxu0 0.0
  %673 = vmatprep.subr.mxu0 0.0
  %674 = vmatpush1.msra.mxu0 0.0
  %675 = vmatprep.subr.mxu0 0.0
  %676 = vmatpush1.msra.mxu0 0.0
  %677 = vmatprep.subr.mxu0 0.0
  %678 = vmatpush1.msra.mxu0 0.0
  %679 = vmatprep.subr.mxu0 0.0
  %680 = vmatpush1.msra.mxu0 0.0
  %681 = vmatprep.subr.mxu0 0.0
  %682 = vmatpush1.msra.mxu0 0.0
  %683 = vmatprep.subr.mxu0 0.0
  %684 = vmatpush1.msra.mxu0 0.0
  %685 = vmatprep.subr.mxu0 0.0
  %686 = vmatpush1.msra.mxu0 0.0
  %687 = vmatprep.subr.mxu0 0.0
  %688 = vmatpush1.msra.mxu0 0.0
  %689 = vmatprep.subr.mxu0 0.0
  %690 = vmatpush1.msra.mxu0 0.0
  %691 = vmatprep.subr.mxu0 0.0
  %692 = vmatpush1.msra.mxu0 0.0
  %693 = vmatprep.subr.mxu0 0.0
  %694 = vmatpush1.msra.mxu0 0.0
  %695 = vmatprep.subr.mxu0 0.0
  %696 = vmatpush1.msra.mxu0 0.0
  %697 = vmatprep.subr.mxu0 0.0
  %698 = vmatpush1.msra.mxu0 0.0
  %699 = vmatprep.subr.mxu0 0.0
  %700 = vmatpush1.msra.mxu0 0.0
  %701 = vmatprep.subr.mxu0 0.0
  %702 = vmatpush1.msra.mxu0 0.0
  %703 = vmatprep.subr.mxu0 0.0
  %704 = vmatpush1.msra.mxu0 0.0
  %705 = vmatprep.subr.mxu0 0.0
  %706 = vmatpush1.msra.mxu0 0.0
  %707 = vmatprep.subr.mxu0 0.0
  %708 = vmatpush1.msra.mxu0 0.0
  %709 = vmatprep.subr.mxu0 0.0
  %710 = vmatpush1.msra.mxu0 0.0
  %711 = vmatprep.subr.mxu0 0.0
  %712 = vmatpush1.msra.mxu0 0.0
  %713 = vmatprep.subr.mxu0 0.0
  %714 = vmatpush1.msra.mxu0 0.0
  %715 = vmatprep.subr.mxu0 0.0
  %716 = vmatpush1.msra.mxu0 0.0
  %717 = vmatprep.subr.mxu0 0.0
  %718 = vmatpush1.msra.mxu0 0.0
  %719 = vmatprep.subr.mxu0 0.0
  %720 = vmatpush1.msra.mxu0 0.0
  %721 = vmatprep.subr.mxu0 0.0
  %722 = vmatpush1.msra.mxu0 0.0
  %723 = vmatprep.mubr.f32.mxu0 0.0
  %724 = vmatmul.mubr.f32.gmra.mrb[0].mxu0 %v654
  %v725 = vpop.f32.mrb[0].mxu0
  %v726 = vadd.f32 %v651, %v725
  %v727 = vpop.f32.mrb[0].mxu0
  %728 = vmatprep.mubr.f32.mxu0 0.0
  %729 = vmatmul.mubr.f32.gmra.mrb[0].mxu0 %v657
  %v730 = vpop.f32.mrb[0].mxu0
  %v731 = vadd.f32 %v651, %v730
  %v732 = vpop.f32.mrb[0].mxu0
  %733 = vdwg.mxu0
  %vm734 = vcmp.ge.s32.totalorder %v417, 0
  %vm735 = vcmp.lt.s32.totalorder %v417, 8
  %vm736 = vmand %vm734, %vm735
  %v737 = vsel %vm736, 0.35355338, 0.0
  %739 = vrot.lane.b32.xlu0 %v737, 32
  %v740 = vpop.permute.xlu0 %739
  %v742 = vmul.f32 %v726, %v740
  %v743 = vmul.f32 %v731, %v740
  %v744 = vsel %vm736, 1.0, 0.0
  %746 = vrot.lane.b32.xlu0 %v744, 64
  %v747 = vpop.permute.xlu0 %746
  %v749 = vmul.f32 %v726, %v747
  %v750 = vmul.f32 %v731, %v747
  %753 = vrot.lane.b32.xlu0 %v742, 96
  %v754 = vpop.permute.xlu0 %753
  %755 = vrot.lane.b32.xlu0 %v743, 96
  %v756 = vpop.permute.xlu0 %755
  %v758 = vsel %vm150, %v726, 0
  %v761 = vsel %vm150, %v731, 0
  %v763 = vsel %vm150, %v754, 0
  %v765 = vsel %vm150, %v756, 0
  %767 = vmatprep.subr.mxu0 0.0
  %768 = vmatpush1.xpose.msra.mxu0 %v763
  %769 = vmatprep.subr.mxu0 0.0
  %770 = vmatpush1.xpose.msra.mxu0 %v765
  %771 = vmatprep.subr.mxu0 0.0
  %772 = vmatpush1.xpose.msra.mxu0 0.0
  %773 = vmatprep.subr.mxu0 0.0
  %774 = vmatpush1.xpose.msra.mxu0 0.0
  %775 = vmatprep.subr.mxu0 0.0
  %776 = vmatpush1.xpose.msra.mxu0 0.0
  %777 = vmatprep.subr.mxu0 0.0
  %778 = vmatpush1.xpose.msra.mxu0 0.0
  %779 = vmatprep.subr.mxu0 0.0
  %780 = vmatpush1.xpose.msra.mxu0 0.0
  %781 = vmatprep.subr.mxu0 0.0
  %782 = vmatpush1.xpose.msra.mxu0 0.0
  %783 = vmatprep.subr.mxu0 0.0
  %784 = vmatpush1.xpose.msra.mxu0 0.0
  %785 = vmatprep.subr.mxu0 0.0
  %786 = vmatpush1.xpose.msra.mxu0 0.0
  %787 = vmatprep.subr.mxu0 0.0
  %788 = vmatpush1.xpose.msra.mxu0 0.0
  %789 = vmatprep.subr.mxu0 0.0
  %790 = vmatpush1.xpose.msra.mxu0 0.0
  %791 = vmatprep.subr.mxu0 0.0
  %792 = vmatpush1.xpose.msra.mxu0 0.0
  %793 = vmatprep.subr.mxu0 0.0
  %794 = vmatpush1.xpose.msra.mxu0 0.0
  %795 = vmatprep.subr.mxu0 0.0
  %796 = vmatpush1.xpose.msra.mxu0 0.0
  %797 = vmatprep.subr.mxu0 0.0
  %798 = vmatpush1.xpose.msra.mxu0 0.0
  %799 = vmatprep.subr.mxu0 0.0
  %800 = vmatpush1.xpose.msra.mxu0 0.0
  %801 = vmatprep.subr.mxu0 0.0
  %802 = vmatpush1.xpose.msra.mxu0 0.0
  %803 = vmatprep.subr.mxu0 0.0
  %804 = vmatpush1.xpose.msra.mxu0 0.0
  %805 = vmatprep.subr.mxu0 0.0
  %806 = vmatpush1.xpose.msra.mxu0 0.0
  %807 = vmatprep.subr.mxu0 0.0
  %808 = vmatpush1.xpose.msra.mxu0 0.0
  %809 = vmatprep.subr.mxu0 0.0
  %810 = vmatpush1.xpose.msra.mxu0 0.0
  %811 = vmatprep.subr.mxu0 0.0
  %812 = vmatpush1.xpose.msra.mxu0 0.0
  %813 = vmatprep.subr.mxu0 0.0
  %814 = vmatpush1.xpose.msra.mxu0 0.0
  %815 = vmatprep.subr.mxu0 0.0
  %816 = vmatpush1.xpose.msra.mxu0 0.0
  %817 = vmatprep.subr.mxu0 0.0
  %818 = vmatpush1.xpose.msra.mxu0 0.0
  %819 = vmatprep.subr.mxu0 0.0
  %820 = vmatpush1.xpose.msra.mxu0 0.0
  %821 = vmatprep.subr.mxu0 0.0
  %822 = vmatpush1.xpose.msra.mxu0 0.0
  %823 = vmatprep.subr.mxu0 0.0
  %824 = vmatpush1.xpose.msra.mxu0 0.0
  %825 = vmatprep.subr.mxu0 0.0
  %826 = vmatpush1.xpose.msra.mxu0 0.0
  %827 = vmatprep.subr.mxu0 0.0
  %828 = vmatpush1.xpose.msra.mxu0 0.0
  %829 = vmatprep.subr.mxu0 0.0
  %830 = vmatpush1.xpose.msra.mxu0 0.0
  %831 = vmatprep.mubr.f32.mxu0 0.0
  %832 = vmatmul.mubr.f32.gmra.mrb[0].mxu0 %v758
  %v833 = vpop.f32.mrb[0].mxu0
  %v834 = vadd.f32 %v638, %v833
  %v835 = vpop.f32.mrb[0].mxu0
  %836 = vmatprep.mubr.f32.mxu0 0.0
  %837 = vmatmul.mubr.f32.gmra.mrb[0].mxu0 %v761
  %v838 = vpop.f32.mrb[0].mxu0
  %v839 = vadd.f32 %v639, %v838
  %v840 = vpop.f32.mrb[0].mxu0
  %841 = vdwg.mxu0
  %vm842 = vcmask 97280
  %v843 = vsel %vm842, %v834, -inf
  %844 = vmax.xlane.f32.xlu0 %v843
  %v845 = vpop.xlane.xlu0 %844
  %vm846 = vcmask 93184
  %v847 = vsel %vm846, %v839, -inf
  %848 = vmax.xlane.f32.xlu0 %v847
  %v849 = vpop.xlane.xlu0 %848
  %v850 = vsub.f32 %v834, %v845
  %v851 = vsub.f32 %v839, %v849
  %v852 = vmul.f32 %v850, 1.442695
  %v853 = vpow.pop %v852
  %v854 = vmul.f32 %v851, 1.442695
  %v855 = vpow.pop %v854
  %v856 = vsel %vm842, %v853, 0.0
  %857 = vadd.xlane.f32.xlu0 %v856
  %v858 = vpop.xlane.xlu0 %857
  %v859 = vsel %vm846, %v855, 0.0
  %860 = vadd.xlane.f32.xlu0 %v859
  %v861 = vpop.xlane.xlu0 %860
  %v862 = vrcp.pop %v858
  %v863 = vrcp.pop %v861
  %v864 = vmul.f32 %v853, %v862
  %v865 = vmul.f32 %v855, %v863
  %vm866 = vcmp.ge.s32.totalorder %v417, 8
  %vm867 = vcmp.lt.s32.totalorder %v417, 16
  %vm868 = vmand %vm866, %vm867
  %v869 = vsel %vm868, 0.35355338, 0.0
  %871 = vrot.lane.b32.xlu0 %v869, 32
  %v872 = vpop.permute.xlu0 %871
  %v874 = vmul.f32 %v726, %v872
  %v875 = vmul.f32 %v731, %v872
  %v876 = vsel %vm868, 1.0, 0.0
  %878 = vrot.lane.b32.xlu0 %v876, 64
  %v879 = vpop.permute.xlu0 %878
  %v881 = vmul.f32 %v726, %v879
  %v882 = vmul.f32 %v731, %v879
  %885 = vrot.lane.b32.xlu0 %v874, 96
  %v886 = vpop.permute.xlu0 %885
  %887 = vrot.lane.b32.xlu0 %v875, 96
  %v888 = vpop.permute.xlu0 %887
  %v889 = vsel %vm150, %v886, 0
  %v891 = vsel %vm150, %v888, 0
  %893 = vmatprep.subr.mxu0 0.0
  %894 = vmatpush1.xpose.msra.mxu0 %v889
  %895 = vmatprep.subr.mxu0 0.0
  %896 = vmatpush1.xpose.msra.mxu0 %v891
  %897 = vmatprep.subr.mxu0 0.0
  %898 = vmatpush1.xpose.msra.mxu0 0.0
  %899 = vmatprep.subr.mxu0 0.0
  %900 = vmatpush1.xpose.msra.mxu0 0.0
  %901 = vmatprep.subr.mxu0 0.0
  %902 = vmatpush1.xpose.msra.mxu0 0.0
  %903 = vmatprep.subr.mxu0 0.0
  %904 = vmatpush1.xpose.msra.mxu0 0.0
  %905 = vmatprep.subr.mxu0 0.0
  %906 = vmatpush1.xpose.msra.mxu0 0.0
  %907 = vmatprep.subr.mxu0 0.0
  %908 = vmatpush1.xpose.msra.mxu0 0.0
  %909 = vmatprep.subr.mxu0 0.0
  %910 = vmatpush1.xpose.msra.mxu0 0.0
  %911 = vmatprep.subr.mxu0 0.0
  %912 = vmatpush1.xpose.msra.mxu0 0.0
  %913 = vmatprep.subr.mxu0 0.0
  %914 = vmatpush1.xpose.msra.mxu0 0.0
  %915 = vmatprep.subr.mxu0 0.0
  %916 = vmatpush1.xpose.msra.mxu0 0.0
  %917 = vmatprep.subr.mxu0 0.0
  %918 = vmatpush1.xpose.msra.mxu0 0.0
  %919 = vmatprep.subr.mxu0 0.0
  %920 = vmatpush1.xpose.msra.mxu0 0.0
  %921 = vmatprep.subr.mxu0 0.0
  %922 = vmatpush1.xpose.msra.mxu0 0.0
  %923 = vmatprep.subr.mxu0 0.0
  %924 = vmatpush1.xpose.msra.mxu0 0.0
  %925 = vmatprep.subr.mxu0 0.0
  %926 = vmatpush1.xpose.msra.mxu0 0.0
  %927 = vmatprep.subr.mxu0 0.0
  %928 = vmatpush1.xpose.msra.mxu0 0.0
  %929 = vmatprep.subr.mxu0 0.0
  %930 = vmatpush1.xpose.msra.mxu0 0.0
  %931 = vmatprep.subr.mxu0 0.0
  %932 = vmatpush1.xpose.msra.mxu0 0.0
  %933 = vmatprep.subr.mxu0 0.0
  %934 = vmatpush1.xpose.msra.mxu0 0.0
  %935 = vmatprep.subr.mxu0 0.0
  %936 = vmatpush1.xpose.msra.mxu0 0.0
  %937 = vmatprep.subr.mxu0 0.0
  %938 = vmatpush1.xpose.msra.mxu0 0.0
  %939 = vmatprep.subr.mxu0 0.0
  %940 = vmatpush1.xpose.msra.mxu0 0.0
  %941 = vmatprep.subr.mxu0 0.0
  %942 = vmatpush1.xpose.msra.mxu0 0.0
  %943 = vmatprep.subr.mxu0 0.0
  %944 = vmatpush1.xpose.msra.mxu0 0.0
  %945 = vmatprep.subr.mxu0 0.0
  %946 = vmatpush1.xpose.msra.mxu0 0.0
  %947 = vmatprep.subr.mxu0 0.0
  %948 = vmatpush1.xpose.msra.mxu0 0.0
  %949 = vmatprep.subr.mxu0 0.0
  %950 = vmatpush1.xpose.msra.mxu0 0.0
  %951 = vmatprep.subr.mxu0 0.0
  %952 = vmatpush1.xpose.msra.mxu0 0.0
  %953 = vmatprep.subr.mxu0 0.0
  %954 = vmatpush1.xpose.msra.mxu0 0.0
  %955 = vmatprep.subr.mxu0 0.0
  %956 = vmatpush1.xpose.msra.mxu0 0.0
  %957 = vmatprep.mubr.f32.mxu0 0.0
  %958 = vmatmul.mubr.f32.gmra.mrb[0].mxu0 %v758
  %v959 = vpop.f32.mrb[0].mxu0
  %v960 = vadd.f32 %v638, %v959
  %v961 = vpop.f32.mrb[0].mxu0
  %962 = vmatprep.mubr.f32.mxu0 0.0
  %963 = vmatmul.mubr.f32.gmra.mrb[0].mxu0 %v761
  %v964 = vpop.f32.mrb[0].mxu0
  %v965 = vadd.f32 %v639, %v964
  %v966 = vpop.f32.mrb[0].mxu0
  %967 = vdwg.mxu0
  %v968 = vsel %vm842, %v960, -inf
  %969 = vmax.xlane.f32.xlu0 %v968
  %v970 = vpop.xlane.xlu0 %969
  %v971 = vsel %vm846, %v965, -inf
  %972 = vmax.xlane.f32.xlu0 %v971
  %v973 = vpop.xlane.xlu0 %972
  %v974 = vsub.f32 %v960, %v970
  %v975 = vsub.f32 %v965, %v973
  %v976 = vmul.f32 %v974, 1.442695
  %v977 = vpow.pop %v976
  %v978 = vmul.f32 %v975, 1.442695
  %v979 = vpow.pop %v978
  %v980 = vsel %vm842, %v977, 0.0
  %981 = vadd.xlane.f32.xlu0 %v980
  %v982 = vpop.xlane.xlu0 %981
  %v983 = vsel %vm846, %v979, 0.0
  %984 = vadd.xlane.f32.xlu0 %v983
  %v985 = vpop.xlane.xlu0 %984
  %v986 = vrcp.pop %v982
  %v987 = vrcp.pop %v985
  %v988 = vmul.f32 %v977, %v986
  %v989 = vmul.f32 %v979, %v987
  %992 = vrot.lane.b32.xlu0 %v881, 64
  %v993 = vpop.permute.xlu0 %992
  %994 = vrot.lane.b32.xlu0 %v882, 64
  %v995 = vpop.permute.xlu0 %994
  %v998 = vsel %vm842, %v988, 0
  %v1001 = vsel %vm842, %v989, 0
  %vm1003 = vcmask 1043456
  %v1004 = vsel %vm1003, %v995, 0
  %1006 = vmatprep.subr.mxu0 0.0
  %1007 = vmatpush1.msra.mxu0 %v993
  %1008 = vmatprep.subr.mxu0 0.0
  %1009 = vmatpush1.msra.mxu0 %v1004
  %1010 = vmatprep.subr.mxu0 0.0
  %1011 = vmatpush1.msra.mxu0 0.0
  %1012 = vmatprep.subr.mxu0 0.0
  %1013 = vmatpush1.msra.mxu0 0.0
  %1014 = vmatprep.subr.mxu0 0.0
  %1015 = vmatpush1.msra.mxu0 0.0
  %1016 = vmatprep.subr.mxu0 0.0
  %1017 = vmatpush1.msra.mxu0 0.0
  %1018 = vmatprep.subr.mxu0 0.0
  %1019 = vmatpush1.msra.mxu0 0.0
  %1020 = vmatprep.subr.mxu0 0.0
  %1021 = vmatpush1.msra.mxu0 0.0
  %1022 = vmatprep.subr.mxu0 0.0
  %1023 = vmatpush1.msra.mxu0 0.0
  %1024 = vmatprep.subr.mxu0 0.0
  %1025 = vmatpush1.msra.mxu0 0.0
  %1026 = vmatprep.subr.mxu0 0.0
  %1027 = vmatpush1.msra.mxu0 0.0
  %1028 = vmatprep.subr.mxu0 0.0
  %1029 = vmatpush1.msra.mxu0 0.0
  %1030 = vmatprep.subr.mxu0 0.0
  %1031 = vmatpush1.msra.mxu0 0.0
  %1032 = vmatprep.subr.mxu0 0.0
  %1033 = vmatpush1.msra.mxu0 0.0
  %1034 = vmatprep.subr.mxu0 0.0
  %1035 = vmatpush1.msra.mxu0 0.0
  %1036 = vmatprep.subr.mxu0 0.0
  %1037 = vmatpush1.msra.mxu0 0.0
  %1038 = vmatprep.subr.mxu0 0.0
  %1039 = vmatpush1.msra.mxu0 0.0
  %1040 = vmatprep.subr.mxu0 0.0
  %1041 = vmatpush1.msra.mxu0 0.0
  %1042 = vmatprep.subr.mxu0 0.0
  %1043 = vmatpush1.msra.mxu0 0.0
  %1044 = vmatprep.subr.mxu0 0.0
  %1045 = vmatpush1.msra.mxu0 0.0
  %1046 = vmatprep.subr.mxu0 0.0
  %1047 = vmatpush1.msra.mxu0 0.0
  %1048 = vmatprep.subr.mxu0 0.0
  %1049 = vmatpush1.msra.mxu0 0.0
  %1050 = vmatprep.subr.mxu0 0.0
  %1051 = vmatpush1.msra.mxu0 0.0
  %1052 = vmatprep.subr.mxu0 0.0
  %1053 = vmatpush1.msra.mxu0 0.0
  %1054 = vmatprep.subr.mxu0 0.0
  %1055 = vmatpush1.msra.mxu0 0.0
  %1056 = vmatprep.subr.mxu0 0.0
  %1057 = vmatpush1.msra.mxu0 0.0
  %1058 = vmatprep.subr.mxu0 0.0
  %1059 = vmatpush1.msra.mxu0 0.0
  %1060 = vmatprep.subr.mxu0 0.0
  %1061 = vmatpush1.msra.mxu0 0.0
  %1062 = vmatprep.subr.mxu0 0.0
  %1063 = vmatpush1.msra.mxu0 0.0
  %1064 = vmatprep.subr.mxu0 0.0
  %1065 = vmatpush1.msra.mxu0 0.0
  %1066 = vmatprep.subr.mxu0 0.0
  %1067 = vmatpush1.msra.mxu0 0.0
  %1068 = vmatprep.subr.mxu0 0.0
  %1069 = vmatpush1.msra.mxu0 0.0
  %1070 = vmatprep.mubr.f32.mxu0 0.0
  %1071 = vmatmul.mubr.f32.gmra.mrb[0].mxu0 %v998
  %v1072 = vpop.f32.mrb[0].mxu0
  %v1073 = vadd.f32 0.0, %v1072
  %v1074 = vpop.f32.mrb[0].mxu0
  %1075 = vmatprep.mubr.f32.mxu0 0.0
  %1076 = vmatmul.mubr.f32.gmra.mrb[0].mxu0 %v1001
  %v1077 = vpop.f32.mrb[0].mxu0
  %v1078 = vadd.f32 0.0, %v1077
  %v1079 = vpop.f32.mrb[0].mxu0
  %1080 = vdwg.mxu0
  %1083 = vrot.lane.b32.xlu0 %v749, 64
  %v1084 = vpop.permute.xlu0 %1083
  %1085 = vrot.lane.b32.xlu0 %v750, 64
  %v1086 = vpop.permute.xlu0 %1085
  %v1089 = vsel %vm842, %v864, 0
  %v1092 = vsel %vm842, %v865, 0
  %v1094 = vsel %vm1003, %v1086, 0
  %1096 = vmatprep.subr.mxu0 0.0
  %1097 = vmatpush1.msra.mxu0 %v1084
  %1098 = vmatprep.subr.mxu0 0.0
  %1099 = vmatpush1.msra.mxu0 %v1094
  %1100 = vmatprep.subr.mxu0 0.0
  %1101 = vmatpush1.msra.mxu0 0.0
  %1102 = vmatprep.subr.mxu0 0.0
  %1103 = vmatpush1.msra.mxu0 0.0
  %1104 = vmatprep.subr.mxu0 0.0
  %1105 = vmatpush1.msra.mxu0 0.0
  %1106 = vmatprep.subr.mxu0 0.0
  %1107 = vmatpush1.msra.mxu0 0.0
  %1108 = vmatprep.subr.mxu0 0.0
  %1109 = vmatpush1.msra.mxu0 0.0
  %1110 = vmatprep.subr.mxu0 0.0
  %1111 = vmatpush1.msra.mxu0 0.0
  %1112 = vmatprep.subr.mxu0 0.0
  %1113 = vmatpush1.msra.mxu0 0.0
  %1114 = vmatprep.subr.mxu0 0.0
  %1115 = vmatpush1.msra.mxu0 0.0
  %1116 = vmatprep.subr.mxu0 0.0
  %1117 = vmatpush1.msra.mxu0 0.0
  %1118 = vmatprep.subr.mxu0 0.0
  %1119 = vmatpush1.msra.mxu0 0.0
  %1120 = vmatprep.subr.mxu0 0.0
  %1121 = vmatpush1.msra.mxu0 0.0
  %1122 = vmatprep.subr.mxu0 0.0
  %1123 = vmatpush1.msra.mxu0 0.0
  %1124 = vmatprep.subr.mxu0 0.0
  %1125 = vmatpush1.msra.mxu0 0.0
  %1126 = vmatprep.subr.mxu0 0.0
  %1127 = vmatpush1.msra.mxu0 0.0
  %1128 = vmatprep.subr.mxu0 0.0
  %1129 = vmatpush1.msra.mxu0 0.0
  %1130 = vmatprep.subr.mxu0 0.0
  %1131 = vmatpush1.msra.mxu0 0.0
  %1132 = vmatprep.subr.mxu0 0.0
  %1133 = vmatpush1.msra.mxu0 0.0
  %1134 = vmatprep.subr.mxu0 0.0
  %1135 = vmatpush1.msra.mxu0 0.0
  %1136 = vmatprep.subr.mxu0 0.0
  %1137 = vmatpush1.msra.mxu0 0.0
  %1138 = vmatprep.subr.mxu0 0.0
  %1139 = vmatpush1.msra.mxu0 0.0
  %1140 = vmatprep.subr.mxu0 0.0
  %1141 = vmatpush1.msra.mxu0 0.0
  %1142 = vmatprep.subr.mxu0 0.0
  %1143 = vmatpush1.msra.mxu0 0.0
  %1144 = vmatprep.subr.mxu0 0.0
  %1145 = vmatpush1.msra.mxu0 0.0
  %1146 = vmatprep.subr.mxu0 0.0
  %1147 = vmatpush1.msra.mxu0 0.0
  %1148 = vmatprep.subr.mxu0 0.0
  %1149 = vmatpush1.msra.mxu0 0.0
  %1150 = vmatprep.subr.mxu0 0.0
  %1151 = vmatpush1.msra.mxu0 0.0
  %1152 = vmatprep.subr.mxu0 0.0
  %1153 = vmatpush1.msra.mxu0 0.0
  %1154 = vmatprep.subr.mxu0 0.0
  %1155 = vmatpush1.msra.mxu0 0.0
  %1156 = vmatprep.subr.mxu0 0.0
  %1157 = vmatpush1.msra.mxu0 0.0
  %1158 = vmatprep.subr.mxu0 0.0
  %1159 = vmatpush1.msra.mxu0 0.0
  %1160 = vmatprep.mubr.f32.mxu0 0.0
  %1161 = vmatmul.mubr.f32.gmra.mrb[0].mxu0 %v1089
  %v1162 = vpop.f32.mrb[0].mxu0
  %v1163 = vadd.f32 %v1073, %v1162
  %v1164 = vpop.f32.mrb[0].mxu0
  %1165 = vmatprep.mubr.f32.mxu0 0.0
  %1166 = vmatmul.mubr.f32.gmra.mrb[0].mxu0 %v1092
  %v1167 = vpop.f32.mrb[0].mxu0
  %v1168 = vadd.f32 %v1078, %v1167
  %v1169 = vpop.f32.mrb[0].mxu0
  %1170 = vdwg.mxu0
  %vm1171 = vcmp.ge.s32.totalorder %v417, 16
  %vm1172 = vcmp.lt.s32.totalorder %v417, 24
  %vm1173 = vmand %vm1171, %vm1172
  %v1174 = vsel %vm1173, 0.35355338, 0.0
  %1176 = vrot.lane.b32.xlu0 %v1174, 32
  %v1177 = vpop.permute.xlu0 %1176
  %v1179 = vmul.f32 %v726, %v1177
  %v1180 = vmul.f32 %v731, %v1177
  %v1181 = vsel %vm1173, 1.0, 0.0
  %1183 = vrot.lane.b32.xlu0 %v1181, 64
  %v1184 = vpop.permute.xlu0 %1183
  %v1186 = vmul.f32 %v726, %v1184
  %v1187 = vmul.f32 %v731, %v1184
  %1190 = vrot.lane.b32.xlu0 %v1179, 96
  %v1191 = vpop.permute.xlu0 %1190
  %1192 = vrot.lane.b32.xlu0 %v1180, 96
  %v1193 = vpop.permute.xlu0 %1192
  %v1194 = vsel %vm150, %v1191, 0
  %v1196 = vsel %vm150, %v1193, 0
  %1198 = vmatprep.subr.mxu0 0.0
  %1199 = vmatpush1.xpose.msra.mxu0 %v1194
  %1200 = vmatprep.subr.mxu0 0.0
  %1201 = vmatpush1.xpose.msra.mxu0 %v1196
  %1202 = vmatprep.subr.mxu0 0.0
  %1203 = vmatpush1.xpose.msra.mxu0 0.0
  %1204 = vmatprep.subr.mxu0 0.0
  %1205 = vmatpush1.xpose.msra.mxu0 0.0
  %1206 = vmatprep.subr.mxu0 0.0
  %1207 = vmatpush1.xpose.msra.mxu0 0.0
  %1208 = vmatprep.subr.mxu0 0.0
  %1209 = vmatpush1.xpose.msra.mxu0 0.0
  %1210 = vmatprep.subr.mxu0 0.0
  %1211 = vmatpush1.xpose.msra.mxu0 0.0
  %1212 = vmatprep.subr.mxu0 0.0
  %1213 = vmatpush1.xpose.msra.mxu0 0.0
  %1214 = vmatprep.subr.mxu0 0.0
  %1215 = vmatpush1.xpose.msra.mxu0 0.0
  %1216 = vmatprep.subr.mxu0 0.0
  %1217 = vmatpush1.xpose.msra.mxu0 0.0
  %1218 = vmatprep.subr.mxu0 0.0
  %1219 = vmatpush1.xpose.msra.mxu0 0.0
  %1220 = vmatprep.subr.mxu0 0.0
  %1221 = vmatpush1.xpose.msra.mxu0 0.0
  %1222 = vmatprep.subr.mxu0 0.0
  %1223 = vmatpush1.xpose.msra.mxu0 0.0
  %1224 = vmatprep.subr.mxu0 0.0
  %1225 = vmatpush1.xpose.msra.mxu0 0.0
  %1226 = vmatprep.subr.mxu0 0.0
  %1227 = vmatpush1.xpose.msra.mxu0 0.0
  %1228 = vmatprep.subr.mxu0 0.0
  %1229 = vmatpush1.xpose.msra.mxu0 0.0
  %1230 = vmatprep.subr.mxu0 0.0
  %1231 = vmatpush1.xpose.msra.mxu0 0.0
  %1232 = vmatprep.subr.mxu0 0.0
  %1233 = vmatpush1.xpose.msra.mxu0 0.0
  %1234 = vmatprep.subr.mxu0 0.0
  %1235 = vmatpush1.xpose.msra.mxu0 0.0
  %1236 = vmatprep.subr.mxu0 0.0
  %1237 = vmatpush1.xpose.msra.mxu0 0.0
  %1238 = vmatprep.subr.mxu0 0.0
  %1239 = vmatpush1.xpose.msra.mxu0 0.0
  %1240 = vmatprep.subr.mxu0 0.0
  %1241 = vmatpush1.xpose.msra.mxu0 0.0
  %1242 = vmatprep.subr.mxu0 0.0
  %1243 = vmatpush1.xpose.msra.mxu0 0.0
  %1244 = vmatprep.subr.mxu0 0.0
  %1245 = vmatpush1.xpose.msra.mxu0 0.0
  %1246 = vmatprep.subr.mxu0 0.0
  %1247 = vmatpush1.xpose.msra.mxu0 0.0
  %1248 = vmatprep.subr.mxu0 0.0
  %1249 = vmatpush1.xpose.msra.mxu0 0.0
  %1250 = vmatprep.subr.mxu0 0.0
  %1251 = vmatpush1.xpose.msra.mxu0 0.0
  %1252 = vmatprep.subr.mxu0 0.0
  %1253 = vmatpush1.xpose.msra.mxu0 0.0
  %1254 = vmatprep.subr.mxu0 0.0
  %1255 = vmatpush1.xpose.msra.mxu0 0.0
  %1256 = vmatprep.subr.mxu0 0.0
  %1257 = vmatpush1.xpose.msra.mxu0 0.0
  %1258 = vmatprep.subr.mxu0 0.0
  %1259 = vmatpush1.xpose.msra.mxu0 0.0
  %1260 = vmatprep.subr.mxu0 0.0
  %1261 = vmatpush1.xpose.msra.mxu0 0.0
  %1262 = vmatprep.mubr.f32.mxu0 0.0
  %1263 = vmatmul.mubr.f32.gmra.mrb[0].mxu0 %v758
  %v1264 = vpop.f32.mrb[0].mxu0
  %v1265 = vadd.f32 %v638, %v1264
  %v1266 = vpop.f32.mrb[0].mxu0
  %1267 = vmatprep.mubr.f32.mxu0 0.0
  %1268 = vmatmul.mubr.f32.gmra.mrb[0].mxu0 %v761
  %v1269 = vpop.f32.mrb[0].mxu0
  %v1270 = vadd.f32 %v639, %v1269
  %v1271 = vpop.f32.mrb[0].mxu0
  %1272 = vdwg.mxu0
  %v1273 = vsel %vm842, %v1265, -inf
  %1274 = vmax.xlane.f32.xlu0 %v1273
  %v1275 = vpop.xlane.xlu0 %1274
  %v1276 = vsel %vm846, %v1270, -inf
  %1277 = vmax.xlane.f32.xlu0 %v1276
  %v1278 = vpop.xlane.xlu0 %1277
  %v1279 = vsub.f32 %v1265, %v1275
  %v1280 = vsub.f32 %v1270, %v1278
  %v1281 = vmul.f32 %v1279, 1.442695
  %v1282 = vpow.pop %v1281
  %v1283 = vmul.f32 %v1280, 1.442695
  %v1284 = vpow.pop %v1283
  %v1285 = vsel %vm842, %v1282, 0.0
  %1286 = vadd.xlane.f32.xlu0 %v1285
  %v1287 = vpop.xlane.xlu0 %1286
  %v1288 = vsel %vm846, %v1284, 0.0
  %1289 = vadd.xlane.f32.xlu0 %v1288
  %v1290 = vpop.xlane.xlu0 %1289
  %v1291 = vrcp.pop %v1287
  %v1292 = vrcp.pop %v1290
  %v1293 = vmul.f32 %v1282, %v1291
  %v1294 = vmul.f32 %v1284, %v1292
  %1297 = vrot.lane.b32.xlu0 %v1186, 64
  %v1298 = vpop.permute.xlu0 %1297
  %1299 = vrot.lane.b32.xlu0 %v1187, 64
  %v1300 = vpop.permute.xlu0 %1299
  %v1303 = vsel %vm842, %v1293, 0
  %v1306 = vsel %vm842, %v1294, 0
  %v1308 = vsel %vm1003, %v1300, 0
  %1310 = vmatprep.subr.mxu0 0.0
  %1311 = vmatpush1.msra.mxu0 %v1298
  %1312 = vmatprep.subr.mxu0 0.0
  %1313 = vmatpush1.msra.mxu0 %v1308
  %1314 = vmatprep.subr.mxu0 0.0
  %1315 = vmatpush1.msra.mxu0 0.0
  %1316 = vmatprep.subr.mxu0 0.0
  %1317 = vmatpush1.msra.mxu0 0.0
  %1318 = vmatprep.subr.mxu0 0.0
  %1319 = vmatpush1.msra.mxu0 0.0
  %1320 = vmatprep.subr.mxu0 0.0
  %1321 = vmatpush1.msra.mxu0 0.0
  %1322 = vmatprep.subr.mxu0 0.0
  %1323 = vmatpush1.msra.mxu0 0.0
  %1324 = vmatprep.subr.mxu0 0.0
  %1325 = vmatpush1.msra.mxu0 0.0
  %1326 = vmatprep.subr.mxu0 0.0
  %1327 = vmatpush1.msra.mxu0 0.0
  %1328 = vmatprep.subr.mxu0 0.0
  %1329 = vmatpush1.msra.mxu0 0.0
  %1330 = vmatprep.subr.mxu0 0.0
  %1331 = vmatpush1.msra.mxu0 0.0
  %1332 = vmatprep.subr.mxu0 0.0
  %1333 = vmatpush1.msra.mxu0 0.0
  %1334 = vmatprep.subr.mxu0 0.0
  %1335 = vmatpush1.msra.mxu0 0.0
  %1336 = vmatprep.subr.mxu0 0.0
  %1337 = vmatpush1.msra.mxu0 0.0
  %1338 = vmatprep.subr.mxu0 0.0
  %1339 = vmatpush1.msra.mxu0 0.0
  %1340 = vmatprep.subr.mxu0 0.0
  %1341 = vmatpush1.msra.mxu0 0.0
  %1342 = vmatprep.subr.mxu0 0.0
  %1343 = vmatpush1.msra.mxu0 0.0
  %1344 = vmatprep.subr.mxu0 0.0
  %1345 = vmatpush1.msra.mxu0 0.0
  %1346 = vmatprep.subr.mxu0 0.0
  %1347 = vmatpush1.msra.mxu0 0.0
  %1348 = vmatprep.subr.mxu0 0.0
  %1349 = vmatpush1.msra.mxu0 0.0
  %1350 = vmatprep.subr.mxu0 0.0
  %1351 = vmatpush1.msra.mxu0 0.0
  %1352 = vmatprep.subr.mxu0 0.0
  %1353 = vmatpush1.msra.mxu0 0.0
  %1354 = vmatprep.subr.mxu0 0.0
  %1355 = vmatpush1.msra.mxu0 0.0
  %1356 = vmatprep.subr.mxu0 0.0
  %1357 = vmatpush1.msra.mxu0 0.0
  %1358 = vmatprep.subr.mxu0 0.0
  %1359 = vmatpush1.msra.mxu0 0.0
  %1360 = vmatprep.subr.mxu0 0.0
  %1361 = vmatpush1.msra.mxu0 0.0
  %1362 = vmatprep.subr.mxu0 0.0
  %1363 = vmatpush1.msra.mxu0 0.0
  %1364 = vmatprep.subr.mxu0 0.0
  %1365 = vmatpush1.msra.mxu0 0.0
  %1366 = vmatprep.subr.mxu0 0.0
  %1367 = vmatpush1.msra.mxu0 0.0
  %1368 = vmatprep.subr.mxu0 0.0
  %1369 = vmatpush1.msra.mxu0 0.0
  %1370 = vmatprep.subr.mxu0 0.0
  %1371 = vmatpush1.msra.mxu0 0.0
  %1372 = vmatprep.subr.mxu0 0.0
  %1373 = vmatpush1.msra.mxu0 0.0
  %1374 = vmatprep.mubr.f32.mxu0 0.0
  %1375 = vmatmul.mubr.f32.gmra.mrb[0].mxu0 %v1303
  %v1376 = vpop.f32.mrb[0].mxu0
  %v1377 = vadd.f32 0.0, %v1376
  %v1378 = vpop.f32.mrb[0].mxu0
  %1379 = vmatprep.mubr.f32.mxu0 0.0
  %1380 = vmatmul.mubr.f32.gmra.mrb[0].mxu0 %v1306
  %v1381 = vpop.f32.mrb[0].mxu0
  %v1382 = vadd.f32 0.0, %v1381
  %v1383 = vpop.f32.mrb[0].mxu0
  %1384 = vdwg.mxu0
  %v1385 = vadd.f32 %v1163, %v1377
  %v1386 = vadd.f32 %v1168, %v1382
  %vm1387 = vcmp.ge.s32.totalorder %v417, 24
  %vm1388 = vcmp.lt.s32.totalorder %v417, 32
  %vm1389 = vmand %vm1387, %vm1388
  %v1390 = vsel %vm1389, 0.35355338, 0.0
  %1392 = vrot.lane.b32.xlu0 %v1390, 32
  %v1393 = vpop.permute.xlu0 %1392
  %v1395 = vmul.f32 %v726, %v1393
  %v1396 = vmul.f32 %v731, %v1393
  %v1397 = vsel %vm1389, 1.0, 0.0
  %1399 = vrot.lane.b32.xlu0 %v1397, 64
  %v1400 = vpop.permute.xlu0 %1399
  %v1402 = vmul.f32 %v726, %v1400
  %v1403 = vmul.f32 %v731, %v1400
  %1406 = vrot.lane.b32.xlu0 %v1395, 96
  %v1407 = vpop.permute.xlu0 %1406
  %1408 = vrot.lane.b32.xlu0 %v1396, 96
  %v1409 = vpop.permute.xlu0 %1408
  %v1410 = vsel %vm150, %v1407, 0
  %v1412 = vsel %vm150, %v1409, 0
  %1414 = vmatprep.subr.mxu0 0.0
  %1415 = vmatpush1.xpose.msra.mxu0 %v1410
  %1416 = vmatprep.subr.mxu0 0.0
  %1417 = vmatpush1.xpose.msra.mxu0 %v1412
  %1418 = vmatprep.subr.mxu0 0.0
  %1419 = vmatpush1.xpose.msra.mxu0 0.0
  %1420 = vmatprep.subr.mxu0 0.0
  %1421 = vmatpush1.xpose.msra.mxu0 0.0
  %1422 = vmatprep.subr.mxu0 0.0
  %1423 = vmatpush1.xpose.msra.mxu0 0.0
  %1424 = vmatprep.subr.mxu0 0.0
  %1425 = vmatpush1.xpose.msra.mxu0 0.0
  %1426 = vmatprep.subr.mxu0 0.0
  %1427 = vmatpush1.xpose.msra.mxu0 0.0
  %1428 = vmatprep.subr.mxu0 0.0
  %1429 = vmatpush1.xpose.msra.mxu0 0.0
  %1430 = vmatprep.subr.mxu0 0.0
  %1431 = vmatpush1.xpose.msra.mxu0 0.0
  %1432 = vmatprep.subr.mxu0 0.0
  %1433 = vmatpush1.xpose.msra.mxu0 0.0
  %1434 = vmatprep.subr.mxu0 0.0
  %1435 = vmatpush1.xpose.msra.mxu0 0.0
  %1436 = vmatprep.subr.mxu0 0.0
  %1437 = vmatpush1.xpose.msra.mxu0 0.0
  %1438 = vmatprep.subr.mxu0 0.0
  %1439 = vmatpush1.xpose.msra.mxu0 0.0
  %1440 = vmatprep.subr.mxu0 0.0
  %1441 = vmatpush1.xpose.msra.mxu0 0.0
  %1442 = vmatprep.subr.mxu0 0.0
  %1443 = vmatpush1.xpose.msra.mxu0 0.0
  %1444 = vmatprep.subr.mxu0 0.0
  %1445 = vmatpush1.xpose.msra.mxu0 0.0
  %1446 = vmatprep.subr.mxu0 0.0
  %1447 = vmatpush1.xpose.msra.mxu0 0.0
  %1448 = vmatprep.subr.mxu0 0.0
  %1449 = vmatpush1.xpose.msra.mxu0 0.0
  %1450 = vmatprep.subr.mxu0 0.0
  %1451 = vmatpush1.xpose.msra.mxu0 0.0
  %1452 = vmatprep.subr.mxu0 0.0
  %1453 = vmatpush1.xpose.msra.mxu0 0.0
  %1454 = vmatprep.subr.mxu0 0.0
  %1455 = vmatpush1.xpose.msra.mxu0 0.0
  %1456 = vmatprep.subr.mxu0 0.0
  %1457 = vmatpush1.xpose.msra.mxu0 0.0
  %1458 = vmatprep.subr.mxu0 0.0
  %1459 = vmatpush1.xpose.msra.mxu0 0.0
  %1460 = vmatprep.subr.mxu0 0.0
  %1461 = vmatpush1.xpose.msra.mxu0 0.0
  %1462 = vmatprep.subr.mxu0 0.0
  %1463 = vmatpush1.xpose.msra.mxu0 0.0
  %1464 = vmatprep.subr.mxu0 0.0
  %1465 = vmatpush1.xpose.msra.mxu0 0.0
  %1466 = vmatprep.subr.mxu0 0.0
  %1467 = vmatpush1.xpose.msra.mxu0 0.0
  %1468 = vmatprep.subr.mxu0 0.0
  %1469 = vmatpush1.xpose.msra.mxu0 0.0
  %1470 = vmatprep.subr.mxu0 0.0
  %1471 = vmatpush1.xpose.msra.mxu0 0.0
  %1472 = vmatprep.subr.mxu0 0.0
  %1473 = vmatpush1.xpose.msra.mxu0 0.0
  %1474 = vmatprep.subr.mxu0 0.0
  %1475 = vmatpush1.xpose.msra.mxu0 0.0
  %1476 = vmatprep.subr.mxu0 0.0
  %1477 = vmatpush1.xpose.msra.mxu0 0.0
  %1478 = vmatprep.mubr.f32.mxu0 0.0
  %1479 = vmatmul.mubr.f32.gmra.mrb[0].mxu0 %v758
  %v1480 = vpop.f32.mrb[0].mxu0
  %v1481 = vadd.f32 %v638, %v1480
  %v1482 = vpop.f32.mrb[0].mxu0
  %1483 = vmatprep.mubr.f32.mxu0 0.0
  %1484 = vmatmul.mubr.f32.gmra.mrb[0].mxu0 %v761
  %v1485 = vpop.f32.mrb[0].mxu0
  %v1486 = vadd.f32 %v639, %v1485
  %v1487 = vpop.f32.mrb[0].mxu0
  %1488 = vdwg.mxu0
  %v1489 = vsel %vm842, %v1481, -inf
  %1490 = vmax.xlane.f32.xlu0 %v1489
  %v1491 = vpop.xlane.xlu0 %1490
  %v1492 = vsel %vm846, %v1486, -inf
  %1493 = vmax.xlane.f32.xlu0 %v1492
  %v1494 = vpop.xlane.xlu0 %1493
  %v1495 = vsub.f32 %v1481, %v1491
  %v1496 = vsub.f32 %v1486, %v1494
  %v1497 = vmul.f32 %v1495, 1.442695
  %v1498 = vpow.pop %v1497
  %v1499 = vmul.f32 %v1496, 1.442695
  %v1500 = vpow.pop %v1499
  %v1501 = vsel %vm842, %v1498, 0.0
  %1502 = vadd.xlane.f32.xlu0 %v1501
  %v1503 = vpop.xlane.xlu0 %1502
  %v1504 = vsel %vm846, %v1500, 0.0
  %1505 = vadd.xlane.f32.xlu0 %v1504
  %v1506 = vpop.xlane.xlu0 %1505
  %v1507 = vrcp.pop %v1503
  %v1508 = vrcp.pop %v1506
  %v1509 = vmul.f32 %v1498, %v1507
  %v1510 = vmul.f32 %v1500, %v1508
  %1513 = vrot.lane.b32.xlu0 %v1402, 64
  %v1514 = vpop.permute.xlu0 %1513
  %1515 = vrot.lane.b32.xlu0 %v1403, 64
  %v1516 = vpop.permute.xlu0 %1515
  %v1519 = vsel %vm842, %v1509, 0
  %v1522 = vsel %vm842, %v1510, 0
  %v1524 = vsel %vm1003, %v1516, 0
  %1526 = vmatprep.subr.mxu0 0.0
  %1527 = vmatpush1.msra.mxu0 %v1514
  %1528 = vmatprep.subr.mxu0 0.0
  %1529 = vmatpush1.msra.mxu0 %v1524
  %1530 = vmatprep.subr.mxu0 0.0
  %1531 = vmatpush1.msra.mxu0 0.0
  %1532 = vmatprep.subr.mxu0 0.0
  %1533 = vmatpush1.msra.mxu0 0.0
  %1534 = vmatprep.subr.mxu0 0.0
  %1535 = vmatpush1.msra.mxu0 0.0
  %1536 = vmatprep.subr.mxu0 0.0
  %1537 = vmatpush1.msra.mxu0 0.0
  %1538 = vmatprep.subr.mxu0 0.0
  %1539 = vmatpush1.msra.mxu0 0.0
  %1540 = vmatprep.subr.mxu0 0.0
  %1541 = vmatpush1.msra.mxu0 0.0
  %1542 = vmatprep.subr.mxu0 0.0
  %1543 = vmatpush1.msra.mxu0 0.0
  %1544 = vmatprep.subr.mxu0 0.0
  %1545 = vmatpush1.msra.mxu0 0.0
  %1546 = vmatprep.subr.mxu0 0.0
  %1547 = vmatpush1.msra.mxu0 0.0
  %1548 = vmatprep.subr.mxu0 0.0
  %1549 = vmatpush1.msra.mxu0 0.0
  %1550 = vmatprep.subr.mxu0 0.0
  %1551 = vmatpush1.msra.mxu0 0.0
  %1552 = vmatprep.subr.mxu0 0.0
  %1553 = vmatpush1.msra.mxu0 0.0
  %1554 = vmatprep.subr.mxu0 0.0
  %1555 = vmatpush1.msra.mxu0 0.0
  %1556 = vmatprep.subr.mxu0 0.0
  %1557 = vmatpush1.msra.mxu0 0.0
  %1558 = vmatprep.subr.mxu0 0.0
  %1559 = vmatpush1.msra.mxu0 0.0
  %1560 = vmatprep.subr.mxu0 0.0
  %1561 = vmatpush1.msra.mxu0 0.0
  %1562 = vmatprep.subr.mxu0 0.0
  %1563 = vmatpush1.msra.mxu0 0.0
  %1564 = vmatprep.subr.mxu0 0.0
  %1565 = vmatpush1.msra.mxu0 0.0
  %1566 = vmatprep.subr.mxu0 0.0
  %1567 = vmatpush1.msra.mxu0 0.0
  %1568 = vmatprep.subr.mxu0 0.0
  %1569 = vmatpush1.msra.mxu0 0.0
  %1570 = vmatprep.subr.mxu0 0.0
  %1571 = vmatpush1.msra.mxu0 0.0
  %1572 = vmatprep.subr.mxu0 0.0
  %1573 = vmatpush1.msra.mxu0 0.0
  %1574 = vmatprep.subr.mxu0 0.0
  %1575 = vmatpush1.msra.mxu0 0.0
  %1576 = vmatprep.subr.mxu0 0.0
  %1577 = vmatpush1.msra.mxu0 0.0
  %1578 = vmatprep.subr.mxu0 0.0
  %1579 = vmatpush1.msra.mxu0 0.0
  %1580 = vmatprep.subr.mxu0 0.0
  %1581 = vmatpush1.msra.mxu0 0.0
  %1582 = vmatprep.subr.mxu0 0.0
  %1583 = vmatpush1.msra.mxu0 0.0
  %1584 = vmatprep.subr.mxu0 0.0
  %1585 = vmatpush1.msra.mxu0 0.0
  %1586 = vmatprep.subr.mxu0 0.0
  %1587 = vmatpush1.msra.mxu0 0.0
  %1588 = vmatprep.subr.mxu0 0.0
  %1589 = vmatpush1.msra.mxu0 0.0
  %1590 = vmatprep.mubr.f32.mxu0 0.0
  %1591 = vmatmul.mubr.f32.gmra.mrb[0].mxu0 %v1519
  %v1592 = vpop.f32.mrb[0].mxu0
  %v1593 = vadd.f32 0.0, %v1592
  %v1594 = vpop.f32.mrb[0].mxu0
  %1595 = vmatprep.mubr.f32.mxu0 0.0
  %1596 = vmatmul.mubr.f32.gmra.mrb[0].mxu0 %v1522
  %v1597 = vpop.f32.mrb[0].mxu0
  %v1598 = vadd.f32 0.0, %v1597
  %v1599 = vpop.f32.mrb[0].mxu0
  %1600 = vdwg.mxu0
  %v1601 = vadd.f32 %v1385, %v1593
  %v1602 = vadd.f32 %v1386, %v1598
  %v1603 = vld [vmem:[%s9] sm:$0xff]
  %v1604 = vld [vmem:[%s9 + $0x8] sm:$0xff]
  %v1605 = vld [vmem:[%s9 + $0x10] sm:$0xff]
  %v1606 = vld [vmem:[%s9 + $0x18] sm:$0xff]
  %v1607 = vlaneseq
  %v1608 = vshrl.u32 %v1607, 7
  %v1609 = vsub.s32 0, %v1608
  %v1610 = vrot.slane %v640, %v1609
  %v1612 = vsel %vm150, %v1601, 0
  %v1615 = vsel %vm150, %v1602, 0
  %1617 = vmatprep.subr.mxu0 0.0
  %1618 = vmatpush1.msra.mxu0 %v1603
  %1619 = vmatprep.subr.mxu0 0.0
  %1620 = vmatpush1.msra.mxu0 %v1604
  %1621 = vmatprep.subr.mxu0 0.0
  %1622 = vmatpush1.msra.mxu0 %v1605
  %1623 = vmatprep.subr.mxu0 0.0
  %1624 = vmatpush1.msra.mxu0 %v1606
  %1625 = vmatprep.subr.mxu0 0.0
  %1626 = vmatpush1.msra.mxu0 0.0
  %1627 = vmatprep.subr.mxu0 0.0
  %1628 = vmatpush1.msra.mxu0 0.0
  %1629 = vmatprep.subr.mxu0 0.0
  %1630 = vmatpush1.msra.mxu0 0.0
  %1631 = vmatprep.subr.mxu0 0.0
  %1632 = vmatpush1.msra.mxu0 0.0
  %1633 = vmatprep.subr.mxu0 0.0
  %1634 = vmatpush1.msra.mxu0 0.0
  %1635 = vmatprep.subr.mxu0 0.0
  %1636 = vmatpush1.msra.mxu0 0.0
  %1637 = vmatprep.subr.mxu0 0.0
  %1638 = vmatpush1.msra.mxu0 0.0
  %1639 = vmatprep.subr.mxu0 0.0
  %1640 = vmatpush1.msra.mxu0 0.0
  %1641 = vmatprep.subr.mxu0 0.0
  %1642 = vmatpush1.msra.mxu0 0.0
  %1643 = vmatprep.subr.mxu0 0.0
  %1644 = vmatpush1.msra.mxu0 0.0
  %1645 = vmatprep.subr.mxu0 0.0
  %1646 = vmatpush1.msra.mxu0 0.0
  %1647 = vmatprep.subr.mxu0 0.0
  %1648 = vmatpush1.msra.mxu0 0.0
  %1649 = vmatprep.subr.mxu0 0.0
  %1650 = vmatpush1.msra.mxu0 0.0
  %1651 = vmatprep.subr.mxu0 0.0
  %1652 = vmatpush1.msra.mxu0 0.0
  %1653 = vmatprep.subr.mxu0 0.0
  %1654 = vmatpush1.msra.mxu0 0.0
  %1655 = vmatprep.subr.mxu0 0.0
  %1656 = vmatpush1.msra.mxu0 0.0
  %1657 = vmatprep.subr.mxu0 0.0
  %1658 = vmatpush1.msra.mxu0 0.0
  %1659 = vmatprep.subr.mxu0 0.0
  %1660 = vmatpush1.msra.mxu0 0.0
  %1661 = vmatprep.subr.mxu0 0.0
  %1662 = vmatpush1.msra.mxu0 0.0
  %1663 = vmatprep.subr.mxu0 0.0
  %1664 = vmatpush1.msra.mxu0 0.0
  %1665 = vmatprep.subr.mxu0 0.0
  %1666 = vmatpush1.msra.mxu0 0.0
  %1667 = vmatprep.subr.mxu0 0.0
  %1668 = vmatpush1.msra.mxu0 0.0
  %1669 = vmatprep.subr.mxu0 0.0
  %1670 = vmatpush1.msra.mxu0 0.0
  %1671 = vmatprep.subr.mxu0 0.0
  %1672 = vmatpush1.msra.mxu0 0.0
  %1673 = vmatprep.subr.mxu0 0.0
  %1674 = vmatpush1.msra.mxu0 0.0
  %1675 = vmatprep.subr.mxu0 0.0
  %1676 = vmatpush1.msra.mxu0 0.0
  %1677 = vmatprep.subr.mxu0 0.0
  %1678 = vmatpush1.msra.mxu0 0.0
  %1679 = vmatprep.subr.mxu0 0.0
  %1680 = vmatpush1.msra.mxu0 0.0
  %1681 = vmatprep.mubr.f32.mxu0 0.0
  %1682 = vmatmul.mubr.f32.gmra.mrb[0].mxu0 %v1612
  %v1683 = vpop.f32.mrb[0].mxu0
  %v1684 = vadd.f32 %v1610, %v1683
  %v1685 = vpop.f32.mrb[0].mxu0
  %1686 = vmatprep.mubr.f32.mxu0 0.0
  %1687 = vmatmul.mubr.f32.gmra.mrb[0].mxu0 %v1615
  %v1688 = vpop.f32.mrb[0].mxu0
  %v1689 = vadd.f32 %v1610, %v1688
  %v1690 = vpop.f32.mrb[0].mxu0
  %1691 = vdwg.mxu0
  %v1692 = vadd.f32 %v549, %v1684
  %v1693 = vadd.f32 %v550, %v1689
  %v1694 = vsel %vm150, %v1692, 0.0
  %1695 = vadd.xlane.f32.xlu0 %v1694
  %v1696 = vpop.xlane.xlu0 %1695
  %vm1697 = vcmask 257024
  %v1698 = vsel %vm1697, %v1693, 0.0
  %1699 = vadd.xlane.f32.xlu0 %v1698
  %v1700 = vpop.xlane.xlu0 %1699
  %v1701 = vrcp.pop 32.0
  %v1702 = vmul.f32 %v1696, %v1701
  %v1703 = vmul.f32 %v1700, %v1701
  %v1704 = vsub.f32 %v1692, %v1702
  %v1705 = vsub.f32 %v1693, %v1703
  %v1706 = vmul.f32 %v1704, %v1704
  %v1707 = vmul.f32 %v1705, %v1705
  %v1708 = vsel %vm150, %v1706, 0.0
  %1709 = vadd.xlane.f32.xlu0 %v1708
  %v1710 = vpop.xlane.xlu0 %1709
  %v1711 = vsel %vm1697, %v1707, 0.0
  %1712 = vadd.xlane.f32.xlu0 %v1711
  %v1713 = vpop.xlane.xlu0 %1712
  %v1714 = vmul.f32 %v1710, %v1701
  %v1715 = vmul.f32 %v1713, %v1701
  %v1716 = vadd.f32 %v1714, 1e-05
  %v1717 = vadd.f32 %v1715, 1e-05
  %v1718 = vrsqrt.pop %v1716
  %v1719 = vrsqrt.pop %v1717
  %v1720 = vmul.f32 %v1704, %v1718
  %v1721 = vmul.f32 %v1705, %v1719
  %v1722 = vlaneseq
  %v1723 = vshrl.u32 %v1722, 7
  %v1724 = vsub.s32 2, %v1723
  %v1725 = vrot.slane %v640, %v1724
  %v1726 = vmul.f32 %v1720, %v1725
  %v1727 = vmul.f32 %v1721, %v1725
  %v1728 = vlaneseq
  %v1729 = vshrl.u32 %v1728, 7
  %v1730 = vsub.s32 3, %v1729
  %v1731 = vrot.slane %v640, %v1730
  %v1732 = vadd.f32 %v1726, %v1731
  %v1733 = vadd.f32 %v1727, %v1731
  %v1734 = vlaneseq
  %v1735 = vshrl.u32 %v1734, 7
  %v1736 = vsub.s32 1, %v1735
  %v1737 = vrot.slane %v640, %v1736
  %v1738 = vadd.f32 %v1732, %v1737
  %v1739 = vadd.f32 %v1733, %v1737
  %v1740 = vsel %vm150, %v1738, 0.0
  %1741 = vadd.xlane.f32.xlu0 %v1740
  %v1742 = vpop.xlane.xlu0 %1741
  %v1743 = vsel %vm1697, %v1739, 0.0
  %1744 = vadd.xlane.f32.xlu0 %v1743
  %v1745 = vpop.xlane.xlu0 %1744
  %v1746 = vmul.f32 %v1742, %v1701
  %v1747 = vmul.f32 %v1745, %v1701
  %v1748 = vsub.f32 %v1738, %v1746
  %v1749 = vsub.f32 %v1739, %v1747
  %v1750 = vmul.f32 %v1748, %v1748
  %v1751 = vmul.f32 %v1749, %v1749
  %v1752 = vsel %vm150, %v1750, 0.0
  %1753 = vadd.xlane.f32.xlu0 %v1752
  %v1754 = vpop.xlane.xlu0 %1753
  %v1755 = vsel %vm1697, %v1751, 0.0
  %1756 = vadd.xlane.f32.xlu0 %v1755
  %v1757 = vpop.xlane.xlu0 %1756
  %v1758 = vmul.f32 %v1754, %v1701
  %v1759 = vmul.f32 %v1757, %v1701
  %v1760 = vadd.f32 %v1758, 1e-05
  %v1761 = vadd.f32 %v1759, 1e-05
  %v1762 = vrsqrt.pop %v1760
  %v1763 = vrsqrt.pop %v1761
  %v1764 = vmul.f32 %v1748, %v1762
  %v1765 = vmul.f32 %v1749, %v1763
  %v1766 = vlaneseq
  %v1767 = vshrl.u32 %v1766, 7
  %v1768 = vsub.s32 4, %v1767
  %v1769 = vrot.slane %v640, %v1768
  %v1770 = vmul.f32 %v1764, %v1769
  %v1771 = vmul.f32 %v1765, %v1769
  %v1772 = vlaneseq
  %v1773 = vshrl.u32 %v1772, 7
  %v1774 = vsub.s32 5, %v1773
  %v1775 = vrot.slane %v640, %v1774
  %v1776 = vadd.f32 %v1770, %v1775
  %v1777 = vadd.f32 %v1771, %v1775
  %v1778 = vpack.c.bf16 %v1777, %v1776
  %v1779 = vld [vmem:[%s11] sm:$0xff]
  %v1780 = vld [vmem:[%s11 + $0x8] sm:$0xff]
  %v1781 = vld [vmem:[%s11 + $0x10] sm:$0xff]
  %v1782 = vld [vmem:[%s11 + $0x18] sm:$0xff]
  %v1783 = vld [vmem:[%s11 + $0x20] sm:$0xff]
  %v1784 = vld [vmem:[%s11 + $0x28] sm:$0xff]
  %v1785 = vld [vmem:[%s11 + $0x30] sm:$0xff]
  %v1786 = vld [vmem:[%s11 + $0x38] sm:$0xff]
  %v1787 = vld [vmem:[%s11 + $0x40] sm:$0xff]
  %v1788 = vld [vmem:[%s11 + $0x48] sm:$0xff]
  %v1789 = vld [vmem:[%s11 + $0x50] sm:$0xff]
  %v1790 = vld [vmem:[%s11 + $0x58] sm:$0xff]
  %v1791 = vld [vmem:[%s11 + $0x60] sm:$0xff]
  %v1792 = vld [vmem:[%s11 + $0x68] sm:$0xff]
  %v1793 = vld [vmem:[%s11 + $0x70] sm:$0xff]
  %v1794 = vld [vmem:[%s11 + $0x78] sm:$0xff]
  %v1795 = vld [vmem:[%s11 + $0x80] sm:$0xff]
  %v1796 = vld [vmem:[%s11 + $0x88] sm:$0xff]
  %v1797 = vld [vmem:[%s11 + $0x90] sm:$0xff]
  %v1798 = vld [vmem:[%s11 + $0x98] sm:$0xff]
  %v1799 = vld [vmem:[%s11 + $0xa0] sm:$0xff]
  %v1800 = vld [vmem:[%s11 + $0xa8] sm:$0xff]
  %v1801 = vld [vmem:[%s11 + $0xb0] sm:$0xff]
  %v1802 = vld [vmem:[%s11 + $0xb8] sm:$0xff]
  %v1803 = vld [vmem:[%s11 + $0xc0] sm:$0xff]
  %v1804 = vld [vmem:[%s11 + $0xc8] sm:$0xff]
  %v1805 = vld [vmem:[%s11 + $0xd0] sm:$0xff]
  %v1806 = vld [vmem:[%s11 + $0xd8] sm:$0xff]
  %v1807 = vld [vmem:[%s11 + $0xe0] sm:$0xff]
  %v1808 = vld [vmem:[%s11 + $0xe8] sm:$0xff]
  %v1809 = vld [vmem:[%s11 + $0xf0] sm:$0xff]
  %v1810 = vld [vmem:[%s11 + $0xf8] sm:$0xff]
  %v1811 = vld [vmem:[%s12] sm:$0xff]
  %v1812 = vld [vmem:[%s12 + $0x8] sm:$0xff]
  %v1815 = vlaneseq
  %v1816 = vshrl.u32 %v1815, 7
  %v1817 = vsub.s32 0, %v1816
  %v1818 = vrot.slane %v1811, %v1817
  %v1819 = vlaneseq
  %v1820 = vshrl.u32 %v1819, 7
  %v1821 = vsub.s32 1, %v1820
  %v1822 = vrot.slane %v1811, %v1821
  %v1823 = vlaneseq
  %v1824 = vshrl.u32 %v1823, 7
  %v1825 = vsub.s32 2, %v1824
  %v1826 = vrot.slane %v1811, %v1825
  %v1827 = vlaneseq
  %v1828 = vshrl.u32 %v1827, 7
  %v1829 = vsub.s32 3, %v1828
  %v1830 = vrot.slane %v1811, %v1829
  %v1831 = vlaneseq
  %v1832 = vshrl.u32 %v1831, 7
  %v1833 = vsub.s32 4, %v1832
  %v1834 = vrot.slane %v1811, %v1833
  %v1835 = vlaneseq
  %v1836 = vshrl.u32 %v1835, 7
  %v1837 = vsub.s32 5, %v1836
  %v1838 = vrot.slane %v1811, %v1837
  %v1839 = vlaneseq
  %v1840 = vshrl.u32 %v1839, 7
  %v1841 = vsub.s32 6, %v1840
  %v1842 = vrot.slane %v1811, %v1841
  %v1843 = vlaneseq
  %v1844 = vshrl.u32 %v1843, 7
  %v1845 = vsub.s32 7, %v1844
  %v1846 = vrot.slane %v1811, %v1845
  %v1847 = vlaneseq
  %v1848 = vshrl.u32 %v1847, 7
  %v1849 = vsub.s32 0, %v1848
  %v1850 = vrot.slane %v1812, %v1849
  %v1851 = vlaneseq
  %v1852 = vshrl.u32 %v1851, 7
  %v1853 = vsub.s32 1, %v1852
  %v1854 = vrot.slane %v1812, %v1853
  %v1855 = vlaneseq
  %v1856 = vshrl.u32 %v1855, 7
  %v1857 = vsub.s32 2, %v1856
  %v1858 = vrot.slane %v1812, %v1857
  %v1859 = vlaneseq
  %v1860 = vshrl.u32 %v1859, 7
  %v1861 = vsub.s32 3, %v1860
  %v1862 = vrot.slane %v1812, %v1861
  %v1863 = vlaneseq
  %v1864 = vshrl.u32 %v1863, 7
  %v1865 = vsub.s32 4, %v1864
  %v1866 = vrot.slane %v1812, %v1865
  %v1867 = vlaneseq
  %v1868 = vshrl.u32 %v1867, 7
  %v1869 = vsub.s32 5, %v1868
  %v1870 = vrot.slane %v1812, %v1869
  %v1871 = vlaneseq
  %v1872 = vshrl.u32 %v1871, 7
  %v1873 = vsub.s32 6, %v1872
  %v1874 = vrot.slane %v1812, %v1873
  %v1875 = vlaneseq
  %v1876 = vshrl.u32 %v1875, 7
  %v1877 = vsub.s32 7, %v1876
  %v1878 = vrot.slane %v1812, %v1877
  %v1927 = vunpack.c.l.b16 %v1779
  %v1928 = vunpack.c.h.b16 %v1779
  %v1929 = vunpack.c.l.b16 %v1780
  %v1930 = vunpack.c.h.b16 %v1780
  %v1931 = vunpack.c.l.b16 %v1781
  %v1932 = vunpack.c.h.b16 %v1781
  %v1933 = vunpack.c.l.b16 %v1782
  %v1934 = vunpack.c.h.b16 %v1782
  %v1935 = vunpack.c.l.b16 %v1783
  %v1936 = vunpack.c.h.b16 %v1783
  %v1937 = vunpack.c.l.b16 %v1784
  %v1938 = vunpack.c.h.b16 %v1784
  %v1939 = vunpack.c.l.b16 %v1785
  %v1940 = vunpack.c.h.b16 %v1785
  %v1941 = vunpack.c.l.b16 %v1786
  %v1942 = vunpack.c.h.b16 %v1786
  %v1943 = vunpack.c.l.b16 %v1787
  %v1944 = vunpack.c.h.b16 %v1787
  %v1945 = vunpack.c.l.b16 %v1788
  %v1946 = vunpack.c.h.b16 %v1788
  %v1947 = vunpack.c.l.b16 %v1789
  %v1948 = vunpack.c.h.b16 %v1789
  %v1949 = vunpack.c.l.b16 %v1790
  %v1950 = vunpack.c.h.b16 %v1790
  %v1951 = vunpack.c.l.b16 %v1791
  %v1952 = vunpack.c.h.b16 %v1791
  %v1953 = vunpack.c.l.b16 %v1792
  %v1954 = vunpack.c.h.b16 %v1792
  %v1955 = vunpack.c.l.b16 %v1793
  %v1956 = vunpack.c.h.b16 %v1793
  %v1957 = vunpack.c.l.b16 %v1794
  %v1958 = vunpack.c.h.b16 %v1794
  %v1959 = vunpack.c.l.b16 %v1795
  %v1960 = vunpack.c.h.b16 %v1795
  %v1961 = vunpack.c.l.b16 %v1796
  %v1962 = vunpack.c.h.b16 %v1796
  %v1963 = vunpack.c.l.b16 %v1797
  %v1964 = vunpack.c.h.b16 %v1797
  %v1965 = vunpack.c.l.b16 %v1798
  %v1966 = vunpack.c.h.b16 %v1798
  %v1967 = vunpack.c.l.b16 %v1799
  %v1968 = vunpack.c.h.b16 %v1799
  %v1969 = vunpack.c.l.b16 %v1800
  %v1970 = vunpack.c.h.b16 %v1800
  %v1971 = vunpack.c.l.b16 %v1801
  %v1972 = vunpack.c.h.b16 %v1801
  %v1973 = vunpack.c.l.b16 %v1802
  %v1974 = vunpack.c.h.b16 %v1802
  %v1975 = vunpack.c.l.b16 %v1803
  %v1976 = vunpack.c.h.b16 %v1803
  %v1977 = vunpack.c.l.b16 %v1804
  %v1978 = vunpack.c.h.b16 %v1804
  %v1979 = vunpack.c.l.b16 %v1805
  %v1980 = vunpack.c.h.b16 %v1805
  %v1981 = vunpack.c.l.b16 %v1806
  %v1982 = vunpack.c.h.b16 %v1806
  %v1983 = vunpack.c.l.b16 %v1807
  %v1984 = vunpack.c.h.b16 %v1807
  %v1985 = vunpack.c.l.b16 %v1808
  %v1986 = vunpack.c.h.b16 %v1808
  %v1987 = vunpack.c.l.b16 %v1809
  %v1988 = vunpack.c.h.b16 %v1809
  %v1989 = vunpack.c.l.b16 %v1810
  %v1990 = vunpack.c.h.b16 %v1810
  %v1991 = vpack.c.b16 %v1943, %v1927
  %v1992 = vpack.c.b16 %v1944, %v1928
  %v1993 = vpack.c.b16 %v1945, %v1929
  %v1994 = vpack.c.b16 %v1946, %v1930
  %v1995 = vpack.c.b16 %v1947, %v1931
  %v1996 = vpack.c.b16 %v1948, %v1932
  %v1997 = vpack.c.b16 %v1949, %v1933
  %v1998 = vpack.c.b16 %v1950, %v1934
  %v1999 = vpack.c.b16 %v1951, %v1935
  %v2000 = vpack.c.b16 %v1952, %v1936
  %v2001 = vpack.c.b16 %v1953, %v1937
  %v2002 = vpack.c.b16 %v1954, %v1938
  %v2003 = vpack.c.b16 %v1955, %v1939
  %v2004 = vpack.c.b16 %v1956, %v1940
  %v2005 = vpack.c.b16 %v1957, %v1941
  %v2006 = vpack.c.b16 %v1958, %v1942
  %v2007 = vpack.c.b16 %v1975, %v1959
  %v2008 = vpack.c.b16 %v1976, %v1960
  %v2009 = vpack.c.b16 %v1977, %v1961
  %v2010 = vpack.c.b16 %v1978, %v1962
  %v2011 = vpack.c.b16 %v1979, %v1963
  %v2012 = vpack.c.b16 %v1980, %v1964
  %v2013 = vpack.c.b16 %v1981, %v1965
  %v2014 = vpack.c.b16 %v1982, %v1966
  %v2015 = vpack.c.b16 %v1983, %v1967
  %v2016 = vpack.c.b16 %v1984, %v1968
  %v2017 = vpack.c.b16 %v1985, %v1969
  %v2018 = vpack.c.b16 %v1986, %v1970
  %v2019 = vpack.c.b16 %v1987, %v1971
  %v2020 = vpack.c.b16 %v1988, %v1972
  %v2021 = vpack.c.b16 %v1989, %v1973
  %v2022 = vpack.c.b16 %v1990, %v1974
  %v2056 = vsel %vm150, %v1778, 0
  %2058 = vmatprep.subr.bf16.mxu0 %v1992
  %2059 = vmatpush1.bf16.msra.mxu0 %v1991
  %2060 = vmatprep.subr.bf16.mxu0 %v2008
  %2061 = vmatpush1.bf16.msra.mxu0 %v2007
  %2062 = vmatprep.subr.bf16.mxu0 0
  %2063 = vmatpush1.bf16.msra.mxu0 0
  %2064 = vmatprep.subr.bf16.mxu0 0
  %2065 = vmatpush1.bf16.msra.mxu0 0
  %2066 = vmatprep.subr.bf16.mxu0 0
  %2067 = vmatpush1.bf16.msra.mxu0 0
  %2068 = vmatprep.subr.bf16.mxu0 0
  %2069 = vmatpush1.bf16.msra.mxu0 0
  %2070 = vmatprep.subr.bf16.mxu0 0
  %2071 = vmatpush1.bf16.msra.mxu0 0
  %2072 = vmatprep.subr.bf16.mxu0 0
  %2073 = vmatpush1.bf16.msra.mxu0 0
  %2074 = vmatprep.subr.bf16.mxu0 0
  %2075 = vmatpush1.bf16.msra.mxu0 0
  %2076 = vmatprep.subr.bf16.mxu0 0
  %2077 = vmatpush1.bf16.msra.mxu0 0
  %2078 = vmatprep.subr.bf16.mxu0 0
  %2079 = vmatpush1.bf16.msra.mxu0 0
  %2080 = vmatprep.subr.bf16.mxu0 0
  %2081 = vmatpush1.bf16.msra.mxu0 0
  %2082 = vmatprep.subr.bf16.mxu0 0
  %2083 = vmatpush1.bf16.msra.mxu0 0
  %2084 = vmatprep.subr.bf16.mxu0 0
  %2085 = vmatpush1.bf16.msra.mxu0 0
  %2086 = vmatprep.subr.bf16.mxu0 0
  %2087 = vmatpush1.bf16.msra.mxu0 0
  %2088 = vmatprep.subr.bf16.mxu0 0
  %2089 = vmatpush1.bf16.msra.mxu0 0
  %2090 = vmatprep.mubr.bf16.mxu0 0
  %2091 = vmatmul.mubr.bf16.gmra.mrb[0].mxu0 %v2056
  %v2092 = vpop.f32.mrb[0].mxu0
  %v2093 = vadd.f32 %v1818, %v2092
  %v2094 = vpop.f32.mrb[0].mxu0
  %v2095 = vadd.f32 %v1822, %v2094
  %v2096 = vpop.f32.mrb[0].mxu0
  %v2097 = vadd.f32 %v1818, %v2096
  %v2098 = vpop.f32.mrb[0].mxu0
  %v2099 = vadd.f32 %v1822, %v2098
  %2100 = vdwg.mxu0
  %2101 = vmatprep.subr.bf16.mxu0 %v1994
  %2102 = vmatpush1.bf16.msra.mxu0 %v1993
  %2103 = vmatprep.subr.bf16.mxu0 %v2010
  %2104 = vmatpush1.bf16.msra.mxu0 %v2009
  %2105 = vmatprep.subr.bf16.mxu0 0
  %2106 = vmatpush1.bf16.msra.mxu0 0
  %2107 = vmatprep.subr.bf16.mxu0 0
  %2108 = vmatpush1.bf16.msra.mxu0 0
  %2109 = vmatprep.subr.bf16.mxu0 0
  %2110 = vmatpush1.bf16.msra.mxu0 0
  %2111 = vmatprep.subr.bf16.mxu0 0
  %2112 = vmatpush1.bf16.msra.mxu0 0
  %2113 = vmatprep.subr.bf16.mxu0 0
  %2114 = vmatpush1.bf16.msra.mxu0 0
  %2115 = vmatprep.subr.bf16.mxu0 0
  %2116 = vmatpush1.bf16.msra.mxu0 0
  %2117 = vmatprep.subr.bf16.mxu0 0
  %2118 = vmatpush1.bf16.msra.mxu0 0
  %2119 = vmatprep.subr.bf16.mxu0 0
  %2120 = vmatpush1.bf16.msra.mxu0 0
  %2121 = vmatprep.subr.bf16.mxu0 0
  %2122 = vmatpush1.bf16.msra.mxu0 0
  %2123 = vmatprep.subr.bf16.mxu0 0
  %2124 = vmatpush1.bf16.msra.mxu0 0
  %2125 = vmatprep.subr.bf16.mxu0 0
  %2126 = vmatpush1.bf16.msra.mxu0 0
  %2127 = vmatprep.subr.bf16.mxu0 0
  %2128 = vmatpush1.bf16.msra.mxu0 0
  %2129 = vmatprep.subr.bf16.mxu0 0
  %2130 = vmatpush1.bf16.msra.mxu0 0
  %2131 = vmatprep.subr.bf16.mxu0 0
  %2132 = vmatpush1.bf16.msra.mxu0 0
  %2133 = vmatprep.mubr.bf16.mxu0 0
  %2134 = vmatmul.mubr.bf16.gmra.mrb[0].mxu0 %v2056
  %v2135 = vpop.f32.mrb[0].mxu0
  %v2136 = vadd.f32 %v1826, %v2135
  %v2137 = vpop.f32.mrb[0].mxu0
  %v2138 = vadd.f32 %v1830, %v2137
  %v2139 = vpop.f32.mrb[0].mxu0
  %v2140 = vadd.f32 %v1826, %v2139
  %v2141 = vpop.f32.mrb[0].mxu0
  %v2142 = vadd.f32 %v1830, %v2141
  %2143 = vdwg.mxu0
  %2144 = vmatprep.subr.bf16.mxu0 %v1996
  %2145 = vmatpush1.bf16.msra.mxu0 %v1995
  %2146 = vmatprep.subr.bf16.mxu0 %v2012
  %2147 = vmatpush1.bf16.msra.mxu0 %v2011
  %2148 = vmatprep.subr.bf16.mxu0 0
  %2149 = vmatpush1.bf16.msra.mxu0 0
  %2150 = vmatprep.subr.bf16.mxu0 0
  %2151 = vmatpush1.bf16.msra.mxu0 0
  %2152 = vmatprep.subr.bf16.mxu0 0
  %2153 = vmatpush1.bf16.msra.mxu0 0
  %2154 = vmatprep.subr.bf16.mxu0 0
  %2155 = vmatpush1.bf16.msra.mxu0 0
  %2156 = vmatprep.subr.bf16.mxu0 0
  %2157 = vmatpush1.bf16.msra.mxu0 0
  %2158 = vmatprep.subr.bf16.mxu0 0
  %2159 = vmatpush1.bf16.msra.mxu0 0
  %2160 = vmatprep.subr.bf16.mxu0 0
  %2161 = vmatpush1.bf16.msra.mxu0 0
  %2162 = vmatprep.subr.bf16.mxu0 0
  %2163 = vmatpush1.bf16.msra.mxu0 0
  %2164 = vmatprep.subr.bf16.mxu0 0
  %2165 = vmatpush1.bf16.msra.mxu0 0
  %2166 = vmatprep.subr.bf16.mxu0 0
  %2167 = vmatpush1.bf16.msra.mxu0 0
  %2168 = vmatprep.subr.bf16.mxu0 0
  %2169 = vmatpush1.bf16.msra.mxu0 0
  %2170 = vmatprep.subr.bf16.mxu0 0
  %2171 = vmatpush1.bf16.msra.mxu0 0
  %2172 = vmatprep.subr.bf16.mxu0 0
  %2173 = vmatpush1.bf16.msra.mxu0 0
  %2174 = vmatprep.subr.bf16.mxu0 0
  %2175 = vmatpush1.bf16.msra.mxu0 0
  %2176 = vmatprep.mubr.bf16.mxu0 0
  %2177 = vmatmul.mubr.bf16.gmra.mrb[0].mxu0 %v2056
  %v2178 = vpop.f32.mrb[0].mxu0
  %v2179 = vadd.f32 %v1834, %v2178
  %v2180 = vpop.f32.mrb[0].mxu0
  %v2181 = vadd.f32 %v1838, %v2180
  %v2182 = vpop.f32.mrb[0].mxu0
  %v2183 = vadd.f32 %v1834, %v2182
  %v2184 = vpop.f32.mrb[0].mxu0
  %v2185 = vadd.f32 %v1838, %v2184
  %2186 = vdwg.mxu0
  %2187 = vmatprep.subr.bf16.mxu0 %v1998
  %2188 = vmatpush1.bf16.msra.mxu0 %v1997
  %2189 = vmatprep.subr.bf16.mxu0 %v2014
  %2190 = vmatpush1.bf16.msra.mxu0 %v2013
  %2191 = vmatprep.subr.bf16.mxu0 0
  %2192 = vmatpush1.bf16.msra.mxu0 0
  %2193 = vmatprep.subr.bf16.mxu0 0
  %2194 = vmatpush1.bf16.msra.mxu0 0
  %2195 = vmatprep.subr.bf16.mxu0 0
  %2196 = vmatpush1.bf16.msra.mxu0 0
  %2197 = vmatprep.subr.bf16.mxu0 0
  %2198 = vmatpush1.bf16.msra.mxu0 0
  %2199 = vmatprep.subr.bf16.mxu0 0
  %2200 = vmatpush1.bf16.msra.mxu0 0
  %2201 = vmatprep.subr.bf16.mxu0 0
  %2202 = vmatpush1.bf16.msra.mxu0 0
  %2203 = vmatprep.subr.bf16.mxu0 0
  %2204 = vmatpush1.bf16.msra.mxu0 0
  %2205 = vmatprep.subr.bf16.mxu0 0
  %2206 = vmatpush1.bf16.msra.mxu0 0
  %2207 = vmatprep.subr.bf16.mxu0 0
  %2208 = vmatpush1.bf16.msra.mxu0 0
  %2209 = vmatprep.subr.bf16.mxu0 0
  %2210 = vmatpush1.bf16.msra.mxu0 0
  %2211 = vmatprep.subr.bf16.mxu0 0
  %2212 = vmatpush1.bf16.msra.mxu0 0
  %2213 = vmatprep.subr.bf16.mxu0 0
  %2214 = vmatpush1.bf16.msra.mxu0 0
  %2215 = vmatprep.subr.bf16.mxu0 0
  %2216 = vmatpush1.bf16.msra.mxu0 0
  %2217 = vmatprep.subr.bf16.mxu0 0
  %2218 = vmatpush1.bf16.msra.mxu0 0
  %2219 = vmatprep.mubr.bf16.mxu0 0
  %2220 = vmatmul.mubr.bf16.gmra.mrb[0].mxu0 %v2056
  %v2221 = vpop.f32.mrb[0].mxu0
  %v2222 = vadd.f32 %v1842, %v2221
  %v2223 = vpop.f32.mrb[0].mxu0
  %v2224 = vadd.f32 %v1846, %v2223
  %v2225 = vpop.f32.mrb[0].mxu0
  %v2226 = vadd.f32 %v1842, %v2225
  %v2227 = vpop.f32.mrb[0].mxu0
  %v2228 = vadd.f32 %v1846, %v2227
  %2229 = vdwg.mxu0
  %2230 = vmatprep.subr.bf16.mxu0 %v2000
  %2231 = vmatpush1.bf16.msra.mxu0 %v1999
  %2232 = vmatprep.subr.bf16.mxu0 %v2016
  %2233 = vmatpush1.bf16.msra.mxu0 %v2015
  %2234 = vmatprep.subr.bf16.mxu0 0
  %2235 = vmatpush1.bf16.msra.mxu0 0
  %2236 = vmatprep.subr.bf16.mxu0 0
  %2237 = vmatpush1.bf16.msra.mxu0 0
  %2238 = vmatprep.subr.bf16.mxu0 0
  %2239 = vmatpush1.bf16.msra.mxu0 0
  %2240 = vmatprep.subr.bf16.mxu0 0
  %2241 = vmatpush1.bf16.msra.mxu0 0
  %2242 = vmatprep.subr.bf16.mxu0 0
  %2243 = vmatpush1.bf16.msra.mxu0 0
  %2244 = vmatprep.subr.bf16.mxu0 0
  %2245 = vmatpush1.bf16.msra.mxu0 0
  %2246 = vmatprep.subr.bf16.mxu0 0
  %2247 = vmatpush1.bf16.msra.mxu0 0
  %2248 = vmatprep.subr.bf16.mxu0 0
  %2249 = vmatpush1.bf16.msra.mxu0 0
  %2250 = vmatprep.subr.bf16.mxu0 0
  %2251 = vmatpush1.bf16.msra.mxu0 0
  %2252 = vmatprep.subr.bf16.mxu0 0
  %2253 = vmatpush1.bf16.msra.mxu0 0
  %2254 = vmatprep.subr.bf16.mxu0 0
  %2255 = vmatpush1.bf16.msra.mxu0 0
  %2256 = vmatprep.subr.bf16.mxu0 0
  %2257 = vmatpush1.bf16.msra.mxu0 0
  %2258 = vmatprep.subr.bf16.mxu0 0
  %2259 = vmatpush1.bf16.msra.mxu0 0
  %2260 = vmatprep.subr.bf16.mxu0 0
  %2261 = vmatpush1.bf16.msra.mxu0 0
  %2262 = vmatprep.mubr.bf16.mxu0 0
  %2263 = vmatmul.mubr.bf16.gmra.mrb[0].mxu0 %v2056
  %v2264 = vpop.f32.mrb[0].mxu0
  %v2265 = vadd.f32 %v1850, %v2264
  %v2266 = vpop.f32.mrb[0].mxu0
  %v2267 = vadd.f32 %v1854, %v2266
  %v2268 = vpop.f32.mrb[0].mxu0
  %v2269 = vadd.f32 %v1850, %v2268
  %v2270 = vpop.f32.mrb[0].mxu0
  %v2271 = vadd.f32 %v1854, %v2270
  %2272 = vdwg.mxu0
  %2273 = vmatprep.subr.bf16.mxu0 %v2002
  %2274 = vmatpush1.bf16.msra.mxu0 %v2001
  %2275 = vmatprep.subr.bf16.mxu0 %v2018
  %2276 = vmatpush1.bf16.msra.mxu0 %v2017
  %2277 = vmatprep.subr.bf16.mxu0 0
  %2278 = vmatpush1.bf16.msra.mxu0 0
  %2279 = vmatprep.subr.bf16.mxu0 0
  %2280 = vmatpush1.bf16.msra.mxu0 0
  %2281 = vmatprep.subr.bf16.mxu0 0
  %2282 = vmatpush1.bf16.msra.mxu0 0
  %2283 = vmatprep.subr.bf16.mxu0 0
  %2284 = vmatpush1.bf16.msra.mxu0 0
  %2285 = vmatprep.subr.bf16.mxu0 0
  %2286 = vmatpush1.bf16.msra.mxu0 0
  %2287 = vmatprep.subr.bf16.mxu0 0
  %2288 = vmatpush1.bf16.msra.mxu0 0
  %2289 = vmatprep.subr.bf16.mxu0 0
  %2290 = vmatpush1.bf16.msra.mxu0 0
  %2291 = vmatprep.subr.bf16.mxu0 0
  %2292 = vmatpush1.bf16.msra.mxu0 0
  %2293 = vmatprep.subr.bf16.mxu0 0
  %2294 = vmatpush1.bf16.msra.mxu0 0
  %2295 = vmatprep.subr.bf16.mxu0 0
  %2296 = vmatpush1.bf16.msra.mxu0 0
  %2297 = vmatprep.subr.bf16.mxu0 0
  %2298 = vmatpush1.bf16.msra.mxu0 0
  %2299 = vmatprep.subr.bf16.mxu0 0
  %2300 = vmatpush1.bf16.msra.mxu0 0
  %2301 = vmatprep.subr.bf16.mxu0 0
  %2302 = vmatpush1.bf16.msra.mxu0 0
  %2303 = vmatprep.subr.bf16.mxu0 0
  %2304 = vmatpush1.bf16.msra.mxu0 0
  %2305 = vmatprep.mubr.bf16.mxu0 0
  %2306 = vmatmul.mubr.bf16.gmra.mrb[0].mxu0 %v2056
  %v2307 = vpop.f32.mrb[0].mxu0
  %v2308 = vadd.f32 %v1858, %v2307
  %v2309 = vpop.f32.mrb[0].mxu0
  %v2310 = vadd.f32 %v1862, %v2309
  %v2311 = vpop.f32.mrb[0].mxu0
  %v2312 = vadd.f32 %v1858, %v2311
  %v2313 = vpop.f32.mrb[0].mxu0
  %v2314 = vadd.f32 %v1862, %v2313
  %2315 = vdwg.mxu0
  %2316 = vmatprep.subr.bf16.mxu0 %v2004
  %2317 = vmatpush1.bf16.msra.mxu0 %v2003
  %2318 = vmatprep.subr.bf16.mxu0 %v2020
  %2319 = vmatpush1.bf16.msra.mxu0 %v2019
  %2320 = vmatprep.subr.bf16.mxu0 0
  %2321 = vmatpush1.bf16.msra.mxu0 0
  %2322 = vmatprep.subr.bf16.mxu0 0
  %2323 = vmatpush1.bf16.msra.mxu0 0
  %2324 = vmatprep.subr.bf16.mxu0 0
  %2325 = vmatpush1.bf16.msra.mxu0 0
  %2326 = vmatprep.subr.bf16.mxu0 0
  %2327 = vmatpush1.bf16.msra.mxu0 0
  %2328 = vmatprep.subr.bf16.mxu0 0
  %2329 = vmatpush1.bf16.msra.mxu0 0
  %2330 = vmatprep.subr.bf16.mxu0 0
  %2331 = vmatpush1.bf16.msra.mxu0 0
  %2332 = vmatprep.subr.bf16.mxu0 0
  %2333 = vmatpush1.bf16.msra.mxu0 0
  %2334 = vmatprep.subr.bf16.mxu0 0
  %2335 = vmatpush1.bf16.msra.mxu0 0
  %2336 = vmatprep.subr.bf16.mxu0 0
  %2337 = vmatpush1.bf16.msra.mxu0 0
  %2338 = vmatprep.subr.bf16.mxu0 0
  %2339 = vmatpush1.bf16.msra.mxu0 0
  %2340 = vmatprep.subr.bf16.mxu0 0
  %2341 = vmatpush1.bf16.msra.mxu0 0
  %2342 = vmatprep.subr.bf16.mxu0 0
  %2343 = vmatpush1.bf16.msra.mxu0 0
  %2344 = vmatprep.subr.bf16.mxu0 0
  %2345 = vmatpush1.bf16.msra.mxu0 0
  %2346 = vmatprep.subr.bf16.mxu0 0
  %2347 = vmatpush1.bf16.msra.mxu0 0
  %2348 = vmatprep.mubr.bf16.mxu0 0
  %2349 = vmatmul.mubr.bf16.gmra.mrb[0].mxu0 %v2056
  %v2350 = vpop.f32.mrb[0].mxu0
  %v2351 = vadd.f32 %v1866, %v2350
  %v2352 = vpop.f32.mrb[0].mxu0
  %v2353 = vadd.f32 %v1870, %v2352
  %v2354 = vpop.f32.mrb[0].mxu0
  %v2355 = vadd.f32 %v1866, %v2354
  %v2356 = vpop.f32.mrb[0].mxu0
  %v2357 = vadd.f32 %v1870, %v2356
  %2358 = vdwg.mxu0
  %2359 = vmatprep.subr.bf16.mxu0 %v2006
  %2360 = vmatpush1.bf16.msra.mxu0 %v2005
  %2361 = vmatprep.subr.bf16.mxu0 %v2022
  %2362 = vmatpush1.bf16.msra.mxu0 %v2021
  %2363 = vmatprep.subr.bf16.mxu0 0
  %2364 = vmatpush1.bf16.msra.mxu0 0
  %2365 = vmatprep.subr.bf16.mxu0 0
  %2366 = vmatpush1.bf16.msra.mxu0 0
  %2367 = vmatprep.subr.bf16.mxu0 0
  %2368 = vmatpush1.bf16.msra.mxu0 0
  %2369 = vmatprep.subr.bf16.mxu0 0
  %2370 = vmatpush1.bf16.msra.mxu0 0
  %2371 = vmatprep.subr.bf16.mxu0 0
  %2372 = vmatpush1.bf16.msra.mxu0 0
  %2373 = vmatprep.subr.bf16.mxu0 0
  %2374 = vmatpush1.bf16.msra.mxu0 0
  %2375 = vmatprep.subr.bf16.mxu0 0
  %2376 = vmatpush1.bf16.msra.mxu0 0
  %2377 = vmatprep.subr.bf16.mxu0 0
  %2378 = vmatpush1.bf16.msra.mxu0 0
  %2379 = vmatprep.subr.bf16.mxu0 0
  %2380 = vmatpush1.bf16.msra.mxu0 0
  %2381 = vmatprep.subr.bf16.mxu0 0
  %2382 = vmatpush1.bf16.msra.mxu0 0
  %2383 = vmatprep.subr.bf16.mxu0 0
  %2384 = vmatpush1.bf16.msra.mxu0 0
  %2385 = vmatprep.subr.bf16.mxu0 0
  %2386 = vmatpush1.bf16.msra.mxu0 0
  %2387 = vmatprep.subr.bf16.mxu0 0
  %2388 = vmatpush1.bf16.msra.mxu0 0
  %2389 = vmatprep.subr.bf16.mxu0 0
  %2390 = vmatpush1.bf16.msra.mxu0 0
  %2391 = vmatprep.mubr.bf16.mxu0 0
  %2392 = vmatmul.mubr.bf16.gmra.mrb[0].mxu0 %v2056
  %v2393 = vpop.f32.mrb[0].mxu0
  %v2394 = vadd.f32 %v1874, %v2393
  %v2395 = vpop.f32.mrb[0].mxu0
  %v2396 = vadd.f32 %v1878, %v2395
  %v2397 = vpop.f32.mrb[0].mxu0
  %v2398 = vadd.f32 %v1874, %v2397
  %v2399 = vpop.f32.mrb[0].mxu0
  %v2400 = vadd.f32 %v1878, %v2399
  %2401 = vdwg.mxu0
  %v2402 = vmax.f32 %v2093, 0.0
  %v2403 = vmax.f32 %v2095, 0.0
  %v2404 = vmax.f32 %v2136, 0.0
  %v2405 = vmax.f32 %v2138, 0.0
  %v2406 = vmax.f32 %v2179, 0.0
  %v2407 = vmax.f32 %v2181, 0.0
  %v2408 = vmax.f32 %v2222, 0.0
  %v2409 = vmax.f32 %v2224, 0.0
  %v2410 = vmax.f32 %v2265, 0.0
  %v2411 = vmax.f32 %v2267, 0.0
  %v2412 = vmax.f32 %v2308, 0.0
  %v2413 = vmax.f32 %v2310, 0.0
  %v2414 = vmax.f32 %v2351, 0.0
  %v2415 = vmax.f32 %v2353, 0.0
  %v2416 = vmax.f32 %v2394, 0.0
  %v2417 = vmax.f32 %v2396, 0.0
  %v2418 = vmax.f32 %v2097, 0.0
  %v2419 = vmax.f32 %v2099, 0.0
  %v2420 = vmax.f32 %v2140, 0.0
  %v2421 = vmax.f32 %v2142, 0.0
  %v2422 = vmax.f32 %v2183, 0.0
  %v2423 = vmax.f32 %v2185, 0.0
  %v2424 = vmax.f32 %v2226, 0.0
  %v2425 = vmax.f32 %v2228, 0.0
  %v2426 = vmax.f32 %v2269, 0.0
  %v2427 = vmax.f32 %v2271, 0.0
  %v2428 = vmax.f32 %v2312, 0.0
  %v2429 = vmax.f32 %v2314, 0.0
  %v2430 = vmax.f32 %v2355, 0.0
  %v2431 = vmax.f32 %v2357, 0.0
  %v2432 = vmax.f32 %v2398, 0.0
  %v2433 = vmax.f32 %v2400, 0.0
  %v2434 = vpack.c.bf16 %v2418, %v2402
  %v2435 = vpack.c.bf16 %v2419, %v2403
  %v2436 = vpack.c.bf16 %v2420, %v2404
  %v2437 = vpack.c.bf16 %v2421, %v2405
  %v2438 = vpack.c.bf16 %v2422, %v2406
  %v2439 = vpack.c.bf16 %v2423, %v2407
  %v2440 = vpack.c.bf16 %v2424, %v2408
  %v2441 = vpack.c.bf16 %v2425, %v2409
  %v2442 = vpack.c.bf16 %v2426, %v2410
  %v2443 = vpack.c.bf16 %v2427, %v2411
  %v2444 = vpack.c.bf16 %v2428, %v2412
  %v2445 = vpack.c.bf16 %v2429, %v2413
  %v2446 = vpack.c.bf16 %v2430, %v2414
  %v2447 = vpack.c.bf16 %v2431, %v2415
  %v2448 = vpack.c.bf16 %v2432, %v2416
  %v2449 = vpack.c.bf16 %v2433, %v2417
  %v2450 = vld [vmem:[%s13] sm:$0xf]
  %v2451 = vld [vmem:[%s13 + $0x4] sm:$0xf]
  %v2452 = vld [vmem:[%s13 + $0x8] sm:$0xf]
  %v2453 = vld [vmem:[%s13 + $0xc] sm:$0xf]
  %v2454 = vld [vmem:[%s13 + $0x10] sm:$0xf]
  %v2455 = vld [vmem:[%s13 + $0x14] sm:$0xf]
  %v2456 = vld [vmem:[%s13 + $0x18] sm:$0xf]
  %v2457 = vld [vmem:[%s13 + $0x1c] sm:$0xf]
  %v2458 = vld [vmem:[%s13 + $0x20] sm:$0xf]
  %v2459 = vld [vmem:[%s13 + $0x24] sm:$0xf]
  %v2460 = vld [vmem:[%s13 + $0x28] sm:$0xf]
  %v2461 = vld [vmem:[%s13 + $0x2c] sm:$0xf]
  %v2462 = vld [vmem:[%s13 + $0x30] sm:$0xf]
  %v2463 = vld [vmem:[%s13 + $0x34] sm:$0xf]
  %v2464 = vld [vmem:[%s13 + $0x38] sm:$0xf]
  %v2465 = vld [vmem:[%s13 + $0x3c] sm:$0xf]
  %v2466 = vld [vmem:[%s13 + $0x40] sm:$0xf]
  %v2467 = vld [vmem:[%s13 + $0x44] sm:$0xf]
  %v2468 = vld [vmem:[%s13 + $0x48] sm:$0xf]
  %v2469 = vld [vmem:[%s13 + $0x4c] sm:$0xf]
  %v2470 = vld [vmem:[%s13 + $0x50] sm:$0xf]
  %v2471 = vld [vmem:[%s13 + $0x54] sm:$0xf]
  %v2472 = vld [vmem:[%s13 + $0x58] sm:$0xf]
  %v2473 = vld [vmem:[%s13 + $0x5c] sm:$0xf]
  %v2474 = vld [vmem:[%s13 + $0x60] sm:$0xf]
  %v2475 = vld [vmem:[%s13 + $0x64] sm:$0xf]
  %v2476 = vld [vmem:[%s13 + $0x68] sm:$0xf]
  %v2477 = vld [vmem:[%s13 + $0x6c] sm:$0xf]
  %v2478 = vld [vmem:[%s13 + $0x70] sm:$0xf]
  %v2479 = vld [vmem:[%s13 + $0x74] sm:$0xf]
  %v2480 = vld [vmem:[%s13 + $0x78] sm:$0xf]
  %v2481 = vld [vmem:[%s13 + $0x7c] sm:$0xf]
  %v2482 = vld [vmem:[%s13 + $0x80] sm:$0xf]
  %v2483 = vld [vmem:[%s13 + $0x84] sm:$0xf]
  %v2484 = vld [vmem:[%s13 + $0x88] sm:$0xf]
  %v2485 = vld [vmem:[%s13 + $0x8c] sm:$0xf]
  %v2486 = vld [vmem:[%s13 + $0x90] sm:$0xf]
  %v2487 = vld [vmem:[%s13 + $0x94] sm:$0xf]
  %v2488 = vld [vmem:[%s13 + $0x98] sm:$0xf]
  %v2489 = vld [vmem:[%s13 + $0x9c] sm:$0xf]
  %v2490 = vld [vmem:[%s13 + $0xa0] sm:$0xf]
  %v2491 = vld [vmem:[%s13 + $0xa4] sm:$0xf]
  %v2492 = vld [vmem:[%s13 + $0xa8] sm:$0xf]
  %v2493 = vld [vmem:[%s13 + $0xac] sm:$0xf]
  %v2494 = vld [vmem:[%s13 + $0xb0] sm:$0xf]
  %v2495 = vld [vmem:[%s13 + $0xb4] sm:$0xf]
  %v2496 = vld [vmem:[%s13 + $0xb8] sm:$0xf]
  %v2497 = vld [vmem:[%s13 + $0xbc] sm:$0xf]
  %v2498 = vld [vmem:[%s13 + $0xc0] sm:$0xf]
  %v2499 = vld [vmem:[%s13 + $0xc4] sm:$0xf]
  %v2500 = vld [vmem:[%s13 + $0xc8] sm:$0xf]
  %v2501 = vld [vmem:[%s13 + $0xcc] sm:$0xf]
  %v2502 = vld [vmem:[%s13 + $0xd0] sm:$0xf]
  %v2503 = vld [vmem:[%s13 + $0xd4] sm:$0xf]
  %v2504 = vld [vmem:[%s13 + $0xd8] sm:$0xf]
  %v2505 = vld [vmem:[%s13 + $0xdc] sm:$0xf]
  %v2506 = vld [vmem:[%s13 + $0xe0] sm:$0xf]
  %v2507 = vld [vmem:[%s13 + $0xe4] sm:$0xf]
  %v2508 = vld [vmem:[%s13 + $0xe8] sm:$0xf]
  %v2509 = vld [vmem:[%s13 + $0xec] sm:$0xf]
  %v2510 = vld [vmem:[%s13 + $0xf0] sm:$0xf]
  %v2511 = vld [vmem:[%s13 + $0xf4] sm:$0xf]
  %v2512 = vld [vmem:[%s13 + $0xf8] sm:$0xf]
  %v2513 = vld [vmem:[%s13 + $0xfc] sm:$0xf]
  %v2514 = vld [vmem:[%s13 + $0x100] sm:$0xf]
  %v2515 = vld [vmem:[%s13 + $0x104] sm:$0xf]
  %v2516 = vld [vmem:[%s13 + $0x108] sm:$0xf]
  %v2517 = vld [vmem:[%s13 + $0x10c] sm:$0xf]
  %v2518 = vld [vmem:[%s13 + $0x110] sm:$0xf]
  %v2519 = vld [vmem:[%s13 + $0x114] sm:$0xf]
  %v2520 = vld [vmem:[%s13 + $0x118] sm:$0xf]
  %v2521 = vld [vmem:[%s13 + $0x11c] sm:$0xf]
  %v2522 = vld [vmem:[%s13 + $0x120] sm:$0xf]
  %v2523 = vld [vmem:[%s13 + $0x124] sm:$0xf]
  %v2524 = vld [vmem:[%s13 + $0x128] sm:$0xf]
  %v2525 = vld [vmem:[%s13 + $0x12c] sm:$0xf]
  %v2526 = vld [vmem:[%s13 + $0x130] sm:$0xf]
  %v2527 = vld [vmem:[%s13 + $0x134] sm:$0xf]
  %v2528 = vld [vmem:[%s13 + $0x138] sm:$0xf]
  %v2529 = vld [vmem:[%s13 + $0x13c] sm:$0xf]
  %v2530 = vld [vmem:[%s13 + $0x140] sm:$0xf]
  %v2531 = vld [vmem:[%s13 + $0x144] sm:$0xf]
  %v2532 = vld [vmem:[%s13 + $0x148] sm:$0xf]
  %v2533 = vld [vmem:[%s13 + $0x14c] sm:$0xf]
  %v2534 = vld [vmem:[%s13 + $0x150] sm:$0xf]
  %v2535 = vld [vmem:[%s13 + $0x154] sm:$0xf]
  %v2536 = vld [vmem:[%s13 + $0x158] sm:$0xf]
  %v2537 = vld [vmem:[%s13 + $0x15c] sm:$0xf]
  %v2538 = vld [vmem:[%s13 + $0x160] sm:$0xf]
  %v2539 = vld [vmem:[%s13 + $0x164] sm:$0xf]
  %v2540 = vld [vmem:[%s13 + $0x168] sm:$0xf]
  %v2541 = vld [vmem:[%s13 + $0x16c] sm:$0xf]
  %v2542 = vld [vmem:[%s13 + $0x170] sm:$0xf]
  %v2543 = vld [vmem:[%s13 + $0x174] sm:$0xf]
  %v2544 = vld [vmem:[%s13 + $0x178] sm:$0xf]
  %v2545 = vld [vmem:[%s13 + $0x17c] sm:$0xf]
  %v2546 = vld [vmem:[%s13 + $0x180] sm:$0xf]
  %v2547 = vld [vmem:[%s13 + $0x184] sm:$0xf]
  %v2548 = vld [vmem:[%s13 + $0x188] sm:$0xf]
  %v2549 = vld [vmem:[%s13 + $0x18c] sm:$0xf]
  %v2550 = vld [vmem:[%s13 + $0x190] sm:$0xf]
  %v2551 = vld [vmem:[%s13 + $0x194] sm:$0xf]
  %v2552 = vld [vmem:[%s13 + $0x198] sm:$0xf]
  %v2553 = vld [vmem:[%s13 + $0x19c] sm:$0xf]
  %v2554 = vld [vmem:[%s13 + $0x1a0] sm:$0xf]
  %v2555 = vld [vmem:[%s13 + $0x1a4] sm:$0xf]
  %v2556 = vld [vmem:[%s13 + $0x1a8] sm:$0xf]
  %v2557 = vld [vmem:[%s13 + $0x1ac] sm:$0xf]
  %v2558 = vld [vmem:[%s13 + $0x1b0] sm:$0xf]
  %v2559 = vld [vmem:[%s13 + $0x1b4] sm:$0xf]
  %v2560 = vld [vmem:[%s13 + $0x1b8] sm:$0xf]
  %v2561 = vld [vmem:[%s13 + $0x1bc] sm:$0xf]
  %v2562 = vld [vmem:[%s13 + $0x1c0] sm:$0xf]
  %v2563 = vld [vmem:[%s13 + $0x1c4] sm:$0xf]
  %v2564 = vld [vmem:[%s13 + $0x1c8] sm:$0xf]
  %v2565 = vld [vmem:[%s13 + $0x1cc] sm:$0xf]
  %v2566 = vld [vmem:[%s13 + $0x1d0] sm:$0xf]
  %v2567 = vld [vmem:[%s13 + $0x1d4] sm:$0xf]
  %v2568 = vld [vmem:[%s13 + $0x1d8] sm:$0xf]
  %v2569 = vld [vmem:[%s13 + $0x1dc] sm:$0xf]
  %v2570 = vld [vmem:[%s13 + $0x1e0] sm:$0xf]
  %v2571 = vld [vmem:[%s13 + $0x1e4] sm:$0xf]
  %v2572 = vld [vmem:[%s13 + $0x1e8] sm:$0xf]
  %v2573 = vld [vmem:[%s13 + $0x1ec] sm:$0xf]
  %v2574 = vld [vmem:[%s13 + $0x1f0] sm:$0xf]
  %v2575 = vld [vmem:[%s13 + $0x1f4] sm:$0xf]
  %v2576 = vld [vmem:[%s13 + $0x1f8] sm:$0xf]
  %v2577 = vld [vmem:[%s13 + $0x1fc] sm:$0xf]
  %v2578 = vld [vmem:[%s13 + $0x200] sm:$0xf]
  %v2579 = vld [vmem:[%s13 + $0x204] sm:$0xf]
  %v2580 = vld [vmem:[%s13 + $0x208] sm:$0xf]
  %v2581 = vld [vmem:[%s13 + $0x20c] sm:$0xf]
  %v2582 = vld [vmem:[%s13 + $0x210] sm:$0xf]
  %v2583 = vld [vmem:[%s13 + $0x214] sm:$0xf]
  %v2584 = vld [vmem:[%s13 + $0x218] sm:$0xf]
  %v2585 = vld [vmem:[%s13 + $0x21c] sm:$0xf]
  %v2586 = vld [vmem:[%s13 + $0x220] sm:$0xf]
  %v2587 = vld [vmem:[%s13 + $0x224] sm:$0xf]
  %v2588 = vld [vmem:[%s13 + $0x228] sm:$0xf]
  %v2589 = vld [vmem:[%s13 + $0x22c] sm:$0xf]
  %v2590 = vld [vmem:[%s13 + $0x230] sm:$0xf]
  %v2591 = vld [vmem:[%s13 + $0x234] sm:$0xf]
  %v2592 = vld [vmem:[%s13 + $0x238] sm:$0xf]
  %v2593 = vld [vmem:[%s13 + $0x23c] sm:$0xf]
  %v2594 = vld [vmem:[%s13 + $0x240] sm:$0xf]
  %v2595 = vld [vmem:[%s13 + $0x244] sm:$0xf]
  %v2596 = vld [vmem:[%s13 + $0x248] sm:$0xf]
  %v2597 = vld [vmem:[%s13 + $0x24c] sm:$0xf]
  %v2598 = vld [vmem:[%s13 + $0x250] sm:$0xf]
  %v2599 = vld [vmem:[%s13 + $0x254] sm:$0xf]
  %v2600 = vld [vmem:[%s13 + $0x258] sm:$0xf]
  %v2601 = vld [vmem:[%s13 + $0x25c] sm:$0xf]
  %v2602 = vld [vmem:[%s13 + $0x260] sm:$0xf]
  %v2603 = vld [vmem:[%s13 + $0x264] sm:$0xf]
  %v2604 = vld [vmem:[%s13 + $0x268] sm:$0xf]
  %v2605 = vld [vmem:[%s13 + $0x26c] sm:$0xf]
  %v2606 = vld [vmem:[%s13 + $0x270] sm:$0xf]
  %v2607 = vld [vmem:[%s13 + $0x274] sm:$0xf]
  %v2608 = vld [vmem:[%s13 + $0x278] sm:$0xf]
  %v2609 = vld [vmem:[%s13 + $0x27c] sm:$0xf]
  %v2610 = vld [vmem:[%s13 + $0x280] sm:$0xf]
  %v2611 = vld [vmem:[%s13 + $0x284] sm:$0xf]
  %v2612 = vld [vmem:[%s13 + $0x288] sm:$0xf]
  %v2613 = vld [vmem:[%s13 + $0x28c] sm:$0xf]
  %v2614 = vld [vmem:[%s13 + $0x290] sm:$0xf]
  %v2615 = vld [vmem:[%s13 + $0x294] sm:$0xf]
  %v2616 = vld [vmem:[%s13 + $0x298] sm:$0xf]
  %v2617 = vld [vmem:[%s13 + $0x29c] sm:$0xf]
  %v2618 = vld [vmem:[%s13 + $0x2a0] sm:$0xf]
  %v2619 = vld [vmem:[%s13 + $0x2a4] sm:$0xf]
  %v2620 = vld [vmem:[%s13 + $0x2a8] sm:$0xf]
  %v2621 = vld [vmem:[%s13 + $0x2ac] sm:$0xf]
  %v2622 = vld [vmem:[%s13 + $0x2b0] sm:$0xf]
  %v2623 = vld [vmem:[%s13 + $0x2b4] sm:$0xf]
  %v2624 = vld [vmem:[%s13 + $0x2b8] sm:$0xf]
  %v2625 = vld [vmem:[%s13 + $0x2bc] sm:$0xf]
  %v2626 = vld [vmem:[%s13 + $0x2c0] sm:$0xf]
  %v2627 = vld [vmem:[%s13 + $0x2c4] sm:$0xf]
  %v2628 = vld [vmem:[%s13 + $0x2c8] sm:$0xf]
  %v2629 = vld [vmem:[%s13 + $0x2cc] sm:$0xf]
  %v2630 = vld [vmem:[%s13 + $0x2d0] sm:$0xf]
  %v2631 = vld [vmem:[%s13 + $0x2d4] sm:$0xf]
  %v2632 = vld [vmem:[%s13 + $0x2d8] sm:$0xf]
  %v2633 = vld [vmem:[%s13 + $0x2dc] sm:$0xf]
  %v2634 = vld [vmem:[%s13 + $0x2e0] sm:$0xf]
  %v2635 = vld [vmem:[%s13 + $0x2e4] sm:$0xf]
  %v2636 = vld [vmem:[%s13 + $0x2e8] sm:$0xf]
  %v2637 = vld [vmem:[%s13 + $0x2ec] sm:$0xf]
  %v2638 = vld [vmem:[%s13 + $0x2f0] sm:$0xf]
  %v2639 = vld [vmem:[%s13 + $0x2f4] sm:$0xf]
  %v2640 = vld [vmem:[%s13 + $0x2f8] sm:$0xf]
  %v2641 = vld [vmem:[%s13 + $0x2fc] sm:$0xf]
  %v2642 = vld [vmem:[%s13 + $0x300] sm:$0xf]
  %v2643 = vld [vmem:[%s13 + $0x304] sm:$0xf]
  %v2644 = vld [vmem:[%s13 + $0x308] sm:$0xf]
  %v2645 = vld [vmem:[%s13 + $0x30c] sm:$0xf]
  %v2646 = vld [vmem:[%s13 + $0x310] sm:$0xf]
  %v2647 = vld [vmem:[%s13 + $0x314] sm:$0xf]
  %v2648 = vld [vmem:[%s13 + $0x318] sm:$0xf]
  %v2649 = vld [vmem:[%s13 + $0x31c] sm:$0xf]
  %v2650 = vld [vmem:[%s13 + $0x320] sm:$0xf]
  %v2651 = vld [vmem:[%s13 + $0x324] sm:$0xf]
  %v2652 = vld [vmem:[%s13 + $0x328] sm:$0xf]
  %v2653 = vld [vmem:[%s13 + $0x32c] sm:$0xf]
  %v2654 = vld [vmem:[%s13 + $0x330] sm:$0xf]
  %v2655 = vld [vmem:[%s13 + $0x334] sm:$0xf]
  %v2656 = vld [vmem:[%s13 + $0x338] sm:$0xf]
  %v2657 = vld [vmem:[%s13 + $0x33c] sm:$0xf]
  %v2658 = vld [vmem:[%s13 + $0x340] sm:$0xf]
  %v2659 = vld [vmem:[%s13 + $0x344] sm:$0xf]
  %v2660 = vld [vmem:[%s13 + $0x348] sm:$0xf]
  %v2661 = vld [vmem:[%s13 + $0x34c] sm:$0xf]
  %v2662 = vld [vmem:[%s13 + $0x350] sm:$0xf]
  %v2663 = vld [vmem:[%s13 + $0x354] sm:$0xf]
  %v2664 = vld [vmem:[%s13 + $0x358] sm:$0xf]
  %v2665 = vld [vmem:[%s13 + $0x35c] sm:$0xf]
  %v2666 = vld [vmem:[%s13 + $0x360] sm:$0xf]
  %v2667 = vld [vmem:[%s13 + $0x364] sm:$0xf]
  %v2668 = vld [vmem:[%s13 + $0x368] sm:$0xf]
  %v2669 = vld [vmem:[%s13 + $0x36c] sm:$0xf]
  %v2670 = vld [vmem:[%s13 + $0x370] sm:$0xf]
  %v2671 = vld [vmem:[%s13 + $0x374] sm:$0xf]
  %v2672 = vld [vmem:[%s13 + $0x378] sm:$0xf]
  %v2673 = vld [vmem:[%s13 + $0x37c] sm:$0xf]
  %v2674 = vld [vmem:[%s13 + $0x380] sm:$0xf]
  %v2675 = vld [vmem:[%s13 + $0x384] sm:$0xf]
  %v2676 = vld [vmem:[%s13 + $0x388] sm:$0xf]
  %v2677 = vld [vmem:[%s13 + $0x38c] sm:$0xf]
  %v2678 = vld [vmem:[%s13 + $0x390] sm:$0xf]
  %v2679 = vld [vmem:[%s13 + $0x394] sm:$0xf]
  %v2680 = vld [vmem:[%s13 + $0x398] sm:$0xf]
  %v2681 = vld [vmem:[%s13 + $0x39c] sm:$0xf]
  %v2682 = vld [vmem:[%s13 + $0x3a0] sm:$0xf]
  %v2683 = vld [vmem:[%s13 + $0x3a4] sm:$0xf]
  %v2684 = vld [vmem:[%s13 + $0x3a8] sm:$0xf]
  %v2685 = vld [vmem:[%s13 + $0x3ac] sm:$0xf]
  %v2686 = vld [vmem:[%s13 + $0x3b0] sm:$0xf]
  %v2687 = vld [vmem:[%s13 + $0x3b4] sm:$0xf]
  %v2688 = vld [vmem:[%s13 + $0x3b8] sm:$0xf]
  %v2689 = vld [vmem:[%s13 + $0x3bc] sm:$0xf]
  %v2690 = vld [vmem:[%s13 + $0x3c0] sm:$0xf]
  %v2691 = vld [vmem:[%s13 + $0x3c4] sm:$0xf]
  %v2692 = vld [vmem:[%s13 + $0x3c8] sm:$0xf]
  %v2693 = vld [vmem:[%s13 + $0x3cc] sm:$0xf]
  %v2694 = vld [vmem:[%s13 + $0x3d0] sm:$0xf]
  %v2695 = vld [vmem:[%s13 + $0x3d4] sm:$0xf]
  %v2696 = vld [vmem:[%s13 + $0x3d8] sm:$0xf]
  %v2697 = vld [vmem:[%s13 + $0x3dc] sm:$0xf]
  %v2698 = vld [vmem:[%s13 + $0x3e0] sm:$0xf]
  %v2699 = vld [vmem:[%s13 + $0x3e4] sm:$0xf]
  %v2700 = vld [vmem:[%s13 + $0x3e8] sm:$0xf]
  %v2701 = vld [vmem:[%s13 + $0x3ec] sm:$0xf]
  %v2702 = vld [vmem:[%s13 + $0x3f0] sm:$0xf]
  %v2703 = vld [vmem:[%s13 + $0x3f4] sm:$0xf]
  %v2704 = vld [vmem:[%s13 + $0x3f8] sm:$0xf]
  %v2705 = vld [vmem:[%s13 + $0x3fc] sm:$0xf]
  %v2706 = vlaneseq
  %v2707 = vshrl.u32 %v2706, 7
  %v2708 = vsub.s32 0, %v2707
  %v2709 = vrot.slane %v641, %v2708
  %v2966 = vunpack.c.l.b16 %v2450
  %v2967 = vunpack.c.l.b16 %v2451
  %v2968 = vunpack.c.l.b16 %v2452
  %v2969 = vunpack.c.l.b16 %v2453
  %v2970 = vunpack.c.l.b16 %v2454
  %v2971 = vunpack.c.l.b16 %v2455
  %v2972 = vunpack.c.l.b16 %v2456
  %v2973 = vunpack.c.l.b16 %v2457
  %v2974 = vunpack.c.l.b16 %v2458
  %v2975 = vunpack.c.l.b16 %v2459
  %v2976 = vunpack.c.l.b16 %v2460
  %v2977 = vunpack.c.l.b16 %v2461
  %v2978 = vunpack.c.l.b16 %v2462
  %v2979 = vunpack.c.l.b16 %v2463
  %v2980 = vunpack.c.l.b16 %v2464
  %v2981 = vunpack.c.l.b16 %v2465
  %v2982 = vunpack.c.l.b16 %v2466
  %v2983 = vunpack.c.l.b16 %v2467
  %v2984 = vunpack.c.l.b16 %v2468
  %v2985 = vunpack.c.l.b16 %v2469
  %v2986 = vunpack.c.l.b16 %v2470
  %v2987 = vunpack.c.l.b16 %v2471
  %v2988 = vunpack.c.l.b16 %v2472
  %v2989 = vunpack.c.l.b16 %v2473
  %v2990 = vunpack.c.l.b16 %v2474
  %v2991 = vunpack.c.l.b16 %v2475
  %v2992 = vunpack.c.l.b16 %v2476
  %v2993 = vunpack.c.l.b16 %v2477
  %v2994 = vunpack.c.l.b16 %v2478
  %v2995 = vunpack.c.l.b16 %v2479
  %v2996 = vunpack.c.l.b16 %v2480
  %v2997 = vunpack.c.l.b16 %v2481
  %v2998 = vunpack.c.l.b16 %v2482
  %v2999 = vunpack.c.l.b16 %v2483
  %v3000 = vunpack.c.l.b16 %v2484
  %v3001 = vunpack.c.l.b16 %v2485
  %v3002 = vunpack.c.l.b16 %v2486
  %v3003 = vunpack.c.l.b16 %v2487
  %v3004 = vunpack.c.l.b16 %v2488
  %v3005 = vunpack.c.l.b16 %v2489
  %v3006 = vunpack.c.l.b16 %v2490
  %v3007 = vunpack.c.l.b16 %v2491
  %v3008 = vunpack.c.l.b16 %v2492
  %v3009 = vunpack.c.l.b16 %v2493
  %v3010 = vunpack.c.l.b16 %v2494
  %v3011 = vunpack.c.l.b16 %v2495
  %v3012 = vunpack.c.l.b16 %v2496
  %v3013 = vunpack.c.l.b16 %v2497
  %v3014 = vunpack.c.l.b16 %v2498
  %v3015 = vunpack.c.l.b16 %v2499
  %v3016 = vunpack.c.l.b16 %v2500
  %v3017 = vunpack.c.l.b16 %v2501
  %v3018 = vunpack.c.l.b16 %v2502
  %v3019 = vunpack.c.l.b16 %v2503
  %v3020 = vunpack.c.l.b16 %v2504
  %v3021 = vunpack.c.l.b16 %v2505
  %v3022 = vunpack.c.l.b16 %v2506
  %v3023 = vunpack.c.l.b16 %v2507
  %v3024 = vunpack.c.l.b16 %v2508
  %v3025 = vunpack.c.l.b16 %v2509
  %v3026 = vunpack.c.l.b16 %v2510
  %v3027 = vunpack.c.l.b16 %v2511
  %v3028 = vunpack.c.l.b16 %v2512
  %v3029 = vunpack.c.l.b16 %v2513
  %v3030 = vunpack.c.l.b16 %v2514
  %v3031 = vunpack.c.l.b16 %v2515
  %v3032 = vunpack.c.l.b16 %v2516
  %v3033 = vunpack.c.l.b16 %v2517
  %v3034 = vunpack.c.l.b16 %v2518
  %v3035 = vunpack.c.l.b16 %v2519
  %v3036 = vunpack.c.l.b16 %v2520
  %v3037 = vunpack.c.l.b16 %v2521
  %v3038 = vunpack.c.l.b16 %v2522
  %v3039 = vunpack.c.l.b16 %v2523
  %v3040 = vunpack.c.l.b16 %v2524
  %v3041 = vunpack.c.l.b16 %v2525
  %v3042 = vunpack.c.l.b16 %v2526
  %v3043 = vunpack.c.l.b16 %v2527
  %v3044 = vunpack.c.l.b16 %v2528
  %v3045 = vunpack.c.l.b16 %v2529
  %v3046 = vunpack.c.l.b16 %v2530
  %v3047 = vunpack.c.l.b16 %v2531
  %v3048 = vunpack.c.l.b16 %v2532
  %v3049 = vunpack.c.l.b16 %v2533
  %v3050 = vunpack.c.l.b16 %v2534
  %v3051 = vunpack.c.l.b16 %v2535
  %v3052 = vunpack.c.l.b16 %v2536
  %v3053 = vunpack.c.l.b16 %v2537
  %v3054 = vunpack.c.l.b16 %v2538
  %v3055 = vunpack.c.l.b16 %v2539
  %v3056 = vunpack.c.l.b16 %v2540
  %v3057 = vunpack.c.l.b16 %v2541
  %v3058 = vunpack.c.l.b16 %v2542
  %v3059 = vunpack.c.l.b16 %v2543
  %v3060 = vunpack.c.l.b16 %v2544
  %v3061 = vunpack.c.l.b16 %v2545
  %v3062 = vunpack.c.l.b16 %v2546
  %v3063 = vunpack.c.l.b16 %v2547
  %v3064 = vunpack.c.l.b16 %v2548
  %v3065 = vunpack.c.l.b16 %v2549
  %v3066 = vunpack.c.l.b16 %v2550
  %v3067 = vunpack.c.l.b16 %v2551
  %v3068 = vunpack.c.l.b16 %v2552
  %v3069 = vunpack.c.l.b16 %v2553
  %v3070 = vunpack.c.l.b16 %v2554
  %v3071 = vunpack.c.l.b16 %v2555
  %v3072 = vunpack.c.l.b16 %v2556
  %v3073 = vunpack.c.l.b16 %v2557
  %v3074 = vunpack.c.l.b16 %v2558
  %v3075 = vunpack.c.l.b16 %v2559
  %v3076 = vunpack.c.l.b16 %v2560
  %v3077 = vunpack.c.l.b16 %v2561
  %v3078 = vunpack.c.l.b16 %v2562
  %v3079 = vunpack.c.l.b16 %v2563
  %v3080 = vunpack.c.l.b16 %v2564
  %v3081 = vunpack.c.l.b16 %v2565
  %v3082 = vunpack.c.l.b16 %v2566
  %v3083 = vunpack.c.l.b16 %v2567
  %v3084 = vunpack.c.l.b16 %v2568
  %v3085 = vunpack.c.l.b16 %v2569
  %v3086 = vunpack.c.l.b16 %v2570
  %v3087 = vunpack.c.l.b16 %v2571
  %v3088 = vunpack.c.l.b16 %v2572
  %v3089 = vunpack.c.l.b16 %v2573
  %v3090 = vunpack.c.l.b16 %v2574
  %v3091 = vunpack.c.l.b16 %v2575
  %v3092 = vunpack.c.l.b16 %v2576
  %v3093 = vunpack.c.l.b16 %v2577
  %v3094 = vunpack.c.l.b16 %v2578
  %v3095 = vunpack.c.l.b16 %v2579
  %v3096 = vunpack.c.l.b16 %v2580
  %v3097 = vunpack.c.l.b16 %v2581
  %v3098 = vunpack.c.l.b16 %v2582
  %v3099 = vunpack.c.l.b16 %v2583
  %v3100 = vunpack.c.l.b16 %v2584
  %v3101 = vunpack.c.l.b16 %v2585
  %v3102 = vunpack.c.l.b16 %v2586
  %v3103 = vunpack.c.l.b16 %v2587
  %v3104 = vunpack.c.l.b16 %v2588
  %v3105 = vunpack.c.l.b16 %v2589
  %v3106 = vunpack.c.l.b16 %v2590
  %v3107 = vunpack.c.l.b16 %v2591
  %v3108 = vunpack.c.l.b16 %v2592
  %v3109 = vunpack.c.l.b16 %v2593
  %v3110 = vunpack.c.l.b16 %v2594
  %v3111 = vunpack.c.l.b16 %v2595
  %v3112 = vunpack.c.l.b16 %v2596
  %v3113 = vunpack.c.l.b16 %v2597
  %v3114 = vunpack.c.l.b16 %v2598
  %v3115 = vunpack.c.l.b16 %v2599
  %v3116 = vunpack.c.l.b16 %v2600
  %v3117 = vunpack.c.l.b16 %v2601
  %v3118 = vunpack.c.l.b16 %v2602
  %v3119 = vunpack.c.l.b16 %v2603
  %v3120 = vunpack.c.l.b16 %v2604
  %v3121 = vunpack.c.l.b16 %v2605
  %v3122 = vunpack.c.l.b16 %v2606
  %v3123 = vunpack.c.l.b16 %v2607
  %v3124 = vunpack.c.l.b16 %v2608
  %v3125 = vunpack.c.l.b16 %v2609
  %v3126 = vunpack.c.l.b16 %v2610
  %v3127 = vunpack.c.l.b16 %v2611
  %v3128 = vunpack.c.l.b16 %v2612
  %v3129 = vunpack.c.l.b16 %v2613
  %v3130 = vunpack.c.l.b16 %v2614
  %v3131 = vunpack.c.l.b16 %v2615
  %v3132 = vunpack.c.l.b16 %v2616
  %v3133 = vunpack.c.l.b16 %v2617
  %v3134 = vunpack.c.l.b16 %v2618
  %v3135 = vunpack.c.l.b16 %v2619
  %v3136 = vunpack.c.l.b16 %v2620
  %v3137 = vunpack.c.l.b16 %v2621
  %v3138 = vunpack.c.l.b16 %v2622
  %v3139 = vunpack.c.l.b16 %v2623
  %v3140 = vunpack.c.l.b16 %v2624
  %v3141 = vunpack.c.l.b16 %v2625
  %v3142 = vunpack.c.l.b16 %v2626
  %v3143 = vunpack.c.l.b16 %v2627
  %v3144 = vunpack.c.l.b16 %v2628
  %v3145 = vunpack.c.l.b16 %v2629
  %v3146 = vunpack.c.l.b16 %v2630
  %v3147 = vunpack.c.l.b16 %v2631
  %v3148 = vunpack.c.l.b16 %v2632
  %v3149 = vunpack.c.l.b16 %v2633
  %v3150 = vunpack.c.l.b16 %v2634
  %v3151 = vunpack.c.l.b16 %v2635
  %v3152 = vunpack.c.l.b16 %v2636
  %v3153 = vunpack.c.l.b16 %v2637
  %v3154 = vunpack.c.l.b16 %v2638
  %v3155 = vunpack.c.l.b16 %v2639
  %v3156 = vunpack.c.l.b16 %v2640
  %v3157 = vunpack.c.l.b16 %v2641
  %v3158 = vunpack.c.l.b16 %v2642
  %v3159 = vunpack.c.l.b16 %v2643
  %v3160 = vunpack.c.l.b16 %v2644
  %v3161 = vunpack.c.l.b16 %v2645
  %v3162 = vunpack.c.l.b16 %v2646
  %v3163 = vunpack.c.l.b16 %v2647
  %v3164 = vunpack.c.l.b16 %v2648
  %v3165 = vunpack.c.l.b16 %v2649
  %v3166 = vunpack.c.l.b16 %v2650
  %v3167 = vunpack.c.l.b16 %v2651
  %v3168 = vunpack.c.l.b16 %v2652
  %v3169 = vunpack.c.l.b16 %v2653
  %v3170 = vunpack.c.l.b16 %v2654
  %v3171 = vunpack.c.l.b16 %v2655
  %v3172 = vunpack.c.l.b16 %v2656
  %v3173 = vunpack.c.l.b16 %v2657
  %v3174 = vunpack.c.l.b16 %v2658
  %v3175 = vunpack.c.l.b16 %v2659
  %v3176 = vunpack.c.l.b16 %v2660
  %v3177 = vunpack.c.l.b16 %v2661
  %v3178 = vunpack.c.l.b16 %v2662
  %v3179 = vunpack.c.l.b16 %v2663
  %v3180 = vunpack.c.l.b16 %v2664
  %v3181 = vunpack.c.l.b16 %v2665
  %v3182 = vunpack.c.l.b16 %v2666
  %v3183 = vunpack.c.l.b16 %v2667
  %v3184 = vunpack.c.l.b16 %v2668
  %v3185 = vunpack.c.l.b16 %v2669
  %v3186 = vunpack.c.l.b16 %v2670
  %v3187 = vunpack.c.l.b16 %v2671
  %v3188 = vunpack.c.l.b16 %v2672
  %v3189 = vunpack.c.l.b16 %v2673
  %v3190 = vunpack.c.l.b16 %v2674
  %v3191 = vunpack.c.l.b16 %v2675
  %v3192 = vunpack.c.l.b16 %v2676
  %v3193 = vunpack.c.l.b16 %v2677
  %v3194 = vunpack.c.l.b16 %v2678
  %v3195 = vunpack.c.l.b16 %v2679
  %v3196 = vunpack.c.l.b16 %v2680
  %v3197 = vunpack.c.l.b16 %v2681
  %v3198 = vunpack.c.l.b16 %v2682
  %v3199 = vunpack.c.l.b16 %v2683
  %v3200 = vunpack.c.l.b16 %v2684
  %v3201 = vunpack.c.l.b16 %v2685
  %v3202 = vunpack.c.l.b16 %v2686
  %v3203 = vunpack.c.l.b16 %v2687
  %v3204 = vunpack.c.l.b16 %v2688
  %v3205 = vunpack.c.l.b16 %v2689
  %v3206 = vunpack.c.l.b16 %v2690
  %v3207 = vunpack.c.l.b16 %v2691
  %v3208 = vunpack.c.l.b16 %v2692
  %v3209 = vunpack.c.l.b16 %v2693
  %v3210 = vunpack.c.l.b16 %v2694
  %v3211 = vunpack.c.l.b16 %v2695
  %v3212 = vunpack.c.l.b16 %v2696
  %v3213 = vunpack.c.l.b16 %v2697
  %v3214 = vunpack.c.l.b16 %v2698
  %v3215 = vunpack.c.l.b16 %v2699
  %v3216 = vunpack.c.l.b16 %v2700
  %v3217 = vunpack.c.l.b16 %v2701
  %v3218 = vunpack.c.l.b16 %v2702
  %v3219 = vunpack.c.l.b16 %v2703
  %v3220 = vunpack.c.l.b16 %v2704
  %v3221 = vunpack.c.l.b16 %v2705
  %v3222 = vpack.c.b16 %v2967, %v2966
  %v3223 = vpack.c.b16 %v2969, %v2968
  %v3224 = vpack.c.b16 %v2971, %v2970
  %v3225 = vpack.c.b16 %v2973, %v2972
  %v3226 = vpack.c.b16 %v2975, %v2974
  %v3227 = vpack.c.b16 %v2977, %v2976
  %v3228 = vpack.c.b16 %v2979, %v2978
  %v3229 = vpack.c.b16 %v2981, %v2980
  %v3230 = vpack.c.b16 %v2983, %v2982
  %v3231 = vpack.c.b16 %v2985, %v2984
  %v3232 = vpack.c.b16 %v2987, %v2986
  %v3233 = vpack.c.b16 %v2989, %v2988
  %v3234 = vpack.c.b16 %v2991, %v2990
  %v3235 = vpack.c.b16 %v2993, %v2992
  %v3236 = vpack.c.b16 %v2995, %v2994
  %v3237 = vpack.c.b16 %v2997, %v2996
  %v3238 = vpack.c.b16 %v2999, %v2998
  %v3239 = vpack.c.b16 %v3001, %v3000
  %v3240 = vpack.c.b16 %v3003, %v3002
  %v3241 = vpack.c.b16 %v3005, %v3004
  %v3242 = vpack.c.b16 %v3007, %v3006
  %v3243 = vpack.c.b16 %v3009, %v3008
  %v3244 = vpack.c.b16 %v3011, %v3010
  %v3245 = vpack.c.b16 %v3013, %v3012
  %v3246 = vpack.c.b16 %v3015, %v3014
  %v3247 = vpack.c.b16 %v3017, %v3016
  %v3248 = vpack.c.b16 %v3019, %v3018
  %v3249 = vpack.c.b16 %v3021, %v3020
  %v3250 = vpack.c.b16 %v3023, %v3022
  %v3251 = vpack.c.b16 %v3025, %v3024
  %v3252 = vpack.c.b16 %v3027, %v3026
  %v3253 = vpack.c.b16 %v3029, %v3028
  %v3254 = vpack.c.b16 %v3031, %v3030
  %v3255 = vpack.c.b16 %v3033, %v3032
  %v3256 = vpack.c.b16 %v3035, %v3034
  %v3257 = vpack.c.b16 %v3037, %v3036
  %v3258 = vpack.c.b16 %v3039, %v3038
  %v3259 = vpack.c.b16 %v3041, %v3040
  %v3260 = vpack.c.b16 %v3043, %v3042
  %v3261 = vpack.c.b16 %v3045, %v3044
  %v3262 = vpack.c.b16 %v3047, %v3046
  %v3263 = vpack.c.b16 %v3049, %v3048
  %v3264 = vpack.c.b16 %v3051, %v3050
  %v3265 = vpack.c.b16 %v3053, %v3052
  %v3266 = vpack.c.b16 %v3055, %v3054
  %v3267 = vpack.c.b16 %v3057, %v3056
  %v3268 = vpack.c.b16 %v3059, %v3058
  %v3269 = vpack.c.b16 %v3061, %v3060
  %v3270 = vpack.c.b16 %v3063, %v3062
  %v3271 = vpack.c.b16 %v3065, %v3064
  %v3272 = vpack.c.b16 %v3067, %v3066
  %v3273 = vpack.c.b16 %v3069, %v3068
  %v3274 = vpack.c.b16 %v3071, %v3070
  %v3275 = vpack.c.b16 %v3073, %v3072
  %v3276 = vpack.c.b16 %v3075, %v3074
  %v3277 = vpack.c.b16 %v3077, %v3076
  %v3278 = vpack.c.b16 %v3079, %v3078
  %v3279 = vpack.c.b16 %v3081, %v3080
  %v3280 = vpack.c.b16 %v3083, %v3082
  %v3281 = vpack.c.b16 %v3085, %v3084
  %v3282 = vpack.c.b16 %v3087, %v3086
  %v3283 = vpack.c.b16 %v3089, %v3088
  %v3284 = vpack.c.b16 %v3091, %v3090
  %v3285 = vpack.c.b16 %v3093, %v3092
  %v3286 = vpack.c.b16 %v3095, %v3094
  %v3287 = vpack.c.b16 %v3097, %v3096
  %v3288 = vpack.c.b16 %v3099, %v3098
  %v3289 = vpack.c.b16 %v3101, %v3100
  %v3290 = vpack.c.b16 %v3103, %v3102
  %v3291 = vpack.c.b16 %v3105, %v3104
  %v3292 = vpack.c.b16 %v3107, %v3106
  %v3293 = vpack.c.b16 %v3109, %v3108
  %v3294 = vpack.c.b16 %v3111, %v3110
  %v3295 = vpack.c.b16 %v3113, %v3112
  %v3296 = vpack.c.b16 %v3115, %v3114
  %v3297 = vpack.c.b16 %v3117, %v3116
  %v3298 = vpack.c.b16 %v3119, %v3118
  %v3299 = vpack.c.b16 %v3121, %v3120
  %v3300 = vpack.c.b16 %v3123, %v3122
  %v3301 = vpack.c.b16 %v3125, %v3124
  %v3302 = vpack.c.b16 %v3127, %v3126
  %v3303 = vpack.c.b16 %v3129, %v3128
  %v3304 = vpack.c.b16 %v3131, %v3130
  %v3305 = vpack.c.b16 %v3133, %v3132
  %v3306 = vpack.c.b16 %v3135, %v3134
  %v3307 = vpack.c.b16 %v3137, %v3136
  %v3308 = vpack.c.b16 %v3139, %v3138
  %v3309 = vpack.c.b16 %v3141, %v3140
  %v3310 = vpack.c.b16 %v3143, %v3142
  %v3311 = vpack.c.b16 %v3145, %v3144
  %v3312 = vpack.c.b16 %v3147, %v3146
  %v3313 = vpack.c.b16 %v3149, %v3148
  %v3314 = vpack.c.b16 %v3151, %v3150
  %v3315 = vpack.c.b16 %v3153, %v3152
  %v3316 = vpack.c.b16 %v3155, %v3154
  %v3317 = vpack.c.b16 %v3157, %v3156
  %v3318 = vpack.c.b16 %v3159, %v3158
  %v3319 = vpack.c.b16 %v3161, %v3160
  %v3320 = vpack.c.b16 %v3163, %v3162
  %v3321 = vpack.c.b16 %v3165, %v3164
  %v3322 = vpack.c.b16 %v3167, %v3166
  %v3323 = vpack.c.b16 %v3169, %v3168
  %v3324 = vpack.c.b16 %v3171, %v3170
  %v3325 = vpack.c.b16 %v3173, %v3172
  %v3326 = vpack.c.b16 %v3175, %v3174
  %v3327 = vpack.c.b16 %v3177, %v3176
  %v3328 = vpack.c.b16 %v3179, %v3178
  %v3329 = vpack.c.b16 %v3181, %v3180
  %v3330 = vpack.c.b16 %v3183, %v3182
  %v3331 = vpack.c.b16 %v3185, %v3184
  %v3332 = vpack.c.b16 %v3187, %v3186
  %v3333 = vpack.c.b16 %v3189, %v3188
  %v3334 = vpack.c.b16 %v3191, %v3190
  %v3335 = vpack.c.b16 %v3193, %v3192
  %v3336 = vpack.c.b16 %v3195, %v3194
  %v3337 = vpack.c.b16 %v3197, %v3196
  %v3338 = vpack.c.b16 %v3199, %v3198
  %v3339 = vpack.c.b16 %v3201, %v3200
  %v3340 = vpack.c.b16 %v3203, %v3202
  %v3341 = vpack.c.b16 %v3205, %v3204
  %v3342 = vpack.c.b16 %v3207, %v3206
  %v3343 = vpack.c.b16 %v3209, %v3208
  %v3344 = vpack.c.b16 %v3211, %v3210
  %v3345 = vpack.c.b16 %v3213, %v3212
  %v3346 = vpack.c.b16 %v3215, %v3214
  %v3347 = vpack.c.b16 %v3217, %v3216
  %v3348 = vpack.c.b16 %v3219, %v3218
  %v3349 = vpack.c.b16 %v3221, %v3220
  %3478 = vmatprep.subr.bf16.mxu0 0
  %3479 = vmatpush1.bf16.msra.mxu0 %v3222
  %3480 = vmatprep.subr.bf16.mxu0 0
  %3481 = vmatpush1.bf16.msra.mxu0 %v3223
  %3482 = vmatprep.subr.bf16.mxu0 0
  %3483 = vmatpush1.bf16.msra.mxu0 %v3224
  %3484 = vmatprep.subr.bf16.mxu0 0
  %3485 = vmatpush1.bf16.msra.mxu0 %v3225
  %3486 = vmatprep.subr.bf16.mxu0 0
  %3487 = vmatpush1.bf16.msra.mxu0 %v3226
  %3488 = vmatprep.subr.bf16.mxu0 0
  %3489 = vmatpush1.bf16.msra.mxu0 %v3227
  %3490 = vmatprep.subr.bf16.mxu0 0
  %3491 = vmatpush1.bf16.msra.mxu0 %v3228
  %3492 = vmatprep.subr.bf16.mxu0 0
  %3493 = vmatpush1.bf16.msra.mxu0 %v3229
  %3494 = vmatprep.subr.bf16.mxu0 0
  %3495 = vmatpush1.bf16.msra.mxu0 %v3230
  %3496 = vmatprep.subr.bf16.mxu0 0
  %3497 = vmatpush1.bf16.msra.mxu0 %v3231
  %3498 = vmatprep.subr.bf16.mxu0 0
  %3499 = vmatpush1.bf16.msra.mxu0 %v3232
  %3500 = vmatprep.subr.bf16.mxu0 0
  %3501 = vmatpush1.bf16.msra.mxu0 %v3233
  %3502 = vmatprep.subr.bf16.mxu0 0
  %3503 = vmatpush1.bf16.msra.mxu0 %v3234
  %3504 = vmatprep.subr.bf16.mxu0 0
  %3505 = vmatpush1.bf16.msra.mxu0 %v3235
  %3506 = vmatprep.subr.bf16.mxu0 0
  %3507 = vmatpush1.bf16.msra.mxu0 %v3236
  %3508 = vmatprep.subr.bf16.mxu0 0
  %3509 = vmatpush1.bf16.msra.mxu0 %v3237
  %3510 = vmatprep.mubr.bf16.mxu0 %v2435
  %3511 = vmatmul.mubr.bf16.gmra.mrb[0].mxu0 %v2434
  %v3512 = vpop.f32.mrb[0].mxu0
  %v3513 = vadd.f32 %v2709, %v3512
  %v3514 = vpop.f32.mrb[0].mxu0
  %v3515 = vpop.f32.mrb[0].mxu0
  %v3516 = vadd.f32 %v2709, %v3515
  %v3517 = vpop.f32.mrb[0].mxu0
  %3518 = vdwg.mxu0
  %3519 = vmatprep.subr.bf16.mxu0 0
  %3520 = vmatpush1.bf16.msra.mxu0 %v3238
  %3521 = vmatprep.subr.bf16.mxu0 0
  %3522 = vmatpush1.bf16.msra.mxu0 %v3239
  %3523 = vmatprep.subr.bf16.mxu0 0
  %3524 = vmatpush1.bf16.msra.mxu0 %v3240
  %3525 = vmatprep.subr.bf16.mxu0 0
  %3526 = vmatpush1.bf16.msra.mxu0 %v3241
  %3527 = vmatprep.subr.bf16.mxu0 0
  %3528 = vmatpush1.bf16.msra.mxu0 %v3242
  %3529 = vmatprep.subr.bf16.mxu0 0
  %3530 = vmatpush1.bf16.msra.mxu0 %v3243
  %3531 = vmatprep.subr.bf16.mxu0 0
  %3532 = vmatpush1.bf16.msra.mxu0 %v3244
  %3533 = vmatprep.subr.bf16.mxu0 0
  %3534 = vmatpush1.bf16.msra.mxu0 %v3245
  %3535 = vmatprep.subr.bf16.mxu0 0
  %3536 = vmatpush1.bf16.msra.mxu0 %v3246
  %3537 = vmatprep.subr.bf16.mxu0 0
  %3538 = vmatpush1.bf16.msra.mxu0 %v3247
  %3539 = vmatprep.subr.bf16.mxu0 0
  %3540 = vmatpush1.bf16.msra.mxu0 %v3248
  %3541 = vmatprep.subr.bf16.mxu0 0
  %3542 = vmatpush1.bf16.msra.mxu0 %v3249
  %3543 = vmatprep.subr.bf16.mxu0 0
  %3544 = vmatpush1.bf16.msra.mxu0 %v3250
  %3545 = vmatprep.subr.bf16.mxu0 0
  %3546 = vmatpush1.bf16.msra.mxu0 %v3251
  %3547 = vmatprep.subr.bf16.mxu0 0
  %3548 = vmatpush1.bf16.msra.mxu0 %v3252
  %3549 = vmatprep.subr.bf16.mxu0 0
  %3550 = vmatpush1.bf16.msra.mxu0 %v3253
  %3551 = vmatprep.mubr.bf16.mxu0 %v2437
  %3552 = vmatmul.mubr.bf16.gmra.mrb[0].mxu0 %v2436
  %v3553 = vpop.f32.mrb[0].mxu0
  %v3554 = vadd.f32 %v3513, %v3553
  %v3555 = vpop.f32.mrb[0].mxu0
  %v3556 = vpop.f32.mrb[0].mxu0
  %v3557 = vadd.f32 %v3516, %v3556
  %v3558 = vpop.f32.mrb[0].mxu0
  %3559 = vdwg.mxu0
  %3560 = vmatprep.subr.bf16.mxu0 0
  %3561 = vmatpush1.bf16.msra.mxu0 %v3254
  %3562 = vmatprep.subr.bf16.mxu0 0
  %3563 = vmatpush1.bf16.msra.mxu0 %v3255
  %3564 = vmatprep.subr.bf16.mxu0 0
  %3565 = vmatpush1.bf16.msra.mxu0 %v3256
  %3566 = vmatprep.subr.bf16.mxu0 0
  %3567 = vmatpush1.bf16.msra.mxu0 %v3257
  %3568 = vmatprep.subr.bf16.mxu0 0
  %3569 = vmatpush1.bf16.msra.mxu0 %v3258
  %3570 = vmatprep.subr.bf16.mxu0 0
  %3571 = vmatpush1.bf16.msra.mxu0 %v3259
  %3572 = vmatprep.subr.bf16.mxu0 0
  %3573 = vmatpush1.bf16.msra.mxu0 %v3260
  %3574 = vmatprep.subr.bf16.mxu0 0
  %3575 = vmatpush1.bf16.msra.mxu0 %v3261
  %3576 = vmatprep.subr.bf16.mxu0 0
  %3577 = vmatpush1.bf16.msra.mxu0 %v3262
  %3578 = vmatprep.subr.bf16.mxu0 0
  %3579 = vmatpush1.bf16.msra.mxu0 %v3263
  %3580 = vmatprep.subr.bf16.mxu0 0
  %3581 = vmatpush1.bf16.msra.mxu0 %v3264
  %3582 = vmatprep.subr.bf16.mxu0 0
  %3583 = vmatpush1.bf16.msra.mxu0 %v3265
  %3584 = vmatprep.subr.bf16.mxu0 0
  %3585 = vmatpush1.bf16.msra.mxu0 %v3266
  %3586 = vmatprep.subr.bf16.mxu0 0
  %3587 = vmatpush1.bf16.msra.mxu0 %v3267
  %3588 = vmatprep.subr.bf16.mxu0 0
  %3589 = vmatpush1.bf16.msra.mxu0 %v3268
  %3590 = vmatprep.subr.bf16.mxu0 0
  %3591 = vmatpush1.bf16.msra.mxu0 %v3269
  %3592 = vmatprep.mubr.bf16.mxu0 %v2439
  %3593 = vmatmul.mubr.bf16.gmra.mrb[0].mxu0 %v2438
  %v3594 = vpop.f32.mrb[0].mxu0
  %v3595 = vadd.f32 %v3554, %v3594
  %v3596 = vpop.f32.mrb[0].mxu0
  %v3597 = vpop.f32.mrb[0].mxu0
  %v3598 = vadd.f32 %v3557, %v3597
  %v3599 = vpop.f32.mrb[0].mxu0
  %3600 = vdwg.mxu0
  %3601 = vmatprep.subr.bf16.mxu0 0
  %3602 = vmatpush1.bf16.msra.mxu0 %v3270
  %3603 = vmatprep.subr.bf16.mxu0 0
  %3604 = vmatpush1.bf16.msra.mxu0 %v3271
  %3605 = vmatprep.subr.bf16.mxu0 0
  %3606 = vmatpush1.bf16.msra.mxu0 %v3272
  %3607 = vmatprep.subr.bf16.mxu0 0
  %3608 = vmatpush1.bf16.msra.mxu0 %v3273
  %3609 = vmatprep.subr.bf16.mxu0 0
  %3610 = vmatpush1.bf16.msra.mxu0 %v3274
  %3611 = vmatprep.subr.bf16.mxu0 0
  %3612 = vmatpush1.bf16.msra.mxu0 %v3275
  %3613 = vmatprep.subr.bf16.mxu0 0
  %3614 = vmatpush1.bf16.msra.mxu0 %v3276
  %3615 = vmatprep.subr.bf16.mxu0 0
  %3616 = vmatpush1.bf16.msra.mxu0 %v3277
  %3617 = vmatprep.subr.bf16.mxu0 0
  %3618 = vmatpush1.bf16.msra.mxu0 %v3278
  %3619 = vmatprep.subr.bf16.mxu0 0
  %3620 = vmatpush1.bf16.msra.mxu0 %v3279
  %3621 = vmatprep.subr.bf16.mxu0 0
  %3622 = vmatpush1.bf16.msra.mxu0 %v3280
  %3623 = vmatprep.subr.bf16.mxu0 0
  %3624 = vmatpush1.bf16.msra.mxu0 %v3281
  %3625 = vmatprep.subr.bf16.mxu0 0
  %3626 = vmatpush1.bf16.msra.mxu0 %v3282
  %3627 = vmatprep.subr.bf16.mxu0 0
  %3628 = vmatpush1.bf16.msra.mxu0 %v3283
  %3629 = vmatprep.subr.bf16.mxu0 0
  %3630 = vmatpush1.bf16.msra.mxu0 %v3284
  %3631 = vmatprep.subr.bf16.mxu0 0
  %3632 = vmatpush1.bf16.msra.mxu0 %v3285
  %3633 = vmatprep.mubr.bf16.mxu0 %v2441
  %3634 = vmatmul.mubr.bf16.gmra.mrb[0].mxu0 %v2440
  %v3635 = vpop.f32.mrb[0].mxu0
  %v3636 = vadd.f32 %v3595, %v3635
  %v3637 = vpop.f32.mrb[0].mxu0
  %v3638 = vpop.f32.mrb[0].mxu0
  %v3639 = vadd.f32 %v3598, %v3638
  %v3640 = vpop.f32.mrb[0].mxu0
  %3641 = vdwg.mxu0
  %3642 = vmatprep.subr.bf16.mxu0 0
  %3643 = vmatpush1.bf16.msra.mxu0 %v3286
  %3644 = vmatprep.subr.bf16.mxu0 0
  %3645 = vmatpush1.bf16.msra.mxu0 %v3287
  %3646 = vmatprep.subr.bf16.mxu0 0
  %3647 = vmatpush1.bf16.msra.mxu0 %v3288
  %3648 = vmatprep.subr.bf16.mxu0 0
  %3649 = vmatpush1.bf16.msra.mxu0 %v3289
  %3650 = vmatprep.subr.bf16.mxu0 0
  %3651 = vmatpush1.bf16.msra.mxu0 %v3290
  %3652 = vmatprep.subr.bf16.mxu0 0
  %3653 = vmatpush1.bf16.msra.mxu0 %v3291
  %3654 = vmatprep.subr.bf16.mxu0 0
  %3655 = vmatpush1.bf16.msra.mxu0 %v3292
  %3656 = vmatprep.subr.bf16.mxu0 0
  %3657 = vmatpush1.bf16.msra.mxu0 %v3293
  %3658 = vmatprep.subr.bf16.mxu0 0
  %3659 = vmatpush1.bf16.msra.mxu0 %v3294
  %3660 = vmatprep.subr.bf16.mxu0 0
  %3661 = vmatpush1.bf16.msra.mxu0 %v3295
  %3662 = vmatprep.subr.bf16.mxu0 0
  %3663 = vmatpush1.bf16.msra.mxu0 %v3296
  %3664 = vmatprep.subr.bf16.mxu0 0
  %3665 = vmatpush1.bf16.msra.mxu0 %v3297
  %3666 = vmatprep.subr.bf16.mxu0 0
  %3667 = vmatpush1.bf16.msra.mxu0 %v3298
  %3668 = vmatprep.subr.bf16.mxu0 0
  %3669 = vmatpush1.bf16.msra.mxu0 %v3299
  %3670 = vmatprep.subr.bf16.mxu0 0
  %3671 = vmatpush1.bf16.msra.mxu0 %v3300
  %3672 = vmatprep.subr.bf16.mxu0 0
  %3673 = vmatpush1.bf16.msra.mxu0 %v3301
  %3674 = vmatprep.mubr.bf16.mxu0 %v2443
  %3675 = vmatmul.mubr.bf16.gmra.mrb[0].mxu0 %v2442
  %v3676 = vpop.f32.mrb[0].mxu0
  %v3677 = vadd.f32 %v3636, %v3676
  %v3678 = vpop.f32.mrb[0].mxu0
  %v3679 = vpop.f32.mrb[0].mxu0
  %v3680 = vadd.f32 %v3639, %v3679
  %v3681 = vpop.f32.mrb[0].mxu0
  %3682 = vdwg.mxu0
  %3683 = vmatprep.subr.bf16.mxu0 0
  %3684 = vmatpush1.bf16.msra.mxu0 %v3302
  %3685 = vmatprep.subr.bf16.mxu0 0
  %3686 = vmatpush1.bf16.msra.mxu0 %v3303
  %3687 = vmatprep.subr.bf16.mxu0 0
  %3688 = vmatpush1.bf16.msra.mxu0 %v3304
  %3689 = vmatprep.subr.bf16.mxu0 0
  %3690 = vmatpush1.bf16.msra.mxu0 %v3305
  %3691 = vmatprep.subr.bf16.mxu0 0
  %3692 = vmatpush1.bf16.msra.mxu0 %v3306
  %3693 = vmatprep.subr.bf16.mxu0 0
  %3694 = vmatpush1.bf16.msra.mxu0 %v3307
  %3695 = vmatprep.subr.bf16.mxu0 0
  %3696 = vmatpush1.bf16.msra.mxu0 %v3308
  %3697 = vmatprep.subr.bf16.mxu0 0
  %3698 = vmatpush1.bf16.msra.mxu0 %v3309
  %3699 = vmatprep.subr.bf16.mxu0 0
  %3700 = vmatpush1.bf16.msra.mxu0 %v3310
  %3701 = vmatprep.subr.bf16.mxu0 0
  %3702 = vmatpush1.bf16.msra.mxu0 %v3311
  %3703 = vmatprep.subr.bf16.mxu0 0
  %3704 = vmatpush1.bf16.msra.mxu0 %v3312
  %3705 = vmatprep.subr.bf16.mxu0 0
  %3706 = vmatpush1.bf16.msra.mxu0 %v3313
  %3707 = vmatprep.subr.bf16.mxu0 0
  %3708 = vmatpush1.bf16.msra.mxu0 %v3314
  %3709 = vmatprep.subr.bf16.mxu0 0
  %3710 = vmatpush1.bf16.msra.mxu0 %v3315
  %3711 = vmatprep.subr.bf16.mxu0 0
  %3712 = vmatpush1.bf16.msra.mxu0 %v3316
  %3713 = vmatprep.subr.bf16.mxu0 0
  %3714 = vmatpush1.bf16.msra.mxu0 %v3317
  %3715 = vmatprep.mubr.bf16.mxu0 %v2445
  %3716 = vmatmul.mubr.bf16.gmra.mrb[0].mxu0 %v2444
  %v3717 = vpop.f32.mrb[0].mxu0
  %v3718 = vadd.f32 %v3677, %v3717
  %v3719 = vpop.f32.mrb[0].mxu0
  %v3720 = vpop.f32.mrb[0].mxu0
  %v3721 = vadd.f32 %v3680, %v3720
  %v3722 = vpop.f32.mrb[0].mxu0
  %3723 = vdwg.mxu0
  %3724 = vmatprep.subr.bf16.mxu0 0
  %3725 = vmatpush1.bf16.msra.mxu0 %v3318
  %3726 = vmatprep.subr.bf16.mxu0 0
  %3727 = vmatpush1.bf16.msra.mxu0 %v3319
  %3728 = vmatprep.subr.bf16.mxu0 0
  %3729 = vmatpush1.bf16.msra.mxu0 %v3320
  %3730 = vmatprep.subr.bf16.mxu0 0
  %3731 = vmatpush1.bf16.msra.mxu0 %v3321
  %3732 = vmatprep.subr.bf16.mxu0 0
  %3733 = vmatpush1.bf16.msra.mxu0 %v3322
  %3734 = vmatprep.subr.bf16.mxu0 0
  %3735 = vmatpush1.bf16.msra.mxu0 %v3323
  %3736 = vmatprep.subr.bf16.mxu0 0
  %3737 = vmatpush1.bf16.msra.mxu0 %v3324
  %3738 = vmatprep.subr.bf16.mxu0 0
  %3739 = vmatpush1.bf16.msra.mxu0 %v3325
  %3740 = vmatprep.subr.bf16.mxu0 0
  %3741 = vmatpush1.bf16.msra.mxu0 %v3326
  %3742 = vmatprep.subr.bf16.mxu0 0
  %3743 = vmatpush1.bf16.msra.mxu0 %v3327
  %3744 = vmatprep.subr.bf16.mxu0 0
  %3745 = vmatpush1.bf16.msra.mxu0 %v3328
  %3746 = vmatprep.subr.bf16.mxu0 0
  %3747 = vmatpush1.bf16.msra.mxu0 %v3329
  %3748 = vmatprep.subr.bf16.mxu0 0
  %3749 = vmatpush1.bf16.msra.mxu0 %v3330
  %3750 = vmatprep.subr.bf16.mxu0 0
  %3751 = vmatpush1.bf16.msra.mxu0 %v3331
  %3752 = vmatprep.subr.bf16.mxu0 0
  %3753 = vmatpush1.bf16.msra.mxu0 %v3332
  %3754 = vmatprep.subr.bf16.mxu0 0
  %3755 = vmatpush1.bf16.msra.mxu0 %v3333
  %3756 = vmatprep.mubr.bf16.mxu0 %v2447
  %3757 = vmatmul.mubr.bf16.gmra.mrb[0].mxu0 %v2446
  %v3758 = vpop.f32.mrb[0].mxu0
  %v3759 = vadd.f32 %v3718, %v3758
  %v3760 = vpop.f32.mrb[0].mxu0
  %v3761 = vpop.f32.mrb[0].mxu0
  %v3762 = vadd.f32 %v3721, %v3761
  %v3763 = vpop.f32.mrb[0].mxu0
  %3764 = vdwg.mxu0
  %3765 = vmatprep.subr.bf16.mxu0 0
  %3766 = vmatpush1.bf16.msra.mxu0 %v3334
  %3767 = vmatprep.subr.bf16.mxu0 0
  %3768 = vmatpush1.bf16.msra.mxu0 %v3335
  %3769 = vmatprep.subr.bf16.mxu0 0
  %3770 = vmatpush1.bf16.msra.mxu0 %v3336
  %3771 = vmatprep.subr.bf16.mxu0 0
  %3772 = vmatpush1.bf16.msra.mxu0 %v3337
  %3773 = vmatprep.subr.bf16.mxu0 0
  %3774 = vmatpush1.bf16.msra.mxu0 %v3338
  %3775 = vmatprep.subr.bf16.mxu0 0
  %3776 = vmatpush1.bf16.msra.mxu0 %v3339
  %3777 = vmatprep.subr.bf16.mxu0 0
  %3778 = vmatpush1.bf16.msra.mxu0 %v3340
  %3779 = vmatprep.subr.bf16.mxu0 0
  %3780 = vmatpush1.bf16.msra.mxu0 %v3341
  %3781 = vmatprep.subr.bf16.mxu0 0
  %3782 = vmatpush1.bf16.msra.mxu0 %v3342
  %3783 = vmatprep.subr.bf16.mxu0 0
  %3784 = vmatpush1.bf16.msra.mxu0 %v3343
  %3785 = vmatprep.subr.bf16.mxu0 0
  %3786 = vmatpush1.bf16.msra.mxu0 %v3344
  %3787 = vmatprep.subr.bf16.mxu0 0
  %3788 = vmatpush1.bf16.msra.mxu0 %v3345
  %3789 = vmatprep.subr.bf16.mxu0 0
  %3790 = vmatpush1.bf16.msra.mxu0 %v3346
  %3791 = vmatprep.subr.bf16.mxu0 0
  %3792 = vmatpush1.bf16.msra.mxu0 %v3347
  %3793 = vmatprep.subr.bf16.mxu0 0
  %3794 = vmatpush1.bf16.msra.mxu0 %v3348
  %3795 = vmatprep.subr.bf16.mxu0 0
  %3796 = vmatpush1.bf16.msra.mxu0 %v3349
  %3797 = vmatprep.mubr.bf16.mxu0 %v2449
  %3798 = vmatmul.mubr.bf16.gmra.mrb[0].mxu0 %v2448
  %v3799 = vpop.f32.mrb[0].mxu0
  %v3800 = vadd.f32 %v3759, %v3799
  %v3801 = vpop.f32.mrb[0].mxu0
  %v3802 = vpop.f32.mrb[0].mxu0
  %v3803 = vadd.f32 %v3762, %v3802
  %v3804 = vpop.f32.mrb[0].mxu0
  %3805 = vdwg.mxu0
  %v3806 = vadd.f32 %v1776, %v3800
  %v3807 = vadd.f32 %v1777, %v3803
  %v3808 = vsel %vm150, %v3806, 0.0
  %3809 = vadd.xlane.f32.xlu0 %v3808
  %v3810 = vpop.xlane.xlu0 %3809
  %v3811 = vsel %vm1697, %v3807, 0.0
  %3812 = vadd.xlane.f32.xlu0 %v3811
  %v3813 = vpop.xlane.xlu0 %3812
  %v3814 = vmul.f32 %v3810, %v1701
  %v3815 = vmul.f32 %v3813, %v1701
  %v3816 = vsub.f32 %v3806, %v3814
  %v3817 = vsub.f32 %v3807, %v3815
  %v3818 = vmul.f32 %v3816, %v3816
  %v3819 = vmul.f32 %v3817, %v3817
  %v3820 = vsel %vm150, %v3818, 0.0
  %3821 = vadd.xlane.f32.xlu0 %v3820
  %v3822 = vpop.xlane.xlu0 %3821
  %v3823 = vsel %vm1697, %v3819, 0.0
  %3824 = vadd.xlane.f32.xlu0 %v3823
  %v3825 = vpop.xlane.xlu0 %3824
  %v3826 = vmul.f32 %v3822, %v1701
  %v3827 = vmul.f32 %v3825, %v1701
  %v3828 = vadd.f32 %v3826, 1e-05
  %v3829 = vadd.f32 %v3827, 1e-05
  %v3830 = vrsqrt.pop %v3828
  %v3831 = vrsqrt.pop %v3829
  %v3832 = vmul.f32 %v3816, %v3830
  %v3833 = vmul.f32 %v3817, %v3831
  %v3834 = vlaneseq
  %v3835 = vshrl.u32 %v3834, 7
  %v3836 = vsub.s32 6, %v3835
  %v3837 = vrot.slane %v640, %v3836
  %v3838 = vmul.f32 %v3832, %v3837
  %v3839 = vmul.f32 %v3833, %v3837
  %v3840 = vlaneseq
  %v3841 = vshrl.u32 %v3840, 7
  %v3842 = vsub.s32 7, %v3841
  %v3843 = vrot.slane %v640, %v3842
  %v3844 = vadd.f32 %v3838, %v3843
  %v3845 = vadd.f32 %v3839, %v3843
  %s3846 = scalar_lea.vmem %s10, 16
  %v3847 = vld [vmem:[%s3846] sm:$0xff]
  %v3848 = vld [vmem:[%s3846 + $0x8] sm:$0x1]
  %s3849 = scalar_lea.vmem %s7, 32
  %v3850 = vld [vmem:[%s3849] sm:$0xff]
  %v3851 = vld [vmem:[%s3849 + $0x8] sm:$0xff]
  %v3852 = vld [vmem:[%s3849 + $0x10] sm:$0xff]
  %v3853 = vld [vmem:[%s3849 + $0x18] sm:$0xff]
  %s3854 = scalar_lea.vmem %s8, 1
  %v3855 = vld [vmem:[%s3854] sm:$0x1]
  %v3857 = vlaneseq
  %v3858 = vshrl.u32 %v3857, 7
  %v3859 = vsub.s32 0, %v3858
  %v3860 = vrot.slane %v3855, %v3859
  %v3863 = vsel %vm150, %v3844, 0
  %v3866 = vsel %vm150, %v3845, 0
  %3868 = vmatprep.subr.mxu0 0.0
  %3869 = vmatpush1.msra.mxu0 %v3850
  %3870 = vmatprep.subr.mxu0 0.0
  %3871 = vmatpush1.msra.mxu0 %v3851
  %3872 = vmatprep.subr.mxu0 0.0
  %3873 = vmatpush1.msra.mxu0 %v3852
  %3874 = vmatprep.subr.mxu0 0.0
  %3875 = vmatpush1.msra.mxu0 %v3853
  %3876 = vmatprep.subr.mxu0 0.0
  %3877 = vmatpush1.msra.mxu0 0.0
  %3878 = vmatprep.subr.mxu0 0.0
  %3879 = vmatpush1.msra.mxu0 0.0
  %3880 = vmatprep.subr.mxu0 0.0
  %3881 = vmatpush1.msra.mxu0 0.0
  %3882 = vmatprep.subr.mxu0 0.0
  %3883 = vmatpush1.msra.mxu0 0.0
  %3884 = vmatprep.subr.mxu0 0.0
  %3885 = vmatpush1.msra.mxu0 0.0
  %3886 = vmatprep.subr.mxu0 0.0
  %3887 = vmatpush1.msra.mxu0 0.0
  %3888 = vmatprep.subr.mxu0 0.0
  %3889 = vmatpush1.msra.mxu0 0.0
  %3890 = vmatprep.subr.mxu0 0.0
  %3891 = vmatpush1.msra.mxu0 0.0
  %3892 = vmatprep.subr.mxu0 0.0
  %3893 = vmatpush1.msra.mxu0 0.0
  %3894 = vmatprep.subr.mxu0 0.0
  %3895 = vmatpush1.msra.mxu0 0.0
  %3896 = vmatprep.subr.mxu0 0.0
  %3897 = vmatpush1.msra.mxu0 0.0
  %3898 = vmatprep.subr.mxu0 0.0
  %3899 = vmatpush1.msra.mxu0 0.0
  %3900 = vmatprep.subr.mxu0 0.0
  %3901 = vmatpush1.msra.mxu0 0.0
  %3902 = vmatprep.subr.mxu0 0.0
  %3903 = vmatpush1.msra.mxu0 0.0
  %3904 = vmatprep.subr.mxu0 0.0
  %3905 = vmatpush1.msra.mxu0 0.0
  %3906 = vmatprep.subr.mxu0 0.0
  %3907 = vmatpush1.msra.mxu0 0.0
  %3908 = vmatprep.subr.mxu0 0.0
  %3909 = vmatpush1.msra.mxu0 0.0
  %3910 = vmatprep.subr.mxu0 0.0
  %3911 = vmatpush1.msra.mxu0 0.0
  %3912 = vmatprep.subr.mxu0 0.0
  %3913 = vmatpush1.msra.mxu0 0.0
  %3914 = vmatprep.subr.mxu0 0.0
  %3915 = vmatpush1.msra.mxu0 0.0
  %3916 = vmatprep.subr.mxu0 0.0
  %3917 = vmatpush1.msra.mxu0 0.0
  %3918 = vmatprep.subr.mxu0 0.0
  %3919 = vmatpush1.msra.mxu0 0.0
  %3920 = vmatprep.subr.mxu0 0.0
  %3921 = vmatpush1.msra.mxu0 0.0
  %3922 = vmatprep.subr.mxu0 0.0
  %3923 = vmatpush1.msra.mxu0 0.0
  %3924 = vmatprep.subr.mxu0 0.0
  %3925 = vmatpush1.msra.mxu0 0.0
  %3926 = vmatprep.subr.mxu0 0.0
  %3927 = vmatpush1.msra.mxu0 0.0
  %3928 = vmatprep.subr.mxu0 0.0
  %3929 = vmatpush1.msra.mxu0 0.0
  %3930 = vmatprep.subr.mxu0 0.0
  %3931 = vmatpush1.msra.mxu0 0.0
  %3932 = vmatprep.mubr.f32.mxu0 0.0
  %3933 = vmatmul.mubr.f32.gmra.mrb[0].mxu0 %v3863
  %v3934 = vpop.f32.mrb[0].mxu0
  %v3935 = vadd.f32 %v3860, %v3934
  %v3936 = vpop.f32.mrb[0].mxu0
  %3937 = vmatprep.mubr.f32.mxu0 0.0
  %3938 = vmatmul.mubr.f32.gmra.mrb[0].mxu0 %v3866
  %v3939 = vpop.f32.mrb[0].mxu0
  %v3940 = vadd.f32 %v3860, %v3939
  %v3941 = vpop.f32.mrb[0].mxu0
  %3942 = vdwg.mxu0
  %v3943 = vmul.f32 %v3935, %v740
  %v3944 = vmul.f32 %v3940, %v740
  %v3945 = vmul.f32 %v3935, %v747
  %v3946 = vmul.f32 %v3940, %v747
  %3949 = vrot.lane.b32.xlu0 %v3943, 96
  %v3950 = vpop.permute.xlu0 %3949
  %3951 = vrot.lane.b32.xlu0 %v3944, 96
  %v3952 = vpop.permute.xlu0 %3951
  %v3954 = vsel %vm150, %v3935, 0
  %v3957 = vsel %vm150, %v3940, 0
  %v3959 = vsel %vm150, %v3950, 0
  %v3961 = vsel %vm150, %v3952, 0
  %3963 = vmatprep.subr.mxu0 0.0
  %3964 = vmatpush1.xpose.msra.mxu0 %v3959
  %3965 = vmatprep.subr.mxu0 0.0
  %3966 = vmatpush1.xpose.msra.mxu0 %v3961
  %3967 = vmatprep.subr.mxu0 0.0
  %3968 = vmatpush1.xpose.msra.mxu0 0.0
  %3969 = vmatprep.subr.mxu0 0.0
  %3970 = vmatpush1.xpose.msra.mxu0 0.0
  %3971 = vmatprep.subr.mxu0 0.0
  %3972 = vmatpush1.xpose.msra.mxu0 0.0
  %3973 = vmatprep.subr.mxu0 0.0
  %3974 = vmatpush1.xpose.msra.mxu0 0.0
  %3975 = vmatprep.subr.mxu0 0.0
  %3976 = vmatpush1.xpose.msra.mxu0 0.0
  %3977 = vmatprep.subr.mxu0 0.0
  %3978 = vmatpush1.xpose.msra.mxu0 0.0
  %3979 = vmatprep.subr.mxu0 0.0
  %3980 = vmatpush1.xpose.msra.mxu0 0.0
  %3981 = vmatprep.subr.mxu0 0.0
  %3982 = vmatpush1.xpose.msra.mxu0 0.0
  %3983 = vmatprep.subr.mxu0 0.0
  %3984 = vmatpush1.xpose.msra.mxu0 0.0
  %3985 = vmatprep.subr.mxu0 0.0
  %3986 = vmatpush1.xpose.msra.mxu0 0.0
  %3987 = vmatprep.subr.mxu0 0.0
  %3988 = vmatpush1.xpose.msra.mxu0 0.0
  %3989 = vmatprep.subr.mxu0 0.0
  %3990 = vmatpush1.xpose.msra.mxu0 0.0
  %3991 = vmatprep.subr.mxu0 0.0
  %3992 = vmatpush1.xpose.msra.mxu0 0.0
  %3993 = vmatprep.subr.mxu0 0.0
  %3994 = vmatpush1.xpose.msra.mxu0 0.0
  %3995 = vmatprep.subr.mxu0 0.0
  %3996 = vmatpush1.xpose.msra.mxu0 0.0
  %3997 = vmatprep.subr.mxu0 0.0
  %3998 = vmatpush1.xpose.msra.mxu0 0.0
  %3999 = vmatprep.subr.mxu0 0.0
  %4000 = vmatpush1.xpose.msra.mxu0 0.0
  %4001 = vmatprep.subr.mxu0 0.0
  %4002 = vmatpush1.xpose.msra.mxu0 0.0
  %4003 = vmatprep.subr.mxu0 0.0
  %4004 = vmatpush1.xpose.msra.mxu0 0.0
  %4005 = vmatprep.subr.mxu0 0.0
  %4006 = vmatpush1.xpose.msra.mxu0 0.0
  %4007 = vmatprep.subr.mxu0 0.0
  %4008 = vmatpush1.xpose.msra.mxu0 0.0
  %4009 = vmatprep.subr.mxu0 0.0
  %4010 = vmatpush1.xpose.msra.mxu0 0.0
  %4011 = vmatprep.subr.mxu0 0.0
  %4012 = vmatpush1.xpose.msra.mxu0 0.0
  %4013 = vmatprep.subr.mxu0 0.0
  %4014 = vmatpush1.xpose.msra.mxu0 0.0
  %4015 = vmatprep.subr.mxu0 0.0
  %4016 = vmatpush1.xpose.msra.mxu0 0.0
  %4017 = vmatprep.subr.mxu0 0.0
  %4018 = vmatpush1.xpose.msra.mxu0 0.0
  %4019 = vmatprep.subr.mxu0 0.0
  %4020 = vmatpush1.xpose.msra.mxu0 0.0
  %4021 = vmatprep.subr.mxu0 0.0
  %4022 = vmatpush1.xpose.msra.mxu0 0.0
  %4023 = vmatprep.subr.mxu0 0.0
  %4024 = vmatpush1.xpose.msra.mxu0 0.0
  %4025 = vmatprep.subr.mxu0 0.0
  %4026 = vmatpush1.xpose.msra.mxu0 0.0
  %4027 = vmatprep.mubr.f32.mxu0 0.0
  %4028 = vmatmul.mubr.f32.gmra.mrb[0].mxu0 %v3954
  %v4029 = vpop.f32.mrb[0].mxu0
  %v4030 = vadd.f32 %v638, %v4029
  %v4031 = vpop.f32.mrb[0].mxu0
  %4032 = vmatprep.mubr.f32.mxu0 0.0
  %4033 = vmatmul.mubr.f32.gmra.mrb[0].mxu0 %v3957
  %v4034 = vpop.f32.mrb[0].mxu0
  %v4035 = vadd.f32 %v639, %v4034
  %v4036 = vpop.f32.mrb[0].mxu0
  %4037 = vdwg.mxu0
  %v4038 = vsel %vm842, %v4030, -inf
  %4039 = vmax.xlane.f32.xlu0 %v4038
  %v4040 = vpop.xlane.xlu0 %4039
  %v4041 = vsel %vm846, %v4035, -inf
  %4042 = vmax.xlane.f32.xlu0 %v4041
  %v4043 = vpop.xlane.xlu0 %4042
  %v4044 = vsub.f32 %v4030, %v4040
  %v4045 = vsub.f32 %v4035, %v4043
  %v4046 = vmul.f32 %v4044, 1.442695
  %v4047 = vpow.pop %v4046
  %v4048 = vmul.f32 %v4045, 1.442695
  %v4049 = vpow.pop %v4048
  %v4050 = vsel %vm842, %v4047, 0.0
  %4051 = vadd.xlane.f32.xlu0 %v4050
  %v4052 = vpop.xlane.xlu0 %4051
  %v4053 = vsel %vm846, %v4049, 0.0
  %4054 = vadd.xlane.f32.xlu0 %v4053
  %v4055 = vpop.xlane.xlu0 %4054
  %v4056 = vrcp.pop %v4052
  %v4057 = vrcp.pop %v4055
  %v4058 = vmul.f32 %v4047, %v4056
  %v4059 = vmul.f32 %v4049, %v4057
  %v4060 = vmul.f32 %v3935, %v872
  %v4061 = vmul.f32 %v3940, %v872
  %v4062 = vmul.f32 %v3935, %v879
  %v4063 = vmul.f32 %v3940, %v879
  %4066 = vrot.lane.b32.xlu0 %v4060, 96
  %v4067 = vpop.permute.xlu0 %4066
  %4068 = vrot.lane.b32.xlu0 %v4061, 96
  %v4069 = vpop.permute.xlu0 %4068
  %v4070 = vsel %vm150, %v4067, 0
  %v4072 = vsel %vm150, %v4069, 0
  %4074 = vmatprep.subr.mxu0 0.0
  %4075 = vmatpush1.xpose.msra.mxu0 %v4070
  %4076 = vmatprep.subr.mxu0 0.0
  %4077 = vmatpush1.xpose.msra.mxu0 %v4072
  %4078 = vmatprep.subr.mxu0 0.0
  %4079 = vmatpush1.xpose.msra.mxu0 0.0
  %4080 = vmatprep.subr.mxu0 0.0
  %4081 = vmatpush1.xpose.msra.mxu0 0.0
  %4082 = vmatprep.subr.mxu0 0.0
  %4083 = vmatpush1.xpose.msra.mxu0 0.0
  %4084 = vmatprep.subr.mxu0 0.0
  %4085 = vmatpush1.xpose.msra.mxu0 0.0
  %4086 = vmatprep.subr.mxu0 0.0
  %4087 = vmatpush1.xpose.msra.mxu0 0.0
  %4088 = vmatprep.subr.mxu0 0.0
  %4089 = vmatpush1.xpose.msra.mxu0 0.0
  %4090 = vmatprep.subr.mxu0 0.0
  %4091 = vmatpush1.xpose.msra.mxu0 0.0
  %4092 = vmatprep.subr.mxu0 0.0
  %4093 = vmatpush1.xpose.msra.mxu0 0.0
  %4094 = vmatprep.subr.mxu0 0.0
  %4095 = vmatpush1.xpose.msra.mxu0 0.0
  %4096 = vmatprep.subr.mxu0 0.0
  %4097 = vmatpush1.xpose.msra.mxu0 0.0
  %4098 = vmatprep.subr.mxu0 0.0
  %4099 = vmatpush1.xpose.msra.mxu0 0.0
  %4100 = vmatprep.subr.mxu0 0.0
  %4101 = vmatpush1.xpose.msra.mxu0 0.0
  %4102 = vmatprep.subr.mxu0 0.0
  %4103 = vmatpush1.xpose.msra.mxu0 0.0
  %4104 = vmatprep.subr.mxu0 0.0
  %4105 = vmatpush1.xpose.msra.mxu0 0.0
  %4106 = vmatprep.subr.mxu0 0.0
  %4107 = vmatpush1.xpose.msra.mxu0 0.0
  %4108 = vmatprep.subr.mxu0 0.0
  %4109 = vmatpush1.xpose.msra.mxu0 0.0
  %4110 = vmatprep.subr.mxu0 0.0
  %4111 = vmatpush1.xpose.msra.mxu0 0.0
  %4112 = vmatprep.subr.mxu0 0.0
  %4113 = vmatpush1.xpose.msra.mxu0 0.0
  %4114 = vmatprep.subr.mxu0 0.0
  %4115 = vmatpush1.xpose.msra.mxu0 0.0
  %4116 = vmatprep.subr.mxu0 0.0
  %4117 = vmatpush1.xpose.msra.mxu0 0.0
  %4118 = vmatprep.subr.mxu0 0.0
  %4119 = vmatpush1.xpose.msra.mxu0 0.0
  %4120 = vmatprep.subr.mxu0 0.0
  %4121 = vmatpush1.xpose.msra.mxu0 0.0
  %4122 = vmatprep.subr.mxu0 0.0
  %4123 = vmatpush1.xpose.msra.mxu0 0.0
  %4124 = vmatprep.subr.mxu0 0.0
  %4125 = vmatpush1.xpose.msra.mxu0 0.0
  %4126 = vmatprep.subr.mxu0 0.0
  %4127 = vmatpush1.xpose.msra.mxu0 0.0
  %4128 = vmatprep.subr.mxu0 0.0
  %4129 = vmatpush1.xpose.msra.mxu0 0.0
  %4130 = vmatprep.subr.mxu0 0.0
  %4131 = vmatpush1.xpose.msra.mxu0 0.0
  %4132 = vmatprep.subr.mxu0 0.0
  %4133 = vmatpush1.xpose.msra.mxu0 0.0
  %4134 = vmatprep.subr.mxu0 0.0
  %4135 = vmatpush1.xpose.msra.mxu0 0.0
  %4136 = vmatprep.subr.mxu0 0.0
  %4137 = vmatpush1.xpose.msra.mxu0 0.0
  %4138 = vmatprep.mubr.f32.mxu0 0.0
  %4139 = vmatmul.mubr.f32.gmra.mrb[0].mxu0 %v3954
  %v4140 = vpop.f32.mrb[0].mxu0
  %v4141 = vadd.f32 %v638, %v4140
  %v4142 = vpop.f32.mrb[0].mxu0
  %4143 = vmatprep.mubr.f32.mxu0 0.0
  %4144 = vmatmul.mubr.f32.gmra.mrb[0].mxu0 %v3957
  %v4145 = vpop.f32.mrb[0].mxu0
  %v4146 = vadd.f32 %v639, %v4145
  %v4147 = vpop.f32.mrb[0].mxu0
  %4148 = vdwg.mxu0
  %v4149 = vsel %vm842, %v4141, -inf
  %4150 = vmax.xlane.f32.xlu0 %v4149
  %v4151 = vpop.xlane.xlu0 %4150
  %v4152 = vsel %vm846, %v4146, -inf
  %4153 = vmax.xlane.f32.xlu0 %v4152
  %v4154 = vpop.xlane.xlu0 %4153
  %v4155 = vsub.f32 %v4141, %v4151
  %v4156 = vsub.f32 %v4146, %v4154
  %v4157 = vmul.f32 %v4155, 1.442695
  %v4158 = vpow.pop %v4157
  %v4159 = vmul.f32 %v4156, 1.442695
  %v4160 = vpow.pop %v4159
  %v4161 = vsel %vm842, %v4158, 0.0
  %4162 = vadd.xlane.f32.xlu0 %v4161
  %v4163 = vpop.xlane.xlu0 %4162
  %v4164 = vsel %vm846, %v4160, 0.0
  %4165 = vadd.xlane.f32.xlu0 %v4164
  %v4166 = vpop.xlane.xlu0 %4165
  %v4167 = vrcp.pop %v4163
  %v4168 = vrcp.pop %v4166
  %v4169 = vmul.f32 %v4158, %v4167
  %v4170 = vmul.f32 %v4160, %v4168
  %4173 = vrot.lane.b32.xlu0 %v4062, 64
  %v4174 = vpop.permute.xlu0 %4173
  %4175 = vrot.lane.b32.xlu0 %v4063, 64
  %v4176 = vpop.permute.xlu0 %4175
  %v4179 = vsel %vm842, %v4169, 0
  %v4182 = vsel %vm842, %v4170, 0
  %v4184 = vsel %vm1003, %v4176, 0
  %4186 = vmatprep.subr.mxu0 0.0
  %4187 = vmatpush1.msra.mxu0 %v4174
  %4188 = vmatprep.subr.mxu0 0.0
  %4189 = vmatpush1.msra.mxu0 %v4184
  %4190 = vmatprep.subr.mxu0 0.0
  %4191 = vmatpush1.msra.mxu0 0.0
  %4192 = vmatprep.subr.mxu0 0.0
  %4193 = vmatpush1.msra.mxu0 0.0
  %4194 = vmatprep.subr.mxu0 0.0
  %4195 = vmatpush1.msra.mxu0 0.0
  %4196 = vmatprep.subr.mxu0 0.0
  %4197 = vmatpush1.msra.mxu0 0.0
  %4198 = vmatprep.subr.mxu0 0.0
  %4199 = vmatpush1.msra.mxu0 0.0
  %4200 = vmatprep.subr.mxu0 0.0
  %4201 = vmatpush1.msra.mxu0 0.0
  %4202 = vmatprep.subr.mxu0 0.0
  %4203 = vmatpush1.msra.mxu0 0.0
  %4204 = vmatprep.subr.mxu0 0.0
  %4205 = vmatpush1.msra.mxu0 0.0
  %4206 = vmatprep.subr.mxu0 0.0
  %4207 = vmatpush1.msra.mxu0 0.0
  %4208 = vmatprep.subr.mxu0 0.0
  %4209 = vmatpush1.msra.mxu0 0.0
  %4210 = vmatprep.subr.mxu0 0.0
  %4211 = vmatpush1.msra.mxu0 0.0
  %4212 = vmatprep.subr.mxu0 0.0
  %4213 = vmatpush1.msra.mxu0 0.0
  %4214 = vmatprep.subr.mxu0 0.0
  %4215 = vmatpush1.msra.mxu0 0.0
  %4216 = vmatprep.subr.mxu0 0.0
  %4217 = vmatpush1.msra.mxu0 0.0
  %4218 = vmatprep.subr.mxu0 0.0
  %4219 = vmatpush1.msra.mxu0 0.0
  %4220 = vmatprep.subr.mxu0 0.0
  %4221 = vmatpush1.msra.mxu0 0.0
  %4222 = vmatprep.subr.mxu0 0.0
  %4223 = vmatpush1.msra.mxu0 0.0
  %4224 = vmatprep.subr.mxu0 0.0
  %4225 = vmatpush1.msra.mxu0 0.0
  %4226 = vmatprep.subr.mxu0 0.0
  %4227 = vmatpush1.msra.mxu0 0.0
  %4228 = vmatprep.subr.mxu0 0.0
  %4229 = vmatpush1.msra.mxu0 0.0
  %4230 = vmatprep.subr.mxu0 0.0
  %4231 = vmatpush1.msra.mxu0 0.0
  %4232 = vmatprep.subr.mxu0 0.0
  %4233 = vmatpush1.msra.mxu0 0.0
  %4234 = vmatprep.subr.mxu0 0.0
  %4235 = vmatpush1.msra.mxu0 0.0
  %4236 = vmatprep.subr.mxu0 0.0
  %4237 = vmatpush1.msra.mxu0 0.0
  %4238 = vmatprep.subr.mxu0 0.0
  %4239 = vmatpush1.msra.mxu0 0.0
  %4240 = vmatprep.subr.mxu0 0.0
  %4241 = vmatpush1.msra.mxu0 0.0
  %4242 = vmatprep.subr.mxu0 0.0
  %4243 = vmatpush1.msra.mxu0 0.0
  %4244 = vmatprep.subr.mxu0 0.0
  %4245 = vmatpush1.msra.mxu0 0.0
  %4246 = vmatprep.subr.mxu0 0.0
  %4247 = vmatpush1.msra.mxu0 0.0
  %4248 = vmatprep.subr.mxu0 0.0
  %4249 = vmatpush1.msra.mxu0 0.0
  %4250 = vmatprep.mubr.f32.mxu0 0.0
  %4251 = vmatmul.mubr.f32.gmra.mrb[0].mxu0 %v4179
  %v4252 = vpop.f32.mrb[0].mxu0
  %v4253 = vadd.f32 0.0, %v4252
  %v4254 = vpop.f32.mrb[0].mxu0
  %4255 = vmatprep.mubr.f32.mxu0 0.0
  %4256 = vmatmul.mubr.f32.gmra.mrb[0].mxu0 %v4182
  %v4257 = vpop.f32.mrb[0].mxu0
  %v4258 = vadd.f32 0.0, %v4257
  %v4259 = vpop.f32.mrb[0].mxu0
  %4260 = vdwg.mxu0
  %4263 = vrot.lane.b32.xlu0 %v3945, 64
  %v4264 = vpop.permute.xlu0 %4263
  %4265 = vrot.lane.b32.xlu0 %v3946, 64
  %v4266 = vpop.permute.xlu0 %4265
  %v4269 = vsel %vm842, %v4058, 0
  %v4272 = vsel %vm842, %v4059, 0
  %v4274 = vsel %vm1003, %v4266, 0
  %4276 = vmatprep.subr.mxu0 0.0
  %4277 = vmatpush1.msra.mxu0 %v4264
  %4278 = vmatprep.subr.mxu0 0.0
  %4279 = vmatpush1.msra.mxu0 %v4274
  %4280 = vmatprep.subr.mxu0 0.0
  %4281 = vmatpush1.msra.mxu0 0.0
  %4282 = vmatprep.subr.mxu0 0.0
  %4283 = vmatpush1.msra.mxu0 0.0
  %4284 = vmatprep.subr.mxu0 0.0
  %4285 = vmatpush1.msra.mxu0 0.0
  %4286 = vmatprep.subr.mxu0 0.0
  %4287 = vmatpush1.msra.mxu0 0.0
  %4288 = vmatprep.subr.mxu0 0.0
  %4289 = vmatpush1.msra.mxu0 0.0
  %4290 = vmatprep.subr.mxu0 0.0
  %4291 = vmatpush1.msra.mxu0 0.0
  %4292 = vmatprep.subr.mxu0 0.0
  %4293 = vmatpush1.msra.mxu0 0.0
  %4294 = vmatprep.subr.mxu0 0.0
  %4295 = vmatpush1.msra.mxu0 0.0
  %4296 = vmatprep.subr.mxu0 0.0
  %4297 = vmatpush1.msra.mxu0 0.0
  %4298 = vmatprep.subr.mxu0 0.0
  %4299 = vmatpush1.msra.mxu0 0.0
  %4300 = vmatprep.subr.mxu0 0.0
  %4301 = vmatpush1.msra.mxu0 0.0
  %4302 = vmatprep.subr.mxu0 0.0
  %4303 = vmatpush1.msra.mxu0 0.0
  %4304 = vmatprep.subr.mxu0 0.0
  %4305 = vmatpush1.msra.mxu0 0.0
  %4306 = vmatprep.subr.mxu0 0.0
  %4307 = vmatpush1.msra.mxu0 0.0
  %4308 = vmatprep.subr.mxu0 0.0
  %4309 = vmatpush1.msra.mxu0 0.0
  %4310 = vmatprep.subr.mxu0 0.0
  %4311 = vmatpush1.msra.mxu0 0.0
  %4312 = vmatprep.subr.mxu0 0.0
  %4313 = vmatpush1.msra.mxu0 0.0
  %4314 = vmatprep.subr.mxu0 0.0
  %4315 = vmatpush1.msra.mxu0 0.0
  %4316 = vmatprep.subr.mxu0 0.0
  %4317 = vmatpush1.msra.mxu0 0.0
  %4318 = vmatprep.subr.mxu0 0.0
  %4319 = vmatpush1.msra.mxu0 0.0
  %4320 = vmatprep.subr.mxu0 0.0
  %4321 = vmatpush1.msra.mxu0 0.0
  %4322 = vmatprep.subr.mxu0 0.0
  %4323 = vmatpush1.msra.mxu0 0.0
  %4324 = vmatprep.subr.mxu0 0.0
  %4325 = vmatpush1.msra.mxu0 0.0
  %4326 = vmatprep.subr.mxu0 0.0
  %4327 = vmatpush1.msra.mxu0 0.0
  %4328 = vmatprep.subr.mxu0 0.0
  %4329 = vmatpush1.msra.mxu0 0.0
  %4330 = vmatprep.subr.mxu0 0.0
  %4331 = vmatpush1.msra.mxu0 0.0
  %4332 = vmatprep.subr.mxu0 0.0
  %4333 = vmatpush1.msra.mxu0 0.0
  %4334 = vmatprep.subr.mxu0 0.0
  %4335 = vmatpush1.msra.mxu0 0.0
  %4336 = vmatprep.subr.mxu0 0.0
  %4337 = vmatpush1.msra.mxu0 0.0
  %4338 = vmatprep.subr.mxu0 0.0
  %4339 = vmatpush1.msra.mxu0 0.0
  %4340 = vmatprep.mubr.f32.mxu0 0.0
  %4341 = vmatmul.mubr.f32.gmra.mrb[0].mxu0 %v4269
  %v4342 = vpop.f32.mrb[0].mxu0
  %v4343 = vadd.f32 %v4253, %v4342
  %v4344 = vpop.f32.mrb[0].mxu0
  %4345 = vmatprep.mubr.f32.mxu0 0.0
  %4346 = vmatmul.mubr.f32.gmra.mrb[0].mxu0 %v4272
  %v4347 = vpop.f32.mrb[0].mxu0
  %v4348 = vadd.f32 %v4258, %v4347
  %v4349 = vpop.f32.mrb[0].mxu0
  %4350 = vdwg.mxu0
  %v4351 = vmul.f32 %v3935, %v1177
  %v4352 = vmul.f32 %v3940, %v1177
  %v4353 = vmul.f32 %v3935, %v1184
  %v4354 = vmul.f32 %v3940, %v1184
  %4357 = vrot.lane.b32.xlu0 %v4351, 96
  %v4358 = vpop.permute.xlu0 %4357
  %4359 = vrot.lane.b32.xlu0 %v4352, 96
  %v4360 = vpop.permute.xlu0 %4359
  %v4361 = vsel %vm150, %v4358, 0
  %v4363 = vsel %vm150, %v4360, 0
  %4365 = vmatprep.subr.mxu0 0.0
  %4366 = vmatpush1.xpose.msra.mxu0 %v4361
  %4367 = vmatprep.subr.mxu0 0.0
  %4368 = vmatpush1.xpose.msra.mxu0 %v4363
  %4369 = vmatprep.subr.mxu0 0.0
  %4370 = vmatpush1.xpose.msra.mxu0 0.0
  %4371 = vmatprep.subr.mxu0 0.0
  %4372 = vmatpush1.xpose.msra.mxu0 0.0
  %4373 = vmatprep.subr.mxu0 0.0
  %4374 = vmatpush1.xpose.msra.mxu0 0.0
  %4375 = vmatprep.subr.mxu0 0.0
  %4376 = vmatpush1.xpose.msra.mxu0 0.0
  %4377 = vmatprep.subr.mxu0 0.0
  %4378 = vmatpush1.xpose.msra.mxu0 0.0
  %4379 = vmatprep.subr.mxu0 0.0
  %4380 = vmatpush1.xpose.msra.mxu0 0.0
  %4381 = vmatprep.subr.mxu0 0.0
  %4382 = vmatpush1.xpose.msra.mxu0 0.0
  %4383 = vmatprep.subr.mxu0 0.0
  %4384 = vmatpush1.xpose.msra.mxu0 0.0
  %4385 = vmatprep.subr.mxu0 0.0
  %4386 = vmatpush1.xpose.msra.mxu0 0.0
  %4387 = vmatprep.subr.mxu0 0.0
  %4388 = vmatpush1.xpose.msra.mxu0 0.0
  %4389 = vmatprep.subr.mxu0 0.0
  %4390 = vmatpush1.xpose.msra.mxu0 0.0
  %4391 = vmatprep.subr.mxu0 0.0
  %4392 = vmatpush1.xpose.msra.mxu0 0.0
  %4393 = vmatprep.subr.mxu0 0.0
  %4394 = vmatpush1.xpose.msra.mxu0 0.0
  %4395 = vmatprep.subr.mxu0 0.0
  %4396 = vmatpush1.xpose.msra.mxu0 0.0
  %4397 = vmatprep.subr.mxu0 0.0
  %4398 = vmatpush1.xpose.msra.mxu0 0.0
  %4399 = vmatprep.subr.mxu0 0.0
  %4400 = vmatpush1.xpose.msra.mxu0 0.0
  %4401 = vmatprep.subr.mxu0 0.0
  %4402 = vmatpush1.xpose.msra.mxu0 0.0
  %4403 = vmatprep.subr.mxu0 0.0
  %4404 = vmatpush1.xpose.msra.mxu0 0.0
  %4405 = vmatprep.subr.mxu0 0.0
  %4406 = vmatpush1.xpose.msra.mxu0 0.0
  %4407 = vmatprep.subr.mxu0 0.0
  %4408 = vmatpush1.xpose.msra.mxu0 0.0
  %4409 = vmatprep.subr.mxu0 0.0
  %4410 = vmatpush1.xpose.msra.mxu0 0.0
  %4411 = vmatprep.subr.mxu0 0.0
  %4412 = vmatpush1.xpose.msra.mxu0 0.0
  %4413 = vmatprep.subr.mxu0 0.0
  %4414 = vmatpush1.xpose.msra.mxu0 0.0
  %4415 = vmatprep.subr.mxu0 0.0
  %4416 = vmatpush1.xpose.msra.mxu0 0.0
  %4417 = vmatprep.subr.mxu0 0.0
  %4418 = vmatpush1.xpose.msra.mxu0 0.0
  %4419 = vmatprep.subr.mxu0 0.0
  %4420 = vmatpush1.xpose.msra.mxu0 0.0
  %4421 = vmatprep.subr.mxu0 0.0
  %4422 = vmatpush1.xpose.msra.mxu0 0.0
  %4423 = vmatprep.subr.mxu0 0.0
  %4424 = vmatpush1.xpose.msra.mxu0 0.0
  %4425 = vmatprep.subr.mxu0 0.0
  %4426 = vmatpush1.xpose.msra.mxu0 0.0
  %4427 = vmatprep.subr.mxu0 0.0
  %4428 = vmatpush1.xpose.msra.mxu0 0.0
  %4429 = vmatprep.mubr.f32.mxu0 0.0
  %4430 = vmatmul.mubr.f32.gmra.mrb[0].mxu0 %v3954
  %v4431 = vpop.f32.mrb[0].mxu0
  %v4432 = vadd.f32 %v638, %v4431
  %v4433 = vpop.f32.mrb[0].mxu0
  %4434 = vmatprep.mubr.f32.mxu0 0.0
  %4435 = vmatmul.mubr.f32.gmra.mrb[0].mxu0 %v3957
  %v4436 = vpop.f32.mrb[0].mxu0
  %v4437 = vadd.f32 %v639, %v4436
  %v4438 = vpop.f32.mrb[0].mxu0
  %4439 = vdwg.mxu0
  %v4440 = vsel %vm842, %v4432, -inf
  %4441 = vmax.xlane.f32.xlu0 %v4440
  %v4442 = vpop.xlane.xlu0 %4441
  %v4443 = vsel %vm846, %v4437, -inf
  %4444 = vmax.xlane.f32.xlu0 %v4443
  %v4445 = vpop.xlane.xlu0 %4444
  %v4446 = vsub.f32 %v4432, %v4442
  %v4447 = vsub.f32 %v4437, %v4445
  %v4448 = vmul.f32 %v4446, 1.442695
  %v4449 = vpow.pop %v4448
  %v4450 = vmul.f32 %v4447, 1.442695
  %v4451 = vpow.pop %v4450
  %v4452 = vsel %vm842, %v4449, 0.0
  %4453 = vadd.xlane.f32.xlu0 %v4452
  %v4454 = vpop.xlane.xlu0 %4453
  %v4455 = vsel %vm846, %v4451, 0.0
  %4456 = vadd.xlane.f32.xlu0 %v4455
  %v4457 = vpop.xlane.xlu0 %4456
  %v4458 = vrcp.pop %v4454
  %v4459 = vrcp.pop %v4457
  %v4460 = vmul.f32 %v4449, %v4458
  %v4461 = vmul.f32 %v4451, %v4459
  %4464 = vrot.lane.b32.xlu0 %v4353, 64
  %v4465 = vpop.permute.xlu0 %4464
  %4466 = vrot.lane.b32.xlu0 %v4354, 64
  %v4467 = vpop.permute.xlu0 %4466
  %v4470 = vsel %vm842, %v4460, 0
  %v4473 = vsel %vm842, %v4461, 0
  %v4475 = vsel %vm1003, %v4467, 0
  %4477 = vmatprep.subr.mxu0 0.0
  %4478 = vmatpush1.msra.mxu0 %v4465
  %4479 = vmatprep.subr.mxu0 0.0
  %4480 = vmatpush1.msra.mxu0 %v4475
  %4481 = vmatprep.subr.mxu0 0.0
  %4482 = vmatpush1.msra.mxu0 0.0
  %4483 = vmatprep.subr.mxu0 0.0
  %4484 = vmatpush1.msra.mxu0 0.0
  %4485 = vmatprep.subr.mxu0 0.0
  %4486 = vmatpush1.msra.mxu0 0.0
  %4487 = vmatprep.subr.mxu0 0.0
  %4488 = vmatpush1.msra.mxu0 0.0
  %4489 = vmatprep.subr.mxu0 0.0
  %4490 = vmatpush1.msra.mxu0 0.0
  %4491 = vmatprep.subr.mxu0 0.0
  %4492 = vmatpush1.msra.mxu0 0.0
  %4493 = vmatprep.subr.mxu0 0.0
  %4494 = vmatpush1.msra.mxu0 0.0
  %4495 = vmatprep.subr.mxu0 0.0
  %4496 = vmatpush1.msra.mxu0 0.0
  %4497 = vmatprep.subr.mxu0 0.0
  %4498 = vmatpush1.msra.mxu0 0.0
  %4499 = vmatprep.subr.mxu0 0.0
  %4500 = vmatpush1.msra.mxu0 0.0
  %4501 = vmatprep.subr.mxu0 0.0
  %4502 = vmatpush1.msra.mxu0 0.0
  %4503 = vmatprep.subr.mxu0 0.0
  %4504 = vmatpush1.msra.mxu0 0.0
  %4505 = vmatprep.subr.mxu0 0.0
  %4506 = vmatpush1.msra.mxu0 0.0
  %4507 = vmatprep.subr.mxu0 0.0
  %4508 = vmatpush1.msra.mxu0 0.0
  %4509 = vmatprep.subr.mxu0 0.0
  %4510 = vmatpush1.msra.mxu0 0.0
  %4511 = vmatprep.subr.mxu0 0.0
  %4512 = vmatpush1.msra.mxu0 0.0
  %4513 = vmatprep.subr.mxu0 0.0
  %4514 = vmatpush1.msra.mxu0 0.0
  %4515 = vmatprep.subr.mxu0 0.0
  %4516 = vmatpush1.msra.mxu0 0.0
  %4517 = vmatprep.subr.mxu0 0.0
  %4518 = vmatpush1.msra.mxu0 0.0
  %4519 = vmatprep.subr.mxu0 0.0
  %4520 = vmatpush1.msra.mxu0 0.0
  %4521 = vmatprep.subr.mxu0 0.0
  %4522 = vmatpush1.msra.mxu0 0.0
  %4523 = vmatprep.subr.mxu0 0.0
  %4524 = vmatpush1.msra.mxu0 0.0
  %4525 = vmatprep.subr.mxu0 0.0
  %4526 = vmatpush1.msra.mxu0 0.0
  %4527 = vmatprep.subr.mxu0 0.0
  %4528 = vmatpush1.msra.mxu0 0.0
  %4529 = vmatprep.subr.mxu0 0.0
  %4530 = vmatpush1.msra.mxu0 0.0
  %4531 = vmatprep.subr.mxu0 0.0
  %4532 = vmatpush1.msra.mxu0 0.0
  %4533 = vmatprep.subr.mxu0 0.0
  %4534 = vmatpush1.msra.mxu0 0.0
  %4535 = vmatprep.subr.mxu0 0.0
  %4536 = vmatpush1.msra.mxu0 0.0
  %4537 = vmatprep.subr.mxu0 0.0
  %4538 = vmatpush1.msra.mxu0 0.0
  %4539 = vmatprep.subr.mxu0 0.0
  %4540 = vmatpush1.msra.mxu0 0.0
  %4541 = vmatprep.mubr.f32.mxu0 0.0
  %4542 = vmatmul.mubr.f32.gmra.mrb[0].mxu0 %v4470
  %v4543 = vpop.f32.mrb[0].mxu0
  %v4544 = vadd.f32 0.0, %v4543
  %v4545 = vpop.f32.mrb[0].mxu0
  %4546 = vmatprep.mubr.f32.mxu0 0.0
  %4547 = vmatmul.mubr.f32.gmra.mrb[0].mxu0 %v4473
  %v4548 = vpop.f32.mrb[0].mxu0
  %v4549 = vadd.f32 0.0, %v4548
  %v4550 = vpop.f32.mrb[0].mxu0
  %4551 = vdwg.mxu0
  %v4552 = vadd.f32 %v4343, %v4544
  %v4553 = vadd.f32 %v4348, %v4549
  %v4554 = vmul.f32 %v3935, %v1393
  %v4555 = vmul.f32 %v3940, %v1393
  %v4556 = vmul.f32 %v3935, %v1400
  %v4557 = vmul.f32 %v3940, %v1400
  %4560 = vrot.lane.b32.xlu0 %v4554, 96
  %v4561 = vpop.permute.xlu0 %4560
  %4562 = vrot.lane.b32.xlu0 %v4555, 96
  %v4563 = vpop.permute.xlu0 %4562
  %v4564 = vsel %vm150, %v4561, 0
  %v4566 = vsel %vm150, %v4563, 0
  %4568 = vmatprep.subr.mxu0 0.0
  %4569 = vmatpush1.xpose.msra.mxu0 %v4564
  %4570 = vmatprep.subr.mxu0 0.0
  %4571 = vmatpush1.xpose.msra.mxu0 %v4566
  %4572 = vmatprep.subr.mxu0 0.0
  %4573 = vmatpush1.xpose.msra.mxu0 0.0
  %4574 = vmatprep.subr.mxu0 0.0
  %4575 = vmatpush1.xpose.msra.mxu0 0.0
  %4576 = vmatprep.subr.mxu0 0.0
  %4577 = vmatpush1.xpose.msra.mxu0 0.0
  %4578 = vmatprep.subr.mxu0 0.0
  %4579 = vmatpush1.xpose.msra.mxu0 0.0
  %4580 = vmatprep.subr.mxu0 0.0
  %4581 = vmatpush1.xpose.msra.mxu0 0.0
  %4582 = vmatprep.subr.mxu0 0.0
  %4583 = vmatpush1.xpose.msra.mxu0 0.0
  %4584 = vmatprep.subr.mxu0 0.0
  %4585 = vmatpush1.xpose.msra.mxu0 0.0
  %4586 = vmatprep.subr.mxu0 0.0
  %4587 = vmatpush1.xpose.msra.mxu0 0.0
  %4588 = vmatprep.subr.mxu0 0.0
  %4589 = vmatpush1.xpose.msra.mxu0 0.0
  %4590 = vmatprep.subr.mxu0 0.0
  %4591 = vmatpush1.xpose.msra.mxu0 0.0
  %4592 = vmatprep.subr.mxu0 0.0
  %4593 = vmatpush1.xpose.msra.mxu0 0.0
  %4594 = vmatprep.subr.mxu0 0.0
  %4595 = vmatpush1.xpose.msra.mxu0 0.0
  %4596 = vmatprep.subr.mxu0 0.0
  %4597 = vmatpush1.xpose.msra.mxu0 0.0
  %4598 = vmatprep.subr.mxu0 0.0
  %4599 = vmatpush1.xpose.msra.mxu0 0.0
  %4600 = vmatprep.subr.mxu0 0.0
  %4601 = vmatpush1.xpose.msra.mxu0 0.0
  %4602 = vmatprep.subr.mxu0 0.0
  %4603 = vmatpush1.xpose.msra.mxu0 0.0
  %4604 = vmatprep.subr.mxu0 0.0
  %4605 = vmatpush1.xpose.msra.mxu0 0.0
  %4606 = vmatprep.subr.mxu0 0.0
  %4607 = vmatpush1.xpose.msra.mxu0 0.0
  %4608 = vmatprep.subr.mxu0 0.0
  %4609 = vmatpush1.xpose.msra.mxu0 0.0
  %4610 = vmatprep.subr.mxu0 0.0
  %4611 = vmatpush1.xpose.msra.mxu0 0.0
  %4612 = vmatprep.subr.mxu0 0.0
  %4613 = vmatpush1.xpose.msra.mxu0 0.0
  %4614 = vmatprep.subr.mxu0 0.0
  %4615 = vmatpush1.xpose.msra.mxu0 0.0
  %4616 = vmatprep.subr.mxu0 0.0
  %4617 = vmatpush1.xpose.msra.mxu0 0.0
  %4618 = vmatprep.subr.mxu0 0.0
  %4619 = vmatpush1.xpose.msra.mxu0 0.0
  %4620 = vmatprep.subr.mxu0 0.0
  %4621 = vmatpush1.xpose.msra.mxu0 0.0
  %4622 = vmatprep.subr.mxu0 0.0
  %4623 = vmatpush1.xpose.msra.mxu0 0.0
  %4624 = vmatprep.subr.mxu0 0.0
  %4625 = vmatpush1.xpose.msra.mxu0 0.0
  %4626 = vmatprep.subr.mxu0 0.0
  %4627 = vmatpush1.xpose.msra.mxu0 0.0
  %4628 = vmatprep.subr.mxu0 0.0
  %4629 = vmatpush1.xpose.msra.mxu0 0.0
  %4630 = vmatprep.subr.mxu0 0.0
  %4631 = vmatpush1.xpose.msra.mxu0 0.0
  %4632 = vmatprep.mubr.f32.mxu0 0.0
  %4633 = vmatmul.mubr.f32.gmra.mrb[0].mxu0 %v3954
  %v4634 = vpop.f32.mrb[0].mxu0
  %v4635 = vadd.f32 %v638, %v4634
  %v4636 = vpop.f32.mrb[0].mxu0
  %4637 = vmatprep.mubr.f32.mxu0 0.0
  %4638 = vmatmul.mubr.f32.gmra.mrb[0].mxu0 %v3957
  %v4639 = vpop.f32.mrb[0].mxu0
  %v4640 = vadd.f32 %v639, %v4639
  %v4641 = vpop.f32.mrb[0].mxu0
  %4642 = vdwg.mxu0
  %v4643 = vsel %vm842, %v4635, -inf
  %4644 = vmax.xlane.f32.xlu0 %v4643
  %v4645 = vpop.xlane.xlu0 %4644
  %v4646 = vsel %vm846, %v4640, -inf
  %4647 = vmax.xlane.f32.xlu0 %v4646
  %v4648 = vpop.xlane.xlu0 %4647
  %v4649 = vsub.f32 %v4635, %v4645
  %v4650 = vsub.f32 %v4640, %v4648
  %v4651 = vmul.f32 %v4649, 1.442695
  %v4652 = vpow.pop %v4651
  %v4653 = vmul.f32 %v4650, 1.442695
  %v4654 = vpow.pop %v4653
  %v4655 = vsel %vm842, %v4652, 0.0
  %4656 = vadd.xlane.f32.xlu0 %v4655
  %v4657 = vpop.xlane.xlu0 %4656
  %v4658 = vsel %vm846, %v4654, 0.0
  %4659 = vadd.xlane.f32.xlu0 %v4658
  %v4660 = vpop.xlane.xlu0 %4659
  %v4661 = vrcp.pop %v4657
  %v4662 = vrcp.pop %v4660
  %v4663 = vmul.f32 %v4652, %v4661
  %v4664 = vmul.f32 %v4654, %v4662
  %4667 = vrot.lane.b32.xlu0 %v4556, 64
  %v4668 = vpop.permute.xlu0 %4667
  %4669 = vrot.lane.b32.xlu0 %v4557, 64
  %v4670 = vpop.permute.xlu0 %4669
  %v4673 = vsel %vm842, %v4663, 0
  %v4676 = vsel %vm842, %v4664, 0
  %v4678 = vsel %vm1003, %v4670, 0
  %4680 = vmatprep.subr.mxu0 0.0
  %4681 = vmatpush1.msra.mxu0 %v4668
  %4682 = vmatprep.subr.mxu0 0.0
  %4683 = vmatpush1.msra.mxu0 %v4678
  %4684 = vmatprep.subr.mxu0 0.0
  %4685 = vmatpush1.msra.mxu0 0.0
  %4686 = vmatprep.subr.mxu0 0.0
  %4687 = vmatpush1.msra.mxu0 0.0
  %4688 = vmatprep.subr.mxu0 0.0
  %4689 = vmatpush1.msra.mxu0 0.0
  %4690 = vmatprep.subr.mxu0 0.0
  %4691 = vmatpush1.msra.mxu0 0.0
  %4692 = vmatprep.subr.mxu0 0.0
  %4693 = vmatpush1.msra.mxu0 0.0
  %4694 = vmatprep.subr.mxu0 0.0
  %4695 = vmatpush1.msra.mxu0 0.0
  %4696 = vmatprep.subr.mxu0 0.0
  %4697 = vmatpush1.msra.mxu0 0.0
  %4698 = vmatprep.subr.mxu0 0.0
  %4699 = vmatpush1.msra.mxu0 0.0
  %4700 = vmatprep.subr.mxu0 0.0
  %4701 = vmatpush1.msra.mxu0 0.0
  %4702 = vmatprep.subr.mxu0 0.0
  %4703 = vmatpush1.msra.mxu0 0.0
  %4704 = vmatprep.subr.mxu0 0.0
  %4705 = vmatpush1.msra.mxu0 0.0
  %4706 = vmatprep.subr.mxu0 0.0
  %4707 = vmatpush1.msra.mxu0 0.0
  %4708 = vmatprep.subr.mxu0 0.0
  %4709 = vmatpush1.msra.mxu0 0.0
  %4710 = vmatprep.subr.mxu0 0.0
  %4711 = vmatpush1.msra.mxu0 0.0
  %4712 = vmatprep.subr.mxu0 0.0
  %4713 = vmatpush1.msra.mxu0 0.0
  %4714 = vmatprep.subr.mxu0 0.0
  %4715 = vmatpush1.msra.mxu0 0.0
  %4716 = vmatprep.subr.mxu0 0.0
  %4717 = vmatpush1.msra.mxu0 0.0
  %4718 = vmatprep.subr.mxu0 0.0
  %4719 = vmatpush1.msra.mxu0 0.0
  %4720 = vmatprep.subr.mxu0 0.0
  %4721 = vmatpush1.msra.mxu0 0.0
  %4722 = vmatprep.subr.mxu0 0.0
  %4723 = vmatpush1.msra.mxu0 0.0
  %4724 = vmatprep.subr.mxu0 0.0
  %4725 = vmatpush1.msra.mxu0 0.0
  %4726 = vmatprep.subr.mxu0 0.0
  %4727 = vmatpush1.msra.mxu0 0.0
  %4728 = vmatprep.subr.mxu0 0.0
  %4729 = vmatpush1.msra.mxu0 0.0
  %4730 = vmatprep.subr.mxu0 0.0
  %4731 = vmatpush1.msra.mxu0 0.0
  %4732 = vmatprep.subr.mxu0 0.0
  %4733 = vmatpush1.msra.mxu0 0.0
  %4734 = vmatprep.subr.mxu0 0.0
  %4735 = vmatpush1.msra.mxu0 0.0
  %4736 = vmatprep.subr.mxu0 0.0
  %4737 = vmatpush1.msra.mxu0 0.0
  %4738 = vmatprep.subr.mxu0 0.0
  %4739 = vmatpush1.msra.mxu0 0.0
  %4740 = vmatprep.subr.mxu0 0.0
  %4741 = vmatpush1.msra.mxu0 0.0
  %4742 = vmatprep.subr.mxu0 0.0
  %4743 = vmatpush1.msra.mxu0 0.0
  %4744 = vmatprep.mubr.f32.mxu0 0.0
  %4745 = vmatmul.mubr.f32.gmra.mrb[0].mxu0 %v4673
  %v4746 = vpop.f32.mrb[0].mxu0
  %v4747 = vadd.f32 0.0, %v4746
  %v4748 = vpop.f32.mrb[0].mxu0
  %4749 = vmatprep.mubr.f32.mxu0 0.0
  %4750 = vmatmul.mubr.f32.gmra.mrb[0].mxu0 %v4676
  %v4751 = vpop.f32.mrb[0].mxu0
  %v4752 = vadd.f32 0.0, %v4751
  %v4753 = vpop.f32.mrb[0].mxu0
  %4754 = vdwg.mxu0
  %v4755 = vadd.f32 %v4552, %v4747
  %v4756 = vadd.f32 %v4553, %v4752
  %s4757 = scalar_lea.vmem %s9, 32
  %v4758 = vld [vmem:[%s4757] sm:$0xff]
  %v4759 = vld [vmem:[%s4757 + $0x8] sm:$0xff]
  %v4760 = vld [vmem:[%s4757 + $0x10] sm:$0xff]
  %v4761 = vld [vmem:[%s4757 + $0x18] sm:$0xff]
  %v4762 = vlaneseq
  %v4763 = vshrl.u32 %v4762, 7
  %v4764 = vsub.s32 0, %v4763
  %v4765 = vrot.slane %v3847, %v4764
  %v4767 = vsel %vm150, %v4755, 0
  %v4770 = vsel %vm150, %v4756, 0
  %4772 = vmatprep.subr.mxu0 0.0
  %4773 = vmatpush1.msra.mxu0 %v4758
  %4774 = vmatprep.subr.mxu0 0.0
  %4775 = vmatpush1.msra.mxu0 %v4759
  %4776 = vmatprep.subr.mxu0 0.0
  %4777 = vmatpush1.msra.mxu0 %v4760
  %4778 = vmatprep.subr.mxu0 0.0
  %4779 = vmatpush1.msra.mxu0 %v4761
  %4780 = vmatprep.subr.mxu0 0.0
  %4781 = vmatpush1.msra.mxu0 0.0
  %4782 = vmatprep.subr.mxu0 0.0
  %4783 = vmatpush1.msra.mxu0 0.0
  %4784 = vmatprep.subr.mxu0 0.0
  %4785 = vmatpush1.msra.mxu0 0.0
  %4786 = vmatprep.subr.mxu0 0.0
  %4787 = vmatpush1.msra.mxu0 0.0
  %4788 = vmatprep.subr.mxu0 0.0
  %4789 = vmatpush1.msra.mxu0 0.0
  %4790 = vmatprep.subr.mxu0 0.0
  %4791 = vmatpush1.msra.mxu0 0.0
  %4792 = vmatprep.subr.mxu0 0.0
  %4793 = vmatpush1.msra.mxu0 0.0
  %4794 = vmatprep.subr.mxu0 0.0
  %4795 = vmatpush1.msra.mxu0 0.0
  %4796 = vmatprep.subr.mxu0 0.0
  %4797 = vmatpush1.msra.mxu0 0.0
  %4798 = vmatprep.subr.mxu0 0.0
  %4799 = vmatpush1.msra.mxu0 0.0
  %4800 = vmatprep.subr.mxu0 0.0
  %4801 = vmatpush1.msra.mxu0 0.0
  %4802 = vmatprep.subr.mxu0 0.0
  %4803 = vmatpush1.msra.mxu0 0.0
  %4804 = vmatprep.subr.mxu0 0.0
  %4805 = vmatpush1.msra.mxu0 0.0
  %4806 = vmatprep.subr.mxu0 0.0
  %4807 = vmatpush1.msra.mxu0 0.0
  %4808 = vmatprep.subr.mxu0 0.0
  %4809 = vmatpush1.msra.mxu0 0.0
  %4810 = vmatprep.subr.mxu0 0.0
  %4811 = vmatpush1.msra.mxu0 0.0
  %4812 = vmatprep.subr.mxu0 0.0
  %4813 = vmatpush1.msra.mxu0 0.0
  %4814 = vmatprep.subr.mxu0 0.0
  %4815 = vmatpush1.msra.mxu0 0.0
  %4816 = vmatprep.subr.mxu0 0.0
  %4817 = vmatpush1.msra.mxu0 0.0
  %4818 = vmatprep.subr.mxu0 0.0
  %4819 = vmatpush1.msra.mxu0 0.0
  %4820 = vmatprep.subr.mxu0 0.0
  %4821 = vmatpush1.msra.mxu0 0.0
  %4822 = vmatprep.subr.mxu0 0.0
  %4823 = vmatpush1.msra.mxu0 0.0
  %4824 = vmatprep.subr.mxu0 0.0
  %4825 = vmatpush1.msra.mxu0 0.0
  %4826 = vmatprep.subr.mxu0 0.0
  %4827 = vmatpush1.msra.mxu0 0.0
  %4828 = vmatprep.subr.mxu0 0.0
  %4829 = vmatpush1.msra.mxu0 0.0
  %4830 = vmatprep.subr.mxu0 0.0
  %4831 = vmatpush1.msra.mxu0 0.0
  %4832 = vmatprep.subr.mxu0 0.0
  %4833 = vmatpush1.msra.mxu0 0.0
  %4834 = vmatprep.subr.mxu0 0.0
  %4835 = vmatpush1.msra.mxu0 0.0
  %4836 = vmatprep.mubr.f32.mxu0 0.0
  %4837 = vmatmul.mubr.f32.gmra.mrb[0].mxu0 %v4767
  %v4838 = vpop.f32.mrb[0].mxu0
  %v4839 = vadd.f32 %v4765, %v4838
  %v4840 = vpop.f32.mrb[0].mxu0
  %4841 = vmatprep.mubr.f32.mxu0 0.0
  %4842 = vmatmul.mubr.f32.gmra.mrb[0].mxu0 %v4770
  %v4843 = vpop.f32.mrb[0].mxu0
  %v4844 = vadd.f32 %v4765, %v4843
  %v4845 = vpop.f32.mrb[0].mxu0
  %4846 = vdwg.mxu0
  %v4847 = vadd.f32 %v3844, %v4839
  %v4848 = vadd.f32 %v3845, %v4844
  %v4849 = vsel %vm150, %v4847, 0.0
  %4850 = vadd.xlane.f32.xlu0 %v4849
  %v4851 = vpop.xlane.xlu0 %4850
  %v4852 = vsel %vm1697, %v4848, 0.0
  %4853 = vadd.xlane.f32.xlu0 %v4852
  %v4854 = vpop.xlane.xlu0 %4853
  %v4855 = vmul.f32 %v4851, %v1701
  %v4856 = vmul.f32 %v4854, %v1701
  %v4857 = vsub.f32 %v4847, %v4855
  %v4858 = vsub.f32 %v4848, %v4856
  %v4859 = vmul.f32 %v4857, %v4857
  %v4860 = vmul.f32 %v4858, %v4858
  %v4861 = vsel %vm150, %v4859, 0.0
  %4862 = vadd.xlane.f32.xlu0 %v4861
  %v4863 = vpop.xlane.xlu0 %4862
  %v4864 = vsel %vm1697, %v4860, 0.0
  %4865 = vadd.xlane.f32.xlu0 %v4864
  %v4866 = vpop.xlane.xlu0 %4865
  %v4867 = vmul.f32 %v4863, %v1701
  %v4868 = vmul.f32 %v4866, %v1701
  %v4869 = vadd.f32 %v4867, 1e-05
  %v4870 = vadd.f32 %v4868, 1e-05
  %v4871 = vrsqrt.pop %v4869
  %v4872 = vrsqrt.pop %v4870
  %v4873 = vmul.f32 %v4857, %v4871
  %v4874 = vmul.f32 %v4858, %v4872
  %v4875 = vlaneseq
  %v4876 = vshrl.u32 %v4875, 7
  %v4877 = vsub.s32 2, %v4876
  %v4878 = vrot.slane %v3847, %v4877
  %v4879 = vmul.f32 %v4873, %v4878
  %v4880 = vmul.f32 %v4874, %v4878
  %v4881 = vlaneseq
  %v4882 = vshrl.u32 %v4881, 7
  %v4883 = vsub.s32 3, %v4882
  %v4884 = vrot.slane %v3847, %v4883
  %v4885 = vadd.f32 %v4879, %v4884
  %v4886 = vadd.f32 %v4880, %v4884
  %v4887 = vlaneseq
  %v4888 = vshrl.u32 %v4887, 7
  %v4889 = vsub.s32 1, %v4888
  %v4890 = vrot.slane %v3847, %v4889
  %v4891 = vadd.f32 %v4885, %v4890
  %v4892 = vadd.f32 %v4886, %v4890
  %v4893 = vsel %vm150, %v4891, 0.0
  %4894 = vadd.xlane.f32.xlu0 %v4893
  %v4895 = vpop.xlane.xlu0 %4894
  %v4896 = vsel %vm1697, %v4892, 0.0
  %4897 = vadd.xlane.f32.xlu0 %v4896
  %v4898 = vpop.xlane.xlu0 %4897
  %v4899 = vmul.f32 %v4895, %v1701
  %v4900 = vmul.f32 %v4898, %v1701
  %v4901 = vsub.f32 %v4891, %v4899
  %v4902 = vsub.f32 %v4892, %v4900
  %v4903 = vmul.f32 %v4901, %v4901
  %v4904 = vmul.f32 %v4902, %v4902
  %v4905 = vsel %vm150, %v4903, 0.0
  %4906 = vadd.xlane.f32.xlu0 %v4905
  %v4907 = vpop.xlane.xlu0 %4906
  %v4908 = vsel %vm1697, %v4904, 0.0
  %4909 = vadd.xlane.f32.xlu0 %v4908
  %v4910 = vpop.xlane.xlu0 %4909
  %v4911 = vmul.f32 %v4907, %v1701
  %v4912 = vmul.f32 %v4910, %v1701
  %v4913 = vadd.f32 %v4911, 1e-05
  %v4914 = vadd.f32 %v4912, 1e-05
  %v4915 = vrsqrt.pop %v4913
  %v4916 = vrsqrt.pop %v4914
  %v4917 = vmul.f32 %v4901, %v4915
  %v4918 = vmul.f32 %v4902, %v4916
  %v4919 = vlaneseq
  %v4920 = vshrl.u32 %v4919, 7
  %v4921 = vsub.s32 4, %v4920
  %v4922 = vrot.slane %v3847, %v4921
  %v4923 = vmul.f32 %v4917, %v4922
  %v4924 = vmul.f32 %v4918, %v4922
  %v4925 = vlaneseq
  %v4926 = vshrl.u32 %v4925, 7
  %v4927 = vsub.s32 5, %v4926
  %v4928 = vrot.slane %v3847, %v4927
  %v4929 = vadd.f32 %v4923, %v4928
  %v4930 = vadd.f32 %v4924, %v4928
  %v4931 = vpack.c.bf16 %v4930, %v4929
  %s4932 = scalar_lea.vmem %s11, 256
  %v4933 = vld [vmem:[%s4932] sm:$0xff]
  %v4934 = vld [vmem:[%s4932 + $0x8] sm:$0xff]
  %v4935 = vld [vmem:[%s4932 + $0x10] sm:$0xff]
  %v4936 = vld [vmem:[%s4932 + $0x18] sm:$0xff]
  %v4937 = vld [vmem:[%s4932 + $0x20] sm:$0xff]
  %v4938 = vld [vmem:[%s4932 + $0x28] sm:$0xff]
  %v4939 = vld [vmem:[%s4932 + $0x30] sm:$0xff]
  %v4940 = vld [vmem:[%s4932 + $0x38] sm:$0xff]
  %v4941 = vld [vmem:[%s4932 + $0x40] sm:$0xff]
  %v4942 = vld [vmem:[%s4932 + $0x48] sm:$0xff]
  %v4943 = vld [vmem:[%s4932 + $0x50] sm:$0xff]
  %v4944 = vld [vmem:[%s4932 + $0x58] sm:$0xff]
  %v4945 = vld [vmem:[%s4932 + $0x60] sm:$0xff]
  %v4946 = vld [vmem:[%s4932 + $0x68] sm:$0xff]
  %v4947 = vld [vmem:[%s4932 + $0x70] sm:$0xff]
  %v4948 = vld [vmem:[%s4932 + $0x78] sm:$0xff]
  %v4949 = vld [vmem:[%s4932 + $0x80] sm:$0xff]
  %v4950 = vld [vmem:[%s4932 + $0x88] sm:$0xff]
  %v4951 = vld [vmem:[%s4932 + $0x90] sm:$0xff]
  %v4952 = vld [vmem:[%s4932 + $0x98] sm:$0xff]
  %v4953 = vld [vmem:[%s4932 + $0xa0] sm:$0xff]
  %v4954 = vld [vmem:[%s4932 + $0xa8] sm:$0xff]
  %v4955 = vld [vmem:[%s4932 + $0xb0] sm:$0xff]
  %v4956 = vld [vmem:[%s4932 + $0xb8] sm:$0xff]
  %v4957 = vld [vmem:[%s4932 + $0xc0] sm:$0xff]
  %v4958 = vld [vmem:[%s4932 + $0xc8] sm:$0xff]
  %v4959 = vld [vmem:[%s4932 + $0xd0] sm:$0xff]
  %v4960 = vld [vmem:[%s4932 + $0xd8] sm:$0xff]
  %v4961 = vld [vmem:[%s4932 + $0xe0] sm:$0xff]
  %v4962 = vld [vmem:[%s4932 + $0xe8] sm:$0xff]
  %v4963 = vld [vmem:[%s4932 + $0xf0] sm:$0xff]
  %v4964 = vld [vmem:[%s4932 + $0xf8] sm:$0xff]
  %s4965 = scalar_lea.vmem %s12, 16
  %v4966 = vld [vmem:[%s4965] sm:$0xff]
  %v4967 = vld [vmem:[%s4965 + $0x8] sm:$0xff]
  %v4970 = vlaneseq
  %v4971 = vshrl.u32 %v4970, 7
  %v4972 = vsub.s32 0, %v4971
  %v4973 = vrot.slane %v4966, %v4972
  %v4974 = vlaneseq
  %v4975 = vshrl.u32 %v4974, 7
  %v4976 = vsub.s32 1, %v4975
  %v4977 = vrot.slane %v4966, %v4976
  %v4978 = vlaneseq
  %v4979 = vshrl.u32 %v4978, 7
  %v4980 = vsub.s32 2, %v4979
  %v4981 = vrot.slane %v4966, %v4980
  %v4982 = vlaneseq
  %v4983 = vshrl.u32 %v4982, 7
  %v4984 = vsub.s32 3, %v4983
  %v4985 = vrot.slane %v4966, %v4984
  %v4986 = vlaneseq
  %v4987 = vshrl.u32 %v4986, 7
  %v4988 = vsub.s32 4, %v4987
  %v4989 = vrot.slane %v4966, %v4988
  %v4990 = vlaneseq
  %v4991 = vshrl.u32 %v4990, 7
  %v4992 = vsub.s32 5, %v4991
  %v4993 = vrot.slane %v4966, %v4992
  %v4994 = vlaneseq
  %v4995 = vshrl.u32 %v4994, 7
  %v4996 = vsub.s32 6, %v4995
  %v4997 = vrot.slane %v4966, %v4996
  %v4998 = vlaneseq
  %v4999 = vshrl.u32 %v4998, 7
  %v5000 = vsub.s32 7, %v4999
  %v5001 = vrot.slane %v4966, %v5000
  %v5002 = vlaneseq
  %v5003 = vshrl.u32 %v5002, 7
  %v5004 = vsub.s32 0, %v5003
  %v5005 = vrot.slane %v4967, %v5004
  %v5006 = vlaneseq
  %v5007 = vshrl.u32 %v5006, 7
  %v5008 = vsub.s32 1, %v5007
  %v5009 = vrot.slane %v4967, %v5008
  %v5010 = vlaneseq
  %v5011 = vshrl.u32 %v5010, 7
  %v5012 = vsub.s32 2, %v5011
  %v5013 = vrot.slane %v4967, %v5012
  %v5014 = vlaneseq
  %v5015 = vshrl.u32 %v5014, 7
  %v5016 = vsub.s32 3, %v5015
  %v5017 = vrot.slane %v4967, %v5016
  %v5018 = vlaneseq
  %v5019 = vshrl.u32 %v5018, 7
  %v5020 = vsub.s32 4, %v5019
  %v5021 = vrot.slane %v4967, %v5020
  %v5022 = vlaneseq
  %v5023 = vshrl.u32 %v5022, 7
  %v5024 = vsub.s32 5, %v5023
  %v5025 = vrot.slane %v4967, %v5024
  %v5026 = vlaneseq
  %v5027 = vshrl.u32 %v5026, 7
  %v5028 = vsub.s32 6, %v5027
  %v5029 = vrot.slane %v4967, %v5028
  %v5030 = vlaneseq
  %v5031 = vshrl.u32 %v5030, 7
  %v5032 = vsub.s32 7, %v5031
  %v5033 = vrot.slane %v4967, %v5032
  %v5082 = vunpack.c.l.b16 %v4933
  %v5083 = vunpack.c.h.b16 %v4933
  %v5084 = vunpack.c.l.b16 %v4934
  %v5085 = vunpack.c.h.b16 %v4934
  %v5086 = vunpack.c.l.b16 %v4935
  %v5087 = vunpack.c.h.b16 %v4935
  %v5088 = vunpack.c.l.b16 %v4936
  %v5089 = vunpack.c.h.b16 %v4936
  %v5090 = vunpack.c.l.b16 %v4937
  %v5091 = vunpack.c.h.b16 %v4937
  %v5092 = vunpack.c.l.b16 %v4938
  %v5093 = vunpack.c.h.b16 %v4938
  %v5094 = vunpack.c.l.b16 %v4939
  %v5095 = vunpack.c.h.b16 %v4939
  %v5096 = vunpack.c.l.b16 %v4940
  %v5097 = vunpack.c.h.b16 %v4940
  %v5098 = vunpack.c.l.b16 %v4941
  %v5099 = vunpack.c.h.b16 %v4941
  %v5100 = vunpack.c.l.b16 %v4942
  %v5101 = vunpack.c.h.b16 %v4942
  %v5102 = vunpack.c.l.b16 %v4943
  %v5103 = vunpack.c.h.b16 %v4943
  %v5104 = vunpack.c.l.b16 %v4944
  %v5105 = vunpack.c.h.b16 %v4944
  %v5106 = vunpack.c.l.b16 %v4945
  %v5107 = vunpack.c.h.b16 %v4945
  %v5108 = vunpack.c.l.b16 %v4946
  %v5109 = vunpack.c.h.b16 %v4946
  %v5110 = vunpack.c.l.b16 %v4947
  %v5111 = vunpack.c.h.b16 %v4947
  %v5112 = vunpack.c.l.b16 %v4948
  %v5113 = vunpack.c.h.b16 %v4948
  %v5114 = vunpack.c.l.b16 %v4949
  %v5115 = vunpack.c.h.b16 %v4949
  %v5116 = vunpack.c.l.b16 %v4950
  %v5117 = vunpack.c.h.b16 %v4950
  %v5118 = vunpack.c.l.b16 %v4951
  %v5119 = vunpack.c.h.b16 %v4951
  %v5120 = vunpack.c.l.b16 %v4952
  %v5121 = vunpack.c.h.b16 %v4952
  %v5122 = vunpack.c.l.b16 %v4953
  %v5123 = vunpack.c.h.b16 %v4953
  %v5124 = vunpack.c.l.b16 %v4954
  %v5125 = vunpack.c.h.b16 %v4954
  %v5126 = vunpack.c.l.b16 %v4955
  %v5127 = vunpack.c.h.b16 %v4955
  %v5128 = vunpack.c.l.b16 %v4956
  %v5129 = vunpack.c.h.b16 %v4956
  %v5130 = vunpack.c.l.b16 %v4957
  %v5131 = vunpack.c.h.b16 %v4957
  %v5132 = vunpack.c.l.b16 %v4958
  %v5133 = vunpack.c.h.b16 %v4958
  %v5134 = vunpack.c.l.b16 %v4959
  %v5135 = vunpack.c.h.b16 %v4959
  %v5136 = vunpack.c.l.b16 %v4960
  %v5137 = vunpack.c.h.b16 %v4960
  %v5138 = vunpack.c.l.b16 %v4961
  %v5139 = vunpack.c.h.b16 %v4961
  %v5140 = vunpack.c.l.b16 %v4962
  %v5141 = vunpack.c.h.b16 %v4962
  %v5142 = vunpack.c.l.b16 %v4963
  %v5143 = vunpack.c.h.b16 %v4963
  %v5144 = vunpack.c.l.b16 %v4964
  %v5145 = vunpack.c.h.b16 %v4964
  %v5146 = vpack.c.b16 %v5098, %v5082
  %v5147 = vpack.c.b16 %v5099, %v5083
  %v5148 = vpack.c.b16 %v5100, %v5084
  %v5149 = vpack.c.b16 %v5101, %v5085
  %v5150 = vpack.c.b16 %v5102, %v5086
  %v5151 = vpack.c.b16 %v5103, %v5087
  %v5152 = vpack.c.b16 %v5104, %v5088
  %v5153 = vpack.c.b16 %v5105, %v5089
  %v5154 = vpack.c.b16 %v5106, %v5090
  %v5155 = vpack.c.b16 %v5107, %v5091
  %v5156 = vpack.c.b16 %v5108, %v5092
  %v5157 = vpack.c.b16 %v5109, %v5093
  %v5158 = vpack.c.b16 %v5110, %v5094
  %v5159 = vpack.c.b16 %v5111, %v5095
  %v5160 = vpack.c.b16 %v5112, %v5096
  %v5161 = vpack.c.b16 %v5113, %v5097
  %v5162 = vpack.c.b16 %v5130, %v5114
  %v5163 = vpack.c.b16 %v5131, %v5115
  %v5164 = vpack.c.b16 %v5132, %v5116
  %v5165 = vpack.c.b16 %v5133, %v5117
  %v5166 = vpack.c.b16 %v5134, %v5118
  %v5167 = vpack.c.b16 %v5135, %v5119
  %v5168 = vpack.c.b16 %v5136, %v5120
  %v5169 = vpack.c.b16 %v5137, %v5121
  %v5170 = vpack.c.b16 %v5138, %v5122
  %v5171 = vpack.c.b16 %v5139, %v5123
  %v5172 = vpack.c.b16 %v5140, %v5124
  %v5173 = vpack.c.b16 %v5141, %v5125
  %v5174 = vpack.c.b16 %v5142, %v5126
  %v5175 = vpack.c.b16 %v5143, %v5127
  %v5176 = vpack.c.b16 %v5144, %v5128
  %v5177 = vpack.c.b16 %v5145, %v5129
  %v5211 = vsel %vm150, %v4931, 0
  %5213 = vmatprep.subr.bf16.mxu0 %v5147
  %5214 = vmatpush1.bf16.msra.mxu0 %v5146
  %5215 = vmatprep.subr.bf16.mxu0 %v5163
  %5216 = vmatpush1.bf16.msra.mxu0 %v5162
  %5217 = vmatprep.subr.bf16.mxu0 0
  %5218 = vmatpush1.bf16.msra.mxu0 0
  %5219 = vmatprep.subr.bf16.mxu0 0
  %5220 = vmatpush1.bf16.msra.mxu0 0
  %5221 = vmatprep.subr.bf16.mxu0 0
  %5222 = vmatpush1.bf16.msra.mxu0 0
  %5223 = vmatprep.subr.bf16.mxu0 0
  %5224 = vmatpush1.bf16.msra.mxu0 0
  %5225 = vmatprep.subr.bf16.mxu0 0
  %5226 = vmatpush1.bf16.msra.mxu0 0
  %5227 = vmatprep.subr.bf16.mxu0 0
  %5228 = vmatpush1.bf16.msra.mxu0 0
  %5229 = vmatprep.subr.bf16.mxu0 0
  %5230 = vmatpush1.bf16.msra.mxu0 0
  %5231 = vmatprep.subr.bf16.mxu0 0
  %5232 = vmatpush1.bf16.msra.mxu0 0
  %5233 = vmatprep.subr.bf16.mxu0 0
  %5234 = vmatpush1.bf16.msra.mxu0 0
  %5235 = vmatprep.subr.bf16.mxu0 0
  %5236 = vmatpush1.bf16.msra.mxu0 0
  %5237 = vmatprep.subr.bf16.mxu0 0
  %5238 = vmatpush1.bf16.msra.mxu0 0
  %5239 = vmatprep.subr.bf16.mxu0 0
  %5240 = vmatpush1.bf16.msra.mxu0 0
  %5241 = vmatprep.subr.bf16.mxu0 0
  %5242 = vmatpush1.bf16.msra.mxu0 0
  %5243 = vmatprep.subr.bf16.mxu0 0
  %5244 = vmatpush1.bf16.msra.mxu0 0
  %5245 = vmatprep.mubr.bf16.mxu0 0
  %5246 = vmatmul.mubr.bf16.gmra.mrb[0].mxu0 %v5211
  %v5247 = vpop.f32.mrb[0].mxu0
  %v5248 = vadd.f32 %v4973, %v5247
  %v5249 = vpop.f32.mrb[0].mxu0
  %v5250 = vadd.f32 %v4977, %v5249
  %v5251 = vpop.f32.mrb[0].mxu0
  %v5252 = vadd.f32 %v4973, %v5251
  %v5253 = vpop.f32.mrb[0].mxu0
  %v5254 = vadd.f32 %v4977, %v5253
  %5255 = vdwg.mxu0
  %5256 = vmatprep.subr.bf16.mxu0 %v5149
  %5257 = vmatpush1.bf16.msra.mxu0 %v5148
  %5258 = vmatprep.subr.bf16.mxu0 %v5165
  %5259 = vmatpush1.bf16.msra.mxu0 %v5164
  %5260 = vmatprep.subr.bf16.mxu0 0
  %5261 = vmatpush1.bf16.msra.mxu0 0
  %5262 = vmatprep.subr.bf16.mxu0 0
  %5263 = vmatpush1.bf16.msra.mxu0 0
  %5264 = vmatprep.subr.bf16.mxu0 0
  %5265 = vmatpush1.bf16.msra.mxu0 0
  %5266 = vmatprep.subr.bf16.mxu0 0
  %5267 = vmatpush1.bf16.msra.mxu0 0
  %5268 = vmatprep.subr.bf16.mxu0 0
  %5269 = vmatpush1.bf16.msra.mxu0 0
  %5270 = vmatprep.subr.bf16.mxu0 0
  %5271 = vmatpush1.bf16.msra.mxu0 0
  %5272 = vmatprep.subr.bf16.mxu0 0
  %5273 = vmatpush1.bf16.msra.mxu0 0
  %5274 = vmatprep.subr.bf16.mxu0 0
  %5275 = vmatpush1.bf16.msra.mxu0 0
  %5276 = vmatprep.subr.bf16.mxu0 0
  %5277 = vmatpush1.bf16.msra.mxu0 0
  %5278 = vmatprep.subr.bf16.mxu0 0
  %5279 = vmatpush1.bf16.msra.mxu0 0
  %5280 = vmatprep.subr.bf16.mxu0 0
  %5281 = vmatpush1.bf16.msra.mxu0 0
  %5282 = vmatprep.subr.bf16.mxu0 0
  %5283 = vmatpush1.bf16.msra.mxu0 0
  %5284 = vmatprep.subr.bf16.mxu0 0
  %5285 = vmatpush1.bf16.msra.mxu0 0
  %5286 = vmatprep.subr.bf16.mxu0 0
  %5287 = vmatpush1.bf16.msra.mxu0 0
  %5288 = vmatprep.mubr.bf16.mxu0 0
  %5289 = vmatmul.mubr.bf16.gmra.mrb[0].mxu0 %v5211
  %v5290 = vpop.f32.mrb[0].mxu0
  %v5291 = vadd.f32 %v4981, %v5290
  %v5292 = vpop.f32.mrb[0].mxu0
  %v5293 = vadd.f32 %v4985, %v5292
  %v5294 = vpop.f32.mrb[0].mxu0
  %v5295 = vadd.f32 %v4981, %v5294
  %v5296 = vpop.f32.mrb[0].mxu0
  %v5297 = vadd.f32 %v4985, %v5296
  %5298 = vdwg.mxu0
  %5299 = vmatprep.subr.bf16.mxu0 %v5151
  %5300 = vmatpush1.bf16.msra.mxu0 %v5150
  %5301 = vmatprep.subr.bf16.mxu0 %v5167
  %5302 = vmatpush1.bf16.msra.mxu0 %v5166
  %5303 = vmatprep.subr.bf16.mxu0 0
  %5304 = vmatpush1.bf16.msra.mxu0 0
  %5305 = vmatprep.subr.bf16.mxu0 0
  %5306 = vmatpush1.bf16.msra.mxu0 0
  %5307 = vmatprep.subr.bf16.mxu0 0
  %5308 = vmatpush1.bf16.msra.mxu0 0
  %5309 = vmatprep.subr.bf16.mxu0 0
  %5310 = vmatpush1.bf16.msra.mxu0 0
  %5311 = vmatprep.subr.bf16.mxu0 0
  %5312 = vmatpush1.bf16.msra.mxu0 0
  %5313 = vmatprep.subr.bf16.mxu0 0
  %5314 = vmatpush1.bf16.msra.mxu0 0
  %5315 = vmatprep.subr.bf16.mxu0 0
  %5316 = vmatpush1.bf16.msra.mxu0 0
  %5317 = vmatprep.subr.bf16.mxu0 0
  %5318 = vmatpush1.bf16.msra.mxu0 0
  %5319 = vmatprep.subr.bf16.mxu0 0
  %5320 = vmatpush1.bf16.msra.mxu0 0
  %5321 = vmatprep.subr.bf16.mxu0 0
  %5322 = vmatpush1.bf16.msra.mxu0 0
  %5323 = vmatprep.subr.bf16.mxu0 0
  %5324 = vmatpush1.bf16.msra.mxu0 0
  %5325 = vmatprep.subr.bf16.mxu0 0
  %5326 = vmatpush1.bf16.msra.mxu0 0
  %5327 = vmatprep.subr.bf16.mxu0 0
  %5328 = vmatpush1.bf16.msra.mxu0 0
  %5329 = vmatprep.subr.bf16.mxu0 0
  %5330 = vmatpush1.bf16.msra.mxu0 0
  %5331 = vmatprep.mubr.bf16.mxu0 0
  %5332 = vmatmul.mubr.bf16.gmra.mrb[0].mxu0 %v5211
  %v5333 = vpop.f32.mrb[0].mxu0
  %v5334 = vadd.f32 %v4989, %v5333
  %v5335 = vpop.f32.mrb[0].mxu0
  %v5336 = vadd.f32 %v4993, %v5335
  %v5337 = vpop.f32.mrb[0].mxu0
  %v5338 = vadd.f32 %v4989, %v5337
  %v5339 = vpop.f32.mrb[0].mxu0
  %v5340 = vadd.f32 %v4993, %v5339
  %5341 = vdwg.mxu0
  %5342 = vmatprep.subr.bf16.mxu0 %v5153
  %5343 = vmatpush1.bf16.msra.mxu0 %v5152
  %5344 = vmatprep.subr.bf16.mxu0 %v5169
  %5345 = vmatpush1.bf16.msra.mxu0 %v5168
  %5346 = vmatprep.subr.bf16.mxu0 0
  %5347 = vmatpush1.bf16.msra.mxu0 0
  %5348 = vmatprep.subr.bf16.mxu0 0
  %5349 = vmatpush1.bf16.msra.mxu0 0
  %5350 = vmatprep.subr.bf16.mxu0 0
  %5351 = vmatpush1.bf16.msra.mxu0 0
  %5352 = vmatprep.subr.bf16.mxu0 0
  %5353 = vmatpush1.bf16.msra.mxu0 0
  %5354 = vmatprep.subr.bf16.mxu0 0
  %5355 = vmatpush1.bf16.msra.mxu0 0
  %5356 = vmatprep.subr.bf16.mxu0 0
  %5357 = vmatpush1.bf16.msra.mxu0 0
  %5358 = vmatprep.subr.bf16.mxu0 0
  %5359 = vmatpush1.bf16.msra.mxu0 0
  %5360 = vmatprep.subr.bf16.mxu0 0
  %5361 = vmatpush1.bf16.msra.mxu0 0
  %5362 = vmatprep.subr.bf16.mxu0 0
  %5363 = vmatpush1.bf16.msra.mxu0 0
  %5364 = vmatprep.subr.bf16.mxu0 0
  %5365 = vmatpush1.bf16.msra.mxu0 0
  %5366 = vmatprep.subr.bf16.mxu0 0
  %5367 = vmatpush1.bf16.msra.mxu0 0
  %5368 = vmatprep.subr.bf16.mxu0 0
  %5369 = vmatpush1.bf16.msra.mxu0 0
  %5370 = vmatprep.subr.bf16.mxu0 0
  %5371 = vmatpush1.bf16.msra.mxu0 0
  %5372 = vmatprep.subr.bf16.mxu0 0
  %5373 = vmatpush1.bf16.msra.mxu0 0
  %5374 = vmatprep.mubr.bf16.mxu0 0
  %5375 = vmatmul.mubr.bf16.gmra.mrb[0].mxu0 %v5211
  %v5376 = vpop.f32.mrb[0].mxu0
  %v5377 = vadd.f32 %v4997, %v5376
  %v5378 = vpop.f32.mrb[0].mxu0
  %v5379 = vadd.f32 %v5001, %v5378
  %v5380 = vpop.f32.mrb[0].mxu0
  %v5381 = vadd.f32 %v4997, %v5380
  %v5382 = vpop.f32.mrb[0].mxu0
  %v5383 = vadd.f32 %v5001, %v5382
  %5384 = vdwg.mxu0
  %5385 = vmatprep.subr.bf16.mxu0 %v5155
  %5386 = vmatpush1.bf16.msra.mxu0 %v5154
  %5387 = vmatprep.subr.bf16.mxu0 %v5171
  %5388 = vmatpush1.bf16.msra.mxu0 %v5170
  %5389 = vmatprep.subr.bf16.mxu0 0
  %5390 = vmatpush1.bf16.msra.mxu0 0
  %5391 = vmatprep.subr.bf16.mxu0 0
  %5392 = vmatpush1.bf16.msra.mxu0 0
  %5393 = vmatprep.subr.bf16.mxu0 0
  %5394 = vmatpush1.bf16.msra.mxu0 0
  %5395 = vmatprep.subr.bf16.mxu0 0
  %5396 = vmatpush1.bf16.msra.mxu0 0
  %5397 = vmatprep.subr.bf16.mxu0 0
  %5398 = vmatpush1.bf16.msra.mxu0 0
  %5399 = vmatprep.subr.bf16.mxu0 0
  %5400 = vmatpush1.bf16.msra.mxu0 0
  %5401 = vmatprep.subr.bf16.mxu0 0
  %5402 = vmatpush1.bf16.msra.mxu0 0
  %5403 = vmatprep.subr.bf16.mxu0 0
  %5404 = vmatpush1.bf16.msra.mxu0 0
  %5405 = vmatprep.subr.bf16.mxu0 0
  %5406 = vmatpush1.bf16.msra.mxu0 0
  %5407 = vmatprep.subr.bf16.mxu0 0
  %5408 = vmatpush1.bf16.msra.mxu0 0
  %5409 = vmatprep.subr.bf16.mxu0 0
  %5410 = vmatpush1.bf16.msra.mxu0 0
  %5411 = vmatprep.subr.bf16.mxu0 0
  %5412 = vmatpush1.bf16.msra.mxu0 0
  %5413 = vmatprep.subr.bf16.mxu0 0
  %5414 = vmatpush1.bf16.msra.mxu0 0
  %5415 = vmatprep.subr.bf16.mxu0 0
  %5416 = vmatpush1.bf16.msra.mxu0 0
  %5417 = vmatprep.mubr.bf16.mxu0 0
  %5418 = vmatmul.mubr.bf16.gmra.mrb[0].mxu0 %v5211
  %v5419 = vpop.f32.mrb[0].mxu0
  %v5420 = vadd.f32 %v5005, %v5419
  %v5421 = vpop.f32.mrb[0].mxu0
  %v5422 = vadd.f32 %v5009, %v5421
  %v5423 = vpop.f32.mrb[0].mxu0
  %v5424 = vadd.f32 %v5005, %v5423
  %v5425 = vpop.f32.mrb[0].mxu0
  %v5426 = vadd.f32 %v5009, %v5425
  %5427 = vdwg.mxu0
  %5428 = vmatprep.subr.bf16.mxu0 %v5157
  %5429 = vmatpush1.bf16.msra.mxu0 %v5156
  %5430 = vmatprep.subr.bf16.mxu0 %v5173
  %5431 = vmatpush1.bf16.msra.mxu0 %v5172
  %5432 = vmatprep.subr.bf16.mxu0 0
  %5433 = vmatpush1.bf16.msra.mxu0 0
  %5434 = vmatprep.subr.bf16.mxu0 0
  %5435 = vmatpush1.bf16.msra.mxu0 0
  %5436 = vmatprep.subr.bf16.mxu0 0
  %5437 = vmatpush1.bf16.msra.mxu0 0
  %5438 = vmatprep.subr.bf16.mxu0 0
  %5439 = vmatpush1.bf16.msra.mxu0 0
  %5440 = vmatprep.subr.bf16.mxu0 0
  %5441 = vmatpush1.bf16.msra.mxu0 0
  %5442 = vmatprep.subr.bf16.mxu0 0
  %5443 = vmatpush1.bf16.msra.mxu0 0
  %5444 = vmatprep.subr.bf16.mxu0 0
  %5445 = vmatpush1.bf16.msra.mxu0 0
  %5446 = vmatprep.subr.bf16.mxu0 0
  %5447 = vmatpush1.bf16.msra.mxu0 0
  %5448 = vmatprep.subr.bf16.mxu0 0
  %5449 = vmatpush1.bf16.msra.mxu0 0
  %5450 = vmatprep.subr.bf16.mxu0 0
  %5451 = vmatpush1.bf16.msra.mxu0 0
  %5452 = vmatprep.subr.bf16.mxu0 0
  %5453 = vmatpush1.bf16.msra.mxu0 0
  %5454 = vmatprep.subr.bf16.mxu0 0
  %5455 = vmatpush1.bf16.msra.mxu0 0
  %5456 = vmatprep.subr.bf16.mxu0 0
  %5457 = vmatpush1.bf16.msra.mxu0 0
  %5458 = vmatprep.subr.bf16.mxu0 0
  %5459 = vmatpush1.bf16.msra.mxu0 0
  %5460 = vmatprep.mubr.bf16.mxu0 0
  %5461 = vmatmul.mubr.bf16.gmra.mrb[0].mxu0 %v5211
  %v5462 = vpop.f32.mrb[0].mxu0
  %v5463 = vadd.f32 %v5013, %v5462
  %v5464 = vpop.f32.mrb[0].mxu0
  %v5465 = vadd.f32 %v5017, %v5464
  %v5466 = vpop.f32.mrb[0].mxu0
  %v5467 = vadd.f32 %v5013, %v5466
  %v5468 = vpop.f32.mrb[0].mxu0
  %v5469 = vadd.f32 %v5017, %v5468
  %5470 = vdwg.mxu0
  %5471 = vmatprep.subr.bf16.mxu0 %v5159
  %5472 = vmatpush1.bf16.msra.mxu0 %v5158
  %5473 = vmatprep.subr.bf16.mxu0 %v5175
  %5474 = vmatpush1.bf16.msra.mxu0 %v5174
  %5475 = vmatprep.subr.bf16.mxu0 0
  %5476 = vmatpush1.bf16.msra.mxu0 0
  %5477 = vmatprep.subr.bf16.mxu0 0
  %5478 = vmatpush1.bf16.msra.mxu0 0
  %5479 = vmatprep.subr.bf16.mxu0 0
  %5480 = vmatpush1.bf16.msra.mxu0 0
  %5481 = vmatprep.subr.bf16.mxu0 0
  %5482 = vmatpush1.bf16.msra.mxu0 0
  %5483 = vmatprep.subr.bf16.mxu0 0
  %5484 = vmatpush1.bf16.msra.mxu0 0
  %5485 = vmatprep.subr.bf16.mxu0 0
  %5486 = vmatpush1.bf16.msra.mxu0 0
  %5487 = vmatprep.subr.bf16.mxu0 0
  %5488 = vmatpush1.bf16.msra.mxu0 0
  %5489 = vmatprep.subr.bf16.mxu0 0
  %5490 = vmatpush1.bf16.msra.mxu0 0
  %5491 = vmatprep.subr.bf16.mxu0 0
  %5492 = vmatpush1.bf16.msra.mxu0 0
  %5493 = vmatprep.subr.bf16.mxu0 0
  %5494 = vmatpush1.bf16.msra.mxu0 0
  %5495 = vmatprep.subr.bf16.mxu0 0
  %5496 = vmatpush1.bf16.msra.mxu0 0
  %5497 = vmatprep.subr.bf16.mxu0 0
  %5498 = vmatpush1.bf16.msra.mxu0 0
  %5499 = vmatprep.subr.bf16.mxu0 0
  %5500 = vmatpush1.bf16.msra.mxu0 0
  %5501 = vmatprep.subr.bf16.mxu0 0
  %5502 = vmatpush1.bf16.msra.mxu0 0
  %5503 = vmatprep.mubr.bf16.mxu0 0
  %5504 = vmatmul.mubr.bf16.gmra.mrb[0].mxu0 %v5211
  %v5505 = vpop.f32.mrb[0].mxu0
  %v5506 = vadd.f32 %v5021, %v5505
  %v5507 = vpop.f32.mrb[0].mxu0
  %v5508 = vadd.f32 %v5025, %v5507
  %v5509 = vpop.f32.mrb[0].mxu0
  %v5510 = vadd.f32 %v5021, %v5509
  %v5511 = vpop.f32.mrb[0].mxu0
  %v5512 = vadd.f32 %v5025, %v5511
  %5513 = vdwg.mxu0
  %5514 = vmatprep.subr.bf16.mxu0 %v5161
  %5515 = vmatpush1.bf16.msra.mxu0 %v5160
  %5516 = vmatprep.subr.bf16.mxu0 %v5177
  %5517 = vmatpush1.bf16.msra.mxu0 %v5176
  %5518 = vmatprep.subr.bf16.mxu0 0
  %5519 = vmatpush1.bf16.msra.mxu0 0
  %5520 = vmatprep.subr.bf16.mxu0 0
  %5521 = vmatpush1.bf16.msra.mxu0 0
  %5522 = vmatprep.subr.bf16.mxu0 0
  %5523 = vmatpush1.bf16.msra.mxu0 0
  %5524 = vmatprep.subr.bf16.mxu0 0
  %5525 = vmatpush1.bf16.msra.mxu0 0
  %5526 = vmatprep.subr.bf16.mxu0 0
  %5527 = vmatpush1.bf16.msra.mxu0 0
  %5528 = vmatprep.subr.bf16.mxu0 0
  %5529 = vmatpush1.bf16.msra.mxu0 0
  %5530 = vmatprep.subr.bf16.mxu0 0
  %5531 = vmatpush1.bf16.msra.mxu0 0
  %5532 = vmatprep.subr.bf16.mxu0 0
  %5533 = vmatpush1.bf16.msra.mxu0 0
  %5534 = vmatprep.subr.bf16.mxu0 0
  %5535 = vmatpush1.bf16.msra.mxu0 0
  %5536 = vmatprep.subr.bf16.mxu0 0
  %5537 = vmatpush1.bf16.msra.mxu0 0
  %5538 = vmatprep.subr.bf16.mxu0 0
  %5539 = vmatpush1.bf16.msra.mxu0 0
  %5540 = vmatprep.subr.bf16.mxu0 0
  %5541 = vmatpush1.bf16.msra.mxu0 0
  %5542 = vmatprep.subr.bf16.mxu0 0
  %5543 = vmatpush1.bf16.msra.mxu0 0
  %5544 = vmatprep.subr.bf16.mxu0 0
  %5545 = vmatpush1.bf16.msra.mxu0 0
  %5546 = vmatprep.mubr.bf16.mxu0 0
  %5547 = vmatmul.mubr.bf16.gmra.mrb[0].mxu0 %v5211
  %v5548 = vpop.f32.mrb[0].mxu0
  %v5549 = vadd.f32 %v5029, %v5548
  %v5550 = vpop.f32.mrb[0].mxu0
  %v5551 = vadd.f32 %v5033, %v5550
  %v5552 = vpop.f32.mrb[0].mxu0
  %v5553 = vadd.f32 %v5029, %v5552
  %v5554 = vpop.f32.mrb[0].mxu0
  %v5555 = vadd.f32 %v5033, %v5554
  %5556 = vdwg.mxu0
  %v5557 = vmax.f32 %v5248, 0.0
  %v5558 = vmax.f32 %v5250, 0.0
  %v5559 = vmax.f32 %v5291, 0.0
  %v5560 = vmax.f32 %v5293, 0.0
  %v5561 = vmax.f32 %v5334, 0.0
  %v5562 = vmax.f32 %v5336, 0.0
  %v5563 = vmax.f32 %v5377, 0.0
  %v5564 = vmax.f32 %v5379, 0.0
  %v5565 = vmax.f32 %v5420, 0.0
  %v5566 = vmax.f32 %v5422, 0.0
  %v5567 = vmax.f32 %v5463, 0.0
  %v5568 = vmax.f32 %v5465, 0.0
  %v5569 = vmax.f32 %v5506, 0.0
  %v5570 = vmax.f32 %v5508, 0.0
  %v5571 = vmax.f32 %v5549, 0.0
  %v5572 = vmax.f32 %v5551, 0.0
  %v5573 = vmax.f32 %v5252, 0.0
  %v5574 = vmax.f32 %v5254, 0.0
  %v5575 = vmax.f32 %v5295, 0.0
  %v5576 = vmax.f32 %v5297, 0.0
  %v5577 = vmax.f32 %v5338, 0.0
  %v5578 = vmax.f32 %v5340, 0.0
  %v5579 = vmax.f32 %v5381, 0.0
  %v5580 = vmax.f32 %v5383, 0.0
  %v5581 = vmax.f32 %v5424, 0.0
  %v5582 = vmax.f32 %v5426, 0.0
  %v5583 = vmax.f32 %v5467, 0.0
  %v5584 = vmax.f32 %v5469, 0.0
  %v5585 = vmax.f32 %v5510, 0.0
  %v5586 = vmax.f32 %v5512, 0.0
  %v5587 = vmax.f32 %v5553, 0.0
  %v5588 = vmax.f32 %v5555, 0.0
  %v5589 = vpack.c.bf16 %v5573, %v5557
  %v5590 = vpack.c.bf16 %v5574, %v5558
  %v5591 = vpack.c.bf16 %v5575, %v5559
  %v5592 = vpack.c.bf16 %v5576, %v5560
  %v5593 = vpack.c.bf16 %v5577, %v5561
  %v5594 = vpack.c.bf16 %v5578, %v5562
  %v5595 = vpack.c.bf16 %v5579, %v5563
  %v5596 = vpack.c.bf16 %v5580, %v5564
  %v5597 = vpack.c.bf16 %v5581, %v5565
  %v5598 = vpack.c.bf16 %v5582, %v5566
  %v5599 = vpack.c.bf16 %v5583, %v5567
  %v5600 = vpack.c.bf16 %v5584, %v5568
  %v5601 = vpack.c.bf16 %v5585, %v5569
  %v5602 = vpack.c.bf16 %v5586, %v5570
  %v5603 = vpack.c.bf16 %v5587, %v5571
  %v5604 = vpack.c.bf16 %v5588, %v5572
  %s5605 = scalar_lea.vmem %s13, 1024
  %v5606 = vld [vmem:[%s5605] sm:$0xf]
  %v5607 = vld [vmem:[%s5605 + $0x4] sm:$0xf]
  %v5608 = vld [vmem:[%s5605 + $0x8] sm:$0xf]
  %v5609 = vld [vmem:[%s5605 + $0xc] sm:$0xf]
  %v5610 = vld [vmem:[%s5605 + $0x10] sm:$0xf]
  %v5611 = vld [vmem:[%s5605 + $0x14] sm:$0xf]
  %v5612 = vld [vmem:[%s5605 + $0x18] sm:$0xf]
  %v5613 = vld [vmem:[%s5605 + $0x1c] sm:$0xf]
  %v5614 = vld [vmem:[%s5605 + $0x20] sm:$0xf]
  %v5615 = vld [vmem:[%s5605 + $0x24] sm:$0xf]
  %v5616 = vld [vmem:[%s5605 + $0x28] sm:$0xf]
  %v5617 = vld [vmem:[%s5605 + $0x2c] sm:$0xf]
  %v5618 = vld [vmem:[%s5605 + $0x30] sm:$0xf]
  %v5619 = vld [vmem:[%s5605 + $0x34] sm:$0xf]
  %v5620 = vld [vmem:[%s5605 + $0x38] sm:$0xf]
  %v5621 = vld [vmem:[%s5605 + $0x3c] sm:$0xf]
  %v5622 = vld [vmem:[%s5605 + $0x40] sm:$0xf]
  %v5623 = vld [vmem:[%s5605 + $0x44] sm:$0xf]
  %v5624 = vld [vmem:[%s5605 + $0x48] sm:$0xf]
  %v5625 = vld [vmem:[%s5605 + $0x4c] sm:$0xf]
  %v5626 = vld [vmem:[%s5605 + $0x50] sm:$0xf]
  %v5627 = vld [vmem:[%s5605 + $0x54] sm:$0xf]
  %v5628 = vld [vmem:[%s5605 + $0x58] sm:$0xf]
  %v5629 = vld [vmem:[%s5605 + $0x5c] sm:$0xf]
  %v5630 = vld [vmem:[%s5605 + $0x60] sm:$0xf]
  %v5631 = vld [vmem:[%s5605 + $0x64] sm:$0xf]
  %v5632 = vld [vmem:[%s5605 + $0x68] sm:$0xf]
  %v5633 = vld [vmem:[%s5605 + $0x6c] sm:$0xf]
  %v5634 = vld [vmem:[%s5605 + $0x70] sm:$0xf]
  %v5635 = vld [vmem:[%s5605 + $0x74] sm:$0xf]
  %v5636 = vld [vmem:[%s5605 + $0x78] sm:$0xf]
  %v5637 = vld [vmem:[%s5605 + $0x7c] sm:$0xf]
  %v5638 = vld [vmem:[%s5605 + $0x80] sm:$0xf]
  %v5639 = vld [vmem:[%s5605 + $0x84] sm:$0xf]
  %v5640 = vld [vmem:[%s5605 + $0x88] sm:$0xf]
  %v5641 = vld [vmem:[%s5605 + $0x8c] sm:$0xf]
  %v5642 = vld [vmem:[%s5605 + $0x90] sm:$0xf]
  %v5643 = vld [vmem:[%s5605 + $0x94] sm:$0xf]
  %v5644 = vld [vmem:[%s5605 + $0x98] sm:$0xf]
  %v5645 = vld [vmem:[%s5605 + $0x9c] sm:$0xf]
  %v5646 = vld [vmem:[%s5605 + $0xa0] sm:$0xf]
  %v5647 = vld [vmem:[%s5605 + $0xa4] sm:$0xf]
  %v5648 = vld [vmem:[%s5605 + $0xa8] sm:$0xf]
  %v5649 = vld [vmem:[%s5605 + $0xac] sm:$0xf]
  %v5650 = vld [vmem:[%s5605 + $0xb0] sm:$0xf]
  %v5651 = vld [vmem:[%s5605 + $0xb4] sm:$0xf]
  %v5652 = vld [vmem:[%s5605 + $0xb8] sm:$0xf]
  %v5653 = vld [vmem:[%s5605 + $0xbc] sm:$0xf]
  %v5654 = vld [vmem:[%s5605 + $0xc0] sm:$0xf]
  %v5655 = vld [vmem:[%s5605 + $0xc4] sm:$0xf]
  %v5656 = vld [vmem:[%s5605 + $0xc8] sm:$0xf]
  %v5657 = vld [vmem:[%s5605 + $0xcc] sm:$0xf]
  %v5658 = vld [vmem:[%s5605 + $0xd0] sm:$0xf]
  %v5659 = vld [vmem:[%s5605 + $0xd4] sm:$0xf]
  %v5660 = vld [vmem:[%s5605 + $0xd8] sm:$0xf]
  %v5661 = vld [vmem:[%s5605 + $0xdc] sm:$0xf]
  %v5662 = vld [vmem:[%s5605 + $0xe0] sm:$0xf]
  %v5663 = vld [vmem:[%s5605 + $0xe4] sm:$0xf]
  %v5664 = vld [vmem:[%s5605 + $0xe8] sm:$0xf]
  %v5665 = vld [vmem:[%s5605 + $0xec] sm:$0xf]
  %v5666 = vld [vmem:[%s5605 + $0xf0] sm:$0xf]
  %v5667 = vld [vmem:[%s5605 + $0xf4] sm:$0xf]
  %v5668 = vld [vmem:[%s5605 + $0xf8] sm:$0xf]
  %v5669 = vld [vmem:[%s5605 + $0xfc] sm:$0xf]
  %v5670 = vld [vmem:[%s5605 + $0x100] sm:$0xf]
  %v5671 = vld [vmem:[%s5605 + $0x104] sm:$0xf]
  %v5672 = vld [vmem:[%s5605 + $0x108] sm:$0xf]
  %v5673 = vld [vmem:[%s5605 + $0x10c] sm:$0xf]
  %v5674 = vld [vmem:[%s5605 + $0x110] sm:$0xf]
  %v5675 = vld [vmem:[%s5605 + $0x114] sm:$0xf]
  %v5676 = vld [vmem:[%s5605 + $0x118] sm:$0xf]
  %v5677 = vld [vmem:[%s5605 + $0x11c] sm:$0xf]
  %v5678 = vld [vmem:[%s5605 + $0x120] sm:$0xf]
  %v5679 = vld [vmem:[%s5605 + $0x124] sm:$0xf]
  %v5680 = vld [vmem:[%s5605 + $0x128] sm:$0xf]
  %v5681 = vld [vmem:[%s5605 + $0x12c] sm:$0xf]
  %v5682 = vld [vmem:[%s5605 + $0x130] sm:$0xf]
  %v5683 = vld [vmem:[%s5605 + $0x134] sm:$0xf]
  %v5684 = vld [vmem:[%s5605 + $0x138] sm:$0xf]
  %v5685 = vld [vmem:[%s5605 + $0x13c] sm:$0xf]
  %v5686 = vld [vmem:[%s5605 + $0x140] sm:$0xf]
  %v5687 = vld [vmem:[%s5605 + $0x144] sm:$0xf]
  %v5688 = vld [vmem:[%s5605 + $0x148] sm:$0xf]
  %v5689 = vld [vmem:[%s5605 + $0x14c] sm:$0xf]
  %v5690 = vld [vmem:[%s5605 + $0x150] sm:$0xf]
  %v5691 = vld [vmem:[%s5605 + $0x154] sm:$0xf]
  %v5692 = vld [vmem:[%s5605 + $0x158] sm:$0xf]
  %v5693 = vld [vmem:[%s5605 + $0x15c] sm:$0xf]
  %v5694 = vld [vmem:[%s5605 + $0x160] sm:$0xf]
  %v5695 = vld [vmem:[%s5605 + $0x164] sm:$0xf]
  %v5696 = vld [vmem:[%s5605 + $0x168] sm:$0xf]
  %v5697 = vld [vmem:[%s5605 + $0x16c] sm:$0xf]
  %v5698 = vld [vmem:[%s5605 + $0x170] sm:$0xf]
  %v5699 = vld [vmem:[%s5605 + $0x174] sm:$0xf]
  %v5700 = vld [vmem:[%s5605 + $0x178] sm:$0xf]
  %v5701 = vld [vmem:[%s5605 + $0x17c] sm:$0xf]
  %v5702 = vld [vmem:[%s5605 + $0x180] sm:$0xf]
  %v5703 = vld [vmem:[%s5605 + $0x184] sm:$0xf]
  %v5704 = vld [vmem:[%s5605 + $0x188] sm:$0xf]
  %v5705 = vld [vmem:[%s5605 + $0x18c] sm:$0xf]
  %v5706 = vld [vmem:[%s5605 + $0x190] sm:$0xf]
  %v5707 = vld [vmem:[%s5605 + $0x194] sm:$0xf]
  %v5708 = vld [vmem:[%s5605 + $0x198] sm:$0xf]
  %v5709 = vld [vmem:[%s5605 + $0x19c] sm:$0xf]
  %v5710 = vld [vmem:[%s5605 + $0x1a0] sm:$0xf]
  %v5711 = vld [vmem:[%s5605 + $0x1a4] sm:$0xf]
  %v5712 = vld [vmem:[%s5605 + $0x1a8] sm:$0xf]
  %v5713 = vld [vmem:[%s5605 + $0x1ac] sm:$0xf]
  %v5714 = vld [vmem:[%s5605 + $0x1b0] sm:$0xf]
  %v5715 = vld [vmem:[%s5605 + $0x1b4] sm:$0xf]
  %v5716 = vld [vmem:[%s5605 + $0x1b8] sm:$0xf]
  %v5717 = vld [vmem:[%s5605 + $0x1bc] sm:$0xf]
  %v5718 = vld [vmem:[%s5605 + $0x1c0] sm:$0xf]
  %v5719 = vld [vmem:[%s5605 + $0x1c4] sm:$0xf]
  %v5720 = vld [vmem:[%s5605 + $0x1c8] sm:$0xf]
  %v5721 = vld [vmem:[%s5605 + $0x1cc] sm:$0xf]
  %v5722 = vld [vmem:[%s5605 + $0x1d0] sm:$0xf]
  %v5723 = vld [vmem:[%s5605 + $0x1d4] sm:$0xf]
  %v5724 = vld [vmem:[%s5605 + $0x1d8] sm:$0xf]
  %v5725 = vld [vmem:[%s5605 + $0x1dc] sm:$0xf]
  %v5726 = vld [vmem:[%s5605 + $0x1e0] sm:$0xf]
  %v5727 = vld [vmem:[%s5605 + $0x1e4] sm:$0xf]
  %v5728 = vld [vmem:[%s5605 + $0x1e8] sm:$0xf]
  %v5729 = vld [vmem:[%s5605 + $0x1ec] sm:$0xf]
  %v5730 = vld [vmem:[%s5605 + $0x1f0] sm:$0xf]
  %v5731 = vld [vmem:[%s5605 + $0x1f4] sm:$0xf]
  %v5732 = vld [vmem:[%s5605 + $0x1f8] sm:$0xf]
  %v5733 = vld [vmem:[%s5605 + $0x1fc] sm:$0xf]
  %v5734 = vld [vmem:[%s5605 + $0x200] sm:$0xf]
  %v5735 = vld [vmem:[%s5605 + $0x204] sm:$0xf]
  %v5736 = vld [vmem:[%s5605 + $0x208] sm:$0xf]
  %v5737 = vld [vmem:[%s5605 + $0x20c] sm:$0xf]
  %v5738 = vld [vmem:[%s5605 + $0x210] sm:$0xf]
  %v5739 = vld [vmem:[%s5605 + $0x214] sm:$0xf]
  %v5740 = vld [vmem:[%s5605 + $0x218] sm:$0xf]
  %v5741 = vld [vmem:[%s5605 + $0x21c] sm:$0xf]
  %v5742 = vld [vmem:[%s5605 + $0x220] sm:$0xf]
  %v5743 = vld [vmem:[%s5605 + $0x224] sm:$0xf]
  %v5744 = vld [vmem:[%s5605 + $0x228] sm:$0xf]
  %v5745 = vld [vmem:[%s5605 + $0x22c] sm:$0xf]
  %v5746 = vld [vmem:[%s5605 + $0x230] sm:$0xf]
  %v5747 = vld [vmem:[%s5605 + $0x234] sm:$0xf]
  %v5748 = vld [vmem:[%s5605 + $0x238] sm:$0xf]
  %v5749 = vld [vmem:[%s5605 + $0x23c] sm:$0xf]
  %v5750 = vld [vmem:[%s5605 + $0x240] sm:$0xf]
  %v5751 = vld [vmem:[%s5605 + $0x244] sm:$0xf]
  %v5752 = vld [vmem:[%s5605 + $0x248] sm:$0xf]
  %v5753 = vld [vmem:[%s5605 + $0x24c] sm:$0xf]
  %v5754 = vld [vmem:[%s5605 + $0x250] sm:$0xf]
  %v5755 = vld [vmem:[%s5605 + $0x254] sm:$0xf]
  %v5756 = vld [vmem:[%s5605 + $0x258] sm:$0xf]
  %v5757 = vld [vmem:[%s5605 + $0x25c] sm:$0xf]
  %v5758 = vld [vmem:[%s5605 + $0x260] sm:$0xf]
  %v5759 = vld [vmem:[%s5605 + $0x264] sm:$0xf]
  %v5760 = vld [vmem:[%s5605 + $0x268] sm:$0xf]
  %v5761 = vld [vmem:[%s5605 + $0x26c] sm:$0xf]
  %v5762 = vld [vmem:[%s5605 + $0x270] sm:$0xf]
  %v5763 = vld [vmem:[%s5605 + $0x274] sm:$0xf]
  %v5764 = vld [vmem:[%s5605 + $0x278] sm:$0xf]
  %v5765 = vld [vmem:[%s5605 + $0x27c] sm:$0xf]
  %v5766 = vld [vmem:[%s5605 + $0x280] sm:$0xf]
  %v5767 = vld [vmem:[%s5605 + $0x284] sm:$0xf]
  %v5768 = vld [vmem:[%s5605 + $0x288] sm:$0xf]
  %v5769 = vld [vmem:[%s5605 + $0x28c] sm:$0xf]
  %v5770 = vld [vmem:[%s5605 + $0x290] sm:$0xf]
  %v5771 = vld [vmem:[%s5605 + $0x294] sm:$0xf]
  %v5772 = vld [vmem:[%s5605 + $0x298] sm:$0xf]
  %v5773 = vld [vmem:[%s5605 + $0x29c] sm:$0xf]
  %v5774 = vld [vmem:[%s5605 + $0x2a0] sm:$0xf]
  %v5775 = vld [vmem:[%s5605 + $0x2a4] sm:$0xf]
  %v5776 = vld [vmem:[%s5605 + $0x2a8] sm:$0xf]
  %v5777 = vld [vmem:[%s5605 + $0x2ac] sm:$0xf]
  %v5778 = vld [vmem:[%s5605 + $0x2b0] sm:$0xf]
  %v5779 = vld [vmem:[%s5605 + $0x2b4] sm:$0xf]
  %v5780 = vld [vmem:[%s5605 + $0x2b8] sm:$0xf]
  %v5781 = vld [vmem:[%s5605 + $0x2bc] sm:$0xf]
  %v5782 = vld [vmem:[%s5605 + $0x2c0] sm:$0xf]
  %v5783 = vld [vmem:[%s5605 + $0x2c4] sm:$0xf]
  %v5784 = vld [vmem:[%s5605 + $0x2c8] sm:$0xf]
  %v5785 = vld [vmem:[%s5605 + $0x2cc] sm:$0xf]
  %v5786 = vld [vmem:[%s5605 + $0x2d0] sm:$0xf]
  %v5787 = vld [vmem:[%s5605 + $0x2d4] sm:$0xf]
  %v5788 = vld [vmem:[%s5605 + $0x2d8] sm:$0xf]
  %v5789 = vld [vmem:[%s5605 + $0x2dc] sm:$0xf]
  %v5790 = vld [vmem:[%s5605 + $0x2e0] sm:$0xf]
  %v5791 = vld [vmem:[%s5605 + $0x2e4] sm:$0xf]
  %v5792 = vld [vmem:[%s5605 + $0x2e8] sm:$0xf]
  %v5793 = vld [vmem:[%s5605 + $0x2ec] sm:$0xf]
  %v5794 = vld [vmem:[%s5605 + $0x2f0] sm:$0xf]
  %v5795 = vld [vmem:[%s5605 + $0x2f4] sm:$0xf]
  %v5796 = vld [vmem:[%s5605 + $0x2f8] sm:$0xf]
  %v5797 = vld [vmem:[%s5605 + $0x2fc] sm:$0xf]
  %v5798 = vld [vmem:[%s5605 + $0x300] sm:$0xf]
  %v5799 = vld [vmem:[%s5605 + $0x304] sm:$0xf]
  %v5800 = vld [vmem:[%s5605 + $0x308] sm:$0xf]
  %v5801 = vld [vmem:[%s5605 + $0x30c] sm:$0xf]
  %v5802 = vld [vmem:[%s5605 + $0x310] sm:$0xf]
  %v5803 = vld [vmem:[%s5605 + $0x314] sm:$0xf]
  %v5804 = vld [vmem:[%s5605 + $0x318] sm:$0xf]
  %v5805 = vld [vmem:[%s5605 + $0x31c] sm:$0xf]
  %v5806 = vld [vmem:[%s5605 + $0x320] sm:$0xf]
  %v5807 = vld [vmem:[%s5605 + $0x324] sm:$0xf]
  %v5808 = vld [vmem:[%s5605 + $0x328] sm:$0xf]
  %v5809 = vld [vmem:[%s5605 + $0x32c] sm:$0xf]
  %v5810 = vld [vmem:[%s5605 + $0x330] sm:$0xf]
  %v5811 = vld [vmem:[%s5605 + $0x334] sm:$0xf]
  %v5812 = vld [vmem:[%s5605 + $0x338] sm:$0xf]
  %v5813 = vld [vmem:[%s5605 + $0x33c] sm:$0xf]
  %v5814 = vld [vmem:[%s5605 + $0x340] sm:$0xf]
  %v5815 = vld [vmem:[%s5605 + $0x344] sm:$0xf]
  %v5816 = vld [vmem:[%s5605 + $0x348] sm:$0xf]
  %v5817 = vld [vmem:[%s5605 + $0x34c] sm:$0xf]
  %v5818 = vld [vmem:[%s5605 + $0x350] sm:$0xf]
  %v5819 = vld [vmem:[%s5605 + $0x354] sm:$0xf]
  %v5820 = vld [vmem:[%s5605 + $0x358] sm:$0xf]
  %v5821 = vld [vmem:[%s5605 + $0x35c] sm:$0xf]
  %v5822 = vld [vmem:[%s5605 + $0x360] sm:$0xf]
  %v5823 = vld [vmem:[%s5605 + $0x364] sm:$0xf]
  %v5824 = vld [vmem:[%s5605 + $0x368] sm:$0xf]
  %v5825 = vld [vmem:[%s5605 + $0x36c] sm:$0xf]
  %v5826 = vld [vmem:[%s5605 + $0x370] sm:$0xf]
  %v5827 = vld [vmem:[%s5605 + $0x374] sm:$0xf]
  %v5828 = vld [vmem:[%s5605 + $0x378] sm:$0xf]
  %v5829 = vld [vmem:[%s5605 + $0x37c] sm:$0xf]
  %v5830 = vld [vmem:[%s5605 + $0x380] sm:$0xf]
  %v5831 = vld [vmem:[%s5605 + $0x384] sm:$0xf]
  %v5832 = vld [vmem:[%s5605 + $0x388] sm:$0xf]
  %v5833 = vld [vmem:[%s5605 + $0x38c] sm:$0xf]
  %v5834 = vld [vmem:[%s5605 + $0x390] sm:$0xf]
  %v5835 = vld [vmem:[%s5605 + $0x394] sm:$0xf]
  %v5836 = vld [vmem:[%s5605 + $0x398] sm:$0xf]
  %v5837 = vld [vmem:[%s5605 + $0x39c] sm:$0xf]
  %v5838 = vld [vmem:[%s5605 + $0x3a0] sm:$0xf]
  %v5839 = vld [vmem:[%s5605 + $0x3a4] sm:$0xf]
  %v5840 = vld [vmem:[%s5605 + $0x3a8] sm:$0xf]
  %v5841 = vld [vmem:[%s5605 + $0x3ac] sm:$0xf]
  %v5842 = vld [vmem:[%s5605 + $0x3b0] sm:$0xf]
  %v5843 = vld [vmem:[%s5605 + $0x3b4] sm:$0xf]
  %v5844 = vld [vmem:[%s5605 + $0x3b8] sm:$0xf]
  %v5845 = vld [vmem:[%s5605 + $0x3bc] sm:$0xf]
  %v5846 = vld [vmem:[%s5605 + $0x3c0] sm:$0xf]
  %v5847 = vld [vmem:[%s5605 + $0x3c4] sm:$0xf]
  %v5848 = vld [vmem:[%s5605 + $0x3c8] sm:$0xf]
  %v5849 = vld [vmem:[%s5605 + $0x3cc] sm:$0xf]
  %v5850 = vld [vmem:[%s5605 + $0x3d0] sm:$0xf]
  %v5851 = vld [vmem:[%s5605 + $0x3d4] sm:$0xf]
  %v5852 = vld [vmem:[%s5605 + $0x3d8] sm:$0xf]
  %v5853 = vld [vmem:[%s5605 + $0x3dc] sm:$0xf]
  %v5854 = vld [vmem:[%s5605 + $0x3e0] sm:$0xf]
  %v5855 = vld [vmem:[%s5605 + $0x3e4] sm:$0xf]
  %v5856 = vld [vmem:[%s5605 + $0x3e8] sm:$0xf]
  %v5857 = vld [vmem:[%s5605 + $0x3ec] sm:$0xf]
  %v5858 = vld [vmem:[%s5605 + $0x3f0] sm:$0xf]
  %v5859 = vld [vmem:[%s5605 + $0x3f4] sm:$0xf]
  %v5860 = vld [vmem:[%s5605 + $0x3f8] sm:$0xf]
  %v5861 = vld [vmem:[%s5605 + $0x3fc] sm:$0xf]
  %v5862 = vlaneseq
  %v5863 = vshrl.u32 %v5862, 7
  %v5864 = vsub.s32 0, %v5863
  %v5865 = vrot.slane %v3848, %v5864
  %v6122 = vunpack.c.l.b16 %v5606
  %v6123 = vunpack.c.l.b16 %v5607
  %v6124 = vunpack.c.l.b16 %v5608
  %v6125 = vunpack.c.l.b16 %v5609
  %v6126 = vunpack.c.l.b16 %v5610
  %v6127 = vunpack.c.l.b16 %v5611
  %v6128 = vunpack.c.l.b16 %v5612
  %v6129 = vunpack.c.l.b16 %v5613
  %v6130 = vunpack.c.l.b16 %v5614
  %v6131 = vunpack.c.l.b16 %v5615
  %v6132 = vunpack.c.l.b16 %v5616
  %v6133 = vunpack.c.l.b16 %v5617
  %v6134 = vunpack.c.l.b16 %v5618
  %v6135 = vunpack.c.l.b16 %v5619
  %v6136 = vunpack.c.l.b16 %v5620
  %v6137 = vunpack.c.l.b16 %v5621
  %v6138 = vunpack.c.l.b16 %v5622
  %v6139 = vunpack.c.l.b16 %v5623
  %v6140 = vunpack.c.l.b16 %v5624
  %v6141 = vunpack.c.l.b16 %v5625
  %v6142 = vunpack.c.l.b16 %v5626
  %v6143 = vunpack.c.l.b16 %v5627
  %v6144 = vunpack.c.l.b16 %v5628
  %v6145 = vunpack.c.l.b16 %v5629
  %v6146 = vunpack.c.l.b16 %v5630
  %v6147 = vunpack.c.l.b16 %v5631
  %v6148 = vunpack.c.l.b16 %v5632
  %v6149 = vunpack.c.l.b16 %v5633
  %v6150 = vunpack.c.l.b16 %v5634
  %v6151 = vunpack.c.l.b16 %v5635
  %v6152 = vunpack.c.l.b16 %v5636
  %v6153 = vunpack.c.l.b16 %v5637
  %v6154 = vunpack.c.l.b16 %v5638
  %v6155 = vunpack.c.l.b16 %v5639
  %v6156 = vunpack.c.l.b16 %v5640
  %v6157 = vunpack.c.l.b16 %v5641
  %v6158 = vunpack.c.l.b16 %v5642
  %v6159 = vunpack.c.l.b16 %v5643
  %v6160 = vunpack.c.l.b16 %v5644
  %v6161 = vunpack.c.l.b16 %v5645
  %v6162 = vunpack.c.l.b16 %v5646
  %v6163 = vunpack.c.l.b16 %v5647
  %v6164 = vunpack.c.l.b16 %v5648
  %v6165 = vunpack.c.l.b16 %v5649
  %v6166 = vunpack.c.l.b16 %v5650
  %v6167 = vunpack.c.l.b16 %v5651
  %v6168 = vunpack.c.l.b16 %v5652
  %v6169 = vunpack.c.l.b16 %v5653
  %v6170 = vunpack.c.l.b16 %v5654
  %v6171 = vunpack.c.l.b16 %v5655
  %v6172 = vunpack.c.l.b16 %v5656
  %v6173 = vunpack.c.l.b16 %v5657
  %v6174 = vunpack.c.l.b16 %v5658
  %v6175 = vunpack.c.l.b16 %v5659
  %v6176 = vunpack.c.l.b16 %v5660
  %v6177 = vunpack.c.l.b16 %v5661
  %v6178 = vunpack.c.l.b16 %v5662
  %v6179 = vunpack.c.l.b16 %v5663
  %v6180 = vunpack.c.l.b16 %v5664
  %v6181 = vunpack.c.l.b16 %v5665
  %v6182 = vunpack.c.l.b16 %v5666
  %v6183 = vunpack.c.l.b16 %v5667
  %v6184 = vunpack.c.l.b16 %v5668
  %v6185 = vunpack.c.l.b16 %v5669
  %v6186 = vunpack.c.l.b16 %v5670
  %v6187 = vunpack.c.l.b16 %v5671
  %v6188 = vunpack.c.l.b16 %v5672
  %v6189 = vunpack.c.l.b16 %v5673
  %v6190 = vunpack.c.l.b16 %v5674
  %v6191 = vunpack.c.l.b16 %v5675
  %v6192 = vunpack.c.l.b16 %v5676
  %v6193 = vunpack.c.l.b16 %v5677
  %v6194 = vunpack.c.l.b16 %v5678
  %v6195 = vunpack.c.l.b16 %v5679
  %v6196 = vunpack.c.l.b16 %v5680
  %v6197 = vunpack.c.l.b16 %v5681
  %v6198 = vunpack.c.l.b16 %v5682
  %v6199 = vunpack.c.l.b16 %v5683
  %v6200 = vunpack.c.l.b16 %v5684
  %v6201 = vunpack.c.l.b16 %v5685
  %v6202 = vunpack.c.l.b16 %v5686
  %v6203 = vunpack.c.l.b16 %v5687
  %v6204 = vunpack.c.l.b16 %v5688
  %v6205 = vunpack.c.l.b16 %v5689
  %v6206 = vunpack.c.l.b16 %v5690
  %v6207 = vunpack.c.l.b16 %v5691
  %v6208 = vunpack.c.l.b16 %v5692
  %v6209 = vunpack.c.l.b16 %v5693
  %v6210 = vunpack.c.l.b16 %v5694
  %v6211 = vunpack.c.l.b16 %v5695
  %v6212 = vunpack.c.l.b16 %v5696
  %v6213 = vunpack.c.l.b16 %v5697
  %v6214 = vunpack.c.l.b16 %v5698
  %v6215 = vunpack.c.l.b16 %v5699
  %v6216 = vunpack.c.l.b16 %v5700
  %v6217 = vunpack.c.l.b16 %v5701
  %v6218 = vunpack.c.l.b16 %v5702
  %v6219 = vunpack.c.l.b16 %v5703
  %v6220 = vunpack.c.l.b16 %v5704
  %v6221 = vunpack.c.l.b16 %v5705
  %v6222 = vunpack.c.l.b16 %v5706
  %v6223 = vunpack.c.l.b16 %v5707
  %v6224 = vunpack.c.l.b16 %v5708
  %v6225 = vunpack.c.l.b16 %v5709
  %v6226 = vunpack.c.l.b16 %v5710
  %v6227 = vunpack.c.l.b16 %v5711
  %v6228 = vunpack.c.l.b16 %v5712
  %v6229 = vunpack.c.l.b16 %v5713
  %v6230 = vunpack.c.l.b16 %v5714
  %v6231 = vunpack.c.l.b16 %v5715
  %v6232 = vunpack.c.l.b16 %v5716
  %v6233 = vunpack.c.l.b16 %v5717
  %v6234 = vunpack.c.l.b16 %v5718
  %v6235 = vunpack.c.l.b16 %v5719
  %v6236 = vunpack.c.l.b16 %v5720
  %v6237 = vunpack.c.l.b16 %v5721
  %v6238 = vunpack.c.l.b16 %v5722
  %v6239 = vunpack.c.l.b16 %v5723
  %v6240 = vunpack.c.l.b16 %v5724
  %v6241 = vunpack.c.l.b16 %v5725
  %v6242 = vunpack.c.l.b16 %v5726
  %v6243 = vunpack.c.l.b16 %v5727
  %v6244 = vunpack.c.l.b16 %v5728
  %v6245 = vunpack.c.l.b16 %v5729
  %v6246 = vunpack.c.l.b16 %v5730
  %v6247 = vunpack.c.l.b16 %v5731
  %v6248 = vunpack.c.l.b16 %v5732
  %v6249 = vunpack.c.l.b16 %v5733
  %v6250 = vunpack.c.l.b16 %v5734
  %v6251 = vunpack.c.l.b16 %v5735
  %v6252 = vunpack.c.l.b16 %v5736
  %v6253 = vunpack.c.l.b16 %v5737
  %v6254 = vunpack.c.l.b16 %v5738
  %v6255 = vunpack.c.l.b16 %v5739
  %v6256 = vunpack.c.l.b16 %v5740
  %v6257 = vunpack.c.l.b16 %v5741
  %v6258 = vunpack.c.l.b16 %v5742
  %v6259 = vunpack.c.l.b16 %v5743
  %v6260 = vunpack.c.l.b16 %v5744
  %v6261 = vunpack.c.l.b16 %v5745
  %v6262 = vunpack.c.l.b16 %v5746
  %v6263 = vunpack.c.l.b16 %v5747
  %v6264 = vunpack.c.l.b16 %v5748
  %v6265 = vunpack.c.l.b16 %v5749
  %v6266 = vunpack.c.l.b16 %v5750
  %v6267 = vunpack.c.l.b16 %v5751
  %v6268 = vunpack.c.l.b16 %v5752
  %v6269 = vunpack.c.l.b16 %v5753
  %v6270 = vunpack.c.l.b16 %v5754
  %v6271 = vunpack.c.l.b16 %v5755
  %v6272 = vunpack.c.l.b16 %v5756
  %v6273 = vunpack.c.l.b16 %v5757
  %v6274 = vunpack.c.l.b16 %v5758
  %v6275 = vunpack.c.l.b16 %v5759
  %v6276 = vunpack.c.l.b16 %v5760
  %v6277 = vunpack.c.l.b16 %v5761
  %v6278 = vunpack.c.l.b16 %v5762
  %v6279 = vunpack.c.l.b16 %v5763
  %v6280 = vunpack.c.l.b16 %v5764
  %v6281 = vunpack.c.l.b16 %v5765
  %v6282 = vunpack.c.l.b16 %v5766
  %v6283 = vunpack.c.l.b16 %v5767
  %v6284 = vunpack.c.l.b16 %v5768
  %v6285 = vunpack.c.l.b16 %v5769
  %v6286 = vunpack.c.l.b16 %v5770
  %v6287 = vunpack.c.l.b16 %v5771
  %v6288 = vunpack.c.l.b16 %v5772
  %v6289 = vunpack.c.l.b16 %v5773
  %v6290 = vunpack.c.l.b16 %v5774
  %v6291 = vunpack.c.l.b16 %v5775
  %v6292 = vunpack.c.l.b16 %v5776
  %v6293 = vunpack.c.l.b16 %v5777
  %v6294 = vunpack.c.l.b16 %v5778
  %v6295 = vunpack.c.l.b16 %v5779
  %v6296 = vunpack.c.l.b16 %v5780
  %v6297 = vunpack.c.l.b16 %v5781
  %v6298 = vunpack.c.l.b16 %v5782
  %v6299 = vunpack.c.l.b16 %v5783
  %v6300 = vunpack.c.l.b16 %v5784
  %v6301 = vunpack.c.l.b16 %v5785
  %v6302 = vunpack.c.l.b16 %v5786
  %v6303 = vunpack.c.l.b16 %v5787
  %v6304 = vunpack.c.l.b16 %v5788
  %v6305 = vunpack.c.l.b16 %v5789
  %v6306 = vunpack.c.l.b16 %v5790
  %v6307 = vunpack.c.l.b16 %v5791
  %v6308 = vunpack.c.l.b16 %v5792
  %v6309 = vunpack.c.l.b16 %v5793
  %v6310 = vunpack.c.l.b16 %v5794
  %v6311 = vunpack.c.l.b16 %v5795
  %v6312 = vunpack.c.l.b16 %v5796
  %v6313 = vunpack.c.l.b16 %v5797
  %v6314 = vunpack.c.l.b16 %v5798
  %v6315 = vunpack.c.l.b16 %v5799
  %v6316 = vunpack.c.l.b16 %v5800
  %v6317 = vunpack.c.l.b16 %v5801
  %v6318 = vunpack.c.l.b16 %v5802
  %v6319 = vunpack.c.l.b16 %v5803
  %v6320 = vunpack.c.l.b16 %v5804
  %v6321 = vunpack.c.l.b16 %v5805
  %v6322 = vunpack.c.l.b16 %v5806
  %v6323 = vunpack.c.l.b16 %v5807
  %v6324 = vunpack.c.l.b16 %v5808
  %v6325 = vunpack.c.l.b16 %v5809
  %v6326 = vunpack.c.l.b16 %v5810
  %v6327 = vunpack.c.l.b16 %v5811
  %v6328 = vunpack.c.l.b16 %v5812
  %v6329 = vunpack.c.l.b16 %v5813
  %v6330 = vunpack.c.l.b16 %v5814
  %v6331 = vunpack.c.l.b16 %v5815
  %v6332 = vunpack.c.l.b16 %v5816
  %v6333 = vunpack.c.l.b16 %v5817
  %v6334 = vunpack.c.l.b16 %v5818
  %v6335 = vunpack.c.l.b16 %v5819
  %v6336 = vunpack.c.l.b16 %v5820
  %v6337 = vunpack.c.l.b16 %v5821
  %v6338 = vunpack.c.l.b16 %v5822
  %v6339 = vunpack.c.l.b16 %v5823
  %v6340 = vunpack.c.l.b16 %v5824
  %v6341 = vunpack.c.l.b16 %v5825
  %v6342 = vunpack.c.l.b16 %v5826
  %v6343 = vunpack.c.l.b16 %v5827
  %v6344 = vunpack.c.l.b16 %v5828
  %v6345 = vunpack.c.l.b16 %v5829
  %v6346 = vunpack.c.l.b16 %v5830
  %v6347 = vunpack.c.l.b16 %v5831
  %v6348 = vunpack.c.l.b16 %v5832
  %v6349 = vunpack.c.l.b16 %v5833
  %v6350 = vunpack.c.l.b16 %v5834
  %v6351 = vunpack.c.l.b16 %v5835
  %v6352 = vunpack.c.l.b16 %v5836
  %v6353 = vunpack.c.l.b16 %v5837
  %v6354 = vunpack.c.l.b16 %v5838
  %v6355 = vunpack.c.l.b16 %v5839
  %v6356 = vunpack.c.l.b16 %v5840
  %v6357 = vunpack.c.l.b16 %v5841
  %v6358 = vunpack.c.l.b16 %v5842
  %v6359 = vunpack.c.l.b16 %v5843
  %v6360 = vunpack.c.l.b16 %v5844
  %v6361 = vunpack.c.l.b16 %v5845
  %v6362 = vunpack.c.l.b16 %v5846
  %v6363 = vunpack.c.l.b16 %v5847
  %v6364 = vunpack.c.l.b16 %v5848
  %v6365 = vunpack.c.l.b16 %v5849
  %v6366 = vunpack.c.l.b16 %v5850
  %v6367 = vunpack.c.l.b16 %v5851
  %v6368 = vunpack.c.l.b16 %v5852
  %v6369 = vunpack.c.l.b16 %v5853
  %v6370 = vunpack.c.l.b16 %v5854
  %v6371 = vunpack.c.l.b16 %v5855
  %v6372 = vunpack.c.l.b16 %v5856
  %v6373 = vunpack.c.l.b16 %v5857
  %v6374 = vunpack.c.l.b16 %v5858
  %v6375 = vunpack.c.l.b16 %v5859
  %v6376 = vunpack.c.l.b16 %v5860
  %v6377 = vunpack.c.l.b16 %v5861
  %v6378 = vpack.c.b16 %v6123, %v6122
  %v6379 = vpack.c.b16 %v6125, %v6124
  %v6380 = vpack.c.b16 %v6127, %v6126
  %v6381 = vpack.c.b16 %v6129, %v6128
  %v6382 = vpack.c.b16 %v6131, %v6130
  %v6383 = vpack.c.b16 %v6133, %v6132
  %v6384 = vpack.c.b16 %v6135, %v6134
  %v6385 = vpack.c.b16 %v6137, %v6136
  %v6386 = vpack.c.b16 %v6139, %v6138
  %v6387 = vpack.c.b16 %v6141, %v6140
  %v6388 = vpack.c.b16 %v6143, %v6142
  %v6389 = vpack.c.b16 %v6145, %v6144
  %v6390 = vpack.c.b16 %v6147, %v6146
  %v6391 = vpack.c.b16 %v6149, %v6148
  %v6392 = vpack.c.b16 %v6151, %v6150
  %v6393 = vpack.c.b16 %v6153, %v6152
  %v6394 = vpack.c.b16 %v6155, %v6154
  %v6395 = vpack.c.b16 %v6157, %v6156
  %v6396 = vpack.c.b16 %v6159, %v6158
  %v6397 = vpack.c.b16 %v6161, %v6160
  %v6398 = vpack.c.b16 %v6163, %v6162
  %v6399 = vpack.c.b16 %v6165, %v6164
  %v6400 = vpack.c.b16 %v6167, %v6166
  %v6401 = vpack.c.b16 %v6169, %v6168
  %v6402 = vpack.c.b16 %v6171, %v6170
  %v6403 = vpack.c.b16 %v6173, %v6172
  %v6404 = vpack.c.b16 %v6175, %v6174
  %v6405 = vpack.c.b16 %v6177, %v6176
  %v6406 = vpack.c.b16 %v6179, %v6178
  %v6407 = vpack.c.b16 %v6181, %v6180
  %v6408 = vpack.c.b16 %v6183, %v6182
  %v6409 = vpack.c.b16 %v6185, %v6184
  %v6410 = vpack.c.b16 %v6187, %v6186
  %v6411 = vpack.c.b16 %v6189, %v6188
  %v6412 = vpack.c.b16 %v6191, %v6190
  %v6413 = vpack.c.b16 %v6193, %v6192
  %v6414 = vpack.c.b16 %v6195, %v6194
  %v6415 = vpack.c.b16 %v6197, %v6196
  %v6416 = vpack.c.b16 %v6199, %v6198
  %v6417 = vpack.c.b16 %v6201, %v6200
  %v6418 = vpack.c.b16 %v6203, %v6202
  %v6419 = vpack.c.b16 %v6205, %v6204
  %v6420 = vpack.c.b16 %v6207, %v6206
  %v6421 = vpack.c.b16 %v6209, %v6208
  %v6422 = vpack.c.b16 %v6211, %v6210
  %v6423 = vpack.c.b16 %v6213, %v6212
  %v6424 = vpack.c.b16 %v6215, %v6214
  %v6425 = vpack.c.b16 %v6217, %v6216
  %v6426 = vpack.c.b16 %v6219, %v6218
  %v6427 = vpack.c.b16 %v6221, %v6220
  %v6428 = vpack.c.b16 %v6223, %v6222
  %v6429 = vpack.c.b16 %v6225, %v6224
  %v6430 = vpack.c.b16 %v6227, %v6226
  %v6431 = vpack.c.b16 %v6229, %v6228
  %v6432 = vpack.c.b16 %v6231, %v6230
  %v6433 = vpack.c.b16 %v6233, %v6232
  %v6434 = vpack.c.b16 %v6235, %v6234
  %v6435 = vpack.c.b16 %v6237, %v6236
  %v6436 = vpack.c.b16 %v6239, %v6238
  %v6437 = vpack.c.b16 %v6241, %v6240
  %v6438 = vpack.c.b16 %v6243, %v6242
  %v6439 = vpack.c.b16 %v6245, %v6244
  %v6440 = vpack.c.b16 %v6247, %v6246
  %v6441 = vpack.c.b16 %v6249, %v6248
  %v6442 = vpack.c.b16 %v6251, %v6250
  %v6443 = vpack.c.b16 %v6253, %v6252
  %v6444 = vpack.c.b16 %v6255, %v6254
  %v6445 = vpack.c.b16 %v6257, %v6256
  %v6446 = vpack.c.b16 %v6259, %v6258
  %v6447 = vpack.c.b16 %v6261, %v6260
  %v6448 = vpack.c.b16 %v6263, %v6262
  %v6449 = vpack.c.b16 %v6265, %v6264
  %v6450 = vpack.c.b16 %v6267, %v6266
  %v6451 = vpack.c.b16 %v6269, %v6268
  %v6452 = vpack.c.b16 %v6271, %v6270
  %v6453 = vpack.c.b16 %v6273, %v6272
  %v6454 = vpack.c.b16 %v6275, %v6274
  %v6455 = vpack.c.b16 %v6277, %v6276
  %v6456 = vpack.c.b16 %v6279, %v6278
  %v6457 = vpack.c.b16 %v6281, %v6280
  %v6458 = vpack.c.b16 %v6283, %v6282
  %v6459 = vpack.c.b16 %v6285, %v6284
  %v6460 = vpack.c.b16 %v6287, %v6286
  %v6461 = vpack.c.b16 %v6289, %v6288
  %v6462 = vpack.c.b16 %v6291, %v6290
  %v6463 = vpack.c.b16 %v6293, %v6292
  %v6464 = vpack.c.b16 %v6295, %v6294
  %v6465 = vpack.c.b16 %v6297, %v6296
  %v6466 = vpack.c.b16 %v6299, %v6298
  %v6467 = vpack.c.b16 %v6301, %v6300
  %v6468 = vpack.c.b16 %v6303, %v6302
  %v6469 = vpack.c.b16 %v6305, %v6304
  %v6470 = vpack.c.b16 %v6307, %v6306
  %v6471 = vpack.c.b16 %v6309, %v6308
  %v6472 = vpack.c.b16 %v6311, %v6310
  %v6473 = vpack.c.b16 %v6313, %v6312
  %v6474 = vpack.c.b16 %v6315, %v6314
  %v6475 = vpack.c.b16 %v6317, %v6316
  %v6476 = vpack.c.b16 %v6319, %v6318
  %v6477 = vpack.c.b16 %v6321, %v6320
  %v6478 = vpack.c.b16 %v6323, %v6322
  %v6479 = vpack.c.b16 %v6325, %v6324
  %v6480 = vpack.c.b16 %v6327, %v6326
  %v6481 = vpack.c.b16 %v6329, %v6328
  %v6482 = vpack.c.b16 %v6331, %v6330
  %v6483 = vpack.c.b16 %v6333, %v6332
  %v6484 = vpack.c.b16 %v6335, %v6334
  %v6485 = vpack.c.b16 %v6337, %v6336
  %v6486 = vpack.c.b16 %v6339, %v6338
  %v6487 = vpack.c.b16 %v6341, %v6340
  %v6488 = vpack.c.b16 %v6343, %v6342
  %v6489 = vpack.c.b16 %v6345, %v6344
  %v6490 = vpack.c.b16 %v6347, %v6346
  %v6491 = vpack.c.b16 %v6349, %v6348
  %v6492 = vpack.c.b16 %v6351, %v6350
  %v6493 = vpack.c.b16 %v6353, %v6352
  %v6494 = vpack.c.b16 %v6355, %v6354
  %v6495 = vpack.c.b16 %v6357, %v6356
  %v6496 = vpack.c.b16 %v6359, %v6358
  %v6497 = vpack.c.b16 %v6361, %v6360
  %v6498 = vpack.c.b16 %v6363, %v6362
  %v6499 = vpack.c.b16 %v6365, %v6364
  %v6500 = vpack.c.b16 %v6367, %v6366
  %v6501 = vpack.c.b16 %v6369, %v6368
  %v6502 = vpack.c.b16 %v6371, %v6370
  %v6503 = vpack.c.b16 %v6373, %v6372
  %v6504 = vpack.c.b16 %v6375, %v6374
  %v6505 = vpack.c.b16 %v6377, %v6376
  %6634 = vmatprep.subr.bf16.mxu0 0
  %6635 = vmatpush1.bf16.msra.mxu0 %v6378
  %6636 = vmatprep.subr.bf16.mxu0 0
  %6637 = vmatpush1.bf16.msra.mxu0 %v6379
  %6638 = vmatprep.subr.bf16.mxu0 0
  %6639 = vmatpush1.bf16.msra.mxu0 %v6380
  %6640 = vmatprep.subr.bf16.mxu0 0
  %6641 = vmatpush1.bf16.msra.mxu0 %v6381
  %6642 = vmatprep.subr.bf16.mxu0 0
  %6643 = vmatpush1.bf16.msra.mxu0 %v6382
  %6644 = vmatprep.subr.bf16.mxu0 0
  %6645 = vmatpush1.bf16.msra.mxu0 %v6383
  %6646 = vmatprep.subr.bf16.mxu0 0
  %6647 = vmatpush1.bf16.msra.mxu0 %v6384
  %6648 = vmatprep.subr.bf16.mxu0 0
  %6649 = vmatpush1.bf16.msra.mxu0 %v6385
  %6650 = vmatprep.subr.bf16.mxu0 0
  %6651 = vmatpush1.bf16.msra.mxu0 %v6386
  %6652 = vmatprep.subr.bf16.mxu0 0
  %6653 = vmatpush1.bf16.msra.mxu0 %v6387
  %6654 = vmatprep.subr.bf16.mxu0 0
  %6655 = vmatpush1.bf16.msra.mxu0 %v6388
  %6656 = vmatprep.subr.bf16.mxu0 0
  %6657 = vmatpush1.bf16.msra.mxu0 %v6389
  %6658 = vmatprep.subr.bf16.mxu0 0
  %6659 = vmatpush1.bf16.msra.mxu0 %v6390
  %6660 = vmatprep.subr.bf16.mxu0 0
  %6661 = vmatpush1.bf16.msra.mxu0 %v6391
  %6662 = vmatprep.subr.bf16.mxu0 0
  %6663 = vmatpush1.bf16.msra.mxu0 %v6392
  %6664 = vmatprep.subr.bf16.mxu0 0
  %6665 = vmatpush1.bf16.msra.mxu0 %v6393
  %6666 = vmatprep.mubr.bf16.mxu0 %v5590
  %6667 = vmatmul.mubr.bf16.gmra.mrb[0].mxu0 %v5589
  %v6668 = vpop.f32.mrb[0].mxu0
  %v6669 = vadd.f32 %v5865, %v6668
  %v6670 = vpop.f32.mrb[0].mxu0
  %v6671 = vpop.f32.mrb[0].mxu0
  %v6672 = vadd.f32 %v5865, %v6671
  %v6673 = vpop.f32.mrb[0].mxu0
  %6674 = vdwg.mxu0
  %6675 = vmatprep.subr.bf16.mxu0 0
  %6676 = vmatpush1.bf16.msra.mxu0 %v6394
  %6677 = vmatprep.subr.bf16.mxu0 0
  %6678 = vmatpush1.bf16.msra.mxu0 %v6395
  %6679 = vmatprep.subr.bf16.mxu0 0
  %6680 = vmatpush1.bf16.msra.mxu0 %v6396
  %6681 = vmatprep.subr.bf16.mxu0 0
  %6682 = vmatpush1.bf16.msra.mxu0 %v6397
  %6683 = vmatprep.subr.bf16.mxu0 0
  %6684 = vmatpush1.bf16.msra.mxu0 %v6398
  %6685 = vmatprep.subr.bf16.mxu0 0
  %6686 = vmatpush1.bf16.msra.mxu0 %v6399
  %6687 = vmatprep.subr.bf16.mxu0 0
  %6688 = vmatpush1.bf16.msra.mxu0 %v6400
  %6689 = vmatprep.subr.bf16.mxu0 0
  %6690 = vmatpush1.bf16.msra.mxu0 %v6401
  %6691 = vmatprep.subr.bf16.mxu0 0
  %6692 = vmatpush1.bf16.msra.mxu0 %v6402
  %6693 = vmatprep.subr.bf16.mxu0 0
  %6694 = vmatpush1.bf16.msra.mxu0 %v6403
  %6695 = vmatprep.subr.bf16.mxu0 0
  %6696 = vmatpush1.bf16.msra.mxu0 %v6404
  %6697 = vmatprep.subr.bf16.mxu0 0
  %6698 = vmatpush1.bf16.msra.mxu0 %v6405
  %6699 = vmatprep.subr.bf16.mxu0 0
  %6700 = vmatpush1.bf16.msra.mxu0 %v6406
  %6701 = vmatprep.subr.bf16.mxu0 0
  %6702 = vmatpush1.bf16.msra.mxu0 %v6407
  %6703 = vmatprep.subr.bf16.mxu0 0
  %6704 = vmatpush1.bf16.msra.mxu0 %v6408
  %6705 = vmatprep.subr.bf16.mxu0 0
  %6706 = vmatpush1.bf16.msra.mxu0 %v6409
  %6707 = vmatprep.mubr.bf16.mxu0 %v5592
  %6708 = vmatmul.mubr.bf16.gmra.mrb[0].mxu0 %v5591
  %v6709 = vpop.f32.mrb[0].mxu0
  %v6710 = vadd.f32 %v6669, %v6709
  %v6711 = vpop.f32.mrb[0].mxu0
  %v6712 = vpop.f32.mrb[0].mxu0
  %v6713 = vadd.f32 %v6672, %v6712
  %v6714 = vpop.f32.mrb[0].mxu0
  %6715 = vdwg.mxu0
  %6716 = vmatprep.subr.bf16.mxu0 0
  %6717 = vmatpush1.bf16.msra.mxu0 %v6410
  %6718 = vmatprep.subr.bf16.mxu0 0
  %6719 = vmatpush1.bf16.msra.mxu0 %v6411
  %6720 = vmatprep.subr.bf16.mxu0 0
  %6721 = vmatpush1.bf16.msra.mxu0 %v6412
  %6722 = vmatprep.subr.bf16.mxu0 0
  %6723 = vmatpush1.bf16.msra.mxu0 %v6413
  %6724 = vmatprep.subr.bf16.mxu0 0
  %6725 = vmatpush1.bf16.msra.mxu0 %v6414
  %6726 = vmatprep.subr.bf16.mxu0 0
  %6727 = vmatpush1.bf16.msra.mxu0 %v6415
  %6728 = vmatprep.subr.bf16.mxu0 0
  %6729 = vmatpush1.bf16.msra.mxu0 %v6416
  %6730 = vmatprep.subr.bf16.mxu0 0
  %6731 = vmatpush1.bf16.msra.mxu0 %v6417
  %6732 = vmatprep.subr.bf16.mxu0 0
  %6733 = vmatpush1.bf16.msra.mxu0 %v6418
  %6734 = vmatprep.subr.bf16.mxu0 0
  %6735 = vmatpush1.bf16.msra.mxu0 %v6419
  %6736 = vmatprep.subr.bf16.mxu0 0
  %6737 = vmatpush1.bf16.msra.mxu0 %v6420
  %6738 = vmatprep.subr.bf16.mxu0 0
  %6739 = vmatpush1.bf16.msra.mxu0 %v6421
  %6740 = vmatprep.subr.bf16.mxu0 0
  %6741 = vmatpush1.bf16.msra.mxu0 %v6422
  %6742 = vmatprep.subr.bf16.mxu0 0
  %6743 = vmatpush1.bf16.msra.mxu0 %v6423
  %6744 = vmatprep.subr.bf16.mxu0 0
  %6745 = vmatpush1.bf16.msra.mxu0 %v6424
  %6746 = vmatprep.subr.bf16.mxu0 0
  %6747 = vmatpush1.bf16.msra.mxu0 %v6425
  %6748 = vmatprep.mubr.bf16.mxu0 %v5594
  %6749 = vmatmul.mubr.bf16.gmra.mrb[0].mxu0 %v5593
  %v6750 = vpop.f32.mrb[0].mxu0
  %v6751 = vadd.f32 %v6710, %v6750
  %v6752 = vpop.f32.mrb[0].mxu0
  %v6753 = vpop.f32.mrb[0].mxu0
  %v6754 = vadd.f32 %v6713, %v6753
  %v6755 = vpop.f32.mrb[0].mxu0
  %6756 = vdwg.mxu0
  %6757 = vmatprep.subr.bf16.mxu0 0
  %6758 = vmatpush1.bf16.msra.mxu0 %v6426
  %6759 = vmatprep.subr.bf16.mxu0 0
  %6760 = vmatpush1.bf16.msra.mxu0 %v6427
  %6761 = vmatprep.subr.bf16.mxu0 0
  %6762 = vmatpush1.bf16.msra.mxu0 %v6428
  %6763 = vmatprep.subr.bf16.mxu0 0
  %6764 = vmatpush1.bf16.msra.mxu0 %v6429
  %6765 = vmatprep.subr.bf16.mxu0 0
  %6766 = vmatpush1.bf16.msra.mxu0 %v6430
  %6767 = vmatprep.subr.bf16.mxu0 0
  %6768 = vmatpush1.bf16.msra.mxu0 %v6431
  %6769 = vmatprep.subr.bf16.mxu0 0
  %6770 = vmatpush1.bf16.msra.mxu0 %v6432
  %6771 = vmatprep.subr.bf16.mxu0 0
  %6772 = vmatpush1.bf16.msra.mxu0 %v6433
  %6773 = vmatprep.subr.bf16.mxu0 0
  %6774 = vmatpush1.bf16.msra.mxu0 %v6434
  %6775 = vmatprep.subr.bf16.mxu0 0
  %6776 = vmatpush1.bf16.msra.mxu0 %v6435
  %6777 = vmatprep.subr.bf16.mxu0 0
  %6778 = vmatpush1.bf16.msra.mxu0 %v6436
  %6779 = vmatprep.subr.bf16.mxu0 0
  %6780 = vmatpush1.bf16.msra.mxu0 %v6437
  %6781 = vmatprep.subr.bf16.mxu0 0
  %6782 = vmatpush1.bf16.msra.mxu0 %v6438
  %6783 = vmatprep.subr.bf16.mxu0 0
  %6784 = vmatpush1.bf16.msra.mxu0 %v6439
  %6785 = vmatprep.subr.bf16.mxu0 0
  %6786 = vmatpush1.bf16.msra.mxu0 %v6440
  %6787 = vmatprep.subr.bf16.mxu0 0
  %6788 = vmatpush1.bf16.msra.mxu0 %v6441
  %6789 = vmatprep.mubr.bf16.mxu0 %v5596
  %6790 = vmatmul.mubr.bf16.gmra.mrb[0].mxu0 %v5595
  %v6791 = vpop.f32.mrb[0].mxu0
  %v6792 = vadd.f32 %v6751, %v6791
  %v6793 = vpop.f32.mrb[0].mxu0
  %v6794 = vpop.f32.mrb[0].mxu0
  %v6795 = vadd.f32 %v6754, %v6794
  %v6796 = vpop.f32.mrb[0].mxu0
  %6797 = vdwg.mxu0
  %6798 = vmatprep.subr.bf16.mxu0 0
  %6799 = vmatpush1.bf16.msra.mxu0 %v6442
  %6800 = vmatprep.subr.bf16.mxu0 0
  %6801 = vmatpush1.bf16.msra.mxu0 %v6443
  %6802 = vmatprep.subr.bf16.mxu0 0
  %6803 = vmatpush1.bf16.msra.mxu0 %v6444
  %6804 = vmatprep.subr.bf16.mxu0 0
  %6805 = vmatpush1.bf16.msra.mxu0 %v6445
  %6806 = vmatprep.subr.bf16.mxu0 0
  %6807 = vmatpush1.bf16.msra.mxu0 %v6446
  %6808 = vmatprep.subr.bf16.mxu0 0
  %6809 = vmatpush1.bf16.msra.mxu0 %v6447
  %6810 = vmatprep.subr.bf16.mxu0 0
  %6811 = vmatpush1.bf16.msra.mxu0 %v6448
  %6812 = vmatprep.subr.bf16.mxu0 0
  %6813 = vmatpush1.bf16.msra.mxu0 %v6449
  %6814 = vmatprep.subr.bf16.mxu0 0
  %6815 = vmatpush1.bf16.msra.mxu0 %v6450
  %6816 = vmatprep.subr.bf16.mxu0 0
  %6817 = vmatpush1.bf16.msra.mxu0 %v6451
  %6818 = vmatprep.subr.bf16.mxu0 0
  %6819 = vmatpush1.bf16.msra.mxu0 %v6452
  %6820 = vmatprep.subr.bf16.mxu0 0
  %6821 = vmatpush1.bf16.msra.mxu0 %v6453
  %6822 = vmatprep.subr.bf16.mxu0 0
  %6823 = vmatpush1.bf16.msra.mxu0 %v6454
  %6824 = vmatprep.subr.bf16.mxu0 0
  %6825 = vmatpush1.bf16.msra.mxu0 %v6455
  %6826 = vmatprep.subr.bf16.mxu0 0
  %6827 = vmatpush1.bf16.msra.mxu0 %v6456
  %6828 = vmatprep.subr.bf16.mxu0 0
  %6829 = vmatpush1.bf16.msra.mxu0 %v6457
  %6830 = vmatprep.mubr.bf16.mxu0 %v5598
  %6831 = vmatmul.mubr.bf16.gmra.mrb[0].mxu0 %v5597
  %v6832 = vpop.f32.mrb[0].mxu0
  %v6833 = vadd.f32 %v6792, %v6832
  %v6834 = vpop.f32.mrb[0].mxu0
  %v6835 = vpop.f32.mrb[0].mxu0
  %v6836 = vadd.f32 %v6795, %v6835
  %v6837 = vpop.f32.mrb[0].mxu0
  %6838 = vdwg.mxu0
  %6839 = vmatprep.subr.bf16.mxu0 0
  %6840 = vmatpush1.bf16.msra.mxu0 %v6458
  %6841 = vmatprep.subr.bf16.mxu0 0
  %6842 = vmatpush1.bf16.msra.mxu0 %v6459
  %6843 = vmatprep.subr.bf16.mxu0 0
  %6844 = vmatpush1.bf16.msra.mxu0 %v6460
  %6845 = vmatprep.subr.bf16.mxu0 0
  %6846 = vmatpush1.bf16.msra.mxu0 %v6461
  %6847 = vmatprep.subr.bf16.mxu0 0
  %6848 = vmatpush1.bf16.msra.mxu0 %v6462
  %6849 = vmatprep.subr.bf16.mxu0 0
  %6850 = vmatpush1.bf16.msra.mxu0 %v6463
  %6851 = vmatprep.subr.bf16.mxu0 0
  %6852 = vmatpush1.bf16.msra.mxu0 %v6464
  %6853 = vmatprep.subr.bf16.mxu0 0
  %6854 = vmatpush1.bf16.msra.mxu0 %v6465
  %6855 = vmatprep.subr.bf16.mxu0 0
  %6856 = vmatpush1.bf16.msra.mxu0 %v6466
  %6857 = vmatprep.subr.bf16.mxu0 0
  %6858 = vmatpush1.bf16.msra.mxu0 %v6467
  %6859 = vmatprep.subr.bf16.mxu0 0
  %6860 = vmatpush1.bf16.msra.mxu0 %v6468
  %6861 = vmatprep.subr.bf16.mxu0 0
  %6862 = vmatpush1.bf16.msra.mxu0 %v6469
  %6863 = vmatprep.subr.bf16.mxu0 0
  %6864 = vmatpush1.bf16.msra.mxu0 %v6470
  %6865 = vmatprep.subr.bf16.mxu0 0
  %6866 = vmatpush1.bf16.msra.mxu0 %v6471
  %6867 = vmatprep.subr.bf16.mxu0 0
  %6868 = vmatpush1.bf16.msra.mxu0 %v6472
  %6869 = vmatprep.subr.bf16.mxu0 0
  %6870 = vmatpush1.bf16.msra.mxu0 %v6473
  %6871 = vmatprep.mubr.bf16.mxu0 %v5600
  %6872 = vmatmul.mubr.bf16.gmra.mrb[0].mxu0 %v5599
  %v6873 = vpop.f32.mrb[0].mxu0
  %v6874 = vadd.f32 %v6833, %v6873
  %v6875 = vpop.f32.mrb[0].mxu0
  %v6876 = vpop.f32.mrb[0].mxu0
  %v6877 = vadd.f32 %v6836, %v6876
  %v6878 = vpop.f32.mrb[0].mxu0
  %6879 = vdwg.mxu0
  %6880 = vmatprep.subr.bf16.mxu0 0
  %6881 = vmatpush1.bf16.msra.mxu0 %v6474
  %6882 = vmatprep.subr.bf16.mxu0 0
  %6883 = vmatpush1.bf16.msra.mxu0 %v6475
  %6884 = vmatprep.subr.bf16.mxu0 0
  %6885 = vmatpush1.bf16.msra.mxu0 %v6476
  %6886 = vmatprep.subr.bf16.mxu0 0
  %6887 = vmatpush1.bf16.msra.mxu0 %v6477
  %6888 = vmatprep.subr.bf16.mxu0 0
  %6889 = vmatpush1.bf16.msra.mxu0 %v6478
  %6890 = vmatprep.subr.bf16.mxu0 0
  %6891 = vmatpush1.bf16.msra.mxu0 %v6479
  %6892 = vmatprep.subr.bf16.mxu0 0
  %6893 = vmatpush1.bf16.msra.mxu0 %v6480
  %6894 = vmatprep.subr.bf16.mxu0 0
  %6895 = vmatpush1.bf16.msra.mxu0 %v6481
  %6896 = vmatprep.subr.bf16.mxu0 0
  %6897 = vmatpush1.bf16.msra.mxu0 %v6482
  %6898 = vmatprep.subr.bf16.mxu0 0
  %6899 = vmatpush1.bf16.msra.mxu0 %v6483
  %6900 = vmatprep.subr.bf16.mxu0 0
  %6901 = vmatpush1.bf16.msra.mxu0 %v6484
  %6902 = vmatprep.subr.bf16.mxu0 0
  %6903 = vmatpush1.bf16.msra.mxu0 %v6485
  %6904 = vmatprep.subr.bf16.mxu0 0
  %6905 = vmatpush1.bf16.msra.mxu0 %v6486
  %6906 = vmatprep.subr.bf16.mxu0 0
  %6907 = vmatpush1.bf16.msra.mxu0 %v6487
  %6908 = vmatprep.subr.bf16.mxu0 0
  %6909 = vmatpush1.bf16.msra.mxu0 %v6488
  %6910 = vmatprep.subr.bf16.mxu0 0
  %6911 = vmatpush1.bf16.msra.mxu0 %v6489
  %6912 = vmatprep.mubr.bf16.mxu0 %v5602
  %6913 = vmatmul.mubr.bf16.gmra.mrb[0].mxu0 %v5601
  %v6914 = vpop.f32.mrb[0].mxu0
  %v6915 = vadd.f32 %v6874, %v6914
  %v6916 = vpop.f32.mrb[0].mxu0
  %v6917 = vpop.f32.mrb[0].mxu0
  %v6918 = vadd.f32 %v6877, %v6917
  %v6919 = vpop.f32.mrb[0].mxu0
  %6920 = vdwg.mxu0
  %6921 = vmatprep.subr.bf16.mxu0 0
  %6922 = vmatpush1.bf16.msra.mxu0 %v6490
  %6923 = vmatprep.subr.bf16.mxu0 0
  %6924 = vmatpush1.bf16.msra.mxu0 %v6491
  %6925 = vmatprep.subr.bf16.mxu0 0
  %6926 = vmatpush1.bf16.msra.mxu0 %v6492
  %6927 = vmatprep.subr.bf16.mxu0 0
  %6928 = vmatpush1.bf16.msra.mxu0 %v6493
  %6929 = vmatprep.subr.bf16.mxu0 0
  %6930 = vmatpush1.bf16.msra.mxu0 %v6494
  %6931 = vmatprep.subr.bf16.mxu0 0
  %6932 = vmatpush1.bf16.msra.mxu0 %v6495
  %6933 = vmatprep.subr.bf16.mxu0 0
  %6934 = vmatpush1.bf16.msra.mxu0 %v6496
  %6935 = vmatprep.subr.bf16.mxu0 0
  %6936 = vmatpush1.bf16.msra.mxu0 %v6497
  %6937 = vmatprep.subr.bf16.mxu0 0
  %6938 = vmatpush1.bf16.msra.mxu0 %v6498
  %6939 = vmatprep.subr.bf16.mxu0 0
  %6940 = vmatpush1.bf16.msra.mxu0 %v6499
  %6941 = vmatprep.subr.bf16.mxu0 0
  %6942 = vmatpush1.bf16.msra.mxu0 %v6500
  %6943 = vmatprep.subr.bf16.mxu0 0
  %6944 = vmatpush1.bf16.msra.mxu0 %v6501
  %6945 = vmatprep.subr.bf16.mxu0 0
  %6946 = vmatpush1.bf16.msra.mxu0 %v6502
  %6947 = vmatprep.subr.bf16.mxu0 0
  %6948 = vmatpush1.bf16.msra.mxu0 %v6503
  %6949 = vmatprep.subr.bf16.mxu0 0
  %6950 = vmatpush1.bf16.msra.mxu0 %v6504
  %6951 = vmatprep.subr.bf16.mxu0 0
  %6952 = vmatpush1.bf16.msra.mxu0 %v6505
  %6953 = vmatprep.mubr.bf16.mxu0 %v5604
  %6954 = vmatmul.mubr.bf16.gmra.mrb[0].mxu0 %v5603
  %v6955 = vpop.f32.mrb[0].mxu0
  %v6956 = vadd.f32 %v6915, %v6955
  %v6957 = vpop.f32.mrb[0].mxu0
  %v6958 = vpop.f32.mrb[0].mxu0
  %v6959 = vadd.f32 %v6918, %v6958
  %v6960 = vpop.f32.mrb[0].mxu0
  %6961 = vdwg.mxu0
  %v6962 = vadd.f32 %v4929, %v6956
  %v6963 = vadd.f32 %v4930, %v6959
  %v6964 = vsel %vm150, %v6962, 0.0
  %6965 = vadd.xlane.f32.xlu0 %v6964
  %v6966 = vpop.xlane.xlu0 %6965
  %v6967 = vsel %vm1697, %v6963, 0.0
  %6968 = vadd.xlane.f32.xlu0 %v6967
  %v6969 = vpop.xlane.xlu0 %6968
  %v6970 = vmul.f32 %v6966, %v1701
  %v6971 = vmul.f32 %v6969, %v1701
  %v6972 = vsub.f32 %v6962, %v6970
  %v6973 = vsub.f32 %v6963, %v6971
  %v6974 = vmul.f32 %v6972, %v6972
  %v6975 = vmul.f32 %v6973, %v6973
  %v6976 = vsel %vm150, %v6974, 0.0
  %6977 = vadd.xlane.f32.xlu0 %v6976
  %v6978 = vpop.xlane.xlu0 %6977
  %v6979 = vsel %vm1697, %v6975, 0.0
  %6980 = vadd.xlane.f32.xlu0 %v6979
  %v6981 = vpop.xlane.xlu0 %6980
  %v6982 = vmul.f32 %v6978, %v1701
  %v6983 = vmul.f32 %v6981, %v1701
  %v6984 = vadd.f32 %v6982, 1e-05
  %v6985 = vadd.f32 %v6983, 1e-05
  %v6986 = vrsqrt.pop %v6984
  %v6987 = vrsqrt.pop %v6985
  %v6988 = vmul.f32 %v6972, %v6986
  %v6989 = vmul.f32 %v6973, %v6987
  %v6990 = vlaneseq
  %v6991 = vshrl.u32 %v6990, 7
  %v6992 = vsub.s32 6, %v6991
  %v6993 = vrot.slane %v3847, %v6992
  %v6994 = vmul.f32 %v6988, %v6993
  %v6995 = vmul.f32 %v6989, %v6993
  %v6996 = vlaneseq
  %v6997 = vshrl.u32 %v6996, 7
  %v6998 = vsub.s32 7, %v6997
  %v6999 = vrot.slane %v3847, %v6998
  %v7000 = vadd.f32 %v6994, %v6999
  %v7001 = vadd.f32 %v6995, %v6999
  %v7002 = vld [vmem:[%s14] sm:$0xff]
  %v7003 = vld [vmem:[%s14 + $0x8] sm:$0xff]
  %v7004 = vld [vmem:[%s14 + $0x10] sm:$0xff]
  %v7005 = vld [vmem:[%s14 + $0x18] sm:$0xff]
  %v7006 = vld [vmem:[%s15] sm:$0x1]
  %v7008 = vlaneseq
  %v7009 = vshrl.u32 %v7008, 7
  %v7010 = vsub.s32 0, %v7009
  %v7011 = vrot.slane %v7006, %v7010
  %v7014 = vsel %vm150, %v7000, 0
  %v7017 = vsel %vm150, %v7001, 0
  %7019 = vmatprep.subr.mxu0 0.0
  %7020 = vmatpush1.msra.mxu0 %v7002
  %7021 = vmatprep.subr.mxu0 0.0
  %7022 = vmatpush1.msra.mxu0 %v7003
  %7023 = vmatprep.subr.mxu0 0.0
  %7024 = vmatpush1.msra.mxu0 %v7004
  %7025 = vmatprep.subr.mxu0 0.0
  %7026 = vmatpush1.msra.mxu0 %v7005
  %7027 = vmatprep.subr.mxu0 0.0
  %7028 = vmatpush1.msra.mxu0 0.0
  %7029 = vmatprep.subr.mxu0 0.0
  %7030 = vmatpush1.msra.mxu0 0.0
  %7031 = vmatprep.subr.mxu0 0.0
  %7032 = vmatpush1.msra.mxu0 0.0
  %7033 = vmatprep.subr.mxu0 0.0
  %7034 = vmatpush1.msra.mxu0 0.0
  %7035 = vmatprep.subr.mxu0 0.0
  %7036 = vmatpush1.msra.mxu0 0.0
  %7037 = vmatprep.subr.mxu0 0.0
  %7038 = vmatpush1.msra.mxu0 0.0
  %7039 = vmatprep.subr.mxu0 0.0
  %7040 = vmatpush1.msra.mxu0 0.0
  %7041 = vmatprep.subr.mxu0 0.0
  %7042 = vmatpush1.msra.mxu0 0.0
  %7043 = vmatprep.subr.mxu0 0.0
  %7044 = vmatpush1.msra.mxu0 0.0
  %7045 = vmatprep.subr.mxu0 0.0
  %7046 = vmatpush1.msra.mxu0 0.0
  %7047 = vmatprep.subr.mxu0 0.0
  %7048 = vmatpush1.msra.mxu0 0.0
  %7049 = vmatprep.subr.mxu0 0.0
  %7050 = vmatpush1.msra.mxu0 0.0
  %7051 = vmatprep.subr.mxu0 0.0
  %7052 = vmatpush1.msra.mxu0 0.0
  %7053 = vmatprep.subr.mxu0 0.0
  %7054 = vmatpush1.msra.mxu0 0.0
  %7055 = vmatprep.subr.mxu0 0.0
  %7056 = vmatpush1.msra.mxu0 0.0
  %7057 = vmatprep.subr.mxu0 0.0
  %7058 = vmatpush1.msra.mxu0 0.0
  %7059 = vmatprep.subr.mxu0 0.0
  %7060 = vmatpush1.msra.mxu0 0.0
  %7061 = vmatprep.subr.mxu0 0.0
  %7062 = vmatpush1.msra.mxu0 0.0
  %7063 = vmatprep.subr.mxu0 0.0
  %7064 = vmatpush1.msra.mxu0 0.0
  %7065 = vmatprep.subr.mxu0 0.0
  %7066 = vmatpush1.msra.mxu0 0.0
  %7067 = vmatprep.subr.mxu0 0.0
  %7068 = vmatpush1.msra.mxu0 0.0
  %7069 = vmatprep.subr.mxu0 0.0
  %7070 = vmatpush1.msra.mxu0 0.0
  %7071 = vmatprep.subr.mxu0 0.0
  %7072 = vmatpush1.msra.mxu0 0.0
  %7073 = vmatprep.subr.mxu0 0.0
  %7074 = vmatpush1.msra.mxu0 0.0
  %7075 = vmatprep.subr.mxu0 0.0
  %7076 = vmatpush1.msra.mxu0 0.0
  %7077 = vmatprep.subr.mxu0 0.0
  %7078 = vmatpush1.msra.mxu0 0.0
  %7079 = vmatprep.subr.mxu0 0.0
  %7080 = vmatpush1.msra.mxu0 0.0
  %7081 = vmatprep.subr.mxu0 0.0
  %7082 = vmatpush1.msra.mxu0 0.0
  %7083 = vmatprep.mubr.f32.mxu0 0.0
  %7084 = vmatmul.mubr.f32.gmra.mrb[0].mxu0 %v7014
  %v7085 = vpop.f32.mrb[0].mxu0
  %v7086 = vadd.f32 %v7011, %v7085
  %v7087 = vpop.f32.mrb[0].mxu0
  %7088 = vmatprep.mubr.f32.mxu0 0.0
  %7089 = vmatmul.mubr.f32.gmra.mrb[0].mxu0 %v7017
  %v7090 = vpop.f32.mrb[0].mxu0
  %v7091 = vadd.f32 %v7011, %v7090
  %v7092 = vpop.f32.mrb[0].mxu0
  %7093 = vdwg.mxu0
  %vm7094 = vcmask 130048
  %v7095 = vsel %vm7094, %v7086, -inf
  %7096 = vmax.xlane.f32.xlu0 %v7095
  %v7097 = vpop.xlane.xlu0 %7096
  %vm7098 = vcmask 125952
  %v7099 = vsel %vm7098, %v7091, -inf
  %7100 = vmax.xlane.f32.xlu0 %v7099
  %v7101 = vpop.xlane.xlu0 %7100
  %v7102 = vsub.f32 %v7086, %v7097
  %v7103 = vsub.f32 %v7091, %v7101
  %v7104 = vmul.f32 %v7102, 1.442695
  %v7105 = vpow.pop %v7104
  %v7106 = vmul.f32 %v7103, 1.442695
  %v7107 = vpow.pop %v7106
  %v7108 = vsel %vm7094, %v7105, 0.0
  %7109 = vadd.xlane.f32.xlu0 %v7108
  %v7110 = vpop.xlane.xlu0 %7109
  %v7111 = vsel %vm7098, %v7107, 0.0
  %7112 = vadd.xlane.f32.xlu0 %v7111
  %v7113 = vpop.xlane.xlu0 %7112
  %v7114 = vrcp.pop %v7110
  %v7115 = vmul.f32 %v7105, %v7114
  %v7116 = vrcp.pop %v7113
  %v7117 = vmul.f32 %v7107, %v7116
  %vm7118 = vcmask 261248
  %v7119 = vsel %vm7118, %v7086, -inf
  %7120 = vmax.xlane.f32.xlu0 %v7119
  %v7121 = vpop.xlane.xlu0 %7120
  %vm7122 = vcmask 257152
  %v7123 = vsel %vm7122, %v7091, -inf
  %7124 = vmax.xlane.f32.xlu0 %v7123
  %v7125 = vpop.xlane.xlu0 %7124
  %v7126 = vsub.f32 %v7086, %v7121
  %v7127 = vsub.f32 %v7091, %v7125
  %v7128 = vmul.f32 %v7126, 1.442695
  %v7129 = vpow.pop %v7128
  %v7130 = vmul.f32 %v7127, 1.442695
  %v7131 = vpow.pop %v7130
  %7134 = vrot.lane.b32.xlu0 %v7129, 112
  %v7135 = vpop.permute.xlu0 %7134
  %7136 = vrot.lane.b32.xlu0 %v7131, 112
  %v7137 = vpop.permute.xlu0 %7136
  %v7140 = vsel %vm7094, %v7135, 0.0
  %7141 = vadd.xlane.f32.xlu0 %v7140
  %v7142 = vpop.xlane.xlu0 %7141
  %v7143 = vsel %vm7098, %v7137, 0.0
  %7144 = vadd.xlane.f32.xlu0 %v7143
  %v7145 = vpop.xlane.xlu0 %7144
  %v7146 = vrcp.pop %v7142
  %v7147 = vmul.f32 %v7129, %v7146
  %v7148 = vrcp.pop %v7145
  %v7149 = vmul.f32 %v7131, %v7148
  %v7150 = vsel %vm7094, %v7115, %v7147
  %v7151 = vsel %vm7094, %v7117, %v7149
  %7152 = vst.msk [vmem:[%s16] sm:$0xff] %vm150, %v7150
  %7153 = vst.msk [vmem:[%s16 + $0x8] sm:$0xf] %vm1697, %v7151
  // Predicated region
  $region66: #{_lambda_.1} parent=0 // pred_check
    _
  $region67: #{_lambda_.1} parent=0 // pred_check_branch
    %7155 = sbr.rel (0) target = $region69
  $region68: #{_lambda_.1} parent=0 // pred_region
    _
  $region69: #{_lambda_.1} parent=0 // pred_fallthru
    _
  // Predicated region
  $region70: #{_lambda_.1} parent=0 // pred_check
    _
  $region71: #{_lambda_.1} parent=0 // pred_check_branch
    %7157 = sbr.rel (0) target = $region73
  $region72: #{_lambda_.1} parent=0 // pred_region
    _
  $region73: #{_lambda_.1} parent=0 // pred_fallthru
    _

</llo_original>
